<compile_context>
chip_gen: v7x
topology: tpu7x:2x2x1
jax: 0.10.0
libtpu: 0.0.40
codegen_flags: <defaults>
</compile_context>

<pallas_src>
import functools

import jax
import jax.numpy as jnp
from jax.experimental import pallas as pl
from jax.experimental.pallas import tpu as pltpu


def _round_up(x, m):
    return ((x + m - 1) // m) * m


# ----------------------------- Pallas kernel ------------------------------ #

def _aspp_kernel(xp_ref, w_ref, wproj_ref, bbr_ref, cb_ref, o_ref, *,
                 row_tile, w8, pad, dilations):
    """One (batch, row-tile) step.

    xp_ref   : (Hp, Wp, Cin_p)  bf16  halo-padded image (whole image resident)
    w_ref    : (28, Cin_p, Cout_p) bf16  [1x1 tap] + 3 branches x 9 taps
    wproj_ref: (4, Cout_p, Cout_p) bf16  per-branch projection slices
    bbr_ref  : (4, Cout_p) f32   per-branch folded BN bias
    cb_ref   : (1, Cout_p) f32   proj bias + pooled-branch contribution (per image)
    o_ref    : (row_tile * w8, Cout_p) f32
    """
    rt = pl.program_id(1)
    row0 = rt * row_tile                      # first output row of this tile
    cinp = xp_ref.shape[-1]
    coutp = o_ref.shape[-1]
    npix = row_tile * w8

    # Lazily-populated caches so the dy == 0 slab / (dy, dx) == (0, 0) tap is
    # loaded & sliced once but reused by the 1x1 branch and the middle row of
    # every dilated branch.
    slab_cache = {}   # dy -> (row_tile, Wp, Cin_p) bf16
    tap_cache = {}    # (dy, dx) -> (npix, Cin_p) bf16

    def get_tap(dy, dx):
        key = (dy, dx)
        if key not in tap_cache:
            if dy not in slab_cache:
                # dynamic slice only on the leading (row) axis -> cheap
                slab_cache[dy] = xp_ref[pl.ds(row0 + pad + dy, row_tile), :, :]
            slab = slab_cache[dy]
            tap_cache[key] = slab[:, pad + dx:pad + dx + w8, :].reshape(npix, cinp)
        return tap_cache[key]

    acc = jnp.zeros((npix, coutp), jnp.float32)   # fused projection accumulator
    widx = 0
    for bi, d in enumerate((0,) + tuple(dilations)):
        offs = (0,) if d == 0 else (-d, 0, d)
        y = jnp.zeros((npix, coutp), jnp.float32)
        for dy in offs:
            for dx in offs:
                y = y + jnp.dot(get_tap(dy, dx), w_ref[widx],
                                preferred_element_type=jnp.float32)
                widx += 1
        # BN-folded bias + ReLU for this branch.
        y = jnp.maximum(y + bbr_ref[bi:bi + 1, :], 0.0)
        # Fused 1x1 projection slice (replaces concat + big projection matmul).
        acc = acc + jnp.dot(y.astype(jnp.bfloat16), wproj_ref[bi],
                            preferred_element_type=jnp.float32)

    # cb already contains proj bias + pooled-branch @ wproj_pool_slice.
    o_ref[...] = jnp.maximum(acc + cb_ref[...], 0.0)


# ------------------------------- glue / host ------------------------------ #

def _fold_bn(wt, bnp, eps=1e-5):
    """Fold BatchNorm (inference) into a (..., Cout) conv weight."""
    g, b, m, v = bnp
    s = g / jnp.sqrt(v + eps)
    return wt * s, b - m * s


def aspp_forward(x_nchw, params, *, row_tile=None):
    """ASPP forward. x_nchw: (N, Cin, H, W) float32 -> (N, Cout, H, W) float32."""
    n, cin, h, w = x_nchw.shape
    cout = params['w1'].shape[-1]
    dils = (6, 12, 18)
    pad = max(dils)

    # ---- padded / tiled geometry (lane & sublane dense) ----
    cin_p = _round_up(cin, 128)
    cout_p = _round_up(cout, 128)
    w8 = _round_up(w, 8)
    if row_tile is None:
        row_tile = min(h, max(1, 1024 // w8))
    row_tile = max(1, min(row_tile, h))
    h_t = _round_up(h, row_tile)
    n_rt = h_t // row_tile
    hp = h_t + 2 * pad
    wp8 = w8 + 2 * pad

    x = jnp.transpose(x_nchw, (0, 2, 3, 1)).astype(jnp.float32)   # NHWC, f32

    # Halo-padded bf16 activation slab (read once per image by the kernel).
    xp = jnp.zeros((n, hp, wp8, cin_p), jnp.bfloat16)
    xp = xp.at[:, pad:pad + h, pad:pad + w, :cin].set(x.astype(jnp.bfloat16))

    # ---- fold BN into conv weights / biases ----
    w1, b1 = _fold_bn(params['w1'], params['bn1'])           # (cin, cout)
    w6, b6 = _fold_bn(params['w6'], params['bn6'])           # (3,3,cin,cout)
    w12, b12 = _fold_bn(params['w12'], params['bn12'])
    w18, b18 = _fold_bn(params['w18'], params['bn18'])
    w_pool, b_pool = _fold_bn(params['wpool'], params['bnpool'])
    wpr, bpr = _fold_bn(params['wproj'], params['bnproj'])   # (5*cout, cout)

    def padw(wt):   # (cin, cout) -> (cin_p, cout_p), zero-padded
        return jnp.zeros((cin_p, cout_p), jnp.float32).at[:cin, :cout].set(wt)

    def padb(bv):   # (cout,) -> (cout_p,)
        return jnp.zeros((cout_p,), jnp.float32).at[:cout].set(bv)

    # Branch tap weights packed as (28, Cin_p, Cout_p): [1x1] + 3x9 dilated taps
    # (same nested order the kernel replays them in).
    taps = [padw(w1)]
    for wd in (w6, w12, w18):
        for ky in range(3):
            for kx in range(3):
                taps.append(padw(wd[ky, kx]))
    w_all = jnp.stack(taps).astype(jnp.bfloat16)

    b_br = jnp.stack([padb(b1), padb(b6), padb(b12), padb(b18)])   # (4, cout_p) f32

    # Projection weight split into per-branch (Cout, Cout) slices (concat removed).
    wproj_slices = []
    for bi in range(4):
        blk = wpr[bi * cout:(bi + 1) * cout, :]
        wproj_slices.append(
            jnp.zeros((cout_p, cout_p), jnp.float32).at[:cout, :cout].set(blk))
    wproj_pack = jnp.stack(wproj_slices).astype(jnp.bfloat16)      # (4, cout_p, cout_p)

    # Image-pooling branch folded into the projection bias (per image, f32, tiny).
    pooled = jnp.mean(x, axis=(1, 2))                              # (N, cin)
    yp = jnp.maximum(pooled @ w_pool + b_pool, 0.0)                # (N, cout)
    cb = bpr[None, :] + yp @ wpr[4 * cout:5 * cout, :]             # (N, cout)
    cb_p = jnp.zeros((n, 1, cout_p), jnp.float32).at[:, 0, :cout].set(cb)

    # ---- VMEM budget (explicit, with headroom; capped for v7x's 64 MiB) ----
    xp_blk = hp * wp8 * cin_p * 2                                  # bf16 image slab
    out_blk = row_tile * w8 * cout_p * 4
    w_bytes = int(w_all.size) * 2 + int(wproj_pack.size) * 2
    misc = int(b_br.size) * 4 + cout_p * 4
    scratch = (2 * row_tile * wp8 * cin_p * 2                      # two live slabs
               + 3 * row_tile * w8 * max(cin_p, cout_p) * 4)       # taps + accumulators
    est = 2 * (xp_blk + out_blk + w_bytes + misc) + scratch + (8 << 20)
    vmem_limit = int(min(max(est, 32 << 20), 64 << 20))

    kernel = functools.partial(_aspp_kernel, row_tile=row_tile, w8=w8,
                               pad=pad, dilations=dils)

    out_flat = pl.pallas_call(
        kernel,
        out_shape=jax.ShapeDtypeStruct((n, h_t * w8, cout_p), jnp.float32),
        grid_spec=pltpu.PrefetchScalarGridSpec(
            num_scalar_prefetch=0,
            grid=(n, n_rt),
            in_specs=[
                # halo-padded image: constant along the row-tile axis -> DMA'd once per image
                pl.BlockSpec((None, hp, wp8, cin_p), lambda b, r: (b, 0, 0, 0)),
                pl.BlockSpec((28, cin_p, cout_p), lambda b, r: (0, 0, 0)),
                pl.BlockSpec((4, cout_p, cout_p), lambda b, r: (0, 0, 0)),
                pl.BlockSpec((4, cout_p), lambda b, r: (0, 0)),
                pl.BlockSpec((None, 1, cout_p), lambda b, r: (b, 0, 0)),
            ],
            out_specs=pl.BlockSpec((None, row_tile * w8, cout_p),
                                   lambda b, r: (b, r, 0)),
        ),
        compiler_params=pltpu.CompilerParams(
            dimension_semantics=("parallel", "parallel"),
            vmem_limit_bytes=vmem_limit),
    )(xp, w_all, wproj_pack, b_br, cb_p)

    out = out_flat.reshape(n, h_t, w8, cout_p)[:, :h, :w, :cout]
    # TODO(synk): Dropout2d(0.5) is identity here (inference semantics); training
    # mode dropout would need pltpu.prng_* channel masking.
    return jnp.transpose(out, (0, 3, 1, 2))


# ------------------------- parameter initialization ----------------------- #

def init_params(key, in_channels, out_channels):
    keys = jax.random.split(key, 12)
    cin, cout = in_channels, out_channels

    def bn(k):
        kg, kb, km, kv = jax.random.split(k, 4)
        gamma = 1.0 + 0.1 * jax.random.normal(kg, (cout,), jnp.float32)
        beta = 0.1 * jax.random.normal(kb, (cout,), jnp.float32)
        mean = 0.1 * jax.random.normal(km, (cout,), jnp.float32)
        var = jnp.abs(jax.random.normal(kv, (cout,), jnp.float32)) + 0.5
        return (gamma, beta, mean, var)

    return {
        'w1':    0.1 * jax.random.normal(keys[0], (cin, cout), jnp.float32),
        'w6':    0.1 * jax.random.normal(keys[1], (3, 3, cin, cout), jnp.float32),
        'w12':   0.1 * jax.random.normal(keys[2], (3, 3, cin, cout), jnp.float32),
        'w18':   0.1 * jax.random.normal(keys[3], (3, 3, cin, cout), jnp.float32),
        'wpool': 0.1 * jax.random.normal(keys[4], (cin, cout), jnp.float32),
        'wproj': 0.1 * jax.random.normal(keys[5], (5 * cout, cout), jnp.float32),
        'bn1': bn(keys[6]), 'bn6': bn(keys[7]), 'bn12': bn(keys[8]),
        'bn18': bn(keys[9]), 'bnpool': bn(keys[10]), 'bnproj': bn(keys[11]),
    }


# ----------------------------- pure-JAX reference -------------------------- #

def _reference(x_nchw, params):
    eps = 1e-5
    x = jnp.transpose(x_nchw, (0, 2, 3, 1)).astype(jnp.float32)
    n, h, w, cin = x.shape
    cout = params['w1'].shape[-1]

    def bn_relu(y, bnp):
        g, b, m, v = bnp
        return jnp.maximum((y - m) * g / jnp.sqrt(v + eps) + b, 0.0)

    def conv(xx, w_hwio, d):
        return jax.lax.conv_general_dilated(
            xx, w_hwio, window_strides=(1, 1),
            padding=[(d, d), (d, d)], rhs_dilation=(d, d),
            dimension_numbers=('NHWC', 'HWIO', 'NHWC'))

    y1 = bn_relu(jnp.einsum('nhwc,co->nhwo', x, params['w1']), params['bn1'])
    y6 = bn_relu(conv(x, params['w6'], 6), params['bn6'])
    y12 = bn_relu(conv(x, params['w12'], 12), params['bn12'])
    y18 = bn_relu(conv(x, params['w18'], 18), params['bn18'])
    pooled = jnp.mean(x, axis=(1, 2))                         # (N, Cin)
    yp = bn_relu(pooled @ params['wpool'], params['bnpool'])  # (N, Cout)
    yp = jnp.broadcast_to(yp[:, None, None, :], (n, h, w, cout))
    cat = jnp.concatenate([y1, y6, y12, y18, yp], axis=-1)
    out = bn_relu(jnp.einsum('nhwc,co->nhwo', cat, params['wproj']),
                  params['bnproj'])
    return jnp.transpose(out, (0, 3, 1, 2))


if __name__ == "__main__":
    key = jax.random.PRNGKey(0)
    kx, kp = jax.random.split(key)

    N, C_IN, C_OUT, H, W = 2, 4, 8, 16, 16
    x = jax.random.normal(kx, (N, C_IN, H, W), jnp.float32)
    params = init_params(kp, C_IN, C_OUT)

    out = jax.block_until_ready(aspp_forward(x, params, row_tile=8))
    ref = jax.block_until_ready(_reference(x, params))

    assert out.shape == (N, C_OUT, H, W), out.shape
    max_err = float(jnp.max(jnp.abs(out - ref)))
    assert max_err < 5e-2, max_err   # bf16 MXU path vs f32 reference

    print("KERNEL_OK")
</pallas_src>

<mosaic_0001>
module attributes {stable_mosaic.version = 11 : i64} {
  func.func @_aspp_kernel(%arg0: i32, %arg1: i32, %arg2: memref<1x52x52x128xbf16, #tpu.memory_space<vmem>>, %arg3: memref<28x128x128xbf16, #tpu.memory_space<vmem>>, %arg4: memref<4x128x128xbf16, #tpu.memory_space<vmem>>, %arg5: memref<4x128xf32, #tpu.memory_space<vmem>>, %arg6: memref<1x1x128xf32, #tpu.memory_space<vmem>>, %arg7: memref<1x128x128xf32, #tpu.memory_space<vmem>>) attributes {dimension_semantics = [#tpu.dimension_semantics<parallel>, #tpu.dimension_semantics<parallel>], iteration_bounds = array<i64: 2, 2>, scalar_prefetch = 0 : i64, scratch_operands = 0 : i64, tpu.core_type = #tpu.core_type<tc>, window_params = [{transform_indices = @transform_0, window_bounds = array<i64: 1, 52, 52, 128>}, {pipeline_mode = #tpu.pipeline_mode<synchronous>, transform_indices = @transform_1, window_bounds = array<i64: 28, 128, 128>}, {pipeline_mode = #tpu.pipeline_mode<synchronous>, transform_indices = @transform_2, window_bounds = array<i64: 4, 128, 128>}, {pipeline_mode = #tpu.pipeline_mode<synchronous>, transform_indices = @transform_3, window_bounds = array<i64: 4, 128>}, {transform_indices = @transform_4, window_bounds = array<i64: 1, 1, 128>}, {transform_indices = @transform_5, window_bounds = array<i64: 1, 128, 128>}]} {
    %c8_i32 = arith.constant 8 : i32
    %0 = arith.muli %arg1, %c8_i32 : i32
    %cst = arith.constant 0.000000e+00 : f32
    %1 = vector.broadcast %cst : f32 to vector<128x128xf32>
    %cst_0 = arith.constant 0.000000e+00 : f32
    %2 = vector.broadcast %cst_0 : f32 to vector<128x128xf32>
    %c18_i32 = arith.constant 18 : i32
    %3 = arith.addi %0, %c18_i32 : i32
    %c0_i32 = arith.constant 0 : i32
    %4 = arith.addi %3, %c0_i32 : i32
    %c0 = arith.constant 0 : index
    %5 = arith.index_cast %4 : i32 to index
    %c0_1 = arith.constant 0 : index
    %c0_2 = arith.constant 0 : index
    %6 = vector.load %arg2[%c0, %5, %c0_1, %c0_2] : memref<1x52x52x128xbf16, #tpu.memory_space<vmem>>, vector<1x8x52x128xbf16>
    %7 = vector.shape_cast %6 : vector<1x8x52x128xbf16> to vector<8x52x128xbf16>
    %8 = vector.extract_strided_slice %7 {offsets = [0, 18, 0], sizes = [8, 16, 128], strides = [1, 1, 1]} : vector<8x52x128xbf16> to vector<8x16x128xbf16>
    %9 = vector.shape_cast %8 : vector<8x16x128xbf16> to vector<128x128xbf16>
    %c0_3 = arith.constant 0 : index
    %c0_4 = arith.constant 0 : index
    %c0_5 = arith.constant 0 : index
    %10 = vector.load %arg3[%c0_3, %c0_4, %c0_5] : memref<28x128x128xbf16, #tpu.memory_space<vmem>>, vector<1x128x128xbf16>
    %11 = vector.shape_cast %10 : vector<1x128x128xbf16> to vector<128x128xbf16>
    %cst_6 = arith.constant dense<0.000000e+00> : vector<128x128xf32>
    %12 = tpu.matmul %9, %11, %cst_6 {dimension_numbers = #tpu.dot_dimension_numbers<[1], [0], [0], [1], [0, 0, 1, 1], [], []>} : vector<128x128xbf16>, vector<128x128xbf16>, vector<128x128xf32> -> vector<128x128xf32>
    %13 = arith.addf %2, %12 : vector<128x128xf32>
    %c0_7 = arith.constant 0 : index
    %c0_8 = arith.constant 0 : index
    %14 = vector.load %arg5[%c0_7, %c0_8] : memref<4x128xf32, #tpu.memory_space<vmem>>, vector<1x128xf32>
    %15 = vector.broadcast %14 : vector<1x128xf32> to vector<128x128xf32>
    %16 = arith.addf %13, %15 : vector<128x128xf32>
    %cst_9 = arith.constant 0.000000e+00 : f32
    %17 = vector.broadcast %cst_9 : f32 to vector<128x128xf32>
    %18 = arith.maximumf %16, %17 : vector<128x128xf32>
    %19 = arith.truncf %18 : vector<128x128xf32> to vector<128x128xbf16>
    %c0_10 = arith.constant 0 : index
    %c0_11 = arith.constant 0 : index
    %c0_12 = arith.constant 0 : index
    %20 = vector.load %arg4[%c0_10, %c0_11, %c0_12] : memref<4x128x128xbf16, #tpu.memory_space<vmem>>, vector<1x128x128xbf16>
    %21 = vector.shape_cast %20 : vector<1x128x128xbf16> to vector<128x128xbf16>
    %cst_13 = arith.constant dense<0.000000e+00> : vector<128x128xf32>
    %22 = tpu.matmul %19, %21, %cst_13 {dimension_numbers = #tpu.dot_dimension_numbers<[1], [0], [0], [1], [0, 0, 1, 1], [], []>} : vector<128x128xbf16>, vector<128x128xbf16>, vector<128x128xf32> -> vector<128x128xf32>
    %23 = arith.addf %1, %22 : vector<128x128xf32>
    %cst_14 = arith.constant 0.000000e+00 : f32
    %24 = vector.broadcast %cst_14 : f32 to vector<128x128xf32>
    %c18_i32_15 = arith.constant 18 : i32
    %25 = arith.addi %0, %c18_i32_15 : i32
    %c-6_i32 = arith.constant -6 : i32
    %26 = arith.addi %25, %c-6_i32 : i32
    %c0_16 = arith.constant 0 : index
    %27 = arith.index_cast %26 : i32 to index
    %c0_17 = arith.constant 0 : index
    %c0_18 = arith.constant 0 : index
    %28 = vector.load %arg2[%c0_16, %27, %c0_17, %c0_18] : memref<1x52x52x128xbf16, #tpu.memory_space<vmem>>, vector<1x8x52x128xbf16>
    %29 = vector.shape_cast %28 : vector<1x8x52x128xbf16> to vector<8x52x128xbf16>
    %30 = vector.extract_strided_slice %29 {offsets = [0, 12, 0], sizes = [8, 16, 128], strides = [1, 1, 1]} : vector<8x52x128xbf16> to vector<8x16x128xbf16>
    %31 = vector.shape_cast %30 : vector<8x16x128xbf16> to vector<128x128xbf16>
    %c1 = arith.constant 1 : index
    %c0_19 = arith.constant 0 : index
    %c0_20 = arith.constant 0 : index
    %32 = vector.load %arg3[%c1, %c0_19, %c0_20] : memref<28x128x128xbf16, #tpu.memory_space<vmem>>, vector<1x128x128xbf16>
    %33 = vector.shape_cast %32 : vector<1x128x128xbf16> to vector<128x128xbf16>
    %cst_21 = arith.constant dense<0.000000e+00> : vector<128x128xf32>
    %34 = tpu.matmul %31, %33, %cst_21 {dimension_numbers = #tpu.dot_dimension_numbers<[1], [0], [0], [1], [0, 0, 1, 1], [], []>} : vector<128x128xbf16>, vector<128x128xbf16>, vector<128x128xf32> -> vector<128x128xf32>
    %35 = arith.addf %24, %34 : vector<128x128xf32>
    %36 = vector.extract_strided_slice %29 {offsets = [0, 18, 0], sizes = [8, 16, 128], strides = [1, 1, 1]} : vector<8x52x128xbf16> to vector<8x16x128xbf16>
    %37 = vector.shape_cast %36 : vector<8x16x128xbf16> to vector<128x128xbf16>
    %c2 = arith.constant 2 : index
    %c0_22 = arith.constant 0 : index
    %c0_23 = arith.constant 0 : index
    %38 = vector.load %arg3[%c2, %c0_22, %c0_23] : memref<28x128x128xbf16, #tpu.memory_space<vmem>>, vector<1x128x128xbf16>
    %39 = vector.shape_cast %38 : vector<1x128x128xbf16> to vector<128x128xbf16>
    %cst_24 = arith.constant dense<0.000000e+00> : vector<128x128xf32>
    %40 = tpu.matmul %37, %39, %cst_24 {dimension_numbers = #tpu.dot_dimension_numbers<[1], [0], [0], [1], [0, 0, 1, 1], [], []>} : vector<128x128xbf16>, vector<128x128xbf16>, vector<128x128xf32> -> vector<128x128xf32>
    %41 = arith.addf %35, %40 : vector<128x128xf32>
    %42 = vector.extract_strided_slice %29 {offsets = [0, 24, 0], sizes = [8, 16, 128], strides = [1, 1, 1]} : vector<8x52x128xbf16> to vector<8x16x128xbf16>
    %43 = vector.shape_cast %42 : vector<8x16x128xbf16> to vector<128x128xbf16>
    %c3 = arith.constant 3 : index
    %c0_25 = arith.constant 0 : index
    %c0_26 = arith.constant 0 : index
    %44 = vector.load %arg3[%c3, %c0_25, %c0_26] : memref<28x128x128xbf16, #tpu.memory_space<vmem>>, vector<1x128x128xbf16>
    %45 = vector.shape_cast %44 : vector<1x128x128xbf16> to vector<128x128xbf16>
    %cst_27 = arith.constant dense<0.000000e+00> : vector<128x128xf32>
    %46 = tpu.matmul %43, %45, %cst_27 {dimension_numbers = #tpu.dot_dimension_numbers<[1], [0], [0], [1], [0, 0, 1, 1], [], []>} : vector<128x128xbf16>, vector<128x128xbf16>, vector<128x128xf32> -> vector<128x128xf32>
    %47 = arith.addf %41, %46 : vector<128x128xf32>
    %48 = vector.extract_strided_slice %7 {offsets = [0, 12, 0], sizes = [8, 16, 128], strides = [1, 1, 1]} : vector<8x52x128xbf16> to vector<8x16x128xbf16>
    %49 = vector.shape_cast %48 : vector<8x16x128xbf16> to vector<128x128xbf16>
    %c4 = arith.constant 4 : index
    %c0_28 = arith.constant 0 : index
    %c0_29 = arith.constant 0 : index
    %50 = vector.load %arg3[%c4, %c0_28, %c0_29] : memref<28x128x128xbf16, #tpu.memory_space<vmem>>, vector<1x128x128xbf16>
    %51 = vector.shape_cast %50 : vector<1x128x128xbf16> to vector<128x128xbf16>
    %cst_30 = arith.constant dense<0.000000e+00> : vector<128x128xf32>
    %52 = tpu.matmul %49, %51, %cst_30 {dimension_numbers = #tpu.dot_dimension_numbers<[1], [0], [0], [1], [0, 0, 1, 1], [], []>} : vector<128x128xbf16>, vector<128x128xbf16>, vector<128x128xf32> -> vector<128x128xf32>
    %53 = arith.addf %47, %52 : vector<128x128xf32>
    %c5 = arith.constant 5 : index
    %c0_31 = arith.constant 0 : index
    %c0_32 = arith.constant 0 : index
    %54 = vector.load %arg3[%c5, %c0_31, %c0_32] : memref<28x128x128xbf16, #tpu.memory_space<vmem>>, vector<1x128x128xbf16>
    %55 = vector.shape_cast %54 : vector<1x128x128xbf16> to vector<128x128xbf16>
    %cst_33 = arith.constant dense<0.000000e+00> : vector<128x128xf32>
    %56 = tpu.matmul %9, %55, %cst_33 {dimension_numbers = #tpu.dot_dimension_numbers<[1], [0], [0], [1], [0, 0, 1, 1], [], []>} : vector<128x128xbf16>, vector<128x128xbf16>, vector<128x128xf32> -> vector<128x128xf32>
    %57 = arith.addf %53, %56 : vector<128x128xf32>
    %58 = vector.extract_strided_slice %7 {offsets = [0, 24, 0], sizes = [8, 16, 128], strides = [1, 1, 1]} : vector<8x52x128xbf16> to vector<8x16x128xbf16>
    %59 = vector.shape_cast %58 : vector<8x16x128xbf16> to vector<128x128xbf16>
    %c6 = arith.constant 6 : index
    %c0_34 = arith.constant 0 : index
    %c0_35 = arith.constant 0 : index
    %60 = vector.load %arg3[%c6, %c0_34, %c0_35] : memref<28x128x128xbf16, #tpu.memory_space<vmem>>, vector<1x128x128xbf16>
    %61 = vector.shape_cast %60 : vector<1x128x128xbf16> to vector<128x128xbf16>
    %cst_36 = arith.constant dense<0.000000e+00> : vector<128x128xf32>
    %62 = tpu.matmul %59, %61, %cst_36 {dimension_numbers = #tpu.dot_dimension_numbers<[1], [0], [0], [1], [0, 0, 1, 1], [], []>} : vector<128x128xbf16>, vector<128x128xbf16>, vector<128x128xf32> -> vector<128x128xf32>
    %63 = arith.addf %57, %62 : vector<128x128xf32>
    %c18_i32_37 = arith.constant 18 : i32
    %64 = arith.addi %0, %c18_i32_37 : i32
    %c6_i32 = arith.constant 6 : i32
    %65 = arith.addi %64, %c6_i32 : i32
    %c0_38 = arith.constant 0 : index
    %66 = arith.index_cast %65 : i32 to index
    %c0_39 = arith.constant 0 : index
    %c0_40 = arith.constant 0 : index
    %67 = vector.load %arg2[%c0_38, %66, %c0_39, %c0_40] : memref<1x52x52x128xbf16, #tpu.memory_space<vmem>>, vector<1x8x52x128xbf16>
    %68 = vector.shape_cast %67 : vector<1x8x52x128xbf16> to vector<8x52x128xbf16>
    %69 = vector.extract_strided_slice %68 {offsets = [0, 12, 0], sizes = [8, 16, 128], strides = [1, 1, 1]} : vector<8x52x128xbf16> to vector<8x16x128xbf16>
    %70 = vector.shape_cast %69 : vector<8x16x128xbf16> to vector<128x128xbf16>
    %c7 = arith.constant 7 : index
    %c0_41 = arith.constant 0 : index
    %c0_42 = arith.constant 0 : index
    %71 = vector.load %arg3[%c7, %c0_41, %c0_42] : memref<28x128x128xbf16, #tpu.memory_space<vmem>>, vector<1x128x128xbf16>
    %72 = vector.shape_cast %71 : vector<1x128x128xbf16> to vector<128x128xbf16>
    %cst_43 = arith.constant dense<0.000000e+00> : vector<128x128xf32>
    %73 = tpu.matmul %70, %72, %cst_43 {dimension_numbers = #tpu.dot_dimension_numbers<[1], [0], [0], [1], [0, 0, 1, 1], [], []>} : vector<128x128xbf16>, vector<128x128xbf16>, vector<128x128xf32> -> vector<128x128xf32>
    %74 = arith.addf %63, %73 : vector<128x128xf32>
    %75 = vector.extract_strided_slice %68 {offsets = [0, 18, 0], sizes = [8, 16, 128], strides = [1, 1, 1]} : vector<8x52x128xbf16> to vector<8x16x128xbf16>
    %76 = vector.shape_cast %75 : vector<8x16x128xbf16> to vector<128x128xbf16>
    %c8 = arith.constant 8 : index
    %c0_44 = arith.constant 0 : index
    %c0_45 = arith.constant 0 : index
    %77 = vector.load %arg3[%c8, %c0_44, %c0_45] : memref<28x128x128xbf16, #tpu.memory_space<vmem>>, vector<1x128x128xbf16>
    %78 = vector.shape_cast %77 : vector<1x128x128xbf16> to vector<128x128xbf16>
    %cst_46 = arith.constant dense<0.000000e+00> : vector<128x128xf32>
    %79 = tpu.matmul %76, %78, %cst_46 {dimension_numbers = #tpu.dot_dimension_numbers<[1], [0], [0], [1], [0, 0, 1, 1], [], []>} : vector<128x128xbf16>, vector<128x128xbf16>, vector<128x128xf32> -> vector<128x128xf32>
    %80 = arith.addf %74, %79 : vector<128x128xf32>
    %81 = vector.extract_strided_slice %68 {offsets = [0, 24, 0], sizes = [8, 16, 128], strides = [1, 1, 1]} : vector<8x52x128xbf16> to vector<8x16x128xbf16>
    %82 = vector.shape_cast %81 : vector<8x16x128xbf16> to vector<128x128xbf16>
    %c9 = arith.constant 9 : index
    %c0_47 = arith.constant 0 : index
    %c0_48 = arith.constant 0 : index
    %83 = vector.load %arg3[%c9, %c0_47, %c0_48] : memref<28x128x128xbf16, #tpu.memory_space<vmem>>, vector<1x128x128xbf16>
    %84 = vector.shape_cast %83 : vector<1x128x128xbf16> to vector<128x128xbf16>
    %cst_49 = arith.constant dense<0.000000e+00> : vector<128x128xf32>
    %85 = tpu.matmul %82, %84, %cst_49 {dimension_numbers = #tpu.dot_dimension_numbers<[1], [0], [0], [1], [0, 0, 1, 1], [], []>} : vector<128x128xbf16>, vector<128x128xbf16>, vector<128x128xf32> -> vector<128x128xf32>
    %86 = arith.addf %80, %85 : vector<128x128xf32>
    %c1_50 = arith.constant 1 : index
    %c0_51 = arith.constant 0 : index
    %87 = vector.load %arg5[%c1_50, %c0_51] : memref<4x128xf32, #tpu.memory_space<vmem>>, vector<1x128xf32>
    %88 = vector.broadcast %87 : vector<1x128xf32> to vector<128x128xf32>
    %89 = arith.addf %86, %88 : vector<128x128xf32>
    %cst_52 = arith.constant 0.000000e+00 : f32
    %90 = vector.broadcast %cst_52 : f32 to vector<128x128xf32>
    %91 = arith.maximumf %89, %90 : vector<128x128xf32>
    %92 = arith.truncf %91 : vector<128x128xf32> to vector<128x128xbf16>
    %c1_53 = arith.constant 1 : index
    %c0_54 = arith.constant 0 : index
    %c0_55 = arith.constant 0 : index
    %93 = vector.load %arg4[%c1_53, %c0_54, %c0_55] : memref<4x128x128xbf16, #tpu.memory_space<vmem>>, vector<1x128x128xbf16>
    %94 = vector.shape_cast %93 : vector<1x128x128xbf16> to vector<128x128xbf16>
    %cst_56 = arith.constant dense<0.000000e+00> : vector<128x128xf32>
    %95 = tpu.matmul %92, %94, %cst_56 {dimension_numbers = #tpu.dot_dimension_numbers<[1], [0], [0], [1], [0, 0, 1, 1], [], []>} : vector<128x128xbf16>, vector<128x128xbf16>, vector<128x128xf32> -> vector<128x128xf32>
    %96 = arith.addf %23, %95 : vector<128x128xf32>
    %cst_57 = arith.constant 0.000000e+00 : f32
    %97 = vector.broadcast %cst_57 : f32 to vector<128x128xf32>
    %c18_i32_58 = arith.constant 18 : i32
    %98 = arith.addi %0, %c18_i32_58 : i32
    %c-12_i32 = arith.constant -12 : i32
    %99 = arith.addi %98, %c-12_i32 : i32
    %c0_59 = arith.constant 0 : index
    %100 = arith.index_cast %99 : i32 to index
    %c0_60 = arith.constant 0 : index
    %c0_61 = arith.constant 0 : index
    %101 = vector.load %arg2[%c0_59, %100, %c0_60, %c0_61] : memref<1x52x52x128xbf16, #tpu.memory_space<vmem>>, vector<1x8x52x128xbf16>
    %102 = vector.shape_cast %101 : vector<1x8x52x128xbf16> to vector<8x52x128xbf16>
    %103 = vector.extract_strided_slice %102 {offsets = [0, 6, 0], sizes = [8, 16, 128], strides = [1, 1, 1]} : vector<8x52x128xbf16> to vector<8x16x128xbf16>
    %104 = vector.shape_cast %103 : vector<8x16x128xbf16> to vector<128x128xbf16>
    %c10 = arith.constant 10 : index
    %c0_62 = arith.constant 0 : index
    %c0_63 = arith.constant 0 : index
    %105 = vector.load %arg3[%c10, %c0_62, %c0_63] : memref<28x128x128xbf16, #tpu.memory_space<vmem>>, vector<1x128x128xbf16>
    %106 = vector.shape_cast %105 : vector<1x128x128xbf16> to vector<128x128xbf16>
    %cst_64 = arith.constant dense<0.000000e+00> : vector<128x128xf32>
    %107 = tpu.matmul %104, %106, %cst_64 {dimension_numbers = #tpu.dot_dimension_numbers<[1], [0], [0], [1], [0, 0, 1, 1], [], []>} : vector<128x128xbf16>, vector<128x128xbf16>, vector<128x128xf32> -> vector<128x128xf32>
    %108 = arith.addf %97, %107 : vector<128x128xf32>
    %109 = vector.extract_strided_slice %102 {offsets = [0, 18, 0], sizes = [8, 16, 128], strides = [1, 1, 1]} : vector<8x52x128xbf16> to vector<8x16x128xbf16>
    %110 = vector.shape_cast %109 : vector<8x16x128xbf16> to vector<128x128xbf16>
    %c11 = arith.constant 11 : index
    %c0_65 = arith.constant 0 : index
    %c0_66 = arith.constant 0 : index
    %111 = vector.load %arg3[%c11, %c0_65, %c0_66] : memref<28x128x128xbf16, #tpu.memory_space<vmem>>, vector<1x128x128xbf16>
    %112 = vector.shape_cast %111 : vector<1x128x128xbf16> to vector<128x128xbf16>
    %cst_67 = arith.constant dense<0.000000e+00> : vector<128x128xf32>
    %113 = tpu.matmul %110, %112, %cst_67 {dimension_numbers = #tpu.dot_dimension_numbers<[1], [0], [0], [1], [0, 0, 1, 1], [], []>} : vector<128x128xbf16>, vector<128x128xbf16>, vector<128x128xf32> -> vector<128x128xf32>
    %114 = arith.addf %108, %113 : vector<128x128xf32>
    %115 = vector.extract_strided_slice %102 {offsets = [0, 30, 0], sizes = [8, 16, 128], strides = [1, 1, 1]} : vector<8x52x128xbf16> to vector<8x16x128xbf16>
    %116 = vector.shape_cast %115 : vector<8x16x128xbf16> to vector<128x128xbf16>
    %c12 = arith.constant 12 : index
    %c0_68 = arith.constant 0 : index
    %c0_69 = arith.constant 0 : index
    %117 = vector.load %arg3[%c12, %c0_68, %c0_69] : memref<28x128x128xbf16, #tpu.memory_space<vmem>>, vector<1x128x128xbf16>
    %118 = vector.shape_cast %117 : vector<1x128x128xbf16> to vector<128x128xbf16>
    %cst_70 = arith.constant dense<0.000000e+00> : vector<128x128xf32>
    %119 = tpu.matmul %116, %118, %cst_70 {dimension_numbers = #tpu.dot_dimension_numbers<[1], [0], [0], [1], [0, 0, 1, 1], [], []>} : vector<128x128xbf16>, vector<128x128xbf16>, vector<128x128xf32> -> vector<128x128xf32>
    %120 = arith.addf %114, %119 : vector<128x128xf32>
    %121 = vector.extract_strided_slice %7 {offsets = [0, 6, 0], sizes = [8, 16, 128], strides = [1, 1, 1]} : vector<8x52x128xbf16> to vector<8x16x128xbf16>
    %122 = vector.shape_cast %121 : vector<8x16x128xbf16> to vector<128x128xbf16>
    %c13 = arith.constant 13 : index
    %c0_71 = arith.constant 0 : index
    %c0_72 = arith.constant 0 : index
    %123 = vector.load %arg3[%c13, %c0_71, %c0_72] : memref<28x128x128xbf16, #tpu.memory_space<vmem>>, vector<1x128x128xbf16>
    %124 = vector.shape_cast %123 : vector<1x128x128xbf16> to vector<128x128xbf16>
    %cst_73 = arith.constant dense<0.000000e+00> : vector<128x128xf32>
    %125 = tpu.matmul %122, %124, %cst_73 {dimension_numbers = #tpu.dot_dimension_numbers<[1], [0], [0], [1], [0, 0, 1, 1], [], []>} : vector<128x128xbf16>, vector<128x128xbf16>, vector<128x128xf32> -> vector<128x128xf32>
    %126 = arith.addf %120, %125 : vector<128x128xf32>
    %c14 = arith.constant 14 : index
    %c0_74 = arith.constant 0 : index
    %c0_75 = arith.constant 0 : index
    %127 = vector.load %arg3[%c14, %c0_74, %c0_75] : memref<28x128x128xbf16, #tpu.memory_space<vmem>>, vector<1x128x128xbf16>
    %128 = vector.shape_cast %127 : vector<1x128x128xbf16> to vector<128x128xbf16>
    %cst_76 = arith.constant dense<0.000000e+00> : vector<128x128xf32>
    %129 = tpu.matmul %9, %128, %cst_76 {dimension_numbers = #tpu.dot_dimension_numbers<[1], [0], [0], [1], [0, 0, 1, 1], [], []>} : vector<128x128xbf16>, vector<128x128xbf16>, vector<128x128xf32> -> vector<128x128xf32>
    %130 = arith.addf %126, %129 : vector<128x128xf32>
    %131 = vector.extract_strided_slice %7 {offsets = [0, 30, 0], sizes = [8, 16, 128], strides = [1, 1, 1]} : vector<8x52x128xbf16> to vector<8x16x128xbf16>
    %132 = vector.shape_cast %131 : vector<8x16x128xbf16> to vector<128x128xbf16>
    %c15 = arith.constant 15 : index
    %c0_77 = arith.constant 0 : index
    %c0_78 = arith.constant 0 : index
    %133 = vector.load %arg3[%c15, %c0_77, %c0_78] : memref<28x128x128xbf16, #tpu.memory_space<vmem>>, vector<1x128x128xbf16>
    %134 = vector.shape_cast %133 : vector<1x128x128xbf16> to vector<128x128xbf16>
    %cst_79 = arith.constant dense<0.000000e+00> : vector<128x128xf32>
    %135 = tpu.matmul %132, %134, %cst_79 {dimension_numbers = #tpu.dot_dimension_numbers<[1], [0], [0], [1], [0, 0, 1, 1], [], []>} : vector<128x128xbf16>, vector<128x128xbf16>, vector<128x128xf32> -> vector<128x128xf32>
    %136 = arith.addf %130, %135 : vector<128x128xf32>
    %c18_i32_80 = arith.constant 18 : i32
    %137 = arith.addi %0, %c18_i32_80 : i32
    %c12_i32 = arith.constant 12 : i32
    %138 = arith.addi %137, %c12_i32 : i32
    %c0_81 = arith.constant 0 : index
    %139 = arith.index_cast %138 : i32 to index
    %c0_82 = arith.constant 0 : index
    %c0_83 = arith.constant 0 : index
    %140 = vector.load %arg2[%c0_81, %139, %c0_82, %c0_83] : memref<1x52x52x128xbf16, #tpu.memory_space<vmem>>, vector<1x8x52x128xbf16>
    %141 = vector.shape_cast %140 : vector<1x8x52x128xbf16> to vector<8x52x128xbf16>
    %142 = vector.extract_strided_slice %141 {offsets = [0, 6, 0], sizes = [8, 16, 128], strides = [1, 1, 1]} : vector<8x52x128xbf16> to vector<8x16x128xbf16>
    %143 = vector.shape_cast %142 : vector<8x16x128xbf16> to vector<128x128xbf16>
    %c16 = arith.constant 16 : index
    %c0_84 = arith.constant 0 : index
    %c0_85 = arith.constant 0 : index
    %144 = vector.load %arg3[%c16, %c0_84, %c0_85] : memref<28x128x128xbf16, #tpu.memory_space<vmem>>, vector<1x128x128xbf16>
    %145 = vector.shape_cast %144 : vector<1x128x128xbf16> to vector<128x128xbf16>
    %cst_86 = arith.constant dense<0.000000e+00> : vector<128x128xf32>
    %146 = tpu.matmul %143, %145, %cst_86 {dimension_numbers = #tpu.dot_dimension_numbers<[1], [0], [0], [1], [0, 0, 1, 1], [], []>} : vector<128x128xbf16>, vector<128x128xbf16>, vector<128x128xf32> -> vector<128x128xf32>
    %147 = arith.addf %136, %146 : vector<128x128xf32>
    %148 = vector.extract_strided_slice %141 {offsets = [0, 18, 0], sizes = [8, 16, 128], strides = [1, 1, 1]} : vector<8x52x128xbf16> to vector<8x16x128xbf16>
    %149 = vector.shape_cast %148 : vector<8x16x128xbf16> to vector<128x128xbf16>
    %c17 = arith.constant 17 : index
    %c0_87 = arith.constant 0 : index
    %c0_88 = arith.constant 0 : index
    %150 = vector.load %arg3[%c17, %c0_87, %c0_88] : memref<28x128x128xbf16, #tpu.memory_space<vmem>>, vector<1x128x128xbf16>
    %151 = vector.shape_cast %150 : vector<1x128x128xbf16> to vector<128x128xbf16>
    %cst_89 = arith.constant dense<0.000000e+00> : vector<128x128xf32>
    %152 = tpu.matmul %149, %151, %cst_89 {dimension_numbers = #tpu.dot_dimension_numbers<[1], [0], [0], [1], [0, 0, 1, 1], [], []>} : vector<128x128xbf16>, vector<128x128xbf16>, vector<128x128xf32> -> vector<128x128xf32>
    %153 = arith.addf %147, %152 : vector<128x128xf32>
    %154 = vector.extract_strided_slice %141 {offsets = [0, 30, 0], sizes = [8, 16, 128], strides = [1, 1, 1]} : vector<8x52x128xbf16> to vector<8x16x128xbf16>
    %155 = vector.shape_cast %154 : vector<8x16x128xbf16> to vector<128x128xbf16>
    %c18 = arith.constant 18 : index
    %c0_90 = arith.constant 0 : index
    %c0_91 = arith.constant 0 : index
    %156 = vector.load %arg3[%c18, %c0_90, %c0_91] : memref<28x128x128xbf16, #tpu.memory_space<vmem>>, vector<1x128x128xbf16>
    %157 = vector.shape_cast %156 : vector<1x128x128xbf16> to vector<128x128xbf16>
    %cst_92 = arith.constant dense<0.000000e+00> : vector<128x128xf32>
    %158 = tpu.matmul %155, %157, %cst_92 {dimension_numbers = #tpu.dot_dimension_numbers<[1], [0], [0], [1], [0, 0, 1, 1], [], []>} : vector<128x128xbf16>, vector<128x128xbf16>, vector<128x128xf32> -> vector<128x128xf32>
    %159 = arith.addf %153, %158 : vector<128x128xf32>
    %c2_93 = arith.constant 2 : index
    %c0_94 = arith.constant 0 : index
    %160 = vector.load %arg5[%c2_93, %c0_94] : memref<4x128xf32, #tpu.memory_space<vmem>>, vector<1x128xf32>
    %161 = vector.broadcast %160 : vector<1x128xf32> to vector<128x128xf32>
    %162 = arith.addf %159, %161 : vector<128x128xf32>
    %cst_95 = arith.constant 0.000000e+00 : f32
    %163 = vector.broadcast %cst_95 : f32 to vector<128x128xf32>
    %164 = arith.maximumf %162, %163 : vector<128x128xf32>
    %165 = arith.truncf %164 : vector<128x128xf32> to vector<128x128xbf16>
    %c2_96 = arith.constant 2 : index
    %c0_97 = arith.constant 0 : index
    %c0_98 = arith.constant 0 : index
    %166 = vector.load %arg4[%c2_96, %c0_97, %c0_98] : memref<4x128x128xbf16, #tpu.memory_space<vmem>>, vector<1x128x128xbf16>
    %167 = vector.shape_cast %166 : vector<1x128x128xbf16> to vector<128x128xbf16>
    %cst_99 = arith.constant dense<0.000000e+00> : vector<128x128xf32>
    %168 = tpu.matmul %165, %167, %cst_99 {dimension_numbers = #tpu.dot_dimension_numbers<[1], [0], [0], [1], [0, 0, 1, 1], [], []>} : vector<128x128xbf16>, vector<128x128xbf16>, vector<128x128xf32> -> vector<128x128xf32>
    %169 = arith.addf %96, %168 : vector<128x128xf32>
    %cst_100 = arith.constant 0.000000e+00 : f32
    %170 = vector.broadcast %cst_100 : f32 to vector<128x128xf32>
    %c18_i32_101 = arith.constant 18 : i32
    %171 = arith.addi %0, %c18_i32_101 : i32
    %c-18_i32 = arith.constant -18 : i32
    %172 = arith.addi %171, %c-18_i32 : i32
    %c0_102 = arith.constant 0 : index
    %173 = arith.index_cast %172 : i32 to index
    %c0_103 = arith.constant 0 : index
    %c0_104 = arith.constant 0 : index
    %174 = vector.load %arg2[%c0_102, %173, %c0_103, %c0_104] : memref<1x52x52x128xbf16, #tpu.memory_space<vmem>>, vector<1x8x52x128xbf16>
    %175 = vector.shape_cast %174 : vector<1x8x52x128xbf16> to vector<8x52x128xbf16>
    %176 = vector.extract_strided_slice %175 {offsets = [0, 0, 0], sizes = [8, 16, 128], strides = [1, 1, 1]} : vector<8x52x128xbf16> to vector<8x16x128xbf16>
    %177 = vector.shape_cast %176 : vector<8x16x128xbf16> to vector<128x128xbf16>
    %c19 = arith.constant 19 : index
    %c0_105 = arith.constant 0 : index
    %c0_106 = arith.constant 0 : index
    %178 = vector.load %arg3[%c19, %c0_105, %c0_106] : memref<28x128x128xbf16, #tpu.memory_space<vmem>>, vector<1x128x128xbf16>
    %179 = vector.shape_cast %178 : vector<1x128x128xbf16> to vector<128x128xbf16>
    %cst_107 = arith.constant dense<0.000000e+00> : vector<128x128xf32>
    %180 = tpu.matmul %177, %179, %cst_107 {dimension_numbers = #tpu.dot_dimension_numbers<[1], [0], [0], [1], [0, 0, 1, 1], [], []>} : vector<128x128xbf16>, vector<128x128xbf16>, vector<128x128xf32> -> vector<128x128xf32>
    %181 = arith.addf %170, %180 : vector<128x128xf32>
    %182 = vector.extract_strided_slice %175 {offsets = [0, 18, 0], sizes = [8, 16, 128], strides = [1, 1, 1]} : vector<8x52x128xbf16> to vector<8x16x128xbf16>
    %183 = vector.shape_cast %182 : vector<8x16x128xbf16> to vector<128x128xbf16>
    %c20 = arith.constant 20 : index
    %c0_108 = arith.constant 0 : index
    %c0_109 = arith.constant 0 : index
    %184 = vector.load %arg3[%c20, %c0_108, %c0_109] : memref<28x128x128xbf16, #tpu.memory_space<vmem>>, vector<1x128x128xbf16>
    %185 = vector.shape_cast %184 : vector<1x128x128xbf16> to vector<128x128xbf16>
    %cst_110 = arith.constant dense<0.000000e+00> : vector<128x128xf32>
    %186 = tpu.matmul %183, %185, %cst_110 {dimension_numbers = #tpu.dot_dimension_numbers<[1], [0], [0], [1], [0, 0, 1, 1], [], []>} : vector<128x128xbf16>, vector<128x128xbf16>, vector<128x128xf32> -> vector<128x128xf32>
    %187 = arith.addf %181, %186 : vector<128x128xf32>
    %188 = vector.extract_strided_slice %175 {offsets = [0, 36, 0], sizes = [8, 16, 128], strides = [1, 1, 1]} : vector<8x52x128xbf16> to vector<8x16x128xbf16>
    %189 = vector.shape_cast %188 : vector<8x16x128xbf16> to vector<128x128xbf16>
    %c21 = arith.constant 21 : index
    %c0_111 = arith.constant 0 : index
    %c0_112 = arith.constant 0 : index
    %190 = vector.load %arg3[%c21, %c0_111, %c0_112] : memref<28x128x128xbf16, #tpu.memory_space<vmem>>, vector<1x128x128xbf16>
    %191 = vector.shape_cast %190 : vector<1x128x128xbf16> to vector<128x128xbf16>
    %cst_113 = arith.constant dense<0.000000e+00> : vector<128x128xf32>
    %192 = tpu.matmul %189, %191, %cst_113 {dimension_numbers = #tpu.dot_dimension_numbers<[1], [0], [0], [1], [0, 0, 1, 1], [], []>} : vector<128x128xbf16>, vector<128x128xbf16>, vector<128x128xf32> -> vector<128x128xf32>
    %193 = arith.addf %187, %192 : vector<128x128xf32>
    %194 = vector.extract_strided_slice %7 {offsets = [0, 0, 0], sizes = [8, 16, 128], strides = [1, 1, 1]} : vector<8x52x128xbf16> to vector<8x16x128xbf16>
    %195 = vector.shape_cast %194 : vector<8x16x128xbf16> to vector<128x128xbf16>
    %c22 = arith.constant 22 : index
    %c0_114 = arith.constant 0 : index
    %c0_115 = arith.constant 0 : index
    %196 = vector.load %arg3[%c22, %c0_114, %c0_115] : memref<28x128x128xbf16, #tpu.memory_space<vmem>>, vector<1x128x128xbf16>
    %197 = vector.shape_cast %196 : vector<1x128x128xbf16> to vector<128x128xbf16>
    %cst_116 = arith.constant dense<0.000000e+00> : vector<128x128xf32>
    %198 = tpu.matmul %195, %197, %cst_116 {dimension_numbers = #tpu.dot_dimension_numbers<[1], [0], [0], [1], [0, 0, 1, 1], [], []>} : vector<128x128xbf16>, vector<128x128xbf16>, vector<128x128xf32> -> vector<128x128xf32>
    %199 = arith.addf %193, %198 : vector<128x128xf32>
    %c23 = arith.constant 23 : index
    %c0_117 = arith.constant 0 : index
    %c0_118 = arith.constant 0 : index
    %200 = vector.load %arg3[%c23, %c0_117, %c0_118] : memref<28x128x128xbf16, #tpu.memory_space<vmem>>, vector<1x128x128xbf16>
    %201 = vector.shape_cast %200 : vector<1x128x128xbf16> to vector<128x128xbf16>
    %cst_119 = arith.constant dense<0.000000e+00> : vector<128x128xf32>
    %202 = tpu.matmul %9, %201, %cst_119 {dimension_numbers = #tpu.dot_dimension_numbers<[1], [0], [0], [1], [0, 0, 1, 1], [], []>} : vector<128x128xbf16>, vector<128x128xbf16>, vector<128x128xf32> -> vector<128x128xf32>
    %203 = arith.addf %199, %202 : vector<128x128xf32>
    %204 = vector.extract_strided_slice %7 {offsets = [0, 36, 0], sizes = [8, 16, 128], strides = [1, 1, 1]} : vector<8x52x128xbf16> to vector<8x16x128xbf16>
    %205 = vector.shape_cast %204 : vector<8x16x128xbf16> to vector<128x128xbf16>
    %c24 = arith.constant 24 : index
    %c0_120 = arith.constant 0 : index
    %c0_121 = arith.constant 0 : index
    %206 = vector.load %arg3[%c24, %c0_120, %c0_121] : memref<28x128x128xbf16, #tpu.memory_space<vmem>>, vector<1x128x128xbf16>
    %207 = vector.shape_cast %206 : vector<1x128x128xbf16> to vector<128x128xbf16>
    %cst_122 = arith.constant dense<0.000000e+00> : vector<128x128xf32>
    %208 = tpu.matmul %205, %207, %cst_122 {dimension_numbers = #tpu.dot_dimension_numbers<[1], [0], [0], [1], [0, 0, 1, 1], [], []>} : vector<128x128xbf16>, vector<128x128xbf16>, vector<128x128xf32> -> vector<128x128xf32>
    %209 = arith.addf %203, %208 : vector<128x128xf32>
    %c18_i32_123 = arith.constant 18 : i32
    %210 = arith.addi %0, %c18_i32_123 : i32
    %c18_i32_124 = arith.constant 18 : i32
    %211 = arith.addi %210, %c18_i32_124 : i32
    %c0_125 = arith.constant 0 : index
    %212 = arith.index_cast %211 : i32 to index
    %c0_126 = arith.constant 0 : index
    %c0_127 = arith.constant 0 : index
    %213 = vector.load %arg2[%c0_125, %212, %c0_126, %c0_127] : memref<1x52x52x128xbf16, #tpu.memory_space<vmem>>, vector<1x8x52x128xbf16>
    %214 = vector.shape_cast %213 : vector<1x8x52x128xbf16> to vector<8x52x128xbf16>
    %215 = vector.extract_strided_slice %214 {offsets = [0, 0, 0], sizes = [8, 16, 128], strides = [1, 1, 1]} : vector<8x52x128xbf16> to vector<8x16x128xbf16>
    %216 = vector.shape_cast %215 : vector<8x16x128xbf16> to vector<128x128xbf16>
    %c25 = arith.constant 25 : index
    %c0_128 = arith.constant 0 : index
    %c0_129 = arith.constant 0 : index
    %217 = vector.load %arg3[%c25, %c0_128, %c0_129] : memref<28x128x128xbf16, #tpu.memory_space<vmem>>, vector<1x128x128xbf16>
    %218 = vector.shape_cast %217 : vector<1x128x128xbf16> to vector<128x128xbf16>
    %cst_130 = arith.constant dense<0.000000e+00> : vector<128x128xf32>
    %219 = tpu.matmul %216, %218, %cst_130 {dimension_numbers = #tpu.dot_dimension_numbers<[1], [0], [0], [1], [0, 0, 1, 1], [], []>} : vector<128x128xbf16>, vector<128x128xbf16>, vector<128x128xf32> -> vector<128x128xf32>
    %220 = arith.addf %209, %219 : vector<128x128xf32>
    %221 = vector.extract_strided_slice %214 {offsets = [0, 18, 0], sizes = [8, 16, 128], strides = [1, 1, 1]} : vector<8x52x128xbf16> to vector<8x16x128xbf16>
    %222 = vector.shape_cast %221 : vector<8x16x128xbf16> to vector<128x128xbf16>
    %c26 = arith.constant 26 : index
    %c0_131 = arith.constant 0 : index
    %c0_132 = arith.constant 0 : index
    %223 = vector.load %arg3[%c26, %c0_131, %c0_132] : memref<28x128x128xbf16, #tpu.memory_space<vmem>>, vector<1x128x128xbf16>
    %224 = vector.shape_cast %223 : vector<1x128x128xbf16> to vector<128x128xbf16>
    %cst_133 = arith.constant dense<0.000000e+00> : vector<128x128xf32>
    %225 = tpu.matmul %222, %224, %cst_133 {dimension_numbers = #tpu.dot_dimension_numbers<[1], [0], [0], [1], [0, 0, 1, 1], [], []>} : vector<128x128xbf16>, vector<128x128xbf16>, vector<128x128xf32> -> vector<128x128xf32>
    %226 = arith.addf %220, %225 : vector<128x128xf32>
    %227 = vector.extract_strided_slice %214 {offsets = [0, 36, 0], sizes = [8, 16, 128], strides = [1, 1, 1]} : vector<8x52x128xbf16> to vector<8x16x128xbf16>
    %228 = vector.shape_cast %227 : vector<8x16x128xbf16> to vector<128x128xbf16>
    %c27 = arith.constant 27 : index
    %c0_134 = arith.constant 0 : index
    %c0_135 = arith.constant 0 : index
    %229 = vector.load %arg3[%c27, %c0_134, %c0_135] : memref<28x128x128xbf16, #tpu.memory_space<vmem>>, vector<1x128x128xbf16>
    %230 = vector.shape_cast %229 : vector<1x128x128xbf16> to vector<128x128xbf16>
    %cst_136 = arith.constant dense<0.000000e+00> : vector<128x128xf32>
    %231 = tpu.matmul %228, %230, %cst_136 {dimension_numbers = #tpu.dot_dimension_numbers<[1], [0], [0], [1], [0, 0, 1, 1], [], []>} : vector<128x128xbf16>, vector<128x128xbf16>, vector<128x128xf32> -> vector<128x128xf32>
    %232 = arith.addf %226, %231 : vector<128x128xf32>
    %c3_137 = arith.constant 3 : index
    %c0_138 = arith.constant 0 : index
    %233 = vector.load %arg5[%c3_137, %c0_138] : memref<4x128xf32, #tpu.memory_space<vmem>>, vector<1x128xf32>
    %234 = vector.broadcast %233 : vector<1x128xf32> to vector<128x128xf32>
    %235 = arith.addf %232, %234 : vector<128x128xf32>
    %cst_139 = arith.constant 0.000000e+00 : f32
    %236 = vector.broadcast %cst_139 : f32 to vector<128x128xf32>
    %237 = arith.maximumf %235, %236 : vector<128x128xf32>
    %238 = arith.truncf %237 : vector<128x128xf32> to vector<128x128xbf16>
    %c3_140 = arith.constant 3 : index
    %c0_141 = arith.constant 0 : index
    %c0_142 = arith.constant 0 : index
    %239 = vector.load %arg4[%c3_140, %c0_141, %c0_142] : memref<4x128x128xbf16, #tpu.memory_space<vmem>>, vector<1x128x128xbf16>
    %240 = vector.shape_cast %239 : vector<1x128x128xbf16> to vector<128x128xbf16>
    %cst_143 = arith.constant dense<0.000000e+00> : vector<128x128xf32>
    %241 = tpu.matmul %238, %240, %cst_143 {dimension_numbers = #tpu.dot_dimension_numbers<[1], [0], [0], [1], [0, 0, 1, 1], [], []>} : vector<128x128xbf16>, vector<128x128xbf16>, vector<128x128xf32> -> vector<128x128xf32>
    %242 = arith.addf %169, %241 : vector<128x128xf32>
    %c0_144 = arith.constant 0 : index
    %c0_145 = arith.constant 0 : index
    %c0_146 = arith.constant 0 : index
    %243 = vector.load %arg6[%c0_144, %c0_145, %c0_146] : memref<1x1x128xf32, #tpu.memory_space<vmem>>, vector<1x1x128xf32>
    %244 = vector.shape_cast %243 : vector<1x1x128xf32> to vector<1x128xf32>
    %245 = vector.broadcast %244 : vector<1x128xf32> to vector<128x128xf32>
    %246 = arith.addf %242, %245 : vector<128x128xf32>
    %cst_147 = arith.constant 0.000000e+00 : f32
    %247 = vector.broadcast %cst_147 : f32 to vector<128x128xf32>
    %248 = arith.maximumf %246, %247 : vector<128x128xf32>
    %c0_148 = arith.constant 0 : index
    %c0_149 = arith.constant 0 : index
    %c0_150 = arith.constant 0 : index
    %249 = vector.load %arg7[%c0_148, %c0_149, %c0_150] : memref<1x128x128xf32, #tpu.memory_space<vmem>>, vector<1x128x128xf32>
    %250 = vector.shape_cast %249 : vector<1x128x128xf32> to vector<128x128xf32>
    %251 = vector.shape_cast %248 : vector<128x128xf32> to vector<1x128x128xf32>
    tpu.vector_store %arg7[%c0_148, %c0_149, %c0_150], %251 {strides = array<i32>} : memref<1x128x128xf32, #tpu.memory_space<vmem>>, vector<1x128x128xf32>,
    return
  }
  func.func @transform_0(%arg0: i32, %arg1: i32) -> (i32, i32, i32, i32) {
    %c0_i32 = arith.constant 0 : i32
    %c0_i32_0 = arith.constant 0 : i32
    %c0_i32_1 = arith.constant 0 : i32
    %c0_i32_2 = arith.constant 0 : i32
    return %arg0, %c0_i32, %c0_i32_0, %c0_i32_1 : i32, i32, i32, i32
  }
  func.func @transform_1(%arg0: i32, %arg1: i32) -> (i32, i32, i32) {
    %c0_i32 = arith.constant 0 : i32
    %c0_i32_0 = arith.constant 0 : i32
    %c0_i32_1 = arith.constant 0 : i32
    %c0_i32_2 = arith.constant 0 : i32
    return %c0_i32, %c0_i32_0, %c0_i32_1 : i32, i32, i32
  }
  func.func @transform_2(%arg0: i32, %arg1: i32) -> (i32, i32, i32) {
    %c0_i32 = arith.constant 0 : i32
    %c0_i32_0 = arith.constant 0 : i32
    %c0_i32_1 = arith.constant 0 : i32
    %c0_i32_2 = arith.constant 0 : i32
    return %c0_i32, %c0_i32_0, %c0_i32_1 : i32, i32, i32
  }
  func.func @transform_3(%arg0: i32, %arg1: i32) -> (i32, i32) {
    %c0_i32 = arith.constant 0 : i32
    %c0_i32_0 = arith.constant 0 : i32
    %c0_i32_1 = arith.constant 0 : i32
    return %c0_i32, %c0_i32_0 : i32, i32
  }
  func.func @transform_4(%arg0: i32, %arg1: i32) -> (i32, i32, i32) {
    %c0_i32 = arith.constant 0 : i32
    %c0_i32_0 = arith.constant 0 : i32
    %c0_i32_1 = arith.constant 0 : i32
    return %arg0, %c0_i32, %c0_i32_0 : i32, i32, i32
  }
  func.func @transform_5(%arg0: i32, %arg1: i32) -> (i32, i32, i32) {
    %c0_i32 = arith.constant 0 : i32
    %c0_i32_0 = arith.constant 0 : i32
    return %arg0, %arg1, %c0_i32 : i32, i32, i32
  }
}

</mosaic_0001>

<llo_original>
// kernel: tpu_custom_call.1
$region0: #{tpu_custom_call.1}
  #allocation0 [shape = 'u32[]', space=smem, size = 0x4, offset = 0x4, fixed_abs, tag = 'smem constant byte address 0x4 - core index']
  #allocation1 [shape = 'u32[144,128]{1,0:T(1,128)}', space=vmem, size = 0x12000, scoped, tag = 'internal scratch']
  %s0 = inlined_call_operand.vmem [shape: bf16[2,52,52,128], index: 0, kind: input, shape index: {}]
  %s1 = inlined_call_operand.vmem [shape: bf16[28,128,128], index: 1, kind: input, shape index: {}]
  %s2 = inlined_call_operand.vmem [shape: bf16[4,128,128], index: 2, kind: input, shape index: {}]
  %s3 = inlined_call_operand.vmem [shape: f32[4,128], index: 3, kind: input, shape index: {}]
  %s4 = inlined_call_operand.vmem [shape: f32[2,1,128], index: 4, kind: input, shape index: {}]
  %s5 = inlined_call_operand.hbm [shape: f32[2,256,128], index: 5, kind: output, shape index: {}]
  %s6 = sld [smem:[#allocation0]]
  $region53: #{tpu_custom_call.1} parent=0
    _
  %s8 = ssub.s32 1, %s6
  %s9 = scalar_select 0, %s8, %s6
  $region1: #{tpu_custom_call.1} parent=0
    #allocation2 [shape = 'u8[131072]{0}', space=vmem, size = 0x20000, scoped, tag = 'output window, operand 0']
    #allocation3 [shape = 's32[2]{0}', space=sflag, size = 0x8, scoped, tag = 'scoped memory for tpu_custom_call.1']
    %10 = vsyncpa [#allocation3], 0
    %s11 = scalar_lea.sflag [#allocation3], 1
    %12 = vsyncpa %s11, 0
    loop: start=0, step=1, limit=6
    $region2: #{tpu_custom_call.1} parent=1 // loop_pre_header
      _
    $region3: #{tpu_custom_call.1} parent=1 // loop_header
      %s14 = sphi 0, %s18
      %p15 = scmp.ge.s32.totalorder %s14, 6
      %s21 = sphi 0, %s33
      %s22 = sphi 0, %s29
      %s23 = sphi 0, %s21
      %s24 = sphi 0, %s22
      %s25 = sphi 0, %s23
      %s26 = sphi 0, %s24
      %s36 = sphi 0, %s38
      %s39 = sphi 0, %s36
      %s40 = sphi 0, %s39
      %s56 = sphi 0, %s40
      %s60 = sphi 0, %s60
      %s62 = sphi 0, %s60
      %s63 = sphi 0, %s62
      %s77 = sphi 0, %s63
      %s81 = sphi 0, %s81
      %s83 = sphi 0, %s81
      %s84 = sphi 0, %s83
      %s98 = sphi 0, %s84
      %s102 = sphi 0, %s102
      %s104 = sphi 0, %s102
      %s105 = sphi 0, %s104
      %s119 = sphi 0, %s105
      %s125 = sphi 0, %s127
      %s128 = sphi 0, %s125
      %s129 = sphi 0, %s128
      %s145 = sphi 0, %s129
      %s153 = sphi 0, %s155
      %s156 = sphi 0, %s153
      %s157 = sphi 0, %s156
      %s173 = sphi 0, %s157
    $region4: #{tpu_custom_call.1} parent=1 // loop_header_branch
      %17 = sbr.rel (%p15) target = $region8
    $region5: #{tpu_custom_call.1} parent=1 // loop_body
      %s19 = ssub.s32 %s14, 1
      %s20 = ssub.s32 %s14, 2
      %s27 = sadd.s32 1, %s22
      %p28 = scmp.ge.s32.totalorder %s27, 2
      %s29 = scalar_select %p28, 0, %s27
      %s30 = sadd.s32 1, %s21
      %s31 = scalar_select %p28, %s30, %s21
      %p32 = scmp.ge.s32.totalorder %s31, 2
      %s33 = scalar_select %p32, 0, %s31
      %s34 = ssub.s32 %s21, %s33
      %p35 = scmp.eq.s32.totalorder %s34, 0
      %s37 = sadd.s32 %s36, 1
      %s38 = scalar_select %p35, %s36, %s37
      %p41 = pneg %p35
      %p42 = scmp.eq.s32.totalorder %s14, 3
      %p43 = por %p41, %p42
      %p44 = scmp.ne.s32.totalorder %s36, %s39
      %p45 = scmp.eq.s32.totalorder %s14, 0
      %p46 = por %p44, %p45
      %p47 = scmp.ne.s32.totalorder %s36, %s39
      %p48 = scmp.eq.s32.totalorder %s19, 3
      %p49 = por %p47, %p48
      %p50 = scmp.ne.s32.totalorder %s39, %s40
      %p51 = scmp.eq.s32.totalorder %s19, 0
      %p52 = por %p50, %p51
      %p53 = scmp.ne.s32.totalorder %s39, %s40
      %p54 = scmp.eq.s32.totalorder %s20, 3
      %p55 = por %p53, %p54
      %p57 = scmp.ne.s32.totalorder %s40, %s56
      %p58 = scmp.eq.s32.totalorder %s20, 0
      %p59 = por %p57, %p58
      %s61 = sadd.s32 %s60, 1
      %p64 = scmp.eq.s32.totalorder %s14, 3
      %p65 = scmp.ne.s32.totalorder %s60, %s62
      %p66 = scmp.eq.s32.totalorder %s14, 0
      %p67 = por %p65, %p66
      %p68 = scmp.ne.s32.totalorder %s60, %s62
      %p69 = scmp.eq.s32.totalorder %s19, 3
      %p70 = por %p68, %p69
      %p71 = scmp.ne.s32.totalorder %s62, %s63
      %p72 = scmp.eq.s32.totalorder %s19, 0
      %p73 = por %p71, %p72
      %p74 = scmp.ne.s32.totalorder %s62, %s63
      %p75 = scmp.eq.s32.totalorder %s20, 3
      %p76 = por %p74, %p75
      %p78 = scmp.ne.s32.totalorder %s63, %s77
      %p79 = scmp.eq.s32.totalorder %s20, 0
      %p80 = por %p78, %p79
      %s82 = sadd.s32 %s81, 1
      %p85 = scmp.eq.s32.totalorder %s14, 3
      %p86 = scmp.ne.s32.totalorder %s81, %s83
      %p87 = scmp.eq.s32.totalorder %s14, 0
      %p88 = por %p86, %p87
      %p89 = scmp.ne.s32.totalorder %s81, %s83
      %p90 = scmp.eq.s32.totalorder %s19, 3
      %p91 = por %p89, %p90
      %p92 = scmp.ne.s32.totalorder %s83, %s84
      %p93 = scmp.eq.s32.totalorder %s19, 0
      %p94 = por %p92, %p93
      %p95 = scmp.ne.s32.totalorder %s83, %s84
      %p96 = scmp.eq.s32.totalorder %s20, 3
      %p97 = por %p95, %p96
      %p99 = scmp.ne.s32.totalorder %s84, %s98
      %p100 = scmp.eq.s32.totalorder %s20, 0
      %p101 = por %p99, %p100
      %s103 = sadd.s32 %s102, 1
      %p106 = scmp.eq.s32.totalorder %s14, 3
      %p107 = scmp.ne.s32.totalorder %s102, %s104
      %p108 = scmp.eq.s32.totalorder %s14, 0
      %p109 = por %p107, %p108
      %p110 = scmp.ne.s32.totalorder %s102, %s104
      %p111 = scmp.eq.s32.totalorder %s19, 3
      %p112 = por %p110, %p111
      %p113 = scmp.ne.s32.totalorder %s104, %s105
      %p114 = scmp.eq.s32.totalorder %s19, 0
      %p115 = por %p113, %p114
      %p116 = scmp.ne.s32.totalorder %s104, %s105
      %p117 = scmp.eq.s32.totalorder %s20, 3
      %p118 = por %p116, %p117
      %p120 = scmp.ne.s32.totalorder %s105, %s119
      %p121 = scmp.eq.s32.totalorder %s20, 0
      %p122 = por %p120, %p121
      %s123 = ssub.s32 %s21, %s33
      %p124 = scmp.eq.s32.totalorder %s123, 0
      %s126 = sadd.s32 %s125, 1
      %s127 = scalar_select %p124, %s125, %s126
      %p130 = pneg %p124
      %p131 = scmp.eq.s32.totalorder %s14, 3
      %p132 = por %p130, %p131
      %p133 = scmp.ne.s32.totalorder %s125, %s128
      %p134 = scmp.eq.s32.totalorder %s14, 0
      %p135 = por %p133, %p134
      %p136 = scmp.ne.s32.totalorder %s125, %s128
      %p137 = scmp.eq.s32.totalorder %s19, 3
      %p138 = por %p136, %p137
      %p139 = scmp.ne.s32.totalorder %s128, %s129
      %p140 = scmp.eq.s32.totalorder %s19, 0
      %p141 = por %p139, %p140
      %p142 = scmp.ne.s32.totalorder %s128, %s129
      %p143 = scmp.eq.s32.totalorder %s20, 3
      %p144 = por %p142, %p143
      %p146 = scmp.ne.s32.totalorder %s129, %s145
      %p147 = scmp.eq.s32.totalorder %s20, 0
      %p148 = por %p146, %p147
      %s149 = ssub.s32 %s21, %s33
      %s150 = ssub.s32 %s22, %s29
      %s151 = sor.u32 %s149, %s150
      %p152 = scmp.eq.s32.totalorder %s151, 0
      %s154 = sadd.s32 %s153, 1
      %s155 = scalar_select %p152, %s153, %s154
      %p158 = pneg %p152
      %p159 = scmp.eq.s32.totalorder %s14, 3
      %p160 = por %p158, %p159
      %p161 = scmp.ne.s32.totalorder %s153, %s156
      %p162 = scmp.eq.s32.totalorder %s14, 0
      %p163 = por %p161, %p162
      %p164 = scmp.ne.s32.totalorder %s153, %s156
      %p165 = scmp.eq.s32.totalorder %s19, 3
      %p166 = por %p164, %p165
      %p167 = scmp.ne.s32.totalorder %s156, %s157
      %p168 = scmp.eq.s32.totalorder %s19, 0
      %p169 = por %p167, %p168
      %p170 = scmp.ne.s32.totalorder %s156, %s157
      %p171 = scmp.eq.s32.totalorder %s20, 3
      %p172 = por %p170, %p171
      %p174 = scmp.ne.s32.totalorder %s157, %s173
      %p175 = scmp.eq.s32.totalorder %s20, 0
      %p176 = por %p174, %p175
      %p177 = scmp.le.s32.totalorder 1, %s14
      %p178 = scmp.lt.s32.totalorder %s14, 5
      %p179 = pnand %p177, %p178
      %p180 = pneg %p179
      // Predicated region
      $region9: #{tpu_custom_call.1} parent=5 // pred_check
        _
      $region10: #{tpu_custom_call.1} parent=5 // pred_check_branch
        %182 = sbr.rel (%p179) target = $region12
      $region11: #{tpu_custom_call.1} parent=5 // pred_region
        %s183 = ssub.s32 %s14, 1
        // Predicated region
        $region13: #{tpu_custom_call.1} parent=11 // pred_check
          %p184 = pneg %p73
        $region14: #{tpu_custom_call.1} parent=11 // pred_check_branch
          %186 = sbr.rel (%p184) target = $region16
        $region15: #{tpu_custom_call.1} parent=11 // pred_region
          _
        $region16: #{tpu_custom_call.1} parent=11 // pred_fallthru
          _
        // Predicated region
        $region17: #{tpu_custom_call.1} parent=11 // pred_check
          %p187 = pneg %p94
        $region18: #{tpu_custom_call.1} parent=11 // pred_check_branch
          %189 = sbr.rel (%p187) target = $region20
        $region19: #{tpu_custom_call.1} parent=11 // pred_region
          _
        $region20: #{tpu_custom_call.1} parent=11 // pred_fallthru
          _
        // Predicated region
        $region21: #{tpu_custom_call.1} parent=11 // pred_check
          %p190 = pneg %p115
        $region22: #{tpu_custom_call.1} parent=11 // pred_check_branch
          %192 = sbr.rel (%p190) target = $region24
        $region23: #{tpu_custom_call.1} parent=11 // pred_region
          _
        $region24: #{tpu_custom_call.1} parent=11 // pred_fallthru
          _
      $region12: #{tpu_custom_call.1} parent=5 // pred_fallthru
        _
      %p193 = scmp.lt.s32.totalorder %s14, 4
      // Predicated region
      $region25: #{tpu_custom_call.1} parent=5 // pred_check
        %p194 = pneg %p193
      $region26: #{tpu_custom_call.1} parent=5 // pred_check_branch
        %196 = sbr.rel (%p194) target = $region28
      $region27: #{tpu_custom_call.1} parent=5 // pred_region
        // Predicated region
        $region29: #{tpu_custom_call.1} parent=27 // pred_check
          %p197 = pneg %p46
        $region30: #{tpu_custom_call.1} parent=27 // pred_check_branch
          %199 = sbr.rel (%p197) target = $region32
        $region31: #{tpu_custom_call.1} parent=27 // pred_region
          %p200 = scmp.lt.s32.totalorder %s21, 1
          %s201 = scalar_select %p200, %s21, 1
          %s202 = smul.addr %s201, 364
          %s203 = smul.addr %s202, 4
          %s204 = scalar_lea.vmem %s0, %s203
        $region32: #{tpu_custom_call.1} parent=27 // pred_fallthru
          _
        // Predicated region
        $region33: #{tpu_custom_call.1} parent=27 // pred_check
          %p205 = pneg %p135
        $region34: #{tpu_custom_call.1} parent=27 // pred_check_branch
          %207 = sbr.rel (%p205) target = $region36
        $region35: #{tpu_custom_call.1} parent=27 // pred_region
          %p208 = scmp.lt.s32.totalorder %s21, 1
          %s209 = scalar_select %p208, %s21, 1
          %s210 = scalar_lea.vmem %s4, %s209
        $region36: #{tpu_custom_call.1} parent=27 // pred_fallthru
          _
      $region28: #{tpu_custom_call.1} parent=5 // pred_fallthru
        _
      %p211 = scmp.le.s32.totalorder 1, %s14
      %p212 = scmp.lt.s32.totalorder %s14, 5
      %p213 = pnand %p211, %p212
      %p214 = pneg %p213
      // Predicated region
      $region37: #{tpu_custom_call.1} parent=5 // pred_check
        _
      $region38: #{tpu_custom_call.1} parent=5 // pred_check_branch
        %216 = sbr.rel (%p213) target = $region40
      $region39: #{tpu_custom_call.1} parent=5 // pred_region
        %s217 = ssub.s32 %s14, 1
        %p218 = scmp.lt.s32.totalorder %s23, 1
        %s219 = scalar_select %p218, %s23, 1
        %s220 = smul.addr %s219, 364
        %s221 = smul.addr %s220, 4
        %s222 = scalar_lea.vmem %s0, %s221
        %p223 = pneg %p52
        %p224 = pneg %p49
        %p225 = pneg %p73
        %p226 = pneg %p70
        %p227 = pneg %p94
        %p228 = pneg %p91
        %p229 = pneg %p115
        %p230 = pneg %p112
        %p231 = scmp.lt.s32.totalorder %s23, 1
        %s232 = scalar_select %p231, %s23, 1
        %s233 = scalar_lea.vmem %s4, %s232
        %p234 = pneg %p141
        %p235 = pneg %p138
        %p236 = pneg %p169
        %p237 = pneg %p166
        %s238 = sand.u32 %s156, 1
        %s239 = scalar_lea.sflag [#allocation3], %s238
        %s240 = sand.u32 %s156, 1
        %s241 = smul.addr %s240, 128
        %s242 = scalar_lea.vmem [#allocation2], %s241
        %p243 = scmp.lt.s32.totalorder %s23, 1
        %s244 = scalar_select %p243, %s23, 1
        %s245 = smul.addr %s244, 364
        %s246 = smul.addr %s245, 4
        %s247 = scalar_lea.vmem %s0, %s246
        %p248 = scmp.lt.s32.totalorder %s23, 1
        %s249 = scalar_select %p248, %s23, 1
        %s250 = scalar_lea.vmem %s4, %s249
        %s251 = smul.u32 16, %s24
        %s253 = smul.u32 %s24, 8
        %s254 = sadd.s32 %s253, 18
        %s255 = smul.u32 %s254, 7
        %s256 = smul.addr %s255, 4
        %s257 = scalar_lea.vmem %s247, %s256
        %v258 = vld [vmem:[%s257] sm:$0xf]
        %v259 = vld [vmem:[%s257 + $0x4] sm:$0xf]
        %v260 = vld [vmem:[%s257 + $0x8] sm:$0xf]
        %v261 = vld [vmem:[%s257 + $0xc] sm:$0xf]
        %v262 = vld [vmem:[%s257 + $0x10] sm:$0xf]
        %v263 = vld [vmem:[%s257 + $0x14] sm:$0xf]
        %v264 = vld [vmem:[%s257 + $0x18] sm:$0x3]
        %v265 = vld [vmem:[%s257 + $0x1c] sm:$0xf]
        %v266 = vld [vmem:[%s257 + $0x20] sm:$0xf]
        %v267 = vld [vmem:[%s257 + $0x24] sm:$0xf]
        %v268 = vld [vmem:[%s257 + $0x28] sm:$0xf]
        %v269 = vld [vmem:[%s257 + $0x2c] sm:$0xf]
        %v270 = vld [vmem:[%s257 + $0x30] sm:$0xf]
        %v271 = vld [vmem:[%s257 + $0x34] sm:$0x3]
        %v272 = vld [vmem:[%s257 + $0x38] sm:$0xf]
        %v273 = vld [vmem:[%s257 + $0x3c] sm:$0xf]
        %v274 = vld [vmem:[%s257 + $0x40] sm:$0xf]
        %v275 = vld [vmem:[%s257 + $0x44] sm:$0xf]
        %v276 = vld [vmem:[%s257 + $0x48] sm:$0xf]
        %v277 = vld [vmem:[%s257 + $0x4c] sm:$0xf]
        %v278 = vld [vmem:[%s257 + $0x50] sm:$0x3]
        %v279 = vld [vmem:[%s257 + $0x54] sm:$0xf]
        %v280 = vld [vmem:[%s257 + $0x58] sm:$0xf]
        %v281 = vld [vmem:[%s257 + $0x5c] sm:$0xf]
        %v282 = vld [vmem:[%s257 + $0x60] sm:$0xf]
        %v283 = vld [vmem:[%s257 + $0x64] sm:$0xf]
        %v284 = vld [vmem:[%s257 + $0x68] sm:$0xf]
        %v285 = vld [vmem:[%s257 + $0x6c] sm:$0x3]
        %v286 = vld [vmem:[%s257 + $0x70] sm:$0xf]
        %v287 = vld [vmem:[%s257 + $0x74] sm:$0xf]
        %v288 = vld [vmem:[%s257 + $0x78] sm:$0xf]
        %v289 = vld [vmem:[%s257 + $0x7c] sm:$0xf]
        %v290 = vld [vmem:[%s257 + $0x80] sm:$0xf]
        %v291 = vld [vmem:[%s257 + $0x84] sm:$0xf]
        %v292 = vld [vmem:[%s257 + $0x88] sm:$0x3]
        %v293 = vld [vmem:[%s257 + $0x8c] sm:$0xf]
        %v294 = vld [vmem:[%s257 + $0x90] sm:$0xf]
        %v295 = vld [vmem:[%s257 + $0x94] sm:$0xf]
        %v296 = vld [vmem:[%s257 + $0x98] sm:$0xf]
        %v297 = vld [vmem:[%s257 + $0x9c] sm:$0xf]
        %v298 = vld [vmem:[%s257 + $0xa0] sm:$0xf]
        %v299 = vld [vmem:[%s257 + $0xa4] sm:$0x3]
        %v300 = vld [vmem:[%s257 + $0xa8] sm:$0xf]
        %v301 = vld [vmem:[%s257 + $0xac] sm:$0xf]
        %v302 = vld [vmem:[%s257 + $0xb0] sm:$0xf]
        %v303 = vld [vmem:[%s257 + $0xb4] sm:$0xf]
        %v304 = vld [vmem:[%s257 + $0xb8] sm:$0xf]
        %v305 = vld [vmem:[%s257 + $0xbc] sm:$0xf]
        %v306 = vld [vmem:[%s257 + $0xc0] sm:$0x3]
        %v307 = vld [vmem:[%s257 + $0xc4] sm:$0xf]
        %v308 = vld [vmem:[%s257 + $0xc8] sm:$0xf]
        %v309 = vld [vmem:[%s257 + $0xcc] sm:$0xf]
        %v310 = vld [vmem:[%s257 + $0xd0] sm:$0xf]
        %v311 = vld [vmem:[%s257 + $0xd4] sm:$0xf]
        %v312 = vld [vmem:[%s257 + $0xd8] sm:$0xf]
        %v313 = vld [vmem:[%s257 + $0xdc] sm:$0x3]
        %vm338 = vcmask 1042432
        %vm339 = vcmask 1046532
        %vm340 = vmor %vm338, %vm339
        %v341 = vrot.slane %v260, 5
        %v342 = vrot.slane %v341, 4
        %v343 = vrot.slane %v261, 5
        %v344 = vsel %vm340, %v342, %v343
        %v345 = vrot.slane %v343, 4
        %v346 = vrot.slane %v262, 5
        %v347 = vsel %vm340, %v345, %v346
        %v348 = vrot.slane %v267, 5
        %v349 = vrot.slane %v348, 4
        %v350 = vrot.slane %v268, 5
        %v351 = vsel %vm340, %v349, %v350
        %v352 = vrot.slane %v350, 4
        %v353 = vrot.slane %v269, 5
        %v354 = vsel %vm340, %v352, %v353
        %v355 = vrot.slane %v274, 5
        %v356 = vrot.slane %v355, 4
        %v357 = vrot.slane %v275, 5
        %v358 = vsel %vm340, %v356, %v357
        %v359 = vrot.slane %v357, 4
        %v360 = vrot.slane %v276, 5
        %v361 = vsel %vm340, %v359, %v360
        %v362 = vrot.slane %v281, 5
        %v363 = vrot.slane %v362, 4
        %v364 = vrot.slane %v282, 5
        %v365 = vsel %vm340, %v363, %v364
        %v366 = vrot.slane %v364, 4
        %v367 = vrot.slane %v283, 5
        %v368 = vsel %vm340, %v366, %v367
        %v369 = vrot.slane %v288, 5
        %v370 = vrot.slane %v369, 4
        %v371 = vrot.slane %v289, 5
        %v372 = vsel %vm340, %v370, %v371
        %v373 = vrot.slane %v371, 4
        %v374 = vrot.slane %v290, 5
        %v375 = vsel %vm340, %v373, %v374
        %v376 = vrot.slane %v295, 5
        %v377 = vrot.slane %v376, 4
        %v378 = vrot.slane %v296, 5
        %v379 = vsel %vm340, %v377, %v378
        %v380 = vrot.slane %v378, 4
        %v381 = vrot.slane %v297, 5
        %v382 = vsel %vm340, %v380, %v381
        %v383 = vrot.slane %v302, 5
        %v384 = vrot.slane %v383, 4
        %v385 = vrot.slane %v303, 5
        %v386 = vsel %vm340, %v384, %v385
        %v387 = vrot.slane %v385, 4
        %v388 = vrot.slane %v304, 5
        %v389 = vsel %vm340, %v387, %v388
        %v390 = vrot.slane %v309, 5
        %v391 = vrot.slane %v390, 4
        %v392 = vrot.slane %v310, 5
        %v393 = vsel %vm340, %v391, %v392
        %v394 = vrot.slane %v392, 4
        %v395 = vrot.slane %v311, 5
        %v396 = vsel %vm340, %v394, %v395
        %v397 = vld [vmem:[%s1] sm:$0xf]
        %v398 = vld [vmem:[%s1 + $0x4] sm:$0xf]
        %v399 = vld [vmem:[%s1 + $0x8] sm:$0xf]
        %v400 = vld [vmem:[%s1 + $0xc] sm:$0xf]
        %v401 = vld [vmem:[%s1 + $0x10] sm:$0xf]
        %v402 = vld [vmem:[%s1 + $0x14] sm:$0xf]
        %v403 = vld [vmem:[%s1 + $0x18] sm:$0xf]
        %v404 = vld [vmem:[%s1 + $0x1c] sm:$0xf]
        %v405 = vld [vmem:[%s1 + $0x20] sm:$0xf]
        %v406 = vld [vmem:[%s1 + $0x24] sm:$0xf]
        %v407 = vld [vmem:[%s1 + $0x28] sm:$0xf]
        %v408 = vld [vmem:[%s1 + $0x2c] sm:$0xf]
        %v409 = vld [vmem:[%s1 + $0x30] sm:$0xf]
        %v410 = vld [vmem:[%s1 + $0x34] sm:$0xf]
        %v411 = vld [vmem:[%s1 + $0x38] sm:$0xf]
        %v412 = vld [vmem:[%s1 + $0x3c] sm:$0xf]
        %v413 = vld [vmem:[%s3] sm:$0x1]
        %v414 = vlaneseq
        %v415 = vshrl.u32 %v414, 7
        %v416 = vsub.s32 0, %v415
        %v417 = vrot.slane %v413, %v416
        %v418 = vunpack.c.l.b16 %v344
        %v419 = vunpack.c.l.b16 %v347
        %v420 = vunpack.c.l.b16 %v351
        %v421 = vunpack.c.l.b16 %v354
        %v422 = vunpack.c.l.b16 %v358
        %v423 = vunpack.c.l.b16 %v361
        %v424 = vunpack.c.l.b16 %v365
        %v425 = vunpack.c.l.b16 %v368
        %v426 = vunpack.c.l.b16 %v372
        %v427 = vunpack.c.l.b16 %v375
        %v428 = vunpack.c.l.b16 %v379
        %v429 = vunpack.c.l.b16 %v382
        %v430 = vunpack.c.l.b16 %v386
        %v431 = vunpack.c.l.b16 %v389
        %v432 = vunpack.c.l.b16 %v393
        %v433 = vunpack.c.l.b16 %v396
        %v434 = vpack.c.b16 %v419, %v418
        %v435 = vpack.c.b16 %v421, %v420
        %v436 = vpack.c.b16 %v423, %v422
        %v437 = vpack.c.b16 %v425, %v424
        %v438 = vpack.c.b16 %v427, %v426
        %v439 = vpack.c.b16 %v429, %v428
        %v440 = vpack.c.b16 %v431, %v430
        %v441 = vpack.c.b16 %v433, %v432
        %v466 = vunpack.c.l.b16 %v397
        %v467 = vunpack.c.l.b16 %v398
        %v468 = vunpack.c.l.b16 %v399
        %v469 = vunpack.c.l.b16 %v400
        %v470 = vunpack.c.l.b16 %v401
        %v471 = vunpack.c.l.b16 %v402
        %v472 = vunpack.c.l.b16 %v403
        %v473 = vunpack.c.l.b16 %v404
        %v474 = vunpack.c.l.b16 %v405
        %v475 = vunpack.c.l.b16 %v406
        %v476 = vunpack.c.l.b16 %v407
        %v477 = vunpack.c.l.b16 %v408
        %v478 = vunpack.c.l.b16 %v409
        %v479 = vunpack.c.l.b16 %v410
        %v480 = vunpack.c.l.b16 %v411
        %v481 = vunpack.c.l.b16 %v412
        %v482 = vpack.c.b16 %v467, %v466
        %v483 = vpack.c.b16 %v469, %v468
        %v484 = vpack.c.b16 %v471, %v470
        %v485 = vpack.c.b16 %v473, %v472
        %v486 = vpack.c.b16 %v475, %v474
        %v487 = vpack.c.b16 %v477, %v476
        %v488 = vpack.c.b16 %v479, %v478
        %v489 = vpack.c.b16 %v481, %v480
        %498 = vmatprep.subr.bf16.mxu0 0
        %499 = vmatpush1.bf16.msra.mxu0 %v482
        %500 = vmatprep.subr.bf16.mxu0 0
        %501 = vmatpush1.bf16.msra.mxu0 %v483
        %502 = vmatprep.subr.bf16.mxu0 0
        %503 = vmatpush1.bf16.msra.mxu0 %v484
        %504 = vmatprep.subr.bf16.mxu0 0
        %505 = vmatpush1.bf16.msra.mxu0 %v485
        %506 = vmatprep.subr.bf16.mxu0 0
        %507 = vmatpush1.bf16.msra.mxu0 %v486
        %508 = vmatprep.subr.bf16.mxu0 0
        %509 = vmatpush1.bf16.msra.mxu0 %v487
        %510 = vmatprep.subr.bf16.mxu0 0
        %511 = vmatpush1.bf16.msra.mxu0 %v488
        %512 = vmatprep.subr.bf16.mxu0 0
        %513 = vmatpush1.bf16.msra.mxu0 %v489
        %514 = vmatprep.subr.bf16.mxu0 0
        %515 = vmatpush1.bf16.msra.mxu0 0
        %516 = vmatprep.subr.bf16.mxu0 0
        %517 = vmatpush1.bf16.msra.mxu0 0
        %518 = vmatprep.subr.bf16.mxu0 0
        %519 = vmatpush1.bf16.msra.mxu0 0
        %520 = vmatprep.subr.bf16.mxu0 0
        %521 = vmatpush1.bf16.msra.mxu0 0
        %522 = vmatprep.subr.bf16.mxu0 0
        %523 = vmatpush1.bf16.msra.mxu0 0
        %524 = vmatprep.subr.bf16.mxu0 0
        %525 = vmatpush1.bf16.msra.mxu0 0
        %526 = vmatprep.subr.bf16.mxu0 0
        %527 = vmatpush1.bf16.msra.mxu0 0
        %528 = vmatprep.subr.bf16.mxu0 0
        %529 = vmatpush1.bf16.msra.mxu0 0
        %530 = vmatprep.mubr.bf16.mxu0 0
        %531 = vmatmul.mubr.bf16.gmra.mrb[0].mxu0 %v434
        %v532 = vpop.f32.mrb[0].mxu0
        %v533 = vadd.f32 %v417, %v532
        %v534 = vpop.f32.mrb[0].mxu0
        %v535 = vpop.f32.mrb[0].mxu0
        %v536 = vadd.f32 %v417, %v535
        %v537 = vpop.f32.mrb[0].mxu0
        %538 = vmatprep.mubr.bf16.mxu0 0
        %539 = vmatmul.mubr.bf16.gmra.mrb[0].mxu0 %v435
        %v540 = vpop.f32.mrb[0].mxu0
        %v541 = vadd.f32 %v417, %v540
        %v542 = vpop.f32.mrb[0].mxu0
        %v543 = vpop.f32.mrb[0].mxu0
        %v544 = vadd.f32 %v417, %v543
        %v545 = vpop.f32.mrb[0].mxu0
        %546 = vmatprep.mubr.bf16.mxu0 0
        %547 = vmatmul.mubr.bf16.gmra.mrb[0].mxu0 %v436
        %v548 = vpop.f32.mrb[0].mxu0
        %v549 = vadd.f32 %v417, %v548
        %v550 = vpop.f32.mrb[0].mxu0
        %v551 = vpop.f32.mrb[0].mxu0
        %v552 = vadd.f32 %v417, %v551
        %v553 = vpop.f32.mrb[0].mxu0
        %554 = vmatprep.mubr.bf16.mxu0 0
        %555 = vmatmul.mubr.bf16.gmra.mrb[0].mxu0 %v437
        %v556 = vpop.f32.mrb[0].mxu0
        %v557 = vadd.f32 %v417, %v556
        %v558 = vpop.f32.mrb[0].mxu0
        %v559 = vpop.f32.mrb[0].mxu0
        %v560 = vadd.f32 %v417, %v559
        %v561 = vpop.f32.mrb[0].mxu0
        %562 = vmatprep.mubr.bf16.mxu0 0
        %563 = vmatmul.mubr.bf16.gmra.mrb[0].mxu0 %v438
        %v564 = vpop.f32.mrb[0].mxu0
        %v565 = vadd.f32 %v417, %v564
        %v566 = vpop.f32.mrb[0].mxu0
        %v567 = vpop.f32.mrb[0].mxu0
        %v568 = vadd.f32 %v417, %v567
        %v569 = vpop.f32.mrb[0].mxu0
        %570 = vmatprep.mubr.bf16.mxu0 0
        %571 = vmatmul.mubr.bf16.gmra.mrb[0].mxu0 %v439
        %v572 = vpop.f32.mrb[0].mxu0
        %v573 = vadd.f32 %v417, %v572
        %v574 = vpop.f32.mrb[0].mxu0
        %v575 = vpop.f32.mrb[0].mxu0
        %v576 = vadd.f32 %v417, %v575
        %v577 = vpop.f32.mrb[0].mxu0
        %578 = vmatprep.mubr.bf16.mxu0 0
        %579 = vmatmul.mubr.bf16.gmra.mrb[0].mxu0 %v440
        %v580 = vpop.f32.mrb[0].mxu0
        %v581 = vadd.f32 %v417, %v580
        %v582 = vpop.f32.mrb[0].mxu0
        %v583 = vpop.f32.mrb[0].mxu0
        %v584 = vadd.f32 %v417, %v583
        %v585 = vpop.f32.mrb[0].mxu0
        %586 = vmatprep.mubr.bf16.mxu0 0
        %587 = vmatmul.mubr.bf16.gmra.mrb[0].mxu0 %v441
        %v588 = vpop.f32.mrb[0].mxu0
        %v589 = vadd.f32 %v417, %v588
        %v590 = vpop.f32.mrb[0].mxu0
        %v591 = vpop.f32.mrb[0].mxu0
        %v592 = vadd.f32 %v417, %v591
        %v593 = vpop.f32.mrb[0].mxu0
        %594 = vdwg.mxu0
        %v595 = vmax.f32 %v533, 0.0
        %v596 = vmax.f32 %v536, 0.0
        %v597 = vmax.f32 %v541, 0.0
        %v598 = vmax.f32 %v544, 0.0
        %v599 = vmax.f32 %v549, 0.0
        %v600 = vmax.f32 %v552, 0.0
        %v601 = vmax.f32 %v557, 0.0
        %v602 = vmax.f32 %v560, 0.0
        %v603 = vmax.f32 %v565, 0.0
        %v604 = vmax.f32 %v568, 0.0
        %v605 = vmax.f32 %v573, 0.0
        %v606 = vmax.f32 %v576, 0.0
        %v607 = vmax.f32 %v581, 0.0
        %v608 = vmax.f32 %v584, 0.0
        %v609 = vmax.f32 %v589, 0.0
        %v610 = vmax.f32 %v592, 0.0
        %v611 = vpack.c.bf16 %v596, %v595
        %v612 = vpack.c.bf16 %v598, %v597
        %v613 = vpack.c.bf16 %v600, %v599
        %v614 = vpack.c.bf16 %v602, %v601
        %v615 = vpack.c.bf16 %v604, %v603
        %v616 = vpack.c.bf16 %v606, %v605
        %v617 = vpack.c.bf16 %v608, %v607
        %v618 = vpack.c.bf16 %v610, %v609
        %v619 = vld [vmem:[%s2] sm:$0xf]
        %v620 = vld [vmem:[%s2 + $0x4] sm:$0xf]
        %v621 = vld [vmem:[%s2 + $0x8] sm:$0xf]
        %v622 = vld [vmem:[%s2 + $0xc] sm:$0xf]
        %v623 = vld [vmem:[%s2 + $0x10] sm:$0xf]
        %v624 = vld [vmem:[%s2 + $0x14] sm:$0xf]
        %v625 = vld [vmem:[%s2 + $0x18] sm:$0xf]
        %v626 = vld [vmem:[%s2 + $0x1c] sm:$0xf]
        %v627 = vld [vmem:[%s2 + $0x20] sm:$0xf]
        %v628 = vld [vmem:[%s2 + $0x24] sm:$0xf]
        %v629 = vld [vmem:[%s2 + $0x28] sm:$0xf]
        %v630 = vld [vmem:[%s2 + $0x2c] sm:$0xf]
        %v631 = vld [vmem:[%s2 + $0x30] sm:$0xf]
        %v632 = vld [vmem:[%s2 + $0x34] sm:$0xf]
        %v633 = vld [vmem:[%s2 + $0x38] sm:$0xf]
        %v634 = vld [vmem:[%s2 + $0x3c] sm:$0xf]
        %s635 = sadd.s32 %s253, 12
        %s636 = smul.u32 %s635, 7
        %s637 = smul.addr %s636, 4
        %s638 = scalar_lea.vmem %s247, %s637
        %v639 = vld [vmem:[%s638 + $0x4] sm:$0xf]
        %v640 = vld [vmem:[%s638 + $0x8] sm:$0xf]
        %v641 = vld [vmem:[%s638 + $0xc] sm:$0xf]
        %v642 = vld [vmem:[%s638 + $0x10] sm:$0xf]
        %v643 = vld [vmem:[%s638 + $0x20] sm:$0xf]
        %v644 = vld [vmem:[%s638 + $0x24] sm:$0xf]
        %v645 = vld [vmem:[%s638 + $0x28] sm:$0xf]
        %v646 = vld [vmem:[%s638 + $0x2c] sm:$0xf]
        %v647 = vld [vmem:[%s638 + $0x3c] sm:$0xf]
        %v648 = vld [vmem:[%s638 + $0x40] sm:$0xf]
        %v649 = vld [vmem:[%s638 + $0x44] sm:$0xf]
        %v650 = vld [vmem:[%s638 + $0x48] sm:$0xf]
        %v651 = vld [vmem:[%s638 + $0x58] sm:$0xf]
        %v652 = vld [vmem:[%s638 + $0x5c] sm:$0xf]
        %v653 = vld [vmem:[%s638 + $0x60] sm:$0xf]
        %v654 = vld [vmem:[%s638 + $0x64] sm:$0xf]
        %v655 = vld [vmem:[%s638 + $0x74] sm:$0xf]
        %v656 = vld [vmem:[%s638 + $0x78] sm:$0xf]
        %v657 = vld [vmem:[%s638 + $0x7c] sm:$0xf]
        %v658 = vld [vmem:[%s638 + $0x80] sm:$0xf]
        %v659 = vld [vmem:[%s638 + $0x90] sm:$0xf]
        %v660 = vld [vmem:[%s638 + $0x94] sm:$0xf]
        %v661 = vld [vmem:[%s638 + $0x98] sm:$0xf]
        %v662 = vld [vmem:[%s638 + $0x9c] sm:$0xf]
        %v663 = vld [vmem:[%s638 + $0xac] sm:$0xf]
        %v664 = vld [vmem:[%s638 + $0xb0] sm:$0xf]
        %v665 = vld [vmem:[%s638 + $0xb4] sm:$0xf]
        %v666 = vld [vmem:[%s638 + $0xb8] sm:$0xf]
        %v667 = vld [vmem:[%s638 + $0xc8] sm:$0xf]
        %v668 = vld [vmem:[%s638 + $0xcc] sm:$0xf]
        %v669 = vld [vmem:[%s638 + $0xd0] sm:$0xf]
        %v670 = vld [vmem:[%s638 + $0xd4] sm:$0xf]
        %vm695 = vcmask 1041408
        %vm696 = vcmask 1045508
        %vm697 = vmor %vm695, %vm696
        %v698 = vrot.slane %v639, 6
        %v699 = vrot.slane %v698, 4
        %v700 = vrot.slane %v640, 6
        %v701 = vsel %vm697, %v699, %v700
        %v702 = vrot.slane %v700, 4
        %v703 = vrot.slane %v641, 6
        %v704 = vsel %vm697, %v702, %v703
        %v705 = vrot.slane %v643, 6
        %v706 = vrot.slane %v705, 4
        %v707 = vrot.slane %v644, 6
        %v708 = vsel %vm697, %v706, %v707
        %v709 = vrot.slane %v707, 4
        %v710 = vrot.slane %v645, 6
        %v711 = vsel %vm697, %v709, %v710
        %v712 = vrot.slane %v647, 6
        %v713 = vrot.slane %v712, 4
        %v714 = vrot.slane %v648, 6
        %v715 = vsel %vm697, %v713, %v714
        %v716 = vrot.slane %v714, 4
        %v717 = vrot.slane %v649, 6
        %v718 = vsel %vm697, %v716, %v717
        %v719 = vrot.slane %v651, 6
        %v720 = vrot.slane %v719, 4
        %v721 = vrot.slane %v652, 6
        %v722 = vsel %vm697, %v720, %v721
        %v723 = vrot.slane %v721, 4
        %v724 = vrot.slane %v653, 6
        %v725 = vsel %vm697, %v723, %v724
        %v726 = vrot.slane %v655, 6
        %v727 = vrot.slane %v726, 4
        %v728 = vrot.slane %v656, 6
        %v729 = vsel %vm697, %v727, %v728
        %v730 = vrot.slane %v728, 4
        %v731 = vrot.slane %v657, 6
        %v732 = vsel %vm697, %v730, %v731
        %v733 = vrot.slane %v659, 6
        %v734 = vrot.slane %v733, 4
        %v735 = vrot.slane %v660, 6
        %v736 = vsel %vm697, %v734, %v735
        %v737 = vrot.slane %v735, 4
        %v738 = vrot.slane %v661, 6
        %v739 = vsel %vm697, %v737, %v738
        %v740 = vrot.slane %v663, 6
        %v741 = vrot.slane %v740, 4
        %v742 = vrot.slane %v664, 6
        %v743 = vsel %vm697, %v741, %v742
        %v744 = vrot.slane %v742, 4
        %v745 = vrot.slane %v665, 6
        %v746 = vsel %vm697, %v744, %v745
        %v747 = vrot.slane %v667, 6
        %v748 = vrot.slane %v747, 4
        %v749 = vrot.slane %v668, 6
        %v750 = vsel %vm697, %v748, %v749
        %v751 = vrot.slane %v749, 4
        %v752 = vrot.slane %v669, 6
        %v753 = vsel %vm697, %v751, %v752
        %s754 = scalar_lea.vmem %s1, 64
        %v755 = vld [vmem:[%s754] sm:$0xf]
        %v756 = vld [vmem:[%s754 + $0x4] sm:$0xf]
        %v757 = vld [vmem:[%s754 + $0x8] sm:$0xf]
        %v758 = vld [vmem:[%s754 + $0xc] sm:$0xf]
        %v759 = vld [vmem:[%s754 + $0x10] sm:$0xf]
        %v760 = vld [vmem:[%s754 + $0x14] sm:$0xf]
        %v761 = vld [vmem:[%s754 + $0x18] sm:$0xf]
        %v762 = vld [vmem:[%s754 + $0x1c] sm:$0xf]
        %v763 = vld [vmem:[%s754 + $0x20] sm:$0xf]
        %v764 = vld [vmem:[%s754 + $0x24] sm:$0xf]
        %v765 = vld [vmem:[%s754 + $0x28] sm:$0xf]
        %v766 = vld [vmem:[%s754 + $0x2c] sm:$0xf]
        %v767 = vld [vmem:[%s754 + $0x30] sm:$0xf]
        %v768 = vld [vmem:[%s754 + $0x34] sm:$0xf]
        %v769 = vld [vmem:[%s754 + $0x38] sm:$0xf]
        %v770 = vld [vmem:[%s754 + $0x3c] sm:$0xf]
        %v779 = vrot.slane %v640, 5
        %v780 = vrot.slane %v779, 4
        %v781 = vrot.slane %v641, 5
        %v782 = vsel %vm340, %v780, %v781
        %v783 = vrot.slane %v781, 4
        %v784 = vrot.slane %v642, 5
        %v785 = vsel %vm340, %v783, %v784
        %v786 = vrot.slane %v644, 5
        %v787 = vrot.slane %v786, 4
        %v788 = vrot.slane %v645, 5
        %v789 = vsel %vm340, %v787, %v788
        %v790 = vrot.slane %v788, 4
        %v791 = vrot.slane %v646, 5
        %v792 = vsel %vm340, %v790, %v791
        %v793 = vrot.slane %v648, 5
        %v794 = vrot.slane %v793, 4
        %v795 = vrot.slane %v649, 5
        %v796 = vsel %vm340, %v794, %v795
        %v797 = vrot.slane %v795, 4
        %v798 = vrot.slane %v650, 5
        %v799 = vsel %vm340, %v797, %v798
        %v800 = vrot.slane %v652, 5
        %v801 = vrot.slane %v800, 4
        %v802 = vrot.slane %v653, 5
        %v803 = vsel %vm340, %v801, %v802
        %v804 = vrot.slane %v802, 4
        %v805 = vrot.slane %v654, 5
        %v806 = vsel %vm340, %v804, %v805
        %v807 = vrot.slane %v656, 5
        %v808 = vrot.slane %v807, 4
        %v809 = vrot.slane %v657, 5
        %v810 = vsel %vm340, %v808, %v809
        %v811 = vrot.slane %v809, 4
        %v812 = vrot.slane %v658, 5
        %v813 = vsel %vm340, %v811, %v812
        %v814 = vrot.slane %v660, 5
        %v815 = vrot.slane %v814, 4
        %v816 = vrot.slane %v661, 5
        %v817 = vsel %vm340, %v815, %v816
        %v818 = vrot.slane %v816, 4
        %v819 = vrot.slane %v662, 5
        %v820 = vsel %vm340, %v818, %v819
        %v821 = vrot.slane %v664, 5
        %v822 = vrot.slane %v821, 4
        %v823 = vrot.slane %v665, 5
        %v824 = vsel %vm340, %v822, %v823
        %v825 = vrot.slane %v823, 4
        %v826 = vrot.slane %v666, 5
        %v827 = vsel %vm340, %v825, %v826
        %v828 = vrot.slane %v668, 5
        %v829 = vrot.slane %v828, 4
        %v830 = vrot.slane %v669, 5
        %v831 = vsel %vm340, %v829, %v830
        %v832 = vrot.slane %v830, 4
        %v833 = vrot.slane %v670, 5
        %v834 = vsel %vm340, %v832, %v833
        %s835 = scalar_lea.vmem %s1, 128
        %v836 = vld [vmem:[%s835] sm:$0xf]
        %v837 = vld [vmem:[%s835 + $0x4] sm:$0xf]
        %v838 = vld [vmem:[%s835 + $0x8] sm:$0xf]
        %v839 = vld [vmem:[%s835 + $0xc] sm:$0xf]
        %v840 = vld [vmem:[%s835 + $0x10] sm:$0xf]
        %v841 = vld [vmem:[%s835 + $0x14] sm:$0xf]
        %v842 = vld [vmem:[%s835 + $0x18] sm:$0xf]
        %v843 = vld [vmem:[%s835 + $0x1c] sm:$0xf]
        %v844 = vld [vmem:[%s835 + $0x20] sm:$0xf]
        %v845 = vld [vmem:[%s835 + $0x24] sm:$0xf]
        %v846 = vld [vmem:[%s835 + $0x28] sm:$0xf]
        %v847 = vld [vmem:[%s835 + $0x2c] sm:$0xf]
        %v848 = vld [vmem:[%s835 + $0x30] sm:$0xf]
        %v849 = vld [vmem:[%s835 + $0x34] sm:$0xf]
        %v850 = vld [vmem:[%s835 + $0x38] sm:$0xf]
        %v851 = vld [vmem:[%s835 + $0x3c] sm:$0xf]
        %v852 = vunpack.c.l.b16 %v782
        %v853 = vunpack.c.l.b16 %v785
        %v854 = vunpack.c.l.b16 %v789
        %v855 = vunpack.c.l.b16 %v792
        %v856 = vunpack.c.l.b16 %v796
        %v857 = vunpack.c.l.b16 %v799
        %v858 = vunpack.c.l.b16 %v803
        %v859 = vunpack.c.l.b16 %v806
        %v860 = vunpack.c.l.b16 %v810
        %v861 = vunpack.c.l.b16 %v813
        %v862 = vunpack.c.l.b16 %v817
        %v863 = vunpack.c.l.b16 %v820
        %v864 = vunpack.c.l.b16 %v824
        %v865 = vunpack.c.l.b16 %v827
        %v866 = vunpack.c.l.b16 %v831
        %v867 = vunpack.c.l.b16 %v834
        %v868 = vpack.c.b16 %v853, %v852
        %v869 = vpack.c.b16 %v855, %v854
        %v870 = vpack.c.b16 %v857, %v856
        %v871 = vpack.c.b16 %v859, %v858
        %v872 = vpack.c.b16 %v861, %v860
        %v873 = vpack.c.b16 %v863, %v862
        %v874 = vpack.c.b16 %v865, %v864
        %v875 = vpack.c.b16 %v867, %v866
        %v900 = vunpack.c.l.b16 %v836
        %v901 = vunpack.c.l.b16 %v837
        %v902 = vunpack.c.l.b16 %v838
        %v903 = vunpack.c.l.b16 %v839
        %v904 = vunpack.c.l.b16 %v840
        %v905 = vunpack.c.l.b16 %v841
        %v906 = vunpack.c.l.b16 %v842
        %v907 = vunpack.c.l.b16 %v843
        %v908 = vunpack.c.l.b16 %v844
        %v909 = vunpack.c.l.b16 %v845
        %v910 = vunpack.c.l.b16 %v846
        %v911 = vunpack.c.l.b16 %v847
        %v912 = vunpack.c.l.b16 %v848
        %v913 = vunpack.c.l.b16 %v849
        %v914 = vunpack.c.l.b16 %v850
        %v915 = vunpack.c.l.b16 %v851
        %v916 = vpack.c.b16 %v901, %v900
        %v917 = vpack.c.b16 %v903, %v902
        %v918 = vpack.c.b16 %v905, %v904
        %v919 = vpack.c.b16 %v907, %v906
        %v920 = vpack.c.b16 %v909, %v908
        %v921 = vpack.c.b16 %v911, %v910
        %v922 = vpack.c.b16 %v913, %v912
        %v923 = vpack.c.b16 %v915, %v914
        %932 = vmatprep.subr.bf16.mxu0 0
        %933 = vmatpush1.bf16.msra.mxu0 %v916
        %934 = vmatprep.subr.bf16.mxu0 0
        %935 = vmatpush1.bf16.msra.mxu0 %v917
        %936 = vmatprep.subr.bf16.mxu0 0
        %937 = vmatpush1.bf16.msra.mxu0 %v918
        %938 = vmatprep.subr.bf16.mxu0 0
        %939 = vmatpush1.bf16.msra.mxu0 %v919
        %940 = vmatprep.subr.bf16.mxu0 0
        %941 = vmatpush1.bf16.msra.mxu0 %v920
        %942 = vmatprep.subr.bf16.mxu0 0
        %943 = vmatpush1.bf16.msra.mxu0 %v921
        %944 = vmatprep.subr.bf16.mxu0 0
        %945 = vmatpush1.bf16.msra.mxu0 %v922
        %946 = vmatprep.subr.bf16.mxu0 0
        %947 = vmatpush1.bf16.msra.mxu0 %v923
        %948 = vmatprep.subr.bf16.mxu0 0
        %949 = vmatpush1.bf16.msra.mxu0 0
        %950 = vmatprep.subr.bf16.mxu0 0
        %951 = vmatpush1.bf16.msra.mxu0 0
        %952 = vmatprep.subr.bf16.mxu0 0
        %953 = vmatpush1.bf16.msra.mxu0 0
        %954 = vmatprep.subr.bf16.mxu0 0
        %955 = vmatpush1.bf16.msra.mxu0 0
        %956 = vmatprep.subr.bf16.mxu0 0
        %957 = vmatpush1.bf16.msra.mxu0 0
        %958 = vmatprep.subr.bf16.mxu0 0
        %959 = vmatpush1.bf16.msra.mxu0 0
        %960 = vmatprep.subr.bf16.mxu0 0
        %961 = vmatpush1.bf16.msra.mxu0 0
        %962 = vmatprep.subr.bf16.mxu0 0
        %963 = vmatpush1.bf16.msra.mxu0 0
        %964 = vmatprep.mubr.bf16.mxu0 0
        %965 = vmatmul.mubr.bf16.gmra.mrb[0].mxu0 %v868
        %v966 = vpop.f32.mrb[0].mxu0
        %v967 = vadd.f32 0.0, %v966
        %v968 = vpop.f32.mrb[0].mxu0
        %v969 = vpop.f32.mrb[0].mxu0
        %v970 = vadd.f32 0.0, %v969
        %v971 = vpop.f32.mrb[0].mxu0
        %972 = vmatprep.mubr.bf16.mxu0 0
        %973 = vmatmul.mubr.bf16.gmra.mrb[0].mxu0 %v869
        %v974 = vpop.f32.mrb[0].mxu0
        %v975 = vadd.f32 0.0, %v974
        %v976 = vpop.f32.mrb[0].mxu0
        %v977 = vpop.f32.mrb[0].mxu0
        %v978 = vadd.f32 0.0, %v977
        %v979 = vpop.f32.mrb[0].mxu0
        %980 = vmatprep.mubr.bf16.mxu0 0
        %981 = vmatmul.mubr.bf16.gmra.mrb[0].mxu0 %v870
        %v982 = vpop.f32.mrb[0].mxu0
        %v983 = vadd.f32 0.0, %v982
        %v984 = vpop.f32.mrb[0].mxu0
        %v985 = vpop.f32.mrb[0].mxu0
        %v986 = vadd.f32 0.0, %v985
        %v987 = vpop.f32.mrb[0].mxu0
        %988 = vmatprep.mubr.bf16.mxu0 0
        %989 = vmatmul.mubr.bf16.gmra.mrb[0].mxu0 %v871
        %v990 = vpop.f32.mrb[0].mxu0
        %v991 = vadd.f32 0.0, %v990
        %v992 = vpop.f32.mrb[0].mxu0
        %v993 = vpop.f32.mrb[0].mxu0
        %v994 = vadd.f32 0.0, %v993
        %v995 = vpop.f32.mrb[0].mxu0
        %996 = vmatprep.mubr.bf16.mxu0 0
        %997 = vmatmul.mubr.bf16.gmra.mrb[0].mxu0 %v872
        %v998 = vpop.f32.mrb[0].mxu0
        %v999 = vadd.f32 0.0, %v998
        %v1000 = vpop.f32.mrb[0].mxu0
        %v1001 = vpop.f32.mrb[0].mxu0
        %v1002 = vadd.f32 0.0, %v1001
        %v1003 = vpop.f32.mrb[0].mxu0
        %1004 = vmatprep.mubr.bf16.mxu0 0
        %1005 = vmatmul.mubr.bf16.gmra.mrb[0].mxu0 %v873
        %v1006 = vpop.f32.mrb[0].mxu0
        %v1007 = vadd.f32 0.0, %v1006
        %v1008 = vpop.f32.mrb[0].mxu0
        %v1009 = vpop.f32.mrb[0].mxu0
        %v1010 = vadd.f32 0.0, %v1009
        %v1011 = vpop.f32.mrb[0].mxu0
        %1012 = vmatprep.mubr.bf16.mxu0 0
        %1013 = vmatmul.mubr.bf16.gmra.mrb[0].mxu0 %v874
        %v1014 = vpop.f32.mrb[0].mxu0
        %v1015 = vadd.f32 0.0, %v1014
        %v1016 = vpop.f32.mrb[0].mxu0
        %v1017 = vpop.f32.mrb[0].mxu0
        %v1018 = vadd.f32 0.0, %v1017
        %v1019 = vpop.f32.mrb[0].mxu0
        %1020 = vmatprep.mubr.bf16.mxu0 0
        %1021 = vmatmul.mubr.bf16.gmra.mrb[0].mxu0 %v875
        %v1022 = vpop.f32.mrb[0].mxu0
        %v1023 = vadd.f32 0.0, %v1022
        %v1024 = vpop.f32.mrb[0].mxu0
        %v1025 = vpop.f32.mrb[0].mxu0
        %v1026 = vadd.f32 0.0, %v1025
        %v1027 = vpop.f32.mrb[0].mxu0
        %1028 = vdwg.mxu0
        %v1029 = vunpack.c.l.b16 %v701
        %v1030 = vunpack.c.l.b16 %v704
        %v1031 = vunpack.c.l.b16 %v708
        %v1032 = vunpack.c.l.b16 %v711
        %v1033 = vunpack.c.l.b16 %v715
        %v1034 = vunpack.c.l.b16 %v718
        %v1035 = vunpack.c.l.b16 %v722
        %v1036 = vunpack.c.l.b16 %v725
        %v1037 = vunpack.c.l.b16 %v729
        %v1038 = vunpack.c.l.b16 %v732
        %v1039 = vunpack.c.l.b16 %v736
        %v1040 = vunpack.c.l.b16 %v739
        %v1041 = vunpack.c.l.b16 %v743
        %v1042 = vunpack.c.l.b16 %v746
        %v1043 = vunpack.c.l.b16 %v750
        %v1044 = vunpack.c.l.b16 %v753
        %v1045 = vpack.c.b16 %v1030, %v1029
        %v1046 = vpack.c.b16 %v1032, %v1031
        %v1047 = vpack.c.b16 %v1034, %v1033
        %v1048 = vpack.c.b16 %v1036, %v1035
        %v1049 = vpack.c.b16 %v1038, %v1037
        %v1050 = vpack.c.b16 %v1040, %v1039
        %v1051 = vpack.c.b16 %v1042, %v1041
        %v1052 = vpack.c.b16 %v1044, %v1043
        %v1077 = vunpack.c.l.b16 %v755
        %v1078 = vunpack.c.l.b16 %v756
        %v1079 = vunpack.c.l.b16 %v757
        %v1080 = vunpack.c.l.b16 %v758
        %v1081 = vunpack.c.l.b16 %v759
        %v1082 = vunpack.c.l.b16 %v760
        %v1083 = vunpack.c.l.b16 %v761
        %v1084 = vunpack.c.l.b16 %v762
        %v1085 = vunpack.c.l.b16 %v763
        %v1086 = vunpack.c.l.b16 %v764
        %v1087 = vunpack.c.l.b16 %v765
        %v1088 = vunpack.c.l.b16 %v766
        %v1089 = vunpack.c.l.b16 %v767
        %v1090 = vunpack.c.l.b16 %v768
        %v1091 = vunpack.c.l.b16 %v769
        %v1092 = vunpack.c.l.b16 %v770
        %v1093 = vpack.c.b16 %v1078, %v1077
        %v1094 = vpack.c.b16 %v1080, %v1079
        %v1095 = vpack.c.b16 %v1082, %v1081
        %v1096 = vpack.c.b16 %v1084, %v1083
        %v1097 = vpack.c.b16 %v1086, %v1085
        %v1098 = vpack.c.b16 %v1088, %v1087
        %v1099 = vpack.c.b16 %v1090, %v1089
        %v1100 = vpack.c.b16 %v1092, %v1091
        %1109 = vmatprep.subr.bf16.mxu0 0
        %1110 = vmatpush1.bf16.msra.mxu0 %v1093
        %1111 = vmatprep.subr.bf16.mxu0 0
        %1112 = vmatpush1.bf16.msra.mxu0 %v1094
        %1113 = vmatprep.subr.bf16.mxu0 0
        %1114 = vmatpush1.bf16.msra.mxu0 %v1095
        %1115 = vmatprep.subr.bf16.mxu0 0
        %1116 = vmatpush1.bf16.msra.mxu0 %v1096
        %1117 = vmatprep.subr.bf16.mxu0 0
        %1118 = vmatpush1.bf16.msra.mxu0 %v1097
        %1119 = vmatprep.subr.bf16.mxu0 0
        %1120 = vmatpush1.bf16.msra.mxu0 %v1098
        %1121 = vmatprep.subr.bf16.mxu0 0
        %1122 = vmatpush1.bf16.msra.mxu0 %v1099
        %1123 = vmatprep.subr.bf16.mxu0 0
        %1124 = vmatpush1.bf16.msra.mxu0 %v1100
        %1125 = vmatprep.subr.bf16.mxu0 0
        %1126 = vmatpush1.bf16.msra.mxu0 0
        %1127 = vmatprep.subr.bf16.mxu0 0
        %1128 = vmatpush1.bf16.msra.mxu0 0
        %1129 = vmatprep.subr.bf16.mxu0 0
        %1130 = vmatpush1.bf16.msra.mxu0 0
        %1131 = vmatprep.subr.bf16.mxu0 0
        %1132 = vmatpush1.bf16.msra.mxu0 0
        %1133 = vmatprep.subr.bf16.mxu0 0
        %1134 = vmatpush1.bf16.msra.mxu0 0
        %1135 = vmatprep.subr.bf16.mxu0 0
        %1136 = vmatpush1.bf16.msra.mxu0 0
        %1137 = vmatprep.subr.bf16.mxu0 0
        %1138 = vmatpush1.bf16.msra.mxu0 0
        %1139 = vmatprep.subr.bf16.mxu0 0
        %1140 = vmatpush1.bf16.msra.mxu0 0
        %1141 = vmatprep.mubr.bf16.mxu0 0
        %1142 = vmatmul.mubr.bf16.gmra.mrb[0].mxu0 %v1045
        %v1143 = vpop.f32.mrb[0].mxu0
        %v1144 = vadd.f32 %v967, %v1143
        %v1145 = vpop.f32.mrb[0].mxu0
        %v1146 = vpop.f32.mrb[0].mxu0
        %v1147 = vadd.f32 %v970, %v1146
        %v1148 = vpop.f32.mrb[0].mxu0
        %1149 = vmatprep.mubr.bf16.mxu0 0
        %1150 = vmatmul.mubr.bf16.gmra.mrb[0].mxu0 %v1046
        %v1151 = vpop.f32.mrb[0].mxu0
        %v1152 = vadd.f32 %v975, %v1151
        %v1153 = vpop.f32.mrb[0].mxu0
        %v1154 = vpop.f32.mrb[0].mxu0
        %v1155 = vadd.f32 %v978, %v1154
        %v1156 = vpop.f32.mrb[0].mxu0
        %1157 = vmatprep.mubr.bf16.mxu0 0
        %1158 = vmatmul.mubr.bf16.gmra.mrb[0].mxu0 %v1047
        %v1159 = vpop.f32.mrb[0].mxu0
        %v1160 = vadd.f32 %v983, %v1159
        %v1161 = vpop.f32.mrb[0].mxu0
        %v1162 = vpop.f32.mrb[0].mxu0
        %v1163 = vadd.f32 %v986, %v1162
        %v1164 = vpop.f32.mrb[0].mxu0
        %1165 = vmatprep.mubr.bf16.mxu0 0
        %1166 = vmatmul.mubr.bf16.gmra.mrb[0].mxu0 %v1048
        %v1167 = vpop.f32.mrb[0].mxu0
        %v1168 = vadd.f32 %v991, %v1167
        %v1169 = vpop.f32.mrb[0].mxu0
        %v1170 = vpop.f32.mrb[0].mxu0
        %v1171 = vadd.f32 %v994, %v1170
        %v1172 = vpop.f32.mrb[0].mxu0
        %1173 = vmatprep.mubr.bf16.mxu0 0
        %1174 = vmatmul.mubr.bf16.gmra.mrb[0].mxu0 %v1049
        %v1175 = vpop.f32.mrb[0].mxu0
        %v1176 = vadd.f32 %v999, %v1175
        %v1177 = vpop.f32.mrb[0].mxu0
        %v1178 = vpop.f32.mrb[0].mxu0
        %v1179 = vadd.f32 %v1002, %v1178
        %v1180 = vpop.f32.mrb[0].mxu0
        %1181 = vmatprep.mubr.bf16.mxu0 0
        %1182 = vmatmul.mubr.bf16.gmra.mrb[0].mxu0 %v1050
        %v1183 = vpop.f32.mrb[0].mxu0
        %v1184 = vadd.f32 %v1007, %v1183
        %v1185 = vpop.f32.mrb[0].mxu0
        %v1186 = vpop.f32.mrb[0].mxu0
        %v1187 = vadd.f32 %v1010, %v1186
        %v1188 = vpop.f32.mrb[0].mxu0
        %1189 = vmatprep.mubr.bf16.mxu0 0
        %1190 = vmatmul.mubr.bf16.gmra.mrb[0].mxu0 %v1051
        %v1191 = vpop.f32.mrb[0].mxu0
        %v1192 = vadd.f32 %v1015, %v1191
        %v1193 = vpop.f32.mrb[0].mxu0
        %v1194 = vpop.f32.mrb[0].mxu0
        %v1195 = vadd.f32 %v1018, %v1194
        %v1196 = vpop.f32.mrb[0].mxu0
        %1197 = vmatprep.mubr.bf16.mxu0 0
        %1198 = vmatmul.mubr.bf16.gmra.mrb[0].mxu0 %v1052
        %v1199 = vpop.f32.mrb[0].mxu0
        %v1200 = vadd.f32 %v1023, %v1199
        %v1201 = vpop.f32.mrb[0].mxu0
        %v1202 = vpop.f32.mrb[0].mxu0
        %v1203 = vadd.f32 %v1026, %v1202
        %v1204 = vpop.f32.mrb[0].mxu0
        %1205 = vdwg.mxu0
        %s1206 = scalar_lea.vmem %s1, 192
        %v1207 = vld [vmem:[%s1206] sm:$0xf]
        %v1208 = vld [vmem:[%s1206 + $0x4] sm:$0xf]
        %v1209 = vld [vmem:[%s1206 + $0x8] sm:$0xf]
        %v1210 = vld [vmem:[%s1206 + $0xc] sm:$0xf]
        %v1211 = vld [vmem:[%s1206 + $0x10] sm:$0xf]
        %v1212 = vld [vmem:[%s1206 + $0x14] sm:$0xf]
        %v1213 = vld [vmem:[%s1206 + $0x18] sm:$0xf]
        %v1214 = vld [vmem:[%s1206 + $0x1c] sm:$0xf]
        %v1215 = vld [vmem:[%s1206 + $0x20] sm:$0xf]
        %v1216 = vld [vmem:[%s1206 + $0x24] sm:$0xf]
        %v1217 = vld [vmem:[%s1206 + $0x28] sm:$0xf]
        %v1218 = vld [vmem:[%s1206 + $0x2c] sm:$0xf]
        %v1219 = vld [vmem:[%s1206 + $0x30] sm:$0xf]
        %v1220 = vld [vmem:[%s1206 + $0x34] sm:$0xf]
        %v1221 = vld [vmem:[%s1206 + $0x38] sm:$0xf]
        %v1222 = vld [vmem:[%s1206 + $0x3c] sm:$0xf]
        %v1223 = vunpack.c.l.b16 %v641
        %v1224 = vunpack.c.l.b16 %v642
        %v1225 = vunpack.c.l.b16 %v645
        %v1226 = vunpack.c.l.b16 %v646
        %v1227 = vunpack.c.l.b16 %v649
        %v1228 = vunpack.c.l.b16 %v650
        %v1229 = vunpack.c.l.b16 %v653
        %v1230 = vunpack.c.l.b16 %v654
        %v1231 = vunpack.c.l.b16 %v657
        %v1232 = vunpack.c.l.b16 %v658
        %v1233 = vunpack.c.l.b16 %v661
        %v1234 = vunpack.c.l.b16 %v662
        %v1235 = vunpack.c.l.b16 %v665
        %v1236 = vunpack.c.l.b16 %v666
        %v1237 = vunpack.c.l.b16 %v669
        %v1238 = vunpack.c.l.b16 %v670
        %v1239 = vpack.c.b16 %v1224, %v1223
        %v1240 = vpack.c.b16 %v1226, %v1225
        %v1241 = vpack.c.b16 %v1228, %v1227
        %v1242 = vpack.c.b16 %v1230, %v1229
        %v1243 = vpack.c.b16 %v1232, %v1231
        %v1244 = vpack.c.b16 %v1234, %v1233
        %v1245 = vpack.c.b16 %v1236, %v1235
        %v1246 = vpack.c.b16 %v1238, %v1237
        %v1271 = vunpack.c.l.b16 %v1207
        %v1272 = vunpack.c.l.b16 %v1208
        %v1273 = vunpack.c.l.b16 %v1209
        %v1274 = vunpack.c.l.b16 %v1210
        %v1275 = vunpack.c.l.b16 %v1211
        %v1276 = vunpack.c.l.b16 %v1212
        %v1277 = vunpack.c.l.b16 %v1213
        %v1278 = vunpack.c.l.b16 %v1214
        %v1279 = vunpack.c.l.b16 %v1215
        %v1280 = vunpack.c.l.b16 %v1216
        %v1281 = vunpack.c.l.b16 %v1217
        %v1282 = vunpack.c.l.b16 %v1218
        %v1283 = vunpack.c.l.b16 %v1219
        %v1284 = vunpack.c.l.b16 %v1220
        %v1285 = vunpack.c.l.b16 %v1221
        %v1286 = vunpack.c.l.b16 %v1222
        %v1287 = vpack.c.b16 %v1272, %v1271
        %v1288 = vpack.c.b16 %v1274, %v1273
        %v1289 = vpack.c.b16 %v1276, %v1275
        %v1290 = vpack.c.b16 %v1278, %v1277
        %v1291 = vpack.c.b16 %v1280, %v1279
        %v1292 = vpack.c.b16 %v1282, %v1281
        %v1293 = vpack.c.b16 %v1284, %v1283
        %v1294 = vpack.c.b16 %v1286, %v1285
        %1303 = vmatprep.subr.bf16.mxu0 0
        %1304 = vmatpush1.bf16.msra.mxu0 %v1287
        %1305 = vmatprep.subr.bf16.mxu0 0
        %1306 = vmatpush1.bf16.msra.mxu0 %v1288
        %1307 = vmatprep.subr.bf16.mxu0 0
        %1308 = vmatpush1.bf16.msra.mxu0 %v1289
        %1309 = vmatprep.subr.bf16.mxu0 0
        %1310 = vmatpush1.bf16.msra.mxu0 %v1290
        %1311 = vmatprep.subr.bf16.mxu0 0
        %1312 = vmatpush1.bf16.msra.mxu0 %v1291
        %1313 = vmatprep.subr.bf16.mxu0 0
        %1314 = vmatpush1.bf16.msra.mxu0 %v1292
        %1315 = vmatprep.subr.bf16.mxu0 0
        %1316 = vmatpush1.bf16.msra.mxu0 %v1293
        %1317 = vmatprep.subr.bf16.mxu0 0
        %1318 = vmatpush1.bf16.msra.mxu0 %v1294
        %1319 = vmatprep.subr.bf16.mxu0 0
        %1320 = vmatpush1.bf16.msra.mxu0 0
        %1321 = vmatprep.subr.bf16.mxu0 0
        %1322 = vmatpush1.bf16.msra.mxu0 0
        %1323 = vmatprep.subr.bf16.mxu0 0
        %1324 = vmatpush1.bf16.msra.mxu0 0
        %1325 = vmatprep.subr.bf16.mxu0 0
        %1326 = vmatpush1.bf16.msra.mxu0 0
        %1327 = vmatprep.subr.bf16.mxu0 0
        %1328 = vmatpush1.bf16.msra.mxu0 0
        %1329 = vmatprep.subr.bf16.mxu0 0
        %1330 = vmatpush1.bf16.msra.mxu0 0
        %1331 = vmatprep.subr.bf16.mxu0 0
        %1332 = vmatpush1.bf16.msra.mxu0 0
        %1333 = vmatprep.subr.bf16.mxu0 0
        %1334 = vmatpush1.bf16.msra.mxu0 0
        %1335 = vmatprep.mubr.bf16.mxu0 0
        %1336 = vmatmul.mubr.bf16.gmra.mrb[0].mxu0 %v1239
        %v1337 = vpop.f32.mrb[0].mxu0
        %v1338 = vadd.f32 0.0, %v1337
        %v1339 = vpop.f32.mrb[0].mxu0
        %v1340 = vpop.f32.mrb[0].mxu0
        %v1341 = vadd.f32 0.0, %v1340
        %v1342 = vpop.f32.mrb[0].mxu0
        %1343 = vmatprep.mubr.bf16.mxu0 0
        %1344 = vmatmul.mubr.bf16.gmra.mrb[0].mxu0 %v1240
        %v1345 = vpop.f32.mrb[0].mxu0
        %v1346 = vadd.f32 0.0, %v1345
        %v1347 = vpop.f32.mrb[0].mxu0
        %v1348 = vpop.f32.mrb[0].mxu0
        %v1349 = vadd.f32 0.0, %v1348
        %v1350 = vpop.f32.mrb[0].mxu0
        %1351 = vmatprep.mubr.bf16.mxu0 0
        %1352 = vmatmul.mubr.bf16.gmra.mrb[0].mxu0 %v1241
        %v1353 = vpop.f32.mrb[0].mxu0
        %v1354 = vadd.f32 0.0, %v1353
        %v1355 = vpop.f32.mrb[0].mxu0
        %v1356 = vpop.f32.mrb[0].mxu0
        %v1357 = vadd.f32 0.0, %v1356
        %v1358 = vpop.f32.mrb[0].mxu0
        %1359 = vmatprep.mubr.bf16.mxu0 0
        %1360 = vmatmul.mubr.bf16.gmra.mrb[0].mxu0 %v1242
        %v1361 = vpop.f32.mrb[0].mxu0
        %v1362 = vadd.f32 0.0, %v1361
        %v1363 = vpop.f32.mrb[0].mxu0
        %v1364 = vpop.f32.mrb[0].mxu0
        %v1365 = vadd.f32 0.0, %v1364
        %v1366 = vpop.f32.mrb[0].mxu0
        %1367 = vmatprep.mubr.bf16.mxu0 0
        %1368 = vmatmul.mubr.bf16.gmra.mrb[0].mxu0 %v1243
        %v1369 = vpop.f32.mrb[0].mxu0
        %v1370 = vadd.f32 0.0, %v1369
        %v1371 = vpop.f32.mrb[0].mxu0
        %v1372 = vpop.f32.mrb[0].mxu0
        %v1373 = vadd.f32 0.0, %v1372
        %v1374 = vpop.f32.mrb[0].mxu0
        %1375 = vmatprep.mubr.bf16.mxu0 0
        %1376 = vmatmul.mubr.bf16.gmra.mrb[0].mxu0 %v1244
        %v1377 = vpop.f32.mrb[0].mxu0
        %v1378 = vadd.f32 0.0, %v1377
        %v1379 = vpop.f32.mrb[0].mxu0
        %v1380 = vpop.f32.mrb[0].mxu0
        %v1381 = vadd.f32 0.0, %v1380
        %v1382 = vpop.f32.mrb[0].mxu0
        %1383 = vmatprep.mubr.bf16.mxu0 0
        %1384 = vmatmul.mubr.bf16.gmra.mrb[0].mxu0 %v1245
        %v1385 = vpop.f32.mrb[0].mxu0
        %v1386 = vadd.f32 0.0, %v1385
        %v1387 = vpop.f32.mrb[0].mxu0
        %v1388 = vpop.f32.mrb[0].mxu0
        %v1389 = vadd.f32 0.0, %v1388
        %v1390 = vpop.f32.mrb[0].mxu0
        %1391 = vmatprep.mubr.bf16.mxu0 0
        %1392 = vmatmul.mubr.bf16.gmra.mrb[0].mxu0 %v1246
        %v1393 = vpop.f32.mrb[0].mxu0
        %v1394 = vadd.f32 0.0, %v1393
        %v1395 = vpop.f32.mrb[0].mxu0
        %v1396 = vpop.f32.mrb[0].mxu0
        %v1397 = vadd.f32 0.0, %v1396
        %v1398 = vpop.f32.mrb[0].mxu0
        %1399 = vdwg.mxu0
        %v1400 = vadd.f32 %v1144, %v1338
        %v1401 = vadd.f32 %v1147, %v1341
        %v1402 = vadd.f32 %v1152, %v1346
        %v1403 = vadd.f32 %v1155, %v1349
        %v1404 = vadd.f32 %v1160, %v1354
        %v1405 = vadd.f32 %v1163, %v1357
        %v1406 = vadd.f32 %v1168, %v1362
        %v1407 = vadd.f32 %v1171, %v1365
        %v1408 = vadd.f32 %v1176, %v1370
        %v1409 = vadd.f32 %v1179, %v1373
        %v1410 = vadd.f32 %v1184, %v1378
        %v1411 = vadd.f32 %v1187, %v1381
        %v1412 = vadd.f32 %v1192, %v1386
        %v1413 = vadd.f32 %v1195, %v1389
        %v1414 = vadd.f32 %v1200, %v1394
        %v1415 = vadd.f32 %v1203, %v1397
        %v1424 = vrot.slane %v259, 6
        %v1425 = vrot.slane %v1424, 4
        %v1426 = vrot.slane %v260, 6
        %v1427 = vsel %vm697, %v1425, %v1426
        %v1428 = vrot.slane %v1426, 4
        %v1429 = vrot.slane %v261, 6
        %v1430 = vsel %vm697, %v1428, %v1429
        %v1431 = vrot.slane %v266, 6
        %v1432 = vrot.slane %v1431, 4
        %v1433 = vrot.slane %v267, 6
        %v1434 = vsel %vm697, %v1432, %v1433
        %v1435 = vrot.slane %v1433, 4
        %v1436 = vrot.slane %v268, 6
        %v1437 = vsel %vm697, %v1435, %v1436
        %v1438 = vrot.slane %v273, 6
        %v1439 = vrot.slane %v1438, 4
        %v1440 = vrot.slane %v274, 6
        %v1441 = vsel %vm697, %v1439, %v1440
        %v1442 = vrot.slane %v1440, 4
        %v1443 = vrot.slane %v275, 6
        %v1444 = vsel %vm697, %v1442, %v1443
        %v1445 = vrot.slane %v280, 6
        %v1446 = vrot.slane %v1445, 4
        %v1447 = vrot.slane %v281, 6
        %v1448 = vsel %vm697, %v1446, %v1447
        %v1449 = vrot.slane %v1447, 4
        %v1450 = vrot.slane %v282, 6
        %v1451 = vsel %vm697, %v1449, %v1450
        %v1452 = vrot.slane %v287, 6
        %v1453 = vrot.slane %v1452, 4
        %v1454 = vrot.slane %v288, 6
        %v1455 = vsel %vm697, %v1453, %v1454
        %v1456 = vrot.slane %v1454, 4
        %v1457 = vrot.slane %v289, 6
        %v1458 = vsel %vm697, %v1456, %v1457
        %v1459 = vrot.slane %v294, 6
        %v1460 = vrot.slane %v1459, 4
        %v1461 = vrot.slane %v295, 6
        %v1462 = vsel %vm697, %v1460, %v1461
        %v1463 = vrot.slane %v1461, 4
        %v1464 = vrot.slane %v296, 6
        %v1465 = vsel %vm697, %v1463, %v1464
        %v1466 = vrot.slane %v301, 6
        %v1467 = vrot.slane %v1466, 4
        %v1468 = vrot.slane %v302, 6
        %v1469 = vsel %vm697, %v1467, %v1468
        %v1470 = vrot.slane %v1468, 4
        %v1471 = vrot.slane %v303, 6
        %v1472 = vsel %vm697, %v1470, %v1471
        %v1473 = vrot.slane %v308, 6
        %v1474 = vrot.slane %v1473, 4
        %v1475 = vrot.slane %v309, 6
        %v1476 = vsel %vm697, %v1474, %v1475
        %v1477 = vrot.slane %v1475, 4
        %v1478 = vrot.slane %v310, 6
        %v1479 = vsel %vm697, %v1477, %v1478
        %s1480 = scalar_lea.vmem %s1, 256
        %v1481 = vld [vmem:[%s1480] sm:$0xf]
        %v1482 = vld [vmem:[%s1480 + $0x4] sm:$0xf]
        %v1483 = vld [vmem:[%s1480 + $0x8] sm:$0xf]
        %v1484 = vld [vmem:[%s1480 + $0xc] sm:$0xf]
        %v1485 = vld [vmem:[%s1480 + $0x10] sm:$0xf]
        %v1486 = vld [vmem:[%s1480 + $0x14] sm:$0xf]
        %v1487 = vld [vmem:[%s1480 + $0x18] sm:$0xf]
        %v1488 = vld [vmem:[%s1480 + $0x1c] sm:$0xf]
        %v1489 = vld [vmem:[%s1480 + $0x20] sm:$0xf]
        %v1490 = vld [vmem:[%s1480 + $0x24] sm:$0xf]
        %v1491 = vld [vmem:[%s1480 + $0x28] sm:$0xf]
        %v1492 = vld [vmem:[%s1480 + $0x2c] sm:$0xf]
        %v1493 = vld [vmem:[%s1480 + $0x30] sm:$0xf]
        %v1494 = vld [vmem:[%s1480 + $0x34] sm:$0xf]
        %v1495 = vld [vmem:[%s1480 + $0x38] sm:$0xf]
        %v1496 = vld [vmem:[%s1480 + $0x3c] sm:$0xf]
        %v1497 = vunpack.c.l.b16 %v1427
        %v1498 = vunpack.c.l.b16 %v1430
        %v1499 = vunpack.c.l.b16 %v1434
        %v1500 = vunpack.c.l.b16 %v1437
        %v1501 = vunpack.c.l.b16 %v1441
        %v1502 = vunpack.c.l.b16 %v1444
        %v1503 = vunpack.c.l.b16 %v1448
        %v1504 = vunpack.c.l.b16 %v1451
        %v1505 = vunpack.c.l.b16 %v1455
        %v1506 = vunpack.c.l.b16 %v1458
        %v1507 = vunpack.c.l.b16 %v1462
        %v1508 = vunpack.c.l.b16 %v1465
        %v1509 = vunpack.c.l.b16 %v1469
        %v1510 = vunpack.c.l.b16 %v1472
        %v1511 = vunpack.c.l.b16 %v1476
        %v1512 = vunpack.c.l.b16 %v1479
        %v1513 = vpack.c.b16 %v1498, %v1497
        %v1514 = vpack.c.b16 %v1500, %v1499
        %v1515 = vpack.c.b16 %v1502, %v1501
        %v1516 = vpack.c.b16 %v1504, %v1503
        %v1517 = vpack.c.b16 %v1506, %v1505
        %v1518 = vpack.c.b16 %v1508, %v1507
        %v1519 = vpack.c.b16 %v1510, %v1509
        %v1520 = vpack.c.b16 %v1512, %v1511
        %v1545 = vunpack.c.l.b16 %v1481
        %v1546 = vunpack.c.l.b16 %v1482
        %v1547 = vunpack.c.l.b16 %v1483
        %v1548 = vunpack.c.l.b16 %v1484
        %v1549 = vunpack.c.l.b16 %v1485
        %v1550 = vunpack.c.l.b16 %v1486
        %v1551 = vunpack.c.l.b16 %v1487
        %v1552 = vunpack.c.l.b16 %v1488
        %v1553 = vunpack.c.l.b16 %v1489
        %v1554 = vunpack.c.l.b16 %v1490
        %v1555 = vunpack.c.l.b16 %v1491
        %v1556 = vunpack.c.l.b16 %v1492
        %v1557 = vunpack.c.l.b16 %v1493
        %v1558 = vunpack.c.l.b16 %v1494
        %v1559 = vunpack.c.l.b16 %v1495
        %v1560 = vunpack.c.l.b16 %v1496
        %v1561 = vpack.c.b16 %v1546, %v1545
        %v1562 = vpack.c.b16 %v1548, %v1547
        %v1563 = vpack.c.b16 %v1550, %v1549
        %v1564 = vpack.c.b16 %v1552, %v1551
        %v1565 = vpack.c.b16 %v1554, %v1553
        %v1566 = vpack.c.b16 %v1556, %v1555
        %v1567 = vpack.c.b16 %v1558, %v1557
        %v1568 = vpack.c.b16 %v1560, %v1559
        %1577 = vmatprep.subr.bf16.mxu0 0
        %1578 = vmatpush1.bf16.msra.mxu0 %v1561
        %1579 = vmatprep.subr.bf16.mxu0 0
        %1580 = vmatpush1.bf16.msra.mxu0 %v1562
        %1581 = vmatprep.subr.bf16.mxu0 0
        %1582 = vmatpush1.bf16.msra.mxu0 %v1563
        %1583 = vmatprep.subr.bf16.mxu0 0
        %1584 = vmatpush1.bf16.msra.mxu0 %v1564
        %1585 = vmatprep.subr.bf16.mxu0 0
        %1586 = vmatpush1.bf16.msra.mxu0 %v1565
        %1587 = vmatprep.subr.bf16.mxu0 0
        %1588 = vmatpush1.bf16.msra.mxu0 %v1566
        %1589 = vmatprep.subr.bf16.mxu0 0
        %1590 = vmatpush1.bf16.msra.mxu0 %v1567
        %1591 = vmatprep.subr.bf16.mxu0 0
        %1592 = vmatpush1.bf16.msra.mxu0 %v1568
        %1593 = vmatprep.subr.bf16.mxu0 0
        %1594 = vmatpush1.bf16.msra.mxu0 0
        %1595 = vmatprep.subr.bf16.mxu0 0
        %1596 = vmatpush1.bf16.msra.mxu0 0
        %1597 = vmatprep.subr.bf16.mxu0 0
        %1598 = vmatpush1.bf16.msra.mxu0 0
        %1599 = vmatprep.subr.bf16.mxu0 0
        %1600 = vmatpush1.bf16.msra.mxu0 0
        %1601 = vmatprep.subr.bf16.mxu0 0
        %1602 = vmatpush1.bf16.msra.mxu0 0
        %1603 = vmatprep.subr.bf16.mxu0 0
        %1604 = vmatpush1.bf16.msra.mxu0 0
        %1605 = vmatprep.subr.bf16.mxu0 0
        %1606 = vmatpush1.bf16.msra.mxu0 0
        %1607 = vmatprep.subr.bf16.mxu0 0
        %1608 = vmatpush1.bf16.msra.mxu0 0
        %1609 = vmatprep.mubr.bf16.mxu0 0
        %1610 = vmatmul.mubr.bf16.gmra.mrb[0].mxu0 %v1513
        %v1611 = vpop.f32.mrb[0].mxu0
        %v1612 = vadd.f32 0.0, %v1611
        %v1613 = vpop.f32.mrb[0].mxu0
        %v1614 = vpop.f32.mrb[0].mxu0
        %v1615 = vadd.f32 0.0, %v1614
        %v1616 = vpop.f32.mrb[0].mxu0
        %1617 = vmatprep.mubr.bf16.mxu0 0
        %1618 = vmatmul.mubr.bf16.gmra.mrb[0].mxu0 %v1514
        %v1619 = vpop.f32.mrb[0].mxu0
        %v1620 = vadd.f32 0.0, %v1619
        %v1621 = vpop.f32.mrb[0].mxu0
        %v1622 = vpop.f32.mrb[0].mxu0
        %v1623 = vadd.f32 0.0, %v1622
        %v1624 = vpop.f32.mrb[0].mxu0
        %1625 = vmatprep.mubr.bf16.mxu0 0
        %1626 = vmatmul.mubr.bf16.gmra.mrb[0].mxu0 %v1515
        %v1627 = vpop.f32.mrb[0].mxu0
        %v1628 = vadd.f32 0.0, %v1627
        %v1629 = vpop.f32.mrb[0].mxu0
        %v1630 = vpop.f32.mrb[0].mxu0
        %v1631 = vadd.f32 0.0, %v1630
        %v1632 = vpop.f32.mrb[0].mxu0
        %1633 = vmatprep.mubr.bf16.mxu0 0
        %1634 = vmatmul.mubr.bf16.gmra.mrb[0].mxu0 %v1516
        %v1635 = vpop.f32.mrb[0].mxu0
        %v1636 = vadd.f32 0.0, %v1635
        %v1637 = vpop.f32.mrb[0].mxu0
        %v1638 = vpop.f32.mrb[0].mxu0
        %v1639 = vadd.f32 0.0, %v1638
        %v1640 = vpop.f32.mrb[0].mxu0
        %1641 = vmatprep.mubr.bf16.mxu0 0
        %1642 = vmatmul.mubr.bf16.gmra.mrb[0].mxu0 %v1517
        %v1643 = vpop.f32.mrb[0].mxu0
        %v1644 = vadd.f32 0.0, %v1643
        %v1645 = vpop.f32.mrb[0].mxu0
        %v1646 = vpop.f32.mrb[0].mxu0
        %v1647 = vadd.f32 0.0, %v1646
        %v1648 = vpop.f32.mrb[0].mxu0
        %1649 = vmatprep.mubr.bf16.mxu0 0
        %1650 = vmatmul.mubr.bf16.gmra.mrb[0].mxu0 %v1518
        %v1651 = vpop.f32.mrb[0].mxu0
        %v1652 = vadd.f32 0.0, %v1651
        %v1653 = vpop.f32.mrb[0].mxu0
        %v1654 = vpop.f32.mrb[0].mxu0
        %v1655 = vadd.f32 0.0, %v1654
        %v1656 = vpop.f32.mrb[0].mxu0
        %1657 = vmatprep.mubr.bf16.mxu0 0
        %1658 = vmatmul.mubr.bf16.gmra.mrb[0].mxu0 %v1519
        %v1659 = vpop.f32.mrb[0].mxu0
        %v1660 = vadd.f32 0.0, %v1659
        %v1661 = vpop.f32.mrb[0].mxu0
        %v1662 = vpop.f32.mrb[0].mxu0
        %v1663 = vadd.f32 0.0, %v1662
        %v1664 = vpop.f32.mrb[0].mxu0
        %1665 = vmatprep.mubr.bf16.mxu0 0
        %1666 = vmatmul.mubr.bf16.gmra.mrb[0].mxu0 %v1520
        %v1667 = vpop.f32.mrb[0].mxu0
        %v1668 = vadd.f32 0.0, %v1667
        %v1669 = vpop.f32.mrb[0].mxu0
        %v1670 = vpop.f32.mrb[0].mxu0
        %v1671 = vadd.f32 0.0, %v1670
        %v1672 = vpop.f32.mrb[0].mxu0
        %1673 = vdwg.mxu0
        %v1674 = vadd.f32 %v1400, %v1612
        %v1675 = vadd.f32 %v1401, %v1615
        %v1676 = vadd.f32 %v1402, %v1620
        %v1677 = vadd.f32 %v1403, %v1623
        %v1678 = vadd.f32 %v1404, %v1628
        %v1679 = vadd.f32 %v1405, %v1631
        %v1680 = vadd.f32 %v1406, %v1636
        %v1681 = vadd.f32 %v1407, %v1639
        %v1682 = vadd.f32 %v1408, %v1644
        %v1683 = vadd.f32 %v1409, %v1647
        %v1684 = vadd.f32 %v1410, %v1652
        %v1685 = vadd.f32 %v1411, %v1655
        %v1686 = vadd.f32 %v1412, %v1660
        %v1687 = vadd.f32 %v1413, %v1663
        %v1688 = vadd.f32 %v1414, %v1668
        %v1689 = vadd.f32 %v1415, %v1671
        %s1690 = scalar_lea.vmem %s1, 320
        %v1691 = vld [vmem:[%s1690] sm:$0xf]
        %v1692 = vld [vmem:[%s1690 + $0x4] sm:$0xf]
        %v1693 = vld [vmem:[%s1690 + $0x8] sm:$0xf]
        %v1694 = vld [vmem:[%s1690 + $0xc] sm:$0xf]
        %v1695 = vld [vmem:[%s1690 + $0x10] sm:$0xf]
        %v1696 = vld [vmem:[%s1690 + $0x14] sm:$0xf]
        %v1697 = vld [vmem:[%s1690 + $0x18] sm:$0xf]
        %v1698 = vld [vmem:[%s1690 + $0x1c] sm:$0xf]
        %v1699 = vld [vmem:[%s1690 + $0x20] sm:$0xf]
        %v1700 = vld [vmem:[%s1690 + $0x24] sm:$0xf]
        %v1701 = vld [vmem:[%s1690 + $0x28] sm:$0xf]
        %v1702 = vld [vmem:[%s1690 + $0x2c] sm:$0xf]
        %v1703 = vld [vmem:[%s1690 + $0x30] sm:$0xf]
        %v1704 = vld [vmem:[%s1690 + $0x34] sm:$0xf]
        %v1705 = vld [vmem:[%s1690 + $0x38] sm:$0xf]
        %v1706 = vld [vmem:[%s1690 + $0x3c] sm:$0xf]
        %v1723 = vunpack.c.l.b16 %v1691
        %v1724 = vunpack.c.l.b16 %v1692
        %v1725 = vunpack.c.l.b16 %v1693
        %v1726 = vunpack.c.l.b16 %v1694
        %v1727 = vunpack.c.l.b16 %v1695
        %v1728 = vunpack.c.l.b16 %v1696
        %v1729 = vunpack.c.l.b16 %v1697
        %v1730 = vunpack.c.l.b16 %v1698
        %v1731 = vunpack.c.l.b16 %v1699
        %v1732 = vunpack.c.l.b16 %v1700
        %v1733 = vunpack.c.l.b16 %v1701
        %v1734 = vunpack.c.l.b16 %v1702
        %v1735 = vunpack.c.l.b16 %v1703
        %v1736 = vunpack.c.l.b16 %v1704
        %v1737 = vunpack.c.l.b16 %v1705
        %v1738 = vunpack.c.l.b16 %v1706
        %v1739 = vpack.c.b16 %v1724, %v1723
        %v1740 = vpack.c.b16 %v1726, %v1725
        %v1741 = vpack.c.b16 %v1728, %v1727
        %v1742 = vpack.c.b16 %v1730, %v1729
        %v1743 = vpack.c.b16 %v1732, %v1731
        %v1744 = vpack.c.b16 %v1734, %v1733
        %v1745 = vpack.c.b16 %v1736, %v1735
        %v1746 = vpack.c.b16 %v1738, %v1737
        %1755 = vmatprep.subr.bf16.mxu0 0
        %1756 = vmatpush1.bf16.msra.mxu0 %v1739
        %1757 = vmatprep.subr.bf16.mxu0 0
        %1758 = vmatpush1.bf16.msra.mxu0 %v1740
        %1759 = vmatprep.subr.bf16.mxu0 0
        %1760 = vmatpush1.bf16.msra.mxu0 %v1741
        %1761 = vmatprep.subr.bf16.mxu0 0
        %1762 = vmatpush1.bf16.msra.mxu0 %v1742
        %1763 = vmatprep.subr.bf16.mxu0 0
        %1764 = vmatpush1.bf16.msra.mxu0 %v1743
        %1765 = vmatprep.subr.bf16.mxu0 0
        %1766 = vmatpush1.bf16.msra.mxu0 %v1744
        %1767 = vmatprep.subr.bf16.mxu0 0
        %1768 = vmatpush1.bf16.msra.mxu0 %v1745
        %1769 = vmatprep.subr.bf16.mxu0 0
        %1770 = vmatpush1.bf16.msra.mxu0 %v1746
        %1771 = vmatprep.subr.bf16.mxu0 0
        %1772 = vmatpush1.bf16.msra.mxu0 0
        %1773 = vmatprep.subr.bf16.mxu0 0
        %1774 = vmatpush1.bf16.msra.mxu0 0
        %1775 = vmatprep.subr.bf16.mxu0 0
        %1776 = vmatpush1.bf16.msra.mxu0 0
        %1777 = vmatprep.subr.bf16.mxu0 0
        %1778 = vmatpush1.bf16.msra.mxu0 0
        %1779 = vmatprep.subr.bf16.mxu0 0
        %1780 = vmatpush1.bf16.msra.mxu0 0
        %1781 = vmatprep.subr.bf16.mxu0 0
        %1782 = vmatpush1.bf16.msra.mxu0 0
        %1783 = vmatprep.subr.bf16.mxu0 0
        %1784 = vmatpush1.bf16.msra.mxu0 0
        %1785 = vmatprep.subr.bf16.mxu0 0
        %1786 = vmatpush1.bf16.msra.mxu0 0
        %1787 = vmatprep.mubr.bf16.mxu0 0
        %1788 = vmatmul.mubr.bf16.gmra.mrb[0].mxu0 %v434
        %v1789 = vpop.f32.mrb[0].mxu0
        %v1790 = vadd.f32 0.0, %v1789
        %v1791 = vpop.f32.mrb[0].mxu0
        %v1792 = vpop.f32.mrb[0].mxu0
        %v1793 = vadd.f32 0.0, %v1792
        %v1794 = vpop.f32.mrb[0].mxu0
        %1795 = vmatprep.mubr.bf16.mxu0 0
        %1796 = vmatmul.mubr.bf16.gmra.mrb[0].mxu0 %v435
        %v1797 = vpop.f32.mrb[0].mxu0
        %v1798 = vadd.f32 0.0, %v1797
        %v1799 = vpop.f32.mrb[0].mxu0
        %v1800 = vpop.f32.mrb[0].mxu0
        %v1801 = vadd.f32 0.0, %v1800
        %v1802 = vpop.f32.mrb[0].mxu0
        %1803 = vmatprep.mubr.bf16.mxu0 0
        %1804 = vmatmul.mubr.bf16.gmra.mrb[0].mxu0 %v436
        %v1805 = vpop.f32.mrb[0].mxu0
        %v1806 = vadd.f32 0.0, %v1805
        %v1807 = vpop.f32.mrb[0].mxu0
        %v1808 = vpop.f32.mrb[0].mxu0
        %v1809 = vadd.f32 0.0, %v1808
        %v1810 = vpop.f32.mrb[0].mxu0
        %1811 = vmatprep.mubr.bf16.mxu0 0
        %1812 = vmatmul.mubr.bf16.gmra.mrb[0].mxu0 %v437
        %v1813 = vpop.f32.mrb[0].mxu0
        %v1814 = vadd.f32 0.0, %v1813
        %v1815 = vpop.f32.mrb[0].mxu0
        %v1816 = vpop.f32.mrb[0].mxu0
        %v1817 = vadd.f32 0.0, %v1816
        %v1818 = vpop.f32.mrb[0].mxu0
        %1819 = vmatprep.mubr.bf16.mxu0 0
        %1820 = vmatmul.mubr.bf16.gmra.mrb[0].mxu0 %v438
        %v1821 = vpop.f32.mrb[0].mxu0
        %v1822 = vadd.f32 0.0, %v1821
        %v1823 = vpop.f32.mrb[0].mxu0
        %v1824 = vpop.f32.mrb[0].mxu0
        %v1825 = vadd.f32 0.0, %v1824
        %v1826 = vpop.f32.mrb[0].mxu0
        %1827 = vmatprep.mubr.bf16.mxu0 0
        %1828 = vmatmul.mubr.bf16.gmra.mrb[0].mxu0 %v439
        %v1829 = vpop.f32.mrb[0].mxu0
        %v1830 = vadd.f32 0.0, %v1829
        %v1831 = vpop.f32.mrb[0].mxu0
        %v1832 = vpop.f32.mrb[0].mxu0
        %v1833 = vadd.f32 0.0, %v1832
        %v1834 = vpop.f32.mrb[0].mxu0
        %1835 = vmatprep.mubr.bf16.mxu0 0
        %1836 = vmatmul.mubr.bf16.gmra.mrb[0].mxu0 %v440
        %v1837 = vpop.f32.mrb[0].mxu0
        %v1838 = vadd.f32 0.0, %v1837
        %v1839 = vpop.f32.mrb[0].mxu0
        %v1840 = vpop.f32.mrb[0].mxu0
        %v1841 = vadd.f32 0.0, %v1840
        %v1842 = vpop.f32.mrb[0].mxu0
        %1843 = vmatprep.mubr.bf16.mxu0 0
        %1844 = vmatmul.mubr.bf16.gmra.mrb[0].mxu0 %v441
        %v1845 = vpop.f32.mrb[0].mxu0
        %v1846 = vadd.f32 0.0, %v1845
        %v1847 = vpop.f32.mrb[0].mxu0
        %v1848 = vpop.f32.mrb[0].mxu0
        %v1849 = vadd.f32 0.0, %v1848
        %v1850 = vpop.f32.mrb[0].mxu0
        %1851 = vdwg.mxu0
        %v1852 = vadd.f32 %v1674, %v1790
        %v1853 = vadd.f32 %v1675, %v1793
        %v1854 = vadd.f32 %v1676, %v1798
        %v1855 = vadd.f32 %v1677, %v1801
        %v1856 = vadd.f32 %v1678, %v1806
        %v1857 = vadd.f32 %v1679, %v1809
        %v1858 = vadd.f32 %v1680, %v1814
        %v1859 = vadd.f32 %v1681, %v1817
        %v1860 = vadd.f32 %v1682, %v1822
        %v1861 = vadd.f32 %v1683, %v1825
        %v1862 = vadd.f32 %v1684, %v1830
        %v1863 = vadd.f32 %v1685, %v1833
        %v1864 = vadd.f32 %v1686, %v1838
        %v1865 = vadd.f32 %v1687, %v1841
        %v1866 = vadd.f32 %v1688, %v1846
        %v1867 = vadd.f32 %v1689, %v1849
        %s1868 = scalar_lea.vmem %s1, 384
        %v1869 = vld [vmem:[%s1868] sm:$0xf]
        %v1870 = vld [vmem:[%s1868 + $0x4] sm:$0xf]
        %v1871 = vld [vmem:[%s1868 + $0x8] sm:$0xf]
        %v1872 = vld [vmem:[%s1868 + $0xc] sm:$0xf]
        %v1873 = vld [vmem:[%s1868 + $0x10] sm:$0xf]
        %v1874 = vld [vmem:[%s1868 + $0x14] sm:$0xf]
        %v1875 = vld [vmem:[%s1868 + $0x18] sm:$0xf]
        %v1876 = vld [vmem:[%s1868 + $0x1c] sm:$0xf]
        %v1877 = vld [vmem:[%s1868 + $0x20] sm:$0xf]
        %v1878 = vld [vmem:[%s1868 + $0x24] sm:$0xf]
        %v1879 = vld [vmem:[%s1868 + $0x28] sm:$0xf]
        %v1880 = vld [vmem:[%s1868 + $0x2c] sm:$0xf]
        %v1881 = vld [vmem:[%s1868 + $0x30] sm:$0xf]
        %v1882 = vld [vmem:[%s1868 + $0x34] sm:$0xf]
        %v1883 = vld [vmem:[%s1868 + $0x38] sm:$0xf]
        %v1884 = vld [vmem:[%s1868 + $0x3c] sm:$0xf]
        %v1885 = vunpack.c.l.b16 %v261
        %v1886 = vunpack.c.l.b16 %v262
        %v1887 = vunpack.c.l.b16 %v268
        %v1888 = vunpack.c.l.b16 %v269
        %v1889 = vunpack.c.l.b16 %v275
        %v1890 = vunpack.c.l.b16 %v276
        %v1891 = vunpack.c.l.b16 %v282
        %v1892 = vunpack.c.l.b16 %v283
        %v1893 = vunpack.c.l.b16 %v289
        %v1894 = vunpack.c.l.b16 %v290
        %v1895 = vunpack.c.l.b16 %v296
        %v1896 = vunpack.c.l.b16 %v297
        %v1897 = vunpack.c.l.b16 %v303
        %v1898 = vunpack.c.l.b16 %v304
        %v1899 = vunpack.c.l.b16 %v310
        %v1900 = vunpack.c.l.b16 %v311
        %v1901 = vpack.c.b16 %v1886, %v1885
        %v1902 = vpack.c.b16 %v1888, %v1887
        %v1903 = vpack.c.b16 %v1890, %v1889
        %v1904 = vpack.c.b16 %v1892, %v1891
        %v1905 = vpack.c.b16 %v1894, %v1893
        %v1906 = vpack.c.b16 %v1896, %v1895
        %v1907 = vpack.c.b16 %v1898, %v1897
        %v1908 = vpack.c.b16 %v1900, %v1899
        %v1933 = vunpack.c.l.b16 %v1869
        %v1934 = vunpack.c.l.b16 %v1870
        %v1935 = vunpack.c.l.b16 %v1871
        %v1936 = vunpack.c.l.b16 %v1872
        %v1937 = vunpack.c.l.b16 %v1873
        %v1938 = vunpack.c.l.b16 %v1874
        %v1939 = vunpack.c.l.b16 %v1875
        %v1940 = vunpack.c.l.b16 %v1876
        %v1941 = vunpack.c.l.b16 %v1877
        %v1942 = vunpack.c.l.b16 %v1878
        %v1943 = vunpack.c.l.b16 %v1879
        %v1944 = vunpack.c.l.b16 %v1880
        %v1945 = vunpack.c.l.b16 %v1881
        %v1946 = vunpack.c.l.b16 %v1882
        %v1947 = vunpack.c.l.b16 %v1883
        %v1948 = vunpack.c.l.b16 %v1884
        %v1949 = vpack.c.b16 %v1934, %v1933
        %v1950 = vpack.c.b16 %v1936, %v1935
        %v1951 = vpack.c.b16 %v1938, %v1937
        %v1952 = vpack.c.b16 %v1940, %v1939
        %v1953 = vpack.c.b16 %v1942, %v1941
        %v1954 = vpack.c.b16 %v1944, %v1943
        %v1955 = vpack.c.b16 %v1946, %v1945
        %v1956 = vpack.c.b16 %v1948, %v1947
        %1965 = vmatprep.subr.bf16.mxu0 0
        %1966 = vmatpush1.bf16.msra.mxu0 %v1949
        %1967 = vmatprep.subr.bf16.mxu0 0
        %1968 = vmatpush1.bf16.msra.mxu0 %v1950
        %1969 = vmatprep.subr.bf16.mxu0 0
        %1970 = vmatpush1.bf16.msra.mxu0 %v1951
        %1971 = vmatprep.subr.bf16.mxu0 0
        %1972 = vmatpush1.bf16.msra.mxu0 %v1952
        %1973 = vmatprep.subr.bf16.mxu0 0
        %1974 = vmatpush1.bf16.msra.mxu0 %v1953
        %1975 = vmatprep.subr.bf16.mxu0 0
        %1976 = vmatpush1.bf16.msra.mxu0 %v1954
        %1977 = vmatprep.subr.bf16.mxu0 0
        %1978 = vmatpush1.bf16.msra.mxu0 %v1955
        %1979 = vmatprep.subr.bf16.mxu0 0
        %1980 = vmatpush1.bf16.msra.mxu0 %v1956
        %1981 = vmatprep.subr.bf16.mxu0 0
        %1982 = vmatpush1.bf16.msra.mxu0 0
        %1983 = vmatprep.subr.bf16.mxu0 0
        %1984 = vmatpush1.bf16.msra.mxu0 0
        %1985 = vmatprep.subr.bf16.mxu0 0
        %1986 = vmatpush1.bf16.msra.mxu0 0
        %1987 = vmatprep.subr.bf16.mxu0 0
        %1988 = vmatpush1.bf16.msra.mxu0 0
        %1989 = vmatprep.subr.bf16.mxu0 0
        %1990 = vmatpush1.bf16.msra.mxu0 0
        %1991 = vmatprep.subr.bf16.mxu0 0
        %1992 = vmatpush1.bf16.msra.mxu0 0
        %1993 = vmatprep.subr.bf16.mxu0 0
        %1994 = vmatpush1.bf16.msra.mxu0 0
        %1995 = vmatprep.subr.bf16.mxu0 0
        %1996 = vmatpush1.bf16.msra.mxu0 0
        %1997 = vmatprep.mubr.bf16.mxu0 0
        %1998 = vmatmul.mubr.bf16.gmra.mrb[0].mxu0 %v1901
        %v1999 = vpop.f32.mrb[0].mxu0
        %v2000 = vadd.f32 0.0, %v1999
        %v2001 = vpop.f32.mrb[0].mxu0
        %v2002 = vpop.f32.mrb[0].mxu0
        %v2003 = vadd.f32 0.0, %v2002
        %v2004 = vpop.f32.mrb[0].mxu0
        %2005 = vmatprep.mubr.bf16.mxu0 0
        %2006 = vmatmul.mubr.bf16.gmra.mrb[0].mxu0 %v1902
        %v2007 = vpop.f32.mrb[0].mxu0
        %v2008 = vadd.f32 0.0, %v2007
        %v2009 = vpop.f32.mrb[0].mxu0
        %v2010 = vpop.f32.mrb[0].mxu0
        %v2011 = vadd.f32 0.0, %v2010
        %v2012 = vpop.f32.mrb[0].mxu0
        %2013 = vmatprep.mubr.bf16.mxu0 0
        %2014 = vmatmul.mubr.bf16.gmra.mrb[0].mxu0 %v1903
        %v2015 = vpop.f32.mrb[0].mxu0
        %v2016 = vadd.f32 0.0, %v2015
        %v2017 = vpop.f32.mrb[0].mxu0
        %v2018 = vpop.f32.mrb[0].mxu0
        %v2019 = vadd.f32 0.0, %v2018
        %v2020 = vpop.f32.mrb[0].mxu0
        %2021 = vmatprep.mubr.bf16.mxu0 0
        %2022 = vmatmul.mubr.bf16.gmra.mrb[0].mxu0 %v1904
        %v2023 = vpop.f32.mrb[0].mxu0
        %v2024 = vadd.f32 0.0, %v2023
        %v2025 = vpop.f32.mrb[0].mxu0
        %v2026 = vpop.f32.mrb[0].mxu0
        %v2027 = vadd.f32 0.0, %v2026
        %v2028 = vpop.f32.mrb[0].mxu0
        %2029 = vmatprep.mubr.bf16.mxu0 0
        %2030 = vmatmul.mubr.bf16.gmra.mrb[0].mxu0 %v1905
        %v2031 = vpop.f32.mrb[0].mxu0
        %v2032 = vadd.f32 0.0, %v2031
        %v2033 = vpop.f32.mrb[0].mxu0
        %v2034 = vpop.f32.mrb[0].mxu0
        %v2035 = vadd.f32 0.0, %v2034
        %v2036 = vpop.f32.mrb[0].mxu0
        %2037 = vmatprep.mubr.bf16.mxu0 0
        %2038 = vmatmul.mubr.bf16.gmra.mrb[0].mxu0 %v1906
        %v2039 = vpop.f32.mrb[0].mxu0
        %v2040 = vadd.f32 0.0, %v2039
        %v2041 = vpop.f32.mrb[0].mxu0
        %v2042 = vpop.f32.mrb[0].mxu0
        %v2043 = vadd.f32 0.0, %v2042
        %v2044 = vpop.f32.mrb[0].mxu0
        %2045 = vmatprep.mubr.bf16.mxu0 0
        %2046 = vmatmul.mubr.bf16.gmra.mrb[0].mxu0 %v1907
        %v2047 = vpop.f32.mrb[0].mxu0
        %v2048 = vadd.f32 0.0, %v2047
        %v2049 = vpop.f32.mrb[0].mxu0
        %v2050 = vpop.f32.mrb[0].mxu0
        %v2051 = vadd.f32 0.0, %v2050
        %v2052 = vpop.f32.mrb[0].mxu0
        %2053 = vmatprep.mubr.bf16.mxu0 0
        %2054 = vmatmul.mubr.bf16.gmra.mrb[0].mxu0 %v1908
        %v2055 = vpop.f32.mrb[0].mxu0
        %v2056 = vadd.f32 0.0, %v2055
        %v2057 = vpop.f32.mrb[0].mxu0
        %v2058 = vpop.f32.mrb[0].mxu0
        %v2059 = vadd.f32 0.0, %v2058
        %v2060 = vpop.f32.mrb[0].mxu0
        %2061 = vdwg.mxu0
        %v2062 = vadd.f32 %v1852, %v2000
        %v2063 = vadd.f32 %v1853, %v2003
        %v2064 = vadd.f32 %v1854, %v2008
        %v2065 = vadd.f32 %v1855, %v2011
        %v2066 = vadd.f32 %v1856, %v2016
        %v2067 = vadd.f32 %v1857, %v2019
        %v2068 = vadd.f32 %v1858, %v2024
        %v2069 = vadd.f32 %v1859, %v2027
        %v2070 = vadd.f32 %v1860, %v2032
        %v2071 = vadd.f32 %v1861, %v2035
        %v2072 = vadd.f32 %v1862, %v2040
        %v2073 = vadd.f32 %v1863, %v2043
        %v2074 = vadd.f32 %v1864, %v2048
        %v2075 = vadd.f32 %v1865, %v2051
        %v2076 = vadd.f32 %v1866, %v2056
        %v2077 = vadd.f32 %v1867, %v2059
        %s2078 = sadd.s32 %s253, 24
        %s2079 = smul.u32 %s2078, 7
        %s2080 = smul.addr %s2079, 4
        %s2081 = scalar_lea.vmem %s247, %s2080
        %v2082 = vld [vmem:[%s2081 + $0x4] sm:$0xf]
        %v2083 = vld [vmem:[%s2081 + $0x8] sm:$0xf]
        %v2084 = vld [vmem:[%s2081 + $0xc] sm:$0xf]
        %v2085 = vld [vmem:[%s2081 + $0x10] sm:$0xf]
        %v2086 = vld [vmem:[%s2081 + $0x20] sm:$0xf]
        %v2087 = vld [vmem:[%s2081 + $0x24] sm:$0xf]
        %v2088 = vld [vmem:[%s2081 + $0x28] sm:$0xf]
        %v2089 = vld [vmem:[%s2081 + $0x2c] sm:$0xf]
        %v2090 = vld [vmem:[%s2081 + $0x3c] sm:$0xf]
        %v2091 = vld [vmem:[%s2081 + $0x40] sm:$0xf]
        %v2092 = vld [vmem:[%s2081 + $0x44] sm:$0xf]
        %v2093 = vld [vmem:[%s2081 + $0x48] sm:$0xf]
        %v2094 = vld [vmem:[%s2081 + $0x58] sm:$0xf]
        %v2095 = vld [vmem:[%s2081 + $0x5c] sm:$0xf]
        %v2096 = vld [vmem:[%s2081 + $0x60] sm:$0xf]
        %v2097 = vld [vmem:[%s2081 + $0x64] sm:$0xf]
        %v2098 = vld [vmem:[%s2081 + $0x74] sm:$0xf]
        %v2099 = vld [vmem:[%s2081 + $0x78] sm:$0xf]
        %v2100 = vld [vmem:[%s2081 + $0x7c] sm:$0xf]
        %v2101 = vld [vmem:[%s2081 + $0x80] sm:$0xf]
        %v2102 = vld [vmem:[%s2081 + $0x90] sm:$0xf]
        %v2103 = vld [vmem:[%s2081 + $0x94] sm:$0xf]
        %v2104 = vld [vmem:[%s2081 + $0x98] sm:$0xf]
        %v2105 = vld [vmem:[%s2081 + $0x9c] sm:$0xf]
        %v2106 = vld [vmem:[%s2081 + $0xac] sm:$0xf]
        %v2107 = vld [vmem:[%s2081 + $0xb0] sm:$0xf]
        %v2108 = vld [vmem:[%s2081 + $0xb4] sm:$0xf]
        %v2109 = vld [vmem:[%s2081 + $0xb8] sm:$0xf]
        %v2110 = vld [vmem:[%s2081 + $0xc8] sm:$0xf]
        %v2111 = vld [vmem:[%s2081 + $0xcc] sm:$0xf]
        %v2112 = vld [vmem:[%s2081 + $0xd0] sm:$0xf]
        %v2113 = vld [vmem:[%s2081 + $0xd4] sm:$0xf]
        %v2138 = vrot.slane %v2082, 6
        %v2139 = vrot.slane %v2138, 4
        %v2140 = vrot.slane %v2083, 6
        %v2141 = vsel %vm697, %v2139, %v2140
        %v2142 = vrot.slane %v2140, 4
        %v2143 = vrot.slane %v2084, 6
        %v2144 = vsel %vm697, %v2142, %v2143
        %v2145 = vrot.slane %v2086, 6
        %v2146 = vrot.slane %v2145, 4
        %v2147 = vrot.slane %v2087, 6
        %v2148 = vsel %vm697, %v2146, %v2147
        %v2149 = vrot.slane %v2147, 4
        %v2150 = vrot.slane %v2088, 6
        %v2151 = vsel %vm697, %v2149, %v2150
        %v2152 = vrot.slane %v2090, 6
        %v2153 = vrot.slane %v2152, 4
        %v2154 = vrot.slane %v2091, 6
        %v2155 = vsel %vm697, %v2153, %v2154
        %v2156 = vrot.slane %v2154, 4
        %v2157 = vrot.slane %v2092, 6
        %v2158 = vsel %vm697, %v2156, %v2157
        %v2159 = vrot.slane %v2094, 6
        %v2160 = vrot.slane %v2159, 4
        %v2161 = vrot.slane %v2095, 6
        %v2162 = vsel %vm697, %v2160, %v2161
        %v2163 = vrot.slane %v2161, 4
        %v2164 = vrot.slane %v2096, 6
        %v2165 = vsel %vm697, %v2163, %v2164
        %v2166 = vrot.slane %v2098, 6
        %v2167 = vrot.slane %v2166, 4
        %v2168 = vrot.slane %v2099, 6
        %v2169 = vsel %vm697, %v2167, %v2168
        %v2170 = vrot.slane %v2168, 4
        %v2171 = vrot.slane %v2100, 6
        %v2172 = vsel %vm697, %v2170, %v2171
        %v2173 = vrot.slane %v2102, 6
        %v2174 = vrot.slane %v2173, 4
        %v2175 = vrot.slane %v2103, 6
        %v2176 = vsel %vm697, %v2174, %v2175
        %v2177 = vrot.slane %v2175, 4
        %v2178 = vrot.slane %v2104, 6
        %v2179 = vsel %vm697, %v2177, %v2178
        %v2180 = vrot.slane %v2106, 6
        %v2181 = vrot.slane %v2180, 4
        %v2182 = vrot.slane %v2107, 6
        %v2183 = vsel %vm697, %v2181, %v2182
        %v2184 = vrot.slane %v2182, 4
        %v2185 = vrot.slane %v2108, 6
        %v2186 = vsel %vm697, %v2184, %v2185
        %v2187 = vrot.slane %v2110, 6
        %v2188 = vrot.slane %v2187, 4
        %v2189 = vrot.slane %v2111, 6
        %v2190 = vsel %vm697, %v2188, %v2189
        %v2191 = vrot.slane %v2189, 4
        %v2192 = vrot.slane %v2112, 6
        %v2193 = vsel %vm697, %v2191, %v2192
        %s2194 = scalar_lea.vmem %s1, 448
        %v2195 = vld [vmem:[%s2194] sm:$0xf]
        %v2196 = vld [vmem:[%s2194 + $0x4] sm:$0xf]
        %v2197 = vld [vmem:[%s2194 + $0x8] sm:$0xf]
        %v2198 = vld [vmem:[%s2194 + $0xc] sm:$0xf]
        %v2199 = vld [vmem:[%s2194 + $0x10] sm:$0xf]
        %v2200 = vld [vmem:[%s2194 + $0x14] sm:$0xf]
        %v2201 = vld [vmem:[%s2194 + $0x18] sm:$0xf]
        %v2202 = vld [vmem:[%s2194 + $0x1c] sm:$0xf]
        %v2203 = vld [vmem:[%s2194 + $0x20] sm:$0xf]
        %v2204 = vld [vmem:[%s2194 + $0x24] sm:$0xf]
        %v2205 = vld [vmem:[%s2194 + $0x28] sm:$0xf]
        %v2206 = vld [vmem:[%s2194 + $0x2c] sm:$0xf]
        %v2207 = vld [vmem:[%s2194 + $0x30] sm:$0xf]
        %v2208 = vld [vmem:[%s2194 + $0x34] sm:$0xf]
        %v2209 = vld [vmem:[%s2194 + $0x38] sm:$0xf]
        %v2210 = vld [vmem:[%s2194 + $0x3c] sm:$0xf]
        %v2211 = vunpack.c.l.b16 %v2141
        %v2212 = vunpack.c.l.b16 %v2144
        %v2213 = vunpack.c.l.b16 %v2148
        %v2214 = vunpack.c.l.b16 %v2151
        %v2215 = vunpack.c.l.b16 %v2155
        %v2216 = vunpack.c.l.b16 %v2158
        %v2217 = vunpack.c.l.b16 %v2162
        %v2218 = vunpack.c.l.b16 %v2165
        %v2219 = vunpack.c.l.b16 %v2169
        %v2220 = vunpack.c.l.b16 %v2172
        %v2221 = vunpack.c.l.b16 %v2176
        %v2222 = vunpack.c.l.b16 %v2179
        %v2223 = vunpack.c.l.b16 %v2183
        %v2224 = vunpack.c.l.b16 %v2186
        %v2225 = vunpack.c.l.b16 %v2190
        %v2226 = vunpack.c.l.b16 %v2193
        %v2227 = vpack.c.b16 %v2212, %v2211
        %v2228 = vpack.c.b16 %v2214, %v2213
        %v2229 = vpack.c.b16 %v2216, %v2215
        %v2230 = vpack.c.b16 %v2218, %v2217
        %v2231 = vpack.c.b16 %v2220, %v2219
        %v2232 = vpack.c.b16 %v2222, %v2221
        %v2233 = vpack.c.b16 %v2224, %v2223
        %v2234 = vpack.c.b16 %v2226, %v2225
        %v2259 = vunpack.c.l.b16 %v2195
        %v2260 = vunpack.c.l.b16 %v2196
        %v2261 = vunpack.c.l.b16 %v2197
        %v2262 = vunpack.c.l.b16 %v2198
        %v2263 = vunpack.c.l.b16 %v2199
        %v2264 = vunpack.c.l.b16 %v2200
        %v2265 = vunpack.c.l.b16 %v2201
        %v2266 = vunpack.c.l.b16 %v2202
        %v2267 = vunpack.c.l.b16 %v2203
        %v2268 = vunpack.c.l.b16 %v2204
        %v2269 = vunpack.c.l.b16 %v2205
        %v2270 = vunpack.c.l.b16 %v2206
        %v2271 = vunpack.c.l.b16 %v2207
        %v2272 = vunpack.c.l.b16 %v2208
        %v2273 = vunpack.c.l.b16 %v2209
        %v2274 = vunpack.c.l.b16 %v2210
        %v2275 = vpack.c.b16 %v2260, %v2259
        %v2276 = vpack.c.b16 %v2262, %v2261
        %v2277 = vpack.c.b16 %v2264, %v2263
        %v2278 = vpack.c.b16 %v2266, %v2265
        %v2279 = vpack.c.b16 %v2268, %v2267
        %v2280 = vpack.c.b16 %v2270, %v2269
        %v2281 = vpack.c.b16 %v2272, %v2271
        %v2282 = vpack.c.b16 %v2274, %v2273
        %2291 = vmatprep.subr.bf16.mxu0 0
        %2292 = vmatpush1.bf16.msra.mxu0 %v2275
        %2293 = vmatprep.subr.bf16.mxu0 0
        %2294 = vmatpush1.bf16.msra.mxu0 %v2276
        %2295 = vmatprep.subr.bf16.mxu0 0
        %2296 = vmatpush1.bf16.msra.mxu0 %v2277
        %2297 = vmatprep.subr.bf16.mxu0 0
        %2298 = vmatpush1.bf16.msra.mxu0 %v2278
        %2299 = vmatprep.subr.bf16.mxu0 0
        %2300 = vmatpush1.bf16.msra.mxu0 %v2279
        %2301 = vmatprep.subr.bf16.mxu0 0
        %2302 = vmatpush1.bf16.msra.mxu0 %v2280
        %2303 = vmatprep.subr.bf16.mxu0 0
        %2304 = vmatpush1.bf16.msra.mxu0 %v2281
        %2305 = vmatprep.subr.bf16.mxu0 0
        %2306 = vmatpush1.bf16.msra.mxu0 %v2282
        %2307 = vmatprep.subr.bf16.mxu0 0
        %2308 = vmatpush1.bf16.msra.mxu0 0
        %2309 = vmatprep.subr.bf16.mxu0 0
        %2310 = vmatpush1.bf16.msra.mxu0 0
        %2311 = vmatprep.subr.bf16.mxu0 0
        %2312 = vmatpush1.bf16.msra.mxu0 0
        %2313 = vmatprep.subr.bf16.mxu0 0
        %2314 = vmatpush1.bf16.msra.mxu0 0
        %2315 = vmatprep.subr.bf16.mxu0 0
        %2316 = vmatpush1.bf16.msra.mxu0 0
        %2317 = vmatprep.subr.bf16.mxu0 0
        %2318 = vmatpush1.bf16.msra.mxu0 0
        %2319 = vmatprep.subr.bf16.mxu0 0
        %2320 = vmatpush1.bf16.msra.mxu0 0
        %2321 = vmatprep.subr.bf16.mxu0 0
        %2322 = vmatpush1.bf16.msra.mxu0 0
        %2323 = vmatprep.mubr.bf16.mxu0 0
        %2324 = vmatmul.mubr.bf16.gmra.mrb[0].mxu0 %v2227
        %v2325 = vpop.f32.mrb[0].mxu0
        %v2326 = vadd.f32 0.0, %v2325
        %v2327 = vpop.f32.mrb[0].mxu0
        %v2328 = vpop.f32.mrb[0].mxu0
        %v2329 = vadd.f32 0.0, %v2328
        %v2330 = vpop.f32.mrb[0].mxu0
        %2331 = vmatprep.mubr.bf16.mxu0 0
        %2332 = vmatmul.mubr.bf16.gmra.mrb[0].mxu0 %v2228
        %v2333 = vpop.f32.mrb[0].mxu0
        %v2334 = vadd.f32 0.0, %v2333
        %v2335 = vpop.f32.mrb[0].mxu0
        %v2336 = vpop.f32.mrb[0].mxu0
        %v2337 = vadd.f32 0.0, %v2336
        %v2338 = vpop.f32.mrb[0].mxu0
        %2339 = vmatprep.mubr.bf16.mxu0 0
        %2340 = vmatmul.mubr.bf16.gmra.mrb[0].mxu0 %v2229
        %v2341 = vpop.f32.mrb[0].mxu0
        %v2342 = vadd.f32 0.0, %v2341
        %v2343 = vpop.f32.mrb[0].mxu0
        %v2344 = vpop.f32.mrb[0].mxu0
        %v2345 = vadd.f32 0.0, %v2344
        %v2346 = vpop.f32.mrb[0].mxu0
        %2347 = vmatprep.mubr.bf16.mxu0 0
        %2348 = vmatmul.mubr.bf16.gmra.mrb[0].mxu0 %v2230
        %v2349 = vpop.f32.mrb[0].mxu0
        %v2350 = vadd.f32 0.0, %v2349
        %v2351 = vpop.f32.mrb[0].mxu0
        %v2352 = vpop.f32.mrb[0].mxu0
        %v2353 = vadd.f32 0.0, %v2352
        %v2354 = vpop.f32.mrb[0].mxu0
        %2355 = vmatprep.mubr.bf16.mxu0 0
        %2356 = vmatmul.mubr.bf16.gmra.mrb[0].mxu0 %v2231
        %v2357 = vpop.f32.mrb[0].mxu0
        %v2358 = vadd.f32 0.0, %v2357
        %v2359 = vpop.f32.mrb[0].mxu0
        %v2360 = vpop.f32.mrb[0].mxu0
        %v2361 = vadd.f32 0.0, %v2360
        %v2362 = vpop.f32.mrb[0].mxu0
        %2363 = vmatprep.mubr.bf16.mxu0 0
        %2364 = vmatmul.mubr.bf16.gmra.mrb[0].mxu0 %v2232
        %v2365 = vpop.f32.mrb[0].mxu0
        %v2366 = vadd.f32 0.0, %v2365
        %v2367 = vpop.f32.mrb[0].mxu0
        %v2368 = vpop.f32.mrb[0].mxu0
        %v2369 = vadd.f32 0.0, %v2368
        %v2370 = vpop.f32.mrb[0].mxu0
        %2371 = vmatprep.mubr.bf16.mxu0 0
        %2372 = vmatmul.mubr.bf16.gmra.mrb[0].mxu0 %v2233
        %v2373 = vpop.f32.mrb[0].mxu0
        %v2374 = vadd.f32 0.0, %v2373
        %v2375 = vpop.f32.mrb[0].mxu0
        %v2376 = vpop.f32.mrb[0].mxu0
        %v2377 = vadd.f32 0.0, %v2376
        %v2378 = vpop.f32.mrb[0].mxu0
        %2379 = vmatprep.mubr.bf16.mxu0 0
        %2380 = vmatmul.mubr.bf16.gmra.mrb[0].mxu0 %v2234
        %v2381 = vpop.f32.mrb[0].mxu0
        %v2382 = vadd.f32 0.0, %v2381
        %v2383 = vpop.f32.mrb[0].mxu0
        %v2384 = vpop.f32.mrb[0].mxu0
        %v2385 = vadd.f32 0.0, %v2384
        %v2386 = vpop.f32.mrb[0].mxu0
        %2387 = vdwg.mxu0
        %v2388 = vadd.f32 %v2062, %v2326
        %v2389 = vadd.f32 %v2063, %v2329
        %v2390 = vadd.f32 %v2064, %v2334
        %v2391 = vadd.f32 %v2065, %v2337
        %v2392 = vadd.f32 %v2066, %v2342
        %v2393 = vadd.f32 %v2067, %v2345
        %v2394 = vadd.f32 %v2068, %v2350
        %v2395 = vadd.f32 %v2069, %v2353
        %v2396 = vadd.f32 %v2070, %v2358
        %v2397 = vadd.f32 %v2071, %v2361
        %v2398 = vadd.f32 %v2072, %v2366
        %v2399 = vadd.f32 %v2073, %v2369
        %v2400 = vadd.f32 %v2074, %v2374
        %v2401 = vadd.f32 %v2075, %v2377
        %v2402 = vadd.f32 %v2076, %v2382
        %v2403 = vadd.f32 %v2077, %v2385
        %v2412 = vrot.slane %v2083, 5
        %v2413 = vrot.slane %v2412, 4
        %v2414 = vrot.slane %v2084, 5
        %v2415 = vsel %vm340, %v2413, %v2414
        %v2416 = vrot.slane %v2414, 4
        %v2417 = vrot.slane %v2085, 5
        %v2418 = vsel %vm340, %v2416, %v2417
        %v2419 = vrot.slane %v2087, 5
        %v2420 = vrot.slane %v2419, 4
        %v2421 = vrot.slane %v2088, 5
        %v2422 = vsel %vm340, %v2420, %v2421
        %v2423 = vrot.slane %v2421, 4
        %v2424 = vrot.slane %v2089, 5
        %v2425 = vsel %vm340, %v2423, %v2424
        %v2426 = vrot.slane %v2091, 5
        %v2427 = vrot.slane %v2426, 4
        %v2428 = vrot.slane %v2092, 5
        %v2429 = vsel %vm340, %v2427, %v2428
        %v2430 = vrot.slane %v2428, 4
        %v2431 = vrot.slane %v2093, 5
        %v2432 = vsel %vm340, %v2430, %v2431
        %v2433 = vrot.slane %v2095, 5
        %v2434 = vrot.slane %v2433, 4
        %v2435 = vrot.slane %v2096, 5
        %v2436 = vsel %vm340, %v2434, %v2435
        %v2437 = vrot.slane %v2435, 4
        %v2438 = vrot.slane %v2097, 5
        %v2439 = vsel %vm340, %v2437, %v2438
        %v2440 = vrot.slane %v2099, 5
        %v2441 = vrot.slane %v2440, 4
        %v2442 = vrot.slane %v2100, 5
        %v2443 = vsel %vm340, %v2441, %v2442
        %v2444 = vrot.slane %v2442, 4
        %v2445 = vrot.slane %v2101, 5
        %v2446 = vsel %vm340, %v2444, %v2445
        %v2447 = vrot.slane %v2103, 5
        %v2448 = vrot.slane %v2447, 4
        %v2449 = vrot.slane %v2104, 5
        %v2450 = vsel %vm340, %v2448, %v2449
        %v2451 = vrot.slane %v2449, 4
        %v2452 = vrot.slane %v2105, 5
        %v2453 = vsel %vm340, %v2451, %v2452
        %v2454 = vrot.slane %v2107, 5
        %v2455 = vrot.slane %v2454, 4
        %v2456 = vrot.slane %v2108, 5
        %v2457 = vsel %vm340, %v2455, %v2456
        %v2458 = vrot.slane %v2456, 4
        %v2459 = vrot.slane %v2109, 5
        %v2460 = vsel %vm340, %v2458, %v2459
        %v2461 = vrot.slane %v2111, 5
        %v2462 = vrot.slane %v2461, 4
        %v2463 = vrot.slane %v2112, 5
        %v2464 = vsel %vm340, %v2462, %v2463
        %v2465 = vrot.slane %v2463, 4
        %v2466 = vrot.slane %v2113, 5
        %v2467 = vsel %vm340, %v2465, %v2466
        %s2468 = scalar_lea.vmem %s1, 512
        %v2469 = vld [vmem:[%s2468] sm:$0xf]
        %v2470 = vld [vmem:[%s2468 + $0x4] sm:$0xf]
        %v2471 = vld [vmem:[%s2468 + $0x8] sm:$0xf]
        %v2472 = vld [vmem:[%s2468 + $0xc] sm:$0xf]
        %v2473 = vld [vmem:[%s2468 + $0x10] sm:$0xf]
        %v2474 = vld [vmem:[%s2468 + $0x14] sm:$0xf]
        %v2475 = vld [vmem:[%s2468 + $0x18] sm:$0xf]
        %v2476 = vld [vmem:[%s2468 + $0x1c] sm:$0xf]
        %v2477 = vld [vmem:[%s2468 + $0x20] sm:$0xf]
        %v2478 = vld [vmem:[%s2468 + $0x24] sm:$0xf]
        %v2479 = vld [vmem:[%s2468 + $0x28] sm:$0xf]
        %v2480 = vld [vmem:[%s2468 + $0x2c] sm:$0xf]
        %v2481 = vld [vmem:[%s2468 + $0x30] sm:$0xf]
        %v2482 = vld [vmem:[%s2468 + $0x34] sm:$0xf]
        %v2483 = vld [vmem:[%s2468 + $0x38] sm:$0xf]
        %v2484 = vld [vmem:[%s2468 + $0x3c] sm:$0xf]
        %v2485 = vunpack.c.l.b16 %v2415
        %v2486 = vunpack.c.l.b16 %v2418
        %v2487 = vunpack.c.l.b16 %v2422
        %v2488 = vunpack.c.l.b16 %v2425
        %v2489 = vunpack.c.l.b16 %v2429
        %v2490 = vunpack.c.l.b16 %v2432
        %v2491 = vunpack.c.l.b16 %v2436
        %v2492 = vunpack.c.l.b16 %v2439
        %v2493 = vunpack.c.l.b16 %v2443
        %v2494 = vunpack.c.l.b16 %v2446
        %v2495 = vunpack.c.l.b16 %v2450
        %v2496 = vunpack.c.l.b16 %v2453
        %v2497 = vunpack.c.l.b16 %v2457
        %v2498 = vunpack.c.l.b16 %v2460
        %v2499 = vunpack.c.l.b16 %v2464
        %v2500 = vunpack.c.l.b16 %v2467
        %v2501 = vpack.c.b16 %v2486, %v2485
        %v2502 = vpack.c.b16 %v2488, %v2487
        %v2503 = vpack.c.b16 %v2490, %v2489
        %v2504 = vpack.c.b16 %v2492, %v2491
        %v2505 = vpack.c.b16 %v2494, %v2493
        %v2506 = vpack.c.b16 %v2496, %v2495
        %v2507 = vpack.c.b16 %v2498, %v2497
        %v2508 = vpack.c.b16 %v2500, %v2499
        %v2533 = vunpack.c.l.b16 %v2469
        %v2534 = vunpack.c.l.b16 %v2470
        %v2535 = vunpack.c.l.b16 %v2471
        %v2536 = vunpack.c.l.b16 %v2472
        %v2537 = vunpack.c.l.b16 %v2473
        %v2538 = vunpack.c.l.b16 %v2474
        %v2539 = vunpack.c.l.b16 %v2475
        %v2540 = vunpack.c.l.b16 %v2476
        %v2541 = vunpack.c.l.b16 %v2477
        %v2542 = vunpack.c.l.b16 %v2478
        %v2543 = vunpack.c.l.b16 %v2479
        %v2544 = vunpack.c.l.b16 %v2480
        %v2545 = vunpack.c.l.b16 %v2481
        %v2546 = vunpack.c.l.b16 %v2482
        %v2547 = vunpack.c.l.b16 %v2483
        %v2548 = vunpack.c.l.b16 %v2484
        %v2549 = vpack.c.b16 %v2534, %v2533
        %v2550 = vpack.c.b16 %v2536, %v2535
        %v2551 = vpack.c.b16 %v2538, %v2537
        %v2552 = vpack.c.b16 %v2540, %v2539
        %v2553 = vpack.c.b16 %v2542, %v2541
        %v2554 = vpack.c.b16 %v2544, %v2543
        %v2555 = vpack.c.b16 %v2546, %v2545
        %v2556 = vpack.c.b16 %v2548, %v2547
        %2565 = vmatprep.subr.bf16.mxu0 0
        %2566 = vmatpush1.bf16.msra.mxu0 %v2549
        %2567 = vmatprep.subr.bf16.mxu0 0
        %2568 = vmatpush1.bf16.msra.mxu0 %v2550
        %2569 = vmatprep.subr.bf16.mxu0 0
        %2570 = vmatpush1.bf16.msra.mxu0 %v2551
        %2571 = vmatprep.subr.bf16.mxu0 0
        %2572 = vmatpush1.bf16.msra.mxu0 %v2552
        %2573 = vmatprep.subr.bf16.mxu0 0
        %2574 = vmatpush1.bf16.msra.mxu0 %v2553
        %2575 = vmatprep.subr.bf16.mxu0 0
        %2576 = vmatpush1.bf16.msra.mxu0 %v2554
        %2577 = vmatprep.subr.bf16.mxu0 0
        %2578 = vmatpush1.bf16.msra.mxu0 %v2555
        %2579 = vmatprep.subr.bf16.mxu0 0
        %2580 = vmatpush1.bf16.msra.mxu0 %v2556
        %2581 = vmatprep.subr.bf16.mxu0 0
        %2582 = vmatpush1.bf16.msra.mxu0 0
        %2583 = vmatprep.subr.bf16.mxu0 0
        %2584 = vmatpush1.bf16.msra.mxu0 0
        %2585 = vmatprep.subr.bf16.mxu0 0
        %2586 = vmatpush1.bf16.msra.mxu0 0
        %2587 = vmatprep.subr.bf16.mxu0 0
        %2588 = vmatpush1.bf16.msra.mxu0 0
        %2589 = vmatprep.subr.bf16.mxu0 0
        %2590 = vmatpush1.bf16.msra.mxu0 0
        %2591 = vmatprep.subr.bf16.mxu0 0
        %2592 = vmatpush1.bf16.msra.mxu0 0
        %2593 = vmatprep.subr.bf16.mxu0 0
        %2594 = vmatpush1.bf16.msra.mxu0 0
        %2595 = vmatprep.subr.bf16.mxu0 0
        %2596 = vmatpush1.bf16.msra.mxu0 0
        %2597 = vmatprep.mubr.bf16.mxu0 0
        %2598 = vmatmul.mubr.bf16.gmra.mrb[0].mxu0 %v2501
        %v2599 = vpop.f32.mrb[0].mxu0
        %v2600 = vadd.f32 0.0, %v2599
        %v2601 = vpop.f32.mrb[0].mxu0
        %v2602 = vpop.f32.mrb[0].mxu0
        %v2603 = vadd.f32 0.0, %v2602
        %v2604 = vpop.f32.mrb[0].mxu0
        %2605 = vmatprep.mubr.bf16.mxu0 0
        %2606 = vmatmul.mubr.bf16.gmra.mrb[0].mxu0 %v2502
        %v2607 = vpop.f32.mrb[0].mxu0
        %v2608 = vadd.f32 0.0, %v2607
        %v2609 = vpop.f32.mrb[0].mxu0
        %v2610 = vpop.f32.mrb[0].mxu0
        %v2611 = vadd.f32 0.0, %v2610
        %v2612 = vpop.f32.mrb[0].mxu0
        %2613 = vmatprep.mubr.bf16.mxu0 0
        %2614 = vmatmul.mubr.bf16.gmra.mrb[0].mxu0 %v2503
        %v2615 = vpop.f32.mrb[0].mxu0
        %v2616 = vadd.f32 0.0, %v2615
        %v2617 = vpop.f32.mrb[0].mxu0
        %v2618 = vpop.f32.mrb[0].mxu0
        %v2619 = vadd.f32 0.0, %v2618
        %v2620 = vpop.f32.mrb[0].mxu0
        %2621 = vmatprep.mubr.bf16.mxu0 0
        %2622 = vmatmul.mubr.bf16.gmra.mrb[0].mxu0 %v2504
        %v2623 = vpop.f32.mrb[0].mxu0
        %v2624 = vadd.f32 0.0, %v2623
        %v2625 = vpop.f32.mrb[0].mxu0
        %v2626 = vpop.f32.mrb[0].mxu0
        %v2627 = vadd.f32 0.0, %v2626
        %v2628 = vpop.f32.mrb[0].mxu0
        %2629 = vmatprep.mubr.bf16.mxu0 0
        %2630 = vmatmul.mubr.bf16.gmra.mrb[0].mxu0 %v2505
        %v2631 = vpop.f32.mrb[0].mxu0
        %v2632 = vadd.f32 0.0, %v2631
        %v2633 = vpop.f32.mrb[0].mxu0
        %v2634 = vpop.f32.mrb[0].mxu0
        %v2635 = vadd.f32 0.0, %v2634
        %v2636 = vpop.f32.mrb[0].mxu0
        %2637 = vmatprep.mubr.bf16.mxu0 0
        %2638 = vmatmul.mubr.bf16.gmra.mrb[0].mxu0 %v2506
        %v2639 = vpop.f32.mrb[0].mxu0
        %v2640 = vadd.f32 0.0, %v2639
        %v2641 = vpop.f32.mrb[0].mxu0
        %v2642 = vpop.f32.mrb[0].mxu0
        %v2643 = vadd.f32 0.0, %v2642
        %v2644 = vpop.f32.mrb[0].mxu0
        %2645 = vmatprep.mubr.bf16.mxu0 0
        %2646 = vmatmul.mubr.bf16.gmra.mrb[0].mxu0 %v2507
        %v2647 = vpop.f32.mrb[0].mxu0
        %v2648 = vadd.f32 0.0, %v2647
        %v2649 = vpop.f32.mrb[0].mxu0
        %v2650 = vpop.f32.mrb[0].mxu0
        %v2651 = vadd.f32 0.0, %v2650
        %v2652 = vpop.f32.mrb[0].mxu0
        %2653 = vmatprep.mubr.bf16.mxu0 0
        %2654 = vmatmul.mubr.bf16.gmra.mrb[0].mxu0 %v2508
        %v2655 = vpop.f32.mrb[0].mxu0
        %v2656 = vadd.f32 0.0, %v2655
        %v2657 = vpop.f32.mrb[0].mxu0
        %v2658 = vpop.f32.mrb[0].mxu0
        %v2659 = vadd.f32 0.0, %v2658
        %v2660 = vpop.f32.mrb[0].mxu0
        %2661 = vdwg.mxu0
        %v2662 = vadd.f32 %v2388, %v2600
        %v2663 = vadd.f32 %v2389, %v2603
        %v2664 = vadd.f32 %v2390, %v2608
        %v2665 = vadd.f32 %v2391, %v2611
        %v2666 = vadd.f32 %v2392, %v2616
        %v2667 = vadd.f32 %v2393, %v2619
        %v2668 = vadd.f32 %v2394, %v2624
        %v2669 = vadd.f32 %v2395, %v2627
        %v2670 = vadd.f32 %v2396, %v2632
        %v2671 = vadd.f32 %v2397, %v2635
        %v2672 = vadd.f32 %v2398, %v2640
        %v2673 = vadd.f32 %v2399, %v2643
        %v2674 = vadd.f32 %v2400, %v2648
        %v2675 = vadd.f32 %v2401, %v2651
        %v2676 = vadd.f32 %v2402, %v2656
        %v2677 = vadd.f32 %v2403, %v2659
        %s2678 = scalar_lea.vmem %s1, 576
        %v2679 = vld [vmem:[%s2678] sm:$0xf]
        %v2680 = vld [vmem:[%s2678 + $0x4] sm:$0xf]
        %v2681 = vld [vmem:[%s2678 + $0x8] sm:$0xf]
        %v2682 = vld [vmem:[%s2678 + $0xc] sm:$0xf]
        %v2683 = vld [vmem:[%s2678 + $0x10] sm:$0xf]
        %v2684 = vld [vmem:[%s2678 + $0x14] sm:$0xf]
        %v2685 = vld [vmem:[%s2678 + $0x18] sm:$0xf]
        %v2686 = vld [vmem:[%s2678 + $0x1c] sm:$0xf]
        %v2687 = vld [vmem:[%s2678 + $0x20] sm:$0xf]
        %v2688 = vld [vmem:[%s2678 + $0x24] sm:$0xf]
        %v2689 = vld [vmem:[%s2678 + $0x28] sm:$0xf]
        %v2690 = vld [vmem:[%s2678 + $0x2c] sm:$0xf]
        %v2691 = vld [vmem:[%s2678 + $0x30] sm:$0xf]
        %v2692 = vld [vmem:[%s2678 + $0x34] sm:$0xf]
        %v2693 = vld [vmem:[%s2678 + $0x38] sm:$0xf]
        %v2694 = vld [vmem:[%s2678 + $0x3c] sm:$0xf]
        %v2695 = vunpack.c.l.b16 %v2084
        %v2696 = vunpack.c.l.b16 %v2085
        %v2697 = vunpack.c.l.b16 %v2088
        %v2698 = vunpack.c.l.b16 %v2089
        %v2699 = vunpack.c.l.b16 %v2092
        %v2700 = vunpack.c.l.b16 %v2093
        %v2701 = vunpack.c.l.b16 %v2096
        %v2702 = vunpack.c.l.b16 %v2097
        %v2703 = vunpack.c.l.b16 %v2100
        %v2704 = vunpack.c.l.b16 %v2101
        %v2705 = vunpack.c.l.b16 %v2104
        %v2706 = vunpack.c.l.b16 %v2105
        %v2707 = vunpack.c.l.b16 %v2108
        %v2708 = vunpack.c.l.b16 %v2109
        %v2709 = vunpack.c.l.b16 %v2112
        %v2710 = vunpack.c.l.b16 %v2113
        %v2711 = vpack.c.b16 %v2696, %v2695
        %v2712 = vpack.c.b16 %v2698, %v2697
        %v2713 = vpack.c.b16 %v2700, %v2699
        %v2714 = vpack.c.b16 %v2702, %v2701
        %v2715 = vpack.c.b16 %v2704, %v2703
        %v2716 = vpack.c.b16 %v2706, %v2705
        %v2717 = vpack.c.b16 %v2708, %v2707
        %v2718 = vpack.c.b16 %v2710, %v2709
        %v2743 = vunpack.c.l.b16 %v2679
        %v2744 = vunpack.c.l.b16 %v2680
        %v2745 = vunpack.c.l.b16 %v2681
        %v2746 = vunpack.c.l.b16 %v2682
        %v2747 = vunpack.c.l.b16 %v2683
        %v2748 = vunpack.c.l.b16 %v2684
        %v2749 = vunpack.c.l.b16 %v2685
        %v2750 = vunpack.c.l.b16 %v2686
        %v2751 = vunpack.c.l.b16 %v2687
        %v2752 = vunpack.c.l.b16 %v2688
        %v2753 = vunpack.c.l.b16 %v2689
        %v2754 = vunpack.c.l.b16 %v2690
        %v2755 = vunpack.c.l.b16 %v2691
        %v2756 = vunpack.c.l.b16 %v2692
        %v2757 = vunpack.c.l.b16 %v2693
        %v2758 = vunpack.c.l.b16 %v2694
        %v2759 = vpack.c.b16 %v2744, %v2743
        %v2760 = vpack.c.b16 %v2746, %v2745
        %v2761 = vpack.c.b16 %v2748, %v2747
        %v2762 = vpack.c.b16 %v2750, %v2749
        %v2763 = vpack.c.b16 %v2752, %v2751
        %v2764 = vpack.c.b16 %v2754, %v2753
        %v2765 = vpack.c.b16 %v2756, %v2755
        %v2766 = vpack.c.b16 %v2758, %v2757
        %2775 = vmatprep.subr.bf16.mxu0 0
        %2776 = vmatpush1.bf16.msra.mxu0 %v2759
        %2777 = vmatprep.subr.bf16.mxu0 0
        %2778 = vmatpush1.bf16.msra.mxu0 %v2760
        %2779 = vmatprep.subr.bf16.mxu0 0
        %2780 = vmatpush1.bf16.msra.mxu0 %v2761
        %2781 = vmatprep.subr.bf16.mxu0 0
        %2782 = vmatpush1.bf16.msra.mxu0 %v2762
        %2783 = vmatprep.subr.bf16.mxu0 0
        %2784 = vmatpush1.bf16.msra.mxu0 %v2763
        %2785 = vmatprep.subr.bf16.mxu0 0
        %2786 = vmatpush1.bf16.msra.mxu0 %v2764
        %2787 = vmatprep.subr.bf16.mxu0 0
        %2788 = vmatpush1.bf16.msra.mxu0 %v2765
        %2789 = vmatprep.subr.bf16.mxu0 0
        %2790 = vmatpush1.bf16.msra.mxu0 %v2766
        %2791 = vmatprep.subr.bf16.mxu0 0
        %2792 = vmatpush1.bf16.msra.mxu0 0
        %2793 = vmatprep.subr.bf16.mxu0 0
        %2794 = vmatpush1.bf16.msra.mxu0 0
        %2795 = vmatprep.subr.bf16.mxu0 0
        %2796 = vmatpush1.bf16.msra.mxu0 0
        %2797 = vmatprep.subr.bf16.mxu0 0
        %2798 = vmatpush1.bf16.msra.mxu0 0
        %2799 = vmatprep.subr.bf16.mxu0 0
        %2800 = vmatpush1.bf16.msra.mxu0 0
        %2801 = vmatprep.subr.bf16.mxu0 0
        %2802 = vmatpush1.bf16.msra.mxu0 0
        %2803 = vmatprep.subr.bf16.mxu0 0
        %2804 = vmatpush1.bf16.msra.mxu0 0
        %2805 = vmatprep.subr.bf16.mxu0 0
        %2806 = vmatpush1.bf16.msra.mxu0 0
        %2807 = vmatprep.mubr.bf16.mxu0 0
        %2808 = vmatmul.mubr.bf16.gmra.mrb[0].mxu0 %v2711
        %v2809 = vpop.f32.mrb[0].mxu0
        %v2810 = vadd.f32 0.0, %v2809
        %v2811 = vpop.f32.mrb[0].mxu0
        %v2812 = vpop.f32.mrb[0].mxu0
        %v2813 = vadd.f32 0.0, %v2812
        %v2814 = vpop.f32.mrb[0].mxu0
        %2815 = vmatprep.mubr.bf16.mxu0 0
        %2816 = vmatmul.mubr.bf16.gmra.mrb[0].mxu0 %v2712
        %v2817 = vpop.f32.mrb[0].mxu0
        %v2818 = vadd.f32 0.0, %v2817
        %v2819 = vpop.f32.mrb[0].mxu0
        %v2820 = vpop.f32.mrb[0].mxu0
        %v2821 = vadd.f32 0.0, %v2820
        %v2822 = vpop.f32.mrb[0].mxu0
        %2823 = vmatprep.mubr.bf16.mxu0 0
        %2824 = vmatmul.mubr.bf16.gmra.mrb[0].mxu0 %v2713
        %v2825 = vpop.f32.mrb[0].mxu0
        %v2826 = vadd.f32 0.0, %v2825
        %v2827 = vpop.f32.mrb[0].mxu0
        %v2828 = vpop.f32.mrb[0].mxu0
        %v2829 = vadd.f32 0.0, %v2828
        %v2830 = vpop.f32.mrb[0].mxu0
        %2831 = vmatprep.mubr.bf16.mxu0 0
        %2832 = vmatmul.mubr.bf16.gmra.mrb[0].mxu0 %v2714
        %v2833 = vpop.f32.mrb[0].mxu0
        %v2834 = vadd.f32 0.0, %v2833
        %v2835 = vpop.f32.mrb[0].mxu0
        %v2836 = vpop.f32.mrb[0].mxu0
        %v2837 = vadd.f32 0.0, %v2836
        %v2838 = vpop.f32.mrb[0].mxu0
        %2839 = vmatprep.mubr.bf16.mxu0 0
        %2840 = vmatmul.mubr.bf16.gmra.mrb[0].mxu0 %v2715
        %v2841 = vpop.f32.mrb[0].mxu0
        %v2842 = vadd.f32 0.0, %v2841
        %v2843 = vpop.f32.mrb[0].mxu0
        %v2844 = vpop.f32.mrb[0].mxu0
        %v2845 = vadd.f32 0.0, %v2844
        %v2846 = vpop.f32.mrb[0].mxu0
        %2847 = vmatprep.mubr.bf16.mxu0 0
        %2848 = vmatmul.mubr.bf16.gmra.mrb[0].mxu0 %v2716
        %v2849 = vpop.f32.mrb[0].mxu0
        %v2850 = vadd.f32 0.0, %v2849
        %v2851 = vpop.f32.mrb[0].mxu0
        %v2852 = vpop.f32.mrb[0].mxu0
        %v2853 = vadd.f32 0.0, %v2852
        %v2854 = vpop.f32.mrb[0].mxu0
        %2855 = vmatprep.mubr.bf16.mxu0 0
        %2856 = vmatmul.mubr.bf16.gmra.mrb[0].mxu0 %v2717
        %v2857 = vpop.f32.mrb[0].mxu0
        %v2858 = vadd.f32 0.0, %v2857
        %v2859 = vpop.f32.mrb[0].mxu0
        %v2860 = vpop.f32.mrb[0].mxu0
        %v2861 = vadd.f32 0.0, %v2860
        %v2862 = vpop.f32.mrb[0].mxu0
        %2863 = vmatprep.mubr.bf16.mxu0 0
        %2864 = vmatmul.mubr.bf16.gmra.mrb[0].mxu0 %v2718
        %v2865 = vpop.f32.mrb[0].mxu0
        %v2866 = vadd.f32 0.0, %v2865
        %v2867 = vpop.f32.mrb[0].mxu0
        %v2868 = vpop.f32.mrb[0].mxu0
        %v2869 = vadd.f32 0.0, %v2868
        %v2870 = vpop.f32.mrb[0].mxu0
        %2871 = vdwg.mxu0
        %v2872 = vadd.f32 %v2662, %v2810
        %v2873 = vadd.f32 %v2663, %v2813
        %v2874 = vadd.f32 %v2664, %v2818
        %v2875 = vadd.f32 %v2665, %v2821
        %v2876 = vadd.f32 %v2666, %v2826
        %v2877 = vadd.f32 %v2667, %v2829
        %v2878 = vadd.f32 %v2668, %v2834
        %v2879 = vadd.f32 %v2669, %v2837
        %v2880 = vadd.f32 %v2670, %v2842
        %v2881 = vadd.f32 %v2671, %v2845
        %v2882 = vadd.f32 %v2672, %v2850
        %v2883 = vadd.f32 %v2673, %v2853
        %v2884 = vadd.f32 %v2674, %v2858
        %v2885 = vadd.f32 %v2675, %v2861
        %v2886 = vadd.f32 %v2676, %v2866
        %v2887 = vadd.f32 %v2677, %v2869
        %v2888 = vld [vmem:[%s3 + $0x1] sm:$0x1]
        %v2889 = vlaneseq
        %v2890 = vshrl.u32 %v2889, 7
        %v2891 = vsub.s32 0, %v2890
        %v2892 = vrot.slane %v2888, %v2891
        %v2893 = vadd.f32 %v2872, %v2892
        %v2894 = vadd.f32 %v2873, %v2892
        %v2895 = vadd.f32 %v2874, %v2892
        %v2896 = vadd.f32 %v2875, %v2892
        %v2897 = vadd.f32 %v2876, %v2892
        %v2898 = vadd.f32 %v2877, %v2892
        %v2899 = vadd.f32 %v2878, %v2892
        %v2900 = vadd.f32 %v2879, %v2892
        %v2901 = vadd.f32 %v2880, %v2892
        %v2902 = vadd.f32 %v2881, %v2892
        %v2903 = vadd.f32 %v2882, %v2892
        %v2904 = vadd.f32 %v2883, %v2892
        %v2905 = vadd.f32 %v2884, %v2892
        %v2906 = vadd.f32 %v2885, %v2892
        %v2907 = vadd.f32 %v2886, %v2892
        %v2908 = vadd.f32 %v2887, %v2892
        %v2909 = vmax.f32 %v2893, 0.0
        %v2910 = vmax.f32 %v2894, 0.0
        %v2911 = vmax.f32 %v2895, 0.0
        %v2912 = vmax.f32 %v2896, 0.0
        %v2913 = vmax.f32 %v2897, 0.0
        %v2914 = vmax.f32 %v2898, 0.0
        %v2915 = vmax.f32 %v2899, 0.0
        %v2916 = vmax.f32 %v2900, 0.0
        %v2917 = vmax.f32 %v2901, 0.0
        %v2918 = vmax.f32 %v2902, 0.0
        %v2919 = vmax.f32 %v2903, 0.0
        %v2920 = vmax.f32 %v2904, 0.0
        %v2921 = vmax.f32 %v2905, 0.0
        %v2922 = vmax.f32 %v2906, 0.0
        %v2923 = vmax.f32 %v2907, 0.0
        %v2924 = vmax.f32 %v2908, 0.0
        %v2925 = vpack.c.bf16 %v2910, %v2909
        %v2926 = vpack.c.bf16 %v2912, %v2911
        %v2927 = vpack.c.bf16 %v2914, %v2913
        %v2928 = vpack.c.bf16 %v2916, %v2915
        %v2929 = vpack.c.bf16 %v2918, %v2917
        %v2930 = vpack.c.bf16 %v2920, %v2919
        %v2931 = vpack.c.bf16 %v2922, %v2921
        %v2932 = vpack.c.bf16 %v2924, %v2923
        %s2933 = scalar_lea.vmem %s2, 64
        %v2934 = vld [vmem:[%s2933] sm:$0xf]
        %v2935 = vld [vmem:[%s2933 + $0x4] sm:$0xf]
        %v2936 = vld [vmem:[%s2933 + $0x8] sm:$0xf]
        %v2937 = vld [vmem:[%s2933 + $0xc] sm:$0xf]
        %v2938 = vld [vmem:[%s2933 + $0x10] sm:$0xf]
        %v2939 = vld [vmem:[%s2933 + $0x14] sm:$0xf]
        %v2940 = vld [vmem:[%s2933 + $0x18] sm:$0xf]
        %v2941 = vld [vmem:[%s2933 + $0x1c] sm:$0xf]
        %v2942 = vld [vmem:[%s2933 + $0x20] sm:$0xf]
        %v2943 = vld [vmem:[%s2933 + $0x24] sm:$0xf]
        %v2944 = vld [vmem:[%s2933 + $0x28] sm:$0xf]
        %v2945 = vld [vmem:[%s2933 + $0x2c] sm:$0xf]
        %v2946 = vld [vmem:[%s2933 + $0x30] sm:$0xf]
        %v2947 = vld [vmem:[%s2933 + $0x34] sm:$0xf]
        %v2948 = vld [vmem:[%s2933 + $0x38] sm:$0xf]
        %v2949 = vld [vmem:[%s2933 + $0x3c] sm:$0xf]
        %v2966 = vunpack.c.l.b16 %v2934
        %v2967 = vunpack.c.l.b16 %v2935
        %v2968 = vunpack.c.l.b16 %v2936
        %v2969 = vunpack.c.l.b16 %v2937
        %v2970 = vunpack.c.l.b16 %v2938
        %v2971 = vunpack.c.l.b16 %v2939
        %v2972 = vunpack.c.l.b16 %v2940
        %v2973 = vunpack.c.l.b16 %v2941
        %v2974 = vunpack.c.l.b16 %v2942
        %v2975 = vunpack.c.l.b16 %v2943
        %v2976 = vunpack.c.l.b16 %v2944
        %v2977 = vunpack.c.l.b16 %v2945
        %v2978 = vunpack.c.l.b16 %v2946
        %v2979 = vunpack.c.l.b16 %v2947
        %v2980 = vunpack.c.l.b16 %v2948
        %v2981 = vunpack.c.l.b16 %v2949
        %v2982 = vpack.c.b16 %v2967, %v2966
        %v2983 = vpack.c.b16 %v2969, %v2968
        %v2984 = vpack.c.b16 %v2971, %v2970
        %v2985 = vpack.c.b16 %v2973, %v2972
        %v2986 = vpack.c.b16 %v2975, %v2974
        %v2987 = vpack.c.b16 %v2977, %v2976
        %v2988 = vpack.c.b16 %v2979, %v2978
        %v2989 = vpack.c.b16 %v2981, %v2980
        %2998 = vmatprep.subr.bf16.mxu0 0
        %2999 = vmatpush1.bf16.msra.mxu0 %v2982
        %3000 = vmatprep.subr.bf16.mxu0 0
        %3001 = vmatpush1.bf16.msra.mxu0 %v2983
        %3002 = vmatprep.subr.bf16.mxu0 0
        %3003 = vmatpush1.bf16.msra.mxu0 %v2984
        %3004 = vmatprep.subr.bf16.mxu0 0
        %3005 = vmatpush1.bf16.msra.mxu0 %v2985
        %3006 = vmatprep.subr.bf16.mxu0 0
        %3007 = vmatpush1.bf16.msra.mxu0 %v2986
        %3008 = vmatprep.subr.bf16.mxu0 0
        %3009 = vmatpush1.bf16.msra.mxu0 %v2987
        %3010 = vmatprep.subr.bf16.mxu0 0
        %3011 = vmatpush1.bf16.msra.mxu0 %v2988
        %3012 = vmatprep.subr.bf16.mxu0 0
        %3013 = vmatpush1.bf16.msra.mxu0 %v2989
        %3014 = vmatprep.subr.bf16.mxu0 0
        %3015 = vmatpush1.bf16.msra.mxu0 0
        %3016 = vmatprep.subr.bf16.mxu0 0
        %3017 = vmatpush1.bf16.msra.mxu0 0
        %3018 = vmatprep.subr.bf16.mxu0 0
        %3019 = vmatpush1.bf16.msra.mxu0 0
        %3020 = vmatprep.subr.bf16.mxu0 0
        %3021 = vmatpush1.bf16.msra.mxu0 0
        %3022 = vmatprep.subr.bf16.mxu0 0
        %3023 = vmatpush1.bf16.msra.mxu0 0
        %3024 = vmatprep.subr.bf16.mxu0 0
        %3025 = vmatpush1.bf16.msra.mxu0 0
        %3026 = vmatprep.subr.bf16.mxu0 0
        %3027 = vmatpush1.bf16.msra.mxu0 0
        %3028 = vmatprep.subr.bf16.mxu0 0
        %3029 = vmatpush1.bf16.msra.mxu0 0
        %3030 = vmatprep.mubr.bf16.mxu0 0
        %3031 = vmatmul.mubr.bf16.gmra.mrb[0].mxu0 %v2925
        %v3032 = vpop.f32.mrb[0].mxu0
        %v3033 = vadd.f32 0.0, %v3032
        %v3034 = vpop.f32.mrb[0].mxu0
        %v3035 = vpop.f32.mrb[0].mxu0
        %v3036 = vadd.f32 0.0, %v3035
        %v3037 = vpop.f32.mrb[0].mxu0
        %3038 = vmatprep.mubr.bf16.mxu0 0
        %3039 = vmatmul.mubr.bf16.gmra.mrb[0].mxu0 %v2926
        %v3040 = vpop.f32.mrb[0].mxu0
        %v3041 = vadd.f32 0.0, %v3040
        %v3042 = vpop.f32.mrb[0].mxu0
        %v3043 = vpop.f32.mrb[0].mxu0
        %v3044 = vadd.f32 0.0, %v3043
        %v3045 = vpop.f32.mrb[0].mxu0
        %3046 = vmatprep.mubr.bf16.mxu0 0
        %3047 = vmatmul.mubr.bf16.gmra.mrb[0].mxu0 %v2927
        %v3048 = vpop.f32.mrb[0].mxu0
        %v3049 = vadd.f32 0.0, %v3048
        %v3050 = vpop.f32.mrb[0].mxu0
        %v3051 = vpop.f32.mrb[0].mxu0
        %v3052 = vadd.f32 0.0, %v3051
        %v3053 = vpop.f32.mrb[0].mxu0
        %3054 = vmatprep.mubr.bf16.mxu0 0
        %3055 = vmatmul.mubr.bf16.gmra.mrb[0].mxu0 %v2928
        %v3056 = vpop.f32.mrb[0].mxu0
        %v3057 = vadd.f32 0.0, %v3056
        %v3058 = vpop.f32.mrb[0].mxu0
        %v3059 = vpop.f32.mrb[0].mxu0
        %v3060 = vadd.f32 0.0, %v3059
        %v3061 = vpop.f32.mrb[0].mxu0
        %3062 = vmatprep.mubr.bf16.mxu0 0
        %3063 = vmatmul.mubr.bf16.gmra.mrb[0].mxu0 %v2929
        %v3064 = vpop.f32.mrb[0].mxu0
        %v3065 = vadd.f32 0.0, %v3064
        %v3066 = vpop.f32.mrb[0].mxu0
        %v3067 = vpop.f32.mrb[0].mxu0
        %v3068 = vadd.f32 0.0, %v3067
        %v3069 = vpop.f32.mrb[0].mxu0
        %3070 = vmatprep.mubr.bf16.mxu0 0
        %3071 = vmatmul.mubr.bf16.gmra.mrb[0].mxu0 %v2930
        %v3072 = vpop.f32.mrb[0].mxu0
        %v3073 = vadd.f32 0.0, %v3072
        %v3074 = vpop.f32.mrb[0].mxu0
        %v3075 = vpop.f32.mrb[0].mxu0
        %v3076 = vadd.f32 0.0, %v3075
        %v3077 = vpop.f32.mrb[0].mxu0
        %3078 = vmatprep.mubr.bf16.mxu0 0
        %3079 = vmatmul.mubr.bf16.gmra.mrb[0].mxu0 %v2931
        %v3080 = vpop.f32.mrb[0].mxu0
        %v3081 = vadd.f32 0.0, %v3080
        %v3082 = vpop.f32.mrb[0].mxu0
        %v3083 = vpop.f32.mrb[0].mxu0
        %v3084 = vadd.f32 0.0, %v3083
        %v3085 = vpop.f32.mrb[0].mxu0
        %3086 = vmatprep.mubr.bf16.mxu0 0
        %3087 = vmatmul.mubr.bf16.gmra.mrb[0].mxu0 %v2932
        %v3088 = vpop.f32.mrb[0].mxu0
        %v3089 = vadd.f32 0.0, %v3088
        %v3090 = vpop.f32.mrb[0].mxu0
        %v3091 = vpop.f32.mrb[0].mxu0
        %v3092 = vadd.f32 0.0, %v3091
        %v3093 = vpop.f32.mrb[0].mxu0
        %3094 = vdwg.mxu0
        %v3111 = vunpack.c.l.b16 %v619
        %v3112 = vunpack.c.l.b16 %v620
        %v3113 = vunpack.c.l.b16 %v621
        %v3114 = vunpack.c.l.b16 %v622
        %v3115 = vunpack.c.l.b16 %v623
        %v3116 = vunpack.c.l.b16 %v624
        %v3117 = vunpack.c.l.b16 %v625
        %v3118 = vunpack.c.l.b16 %v626
        %v3119 = vunpack.c.l.b16 %v627
        %v3120 = vunpack.c.l.b16 %v628
        %v3121 = vunpack.c.l.b16 %v629
        %v3122 = vunpack.c.l.b16 %v630
        %v3123 = vunpack.c.l.b16 %v631
        %v3124 = vunpack.c.l.b16 %v632
        %v3125 = vunpack.c.l.b16 %v633
        %v3126 = vunpack.c.l.b16 %v634
        %v3127 = vpack.c.b16 %v3112, %v3111
        %v3128 = vpack.c.b16 %v3114, %v3113
        %v3129 = vpack.c.b16 %v3116, %v3115
        %v3130 = vpack.c.b16 %v3118, %v3117
        %v3131 = vpack.c.b16 %v3120, %v3119
        %v3132 = vpack.c.b16 %v3122, %v3121
        %v3133 = vpack.c.b16 %v3124, %v3123
        %v3134 = vpack.c.b16 %v3126, %v3125
        %3143 = vmatprep.subr.bf16.mxu0 0
        %3144 = vmatpush1.bf16.msra.mxu0 %v3127
        %3145 = vmatprep.subr.bf16.mxu0 0
        %3146 = vmatpush1.bf16.msra.mxu0 %v3128
        %3147 = vmatprep.subr.bf16.mxu0 0
        %3148 = vmatpush1.bf16.msra.mxu0 %v3129
        %3149 = vmatprep.subr.bf16.mxu0 0
        %3150 = vmatpush1.bf16.msra.mxu0 %v3130
        %3151 = vmatprep.subr.bf16.mxu0 0
        %3152 = vmatpush1.bf16.msra.mxu0 %v3131
        %3153 = vmatprep.subr.bf16.mxu0 0
        %3154 = vmatpush1.bf16.msra.mxu0 %v3132
        %3155 = vmatprep.subr.bf16.mxu0 0
        %3156 = vmatpush1.bf16.msra.mxu0 %v3133
        %3157 = vmatprep.subr.bf16.mxu0 0
        %3158 = vmatpush1.bf16.msra.mxu0 %v3134
        %3159 = vmatprep.subr.bf16.mxu0 0
        %3160 = vmatpush1.bf16.msra.mxu0 0
        %3161 = vmatprep.subr.bf16.mxu0 0
        %3162 = vmatpush1.bf16.msra.mxu0 0
        %3163 = vmatprep.subr.bf16.mxu0 0
        %3164 = vmatpush1.bf16.msra.mxu0 0
        %3165 = vmatprep.subr.bf16.mxu0 0
        %3166 = vmatpush1.bf16.msra.mxu0 0
        %3167 = vmatprep.subr.bf16.mxu0 0
        %3168 = vmatpush1.bf16.msra.mxu0 0
        %3169 = vmatprep.subr.bf16.mxu0 0
        %3170 = vmatpush1.bf16.msra.mxu0 0
        %3171 = vmatprep.subr.bf16.mxu0 0
        %3172 = vmatpush1.bf16.msra.mxu0 0
        %3173 = vmatprep.subr.bf16.mxu0 0
        %3174 = vmatpush1.bf16.msra.mxu0 0
        %3175 = vmatprep.mubr.bf16.mxu0 0
        %3176 = vmatmul.mubr.bf16.gmra.mrb[0].mxu0 %v611
        %v3177 = vpop.f32.mrb[0].mxu0
        %v3178 = vadd.f32 %v3033, %v3177
        %v3179 = vpop.f32.mrb[0].mxu0
        %v3180 = vpop.f32.mrb[0].mxu0
        %v3181 = vadd.f32 %v3036, %v3180
        %v3182 = vpop.f32.mrb[0].mxu0
        %3183 = vmatprep.mubr.bf16.mxu0 0
        %3184 = vmatmul.mubr.bf16.gmra.mrb[0].mxu0 %v612
        %v3185 = vpop.f32.mrb[0].mxu0
        %v3186 = vadd.f32 %v3041, %v3185
        %v3187 = vpop.f32.mrb[0].mxu0
        %v3188 = vpop.f32.mrb[0].mxu0
        %v3189 = vadd.f32 %v3044, %v3188
        %v3190 = vpop.f32.mrb[0].mxu0
        %3191 = vmatprep.mubr.bf16.mxu0 0
        %3192 = vmatmul.mubr.bf16.gmra.mrb[0].mxu0 %v613
        %v3193 = vpop.f32.mrb[0].mxu0
        %v3194 = vadd.f32 %v3049, %v3193
        %v3195 = vpop.f32.mrb[0].mxu0
        %v3196 = vpop.f32.mrb[0].mxu0
        %v3197 = vadd.f32 %v3052, %v3196
        %v3198 = vpop.f32.mrb[0].mxu0
        %3199 = vmatprep.mubr.bf16.mxu0 0
        %3200 = vmatmul.mubr.bf16.gmra.mrb[0].mxu0 %v614
        %v3201 = vpop.f32.mrb[0].mxu0
        %v3202 = vadd.f32 %v3057, %v3201
        %v3203 = vpop.f32.mrb[0].mxu0
        %v3204 = vpop.f32.mrb[0].mxu0
        %v3205 = vadd.f32 %v3060, %v3204
        %v3206 = vpop.f32.mrb[0].mxu0
        %3207 = vmatprep.mubr.bf16.mxu0 0
        %3208 = vmatmul.mubr.bf16.gmra.mrb[0].mxu0 %v615
        %v3209 = vpop.f32.mrb[0].mxu0
        %v3210 = vadd.f32 %v3065, %v3209
        %v3211 = vpop.f32.mrb[0].mxu0
        %v3212 = vpop.f32.mrb[0].mxu0
        %v3213 = vadd.f32 %v3068, %v3212
        %v3214 = vpop.f32.mrb[0].mxu0
        %3215 = vmatprep.mubr.bf16.mxu0 0
        %3216 = vmatmul.mubr.bf16.gmra.mrb[0].mxu0 %v616
        %v3217 = vpop.f32.mrb[0].mxu0
        %v3218 = vadd.f32 %v3073, %v3217
        %v3219 = vpop.f32.mrb[0].mxu0
        %v3220 = vpop.f32.mrb[0].mxu0
        %v3221 = vadd.f32 %v3076, %v3220
        %v3222 = vpop.f32.mrb[0].mxu0
        %3223 = vmatprep.mubr.bf16.mxu0 0
        %3224 = vmatmul.mubr.bf16.gmra.mrb[0].mxu0 %v617
        %v3225 = vpop.f32.mrb[0].mxu0
        %v3226 = vadd.f32 %v3081, %v3225
        %v3227 = vpop.f32.mrb[0].mxu0
        %v3228 = vpop.f32.mrb[0].mxu0
        %v3229 = vadd.f32 %v3084, %v3228
        %v3230 = vpop.f32.mrb[0].mxu0
        %3231 = vmatprep.mubr.bf16.mxu0 0
        %3232 = vmatmul.mubr.bf16.gmra.mrb[0].mxu0 %v618
        %v3233 = vpop.f32.mrb[0].mxu0
        %v3234 = vadd.f32 %v3089, %v3233
        %v3235 = vpop.f32.mrb[0].mxu0
        %v3236 = vpop.f32.mrb[0].mxu0
        %v3237 = vadd.f32 %v3092, %v3236
        %v3238 = vpop.f32.mrb[0].mxu0
        %3239 = vdwg.mxu0
        %s3240 = sadd.s32 %s253, 6
        %s3241 = smul.u32 %s3240, 7
        %s3242 = smul.addr %s3241, 4
        %s3243 = scalar_lea.vmem %s247, %s3242
        %v3244 = vld [vmem:[%s3243] sm:$0xf]
        %v3245 = vld [vmem:[%s3243 + $0x4] sm:$0xf]
        %v3246 = vld [vmem:[%s3243 + $0x8] sm:$0xf]
        %v3247 = vld [vmem:[%s3243 + $0xc] sm:$0xf]
        %v3248 = vld [vmem:[%s3243 + $0x10] sm:$0xf]
        %v3249 = vld [vmem:[%s3243 + $0x14] sm:$0xf]
        %v3250 = vld [vmem:[%s3243 + $0x1c] sm:$0xf]
        %v3251 = vld [vmem:[%s3243 + $0x20] sm:$0xf]
        %v3252 = vld [vmem:[%s3243 + $0x24] sm:$0xf]
        %v3253 = vld [vmem:[%s3243 + $0x28] sm:$0xf]
        %v3254 = vld [vmem:[%s3243 + $0x2c] sm:$0xf]
        %v3255 = vld [vmem:[%s3243 + $0x30] sm:$0xf]
        %v3256 = vld [vmem:[%s3243 + $0x38] sm:$0xf]
        %v3257 = vld [vmem:[%s3243 + $0x3c] sm:$0xf]
        %v3258 = vld [vmem:[%s3243 + $0x40] sm:$0xf]
        %v3259 = vld [vmem:[%s3243 + $0x44] sm:$0xf]
        %v3260 = vld [vmem:[%s3243 + $0x48] sm:$0xf]
        %v3261 = vld [vmem:[%s3243 + $0x4c] sm:$0xf]
        %v3262 = vld [vmem:[%s3243 + $0x54] sm:$0xf]
        %v3263 = vld [vmem:[%s3243 + $0x58] sm:$0xf]
        %v3264 = vld [vmem:[%s3243 + $0x5c] sm:$0xf]
        %v3265 = vld [vmem:[%s3243 + $0x60] sm:$0xf]
        %v3266 = vld [vmem:[%s3243 + $0x64] sm:$0xf]
        %v3267 = vld [vmem:[%s3243 + $0x68] sm:$0xf]
        %v3268 = vld [vmem:[%s3243 + $0x70] sm:$0xf]
        %v3269 = vld [vmem:[%s3243 + $0x74] sm:$0xf]
        %v3270 = vld [vmem:[%s3243 + $0x78] sm:$0xf]
        %v3271 = vld [vmem:[%s3243 + $0x7c] sm:$0xf]
        %v3272 = vld [vmem:[%s3243 + $0x80] sm:$0xf]
        %v3273 = vld [vmem:[%s3243 + $0x84] sm:$0xf]
        %v3274 = vld [vmem:[%s3243 + $0x8c] sm:$0xf]
        %v3275 = vld [vmem:[%s3243 + $0x90] sm:$0xf]
        %v3276 = vld [vmem:[%s3243 + $0x94] sm:$0xf]
        %v3277 = vld [vmem:[%s3243 + $0x98] sm:$0xf]
        %v3278 = vld [vmem:[%s3243 + $0x9c] sm:$0xf]
        %v3279 = vld [vmem:[%s3243 + $0xa0] sm:$0xf]
        %v3280 = vld [vmem:[%s3243 + $0xa8] sm:$0xf]
        %v3281 = vld [vmem:[%s3243 + $0xac] sm:$0xf]
        %v3282 = vld [vmem:[%s3243 + $0xb0] sm:$0xf]
        %v3283 = vld [vmem:[%s3243 + $0xb4] sm:$0xf]
        %v3284 = vld [vmem:[%s3243 + $0xb8] sm:$0xf]
        %v3285 = vld [vmem:[%s3243 + $0xbc] sm:$0xf]
        %v3286 = vld [vmem:[%s3243 + $0xc4] sm:$0xf]
        %v3287 = vld [vmem:[%s3243 + $0xc8] sm:$0xf]
        %v3288 = vld [vmem:[%s3243 + $0xcc] sm:$0xf]
        %v3289 = vld [vmem:[%s3243 + $0xd0] sm:$0xf]
        %v3290 = vld [vmem:[%s3243 + $0xd4] sm:$0xf]
        %v3291 = vld [vmem:[%s3243 + $0xd8] sm:$0xf]
        %vm3316 = vcmask 1040384
        %vm3317 = vcmask 1044484
        %vm3318 = vmor %vm3316, %vm3317
        %v3319 = vrot.slane %v3244, 7
        %v3320 = vrot.slane %v3319, 4
        %v3321 = vrot.slane %v3245, 7
        %v3322 = vsel %vm3318, %v3320, %v3321
        %v3323 = vrot.slane %v3321, 4
        %v3324 = vrot.slane %v3246, 7
        %v3325 = vsel %vm3318, %v3323, %v3324
        %v3326 = vrot.slane %v3250, 7
        %v3327 = vrot.slane %v3326, 4
        %v3328 = vrot.slane %v3251, 7
        %v3329 = vsel %vm3318, %v3327, %v3328
        %v3330 = vrot.slane %v3328, 4
        %v3331 = vrot.slane %v3252, 7
        %v3332 = vsel %vm3318, %v3330, %v3331
        %v3333 = vrot.slane %v3256, 7
        %v3334 = vrot.slane %v3333, 4
        %v3335 = vrot.slane %v3257, 7
        %v3336 = vsel %vm3318, %v3334, %v3335
        %v3337 = vrot.slane %v3335, 4
        %v3338 = vrot.slane %v3258, 7
        %v3339 = vsel %vm3318, %v3337, %v3338
        %v3340 = vrot.slane %v3262, 7
        %v3341 = vrot.slane %v3340, 4
        %v3342 = vrot.slane %v3263, 7
        %v3343 = vsel %vm3318, %v3341, %v3342
        %v3344 = vrot.slane %v3342, 4
        %v3345 = vrot.slane %v3264, 7
        %v3346 = vsel %vm3318, %v3344, %v3345
        %v3347 = vrot.slane %v3268, 7
        %v3348 = vrot.slane %v3347, 4
        %v3349 = vrot.slane %v3269, 7
        %v3350 = vsel %vm3318, %v3348, %v3349
        %v3351 = vrot.slane %v3349, 4
        %v3352 = vrot.slane %v3270, 7
        %v3353 = vsel %vm3318, %v3351, %v3352
        %v3354 = vrot.slane %v3274, 7
        %v3355 = vrot.slane %v3354, 4
        %v3356 = vrot.slane %v3275, 7
        %v3357 = vsel %vm3318, %v3355, %v3356
        %v3358 = vrot.slane %v3356, 4
        %v3359 = vrot.slane %v3276, 7
        %v3360 = vsel %vm3318, %v3358, %v3359
        %v3361 = vrot.slane %v3280, 7
        %v3362 = vrot.slane %v3361, 4
        %v3363 = vrot.slane %v3281, 7
        %v3364 = vsel %vm3318, %v3362, %v3363
        %v3365 = vrot.slane %v3363, 4
        %v3366 = vrot.slane %v3282, 7
        %v3367 = vsel %vm3318, %v3365, %v3366
        %v3368 = vrot.slane %v3286, 7
        %v3369 = vrot.slane %v3368, 4
        %v3370 = vrot.slane %v3287, 7
        %v3371 = vsel %vm3318, %v3369, %v3370
        %v3372 = vrot.slane %v3370, 4
        %v3373 = vrot.slane %v3288, 7
        %v3374 = vsel %vm3318, %v3372, %v3373
        %s3375 = scalar_lea.vmem %s1, 640
        %v3376 = vld [vmem:[%s3375] sm:$0xf]
        %v3377 = vld [vmem:[%s3375 + $0x4] sm:$0xf]
        %v3378 = vld [vmem:[%s3375 + $0x8] sm:$0xf]
        %v3379 = vld [vmem:[%s3375 + $0xc] sm:$0xf]
        %v3380 = vld [vmem:[%s3375 + $0x10] sm:$0xf]
        %v3381 = vld [vmem:[%s3375 + $0x14] sm:$0xf]
        %v3382 = vld [vmem:[%s3375 + $0x18] sm:$0xf]
        %v3383 = vld [vmem:[%s3375 + $0x1c] sm:$0xf]
        %v3384 = vld [vmem:[%s3375 + $0x20] sm:$0xf]
        %v3385 = vld [vmem:[%s3375 + $0x24] sm:$0xf]
        %v3386 = vld [vmem:[%s3375 + $0x28] sm:$0xf]
        %v3387 = vld [vmem:[%s3375 + $0x2c] sm:$0xf]
        %v3388 = vld [vmem:[%s3375 + $0x30] sm:$0xf]
        %v3389 = vld [vmem:[%s3375 + $0x34] sm:$0xf]
        %v3390 = vld [vmem:[%s3375 + $0x38] sm:$0xf]
        %v3391 = vld [vmem:[%s3375 + $0x3c] sm:$0xf]
        %v3408 = vrot.slane %v3246, 5
        %v3409 = vrot.slane %v3408, 4
        %v3410 = vrot.slane %v3247, 5
        %v3411 = vsel %vm340, %v3409, %v3410
        %v3412 = vrot.slane %v3410, 4
        %v3413 = vrot.slane %v3248, 5
        %v3414 = vsel %vm340, %v3412, %v3413
        %v3415 = vrot.slane %v3252, 5
        %v3416 = vrot.slane %v3415, 4
        %v3417 = vrot.slane %v3253, 5
        %v3418 = vsel %vm340, %v3416, %v3417
        %v3419 = vrot.slane %v3417, 4
        %v3420 = vrot.slane %v3254, 5
        %v3421 = vsel %vm340, %v3419, %v3420
        %v3422 = vrot.slane %v3258, 5
        %v3423 = vrot.slane %v3422, 4
        %v3424 = vrot.slane %v3259, 5
        %v3425 = vsel %vm340, %v3423, %v3424
        %v3426 = vrot.slane %v3424, 4
        %v3427 = vrot.slane %v3260, 5
        %v3428 = vsel %vm340, %v3426, %v3427
        %v3429 = vrot.slane %v3264, 5
        %v3430 = vrot.slane %v3429, 4
        %v3431 = vrot.slane %v3265, 5
        %v3432 = vsel %vm340, %v3430, %v3431
        %v3433 = vrot.slane %v3431, 4
        %v3434 = vrot.slane %v3266, 5
        %v3435 = vsel %vm340, %v3433, %v3434
        %v3436 = vrot.slane %v3270, 5
        %v3437 = vrot.slane %v3436, 4
        %v3438 = vrot.slane %v3271, 5
        %v3439 = vsel %vm340, %v3437, %v3438
        %v3440 = vrot.slane %v3438, 4
        %v3441 = vrot.slane %v3272, 5
        %v3442 = vsel %vm340, %v3440, %v3441
        %v3443 = vrot.slane %v3276, 5
        %v3444 = vrot.slane %v3443, 4
        %v3445 = vrot.slane %v3277, 5
        %v3446 = vsel %vm340, %v3444, %v3445
        %v3447 = vrot.slane %v3445, 4
        %v3448 = vrot.slane %v3278, 5
        %v3449 = vsel %vm340, %v3447, %v3448
        %v3450 = vrot.slane %v3282, 5
        %v3451 = vrot.slane %v3450, 4
        %v3452 = vrot.slane %v3283, 5
        %v3453 = vsel %vm340, %v3451, %v3452
        %v3454 = vrot.slane %v3452, 4
        %v3455 = vrot.slane %v3284, 5
        %v3456 = vsel %vm340, %v3454, %v3455
        %v3457 = vrot.slane %v3288, 5
        %v3458 = vrot.slane %v3457, 4
        %v3459 = vrot.slane %v3289, 5
        %v3460 = vsel %vm340, %v3458, %v3459
        %v3461 = vrot.slane %v3459, 4
        %v3462 = vrot.slane %v3290, 5
        %v3463 = vsel %vm340, %v3461, %v3462
        %s3464 = scalar_lea.vmem %s1, 704
        %v3465 = vld [vmem:[%s3464] sm:$0xf]
        %v3466 = vld [vmem:[%s3464 + $0x4] sm:$0xf]
        %v3467 = vld [vmem:[%s3464 + $0x8] sm:$0xf]
        %v3468 = vld [vmem:[%s3464 + $0xc] sm:$0xf]
        %v3469 = vld [vmem:[%s3464 + $0x10] sm:$0xf]
        %v3470 = vld [vmem:[%s3464 + $0x14] sm:$0xf]
        %v3471 = vld [vmem:[%s3464 + $0x18] sm:$0xf]
        %v3472 = vld [vmem:[%s3464 + $0x1c] sm:$0xf]
        %v3473 = vld [vmem:[%s3464 + $0x20] sm:$0xf]
        %v3474 = vld [vmem:[%s3464 + $0x24] sm:$0xf]
        %v3475 = vld [vmem:[%s3464 + $0x28] sm:$0xf]
        %v3476 = vld [vmem:[%s3464 + $0x2c] sm:$0xf]
        %v3477 = vld [vmem:[%s3464 + $0x30] sm:$0xf]
        %v3478 = vld [vmem:[%s3464 + $0x34] sm:$0xf]
        %v3479 = vld [vmem:[%s3464 + $0x38] sm:$0xf]
        %v3480 = vld [vmem:[%s3464 + $0x3c] sm:$0xf]
        %v3481 = vunpack.c.l.b16 %v3411
        %v3482 = vunpack.c.l.b16 %v3414
        %v3483 = vunpack.c.l.b16 %v3418
        %v3484 = vunpack.c.l.b16 %v3421
        %v3485 = vunpack.c.l.b16 %v3425
        %v3486 = vunpack.c.l.b16 %v3428
        %v3487 = vunpack.c.l.b16 %v3432
        %v3488 = vunpack.c.l.b16 %v3435
        %v3489 = vunpack.c.l.b16 %v3439
        %v3490 = vunpack.c.l.b16 %v3442
        %v3491 = vunpack.c.l.b16 %v3446
        %v3492 = vunpack.c.l.b16 %v3449
        %v3493 = vunpack.c.l.b16 %v3453
        %v3494 = vunpack.c.l.b16 %v3456
        %v3495 = vunpack.c.l.b16 %v3460
        %v3496 = vunpack.c.l.b16 %v3463
        %v3497 = vpack.c.b16 %v3482, %v3481
        %v3498 = vpack.c.b16 %v3484, %v3483
        %v3499 = vpack.c.b16 %v3486, %v3485
        %v3500 = vpack.c.b16 %v3488, %v3487
        %v3501 = vpack.c.b16 %v3490, %v3489
        %v3502 = vpack.c.b16 %v3492, %v3491
        %v3503 = vpack.c.b16 %v3494, %v3493
        %v3504 = vpack.c.b16 %v3496, %v3495
        %v3529 = vunpack.c.l.b16 %v3465
        %v3530 = vunpack.c.l.b16 %v3466
        %v3531 = vunpack.c.l.b16 %v3467
        %v3532 = vunpack.c.l.b16 %v3468
        %v3533 = vunpack.c.l.b16 %v3469
        %v3534 = vunpack.c.l.b16 %v3470
        %v3535 = vunpack.c.l.b16 %v3471
        %v3536 = vunpack.c.l.b16 %v3472
        %v3537 = vunpack.c.l.b16 %v3473
        %v3538 = vunpack.c.l.b16 %v3474
        %v3539 = vunpack.c.l.b16 %v3475
        %v3540 = vunpack.c.l.b16 %v3476
        %v3541 = vunpack.c.l.b16 %v3477
        %v3542 = vunpack.c.l.b16 %v3478
        %v3543 = vunpack.c.l.b16 %v3479
        %v3544 = vunpack.c.l.b16 %v3480
        %v3545 = vpack.c.b16 %v3530, %v3529
        %v3546 = vpack.c.b16 %v3532, %v3531
        %v3547 = vpack.c.b16 %v3534, %v3533
        %v3548 = vpack.c.b16 %v3536, %v3535
        %v3549 = vpack.c.b16 %v3538, %v3537
        %v3550 = vpack.c.b16 %v3540, %v3539
        %v3551 = vpack.c.b16 %v3542, %v3541
        %v3552 = vpack.c.b16 %v3544, %v3543
        %3561 = vmatprep.subr.bf16.mxu0 0
        %3562 = vmatpush1.bf16.msra.mxu0 %v3545
        %3563 = vmatprep.subr.bf16.mxu0 0
        %3564 = vmatpush1.bf16.msra.mxu0 %v3546
        %3565 = vmatprep.subr.bf16.mxu0 0
        %3566 = vmatpush1.bf16.msra.mxu0 %v3547
        %3567 = vmatprep.subr.bf16.mxu0 0
        %3568 = vmatpush1.bf16.msra.mxu0 %v3548
        %3569 = vmatprep.subr.bf16.mxu0 0
        %3570 = vmatpush1.bf16.msra.mxu0 %v3549
        %3571 = vmatprep.subr.bf16.mxu0 0
        %3572 = vmatpush1.bf16.msra.mxu0 %v3550
        %3573 = vmatprep.subr.bf16.mxu0 0
        %3574 = vmatpush1.bf16.msra.mxu0 %v3551
        %3575 = vmatprep.subr.bf16.mxu0 0
        %3576 = vmatpush1.bf16.msra.mxu0 %v3552
        %3577 = vmatprep.subr.bf16.mxu0 0
        %3578 = vmatpush1.bf16.msra.mxu0 0
        %3579 = vmatprep.subr.bf16.mxu0 0
        %3580 = vmatpush1.bf16.msra.mxu0 0
        %3581 = vmatprep.subr.bf16.mxu0 0
        %3582 = vmatpush1.bf16.msra.mxu0 0
        %3583 = vmatprep.subr.bf16.mxu0 0
        %3584 = vmatpush1.bf16.msra.mxu0 0
        %3585 = vmatprep.subr.bf16.mxu0 0
        %3586 = vmatpush1.bf16.msra.mxu0 0
        %3587 = vmatprep.subr.bf16.mxu0 0
        %3588 = vmatpush1.bf16.msra.mxu0 0
        %3589 = vmatprep.subr.bf16.mxu0 0
        %3590 = vmatpush1.bf16.msra.mxu0 0
        %3591 = vmatprep.subr.bf16.mxu0 0
        %3592 = vmatpush1.bf16.msra.mxu0 0
        %3593 = vmatprep.mubr.bf16.mxu0 0
        %3594 = vmatmul.mubr.bf16.gmra.mrb[0].mxu0 %v3497
        %v3595 = vpop.f32.mrb[0].mxu0
        %v3596 = vadd.f32 0.0, %v3595
        %v3597 = vpop.f32.mrb[0].mxu0
        %v3598 = vpop.f32.mrb[0].mxu0
        %v3599 = vadd.f32 0.0, %v3598
        %v3600 = vpop.f32.mrb[0].mxu0
        %3601 = vmatprep.mubr.bf16.mxu0 0
        %3602 = vmatmul.mubr.bf16.gmra.mrb[0].mxu0 %v3498
        %v3603 = vpop.f32.mrb[0].mxu0
        %v3604 = vadd.f32 0.0, %v3603
        %v3605 = vpop.f32.mrb[0].mxu0
        %v3606 = vpop.f32.mrb[0].mxu0
        %v3607 = vadd.f32 0.0, %v3606
        %v3608 = vpop.f32.mrb[0].mxu0
        %3609 = vmatprep.mubr.bf16.mxu0 0
        %3610 = vmatmul.mubr.bf16.gmra.mrb[0].mxu0 %v3499
        %v3611 = vpop.f32.mrb[0].mxu0
        %v3612 = vadd.f32 0.0, %v3611
        %v3613 = vpop.f32.mrb[0].mxu0
        %v3614 = vpop.f32.mrb[0].mxu0
        %v3615 = vadd.f32 0.0, %v3614
        %v3616 = vpop.f32.mrb[0].mxu0
        %3617 = vmatprep.mubr.bf16.mxu0 0
        %3618 = vmatmul.mubr.bf16.gmra.mrb[0].mxu0 %v3500
        %v3619 = vpop.f32.mrb[0].mxu0
        %v3620 = vadd.f32 0.0, %v3619
        %v3621 = vpop.f32.mrb[0].mxu0
        %v3622 = vpop.f32.mrb[0].mxu0
        %v3623 = vadd.f32 0.0, %v3622
        %v3624 = vpop.f32.mrb[0].mxu0
        %3625 = vmatprep.mubr.bf16.mxu0 0
        %3626 = vmatmul.mubr.bf16.gmra.mrb[0].mxu0 %v3501
        %v3627 = vpop.f32.mrb[0].mxu0
        %v3628 = vadd.f32 0.0, %v3627
        %v3629 = vpop.f32.mrb[0].mxu0
        %v3630 = vpop.f32.mrb[0].mxu0
        %v3631 = vadd.f32 0.0, %v3630
        %v3632 = vpop.f32.mrb[0].mxu0
        %3633 = vmatprep.mubr.bf16.mxu0 0
        %3634 = vmatmul.mubr.bf16.gmra.mrb[0].mxu0 %v3502
        %v3635 = vpop.f32.mrb[0].mxu0
        %v3636 = vadd.f32 0.0, %v3635
        %v3637 = vpop.f32.mrb[0].mxu0
        %v3638 = vpop.f32.mrb[0].mxu0
        %v3639 = vadd.f32 0.0, %v3638
        %v3640 = vpop.f32.mrb[0].mxu0
        %3641 = vmatprep.mubr.bf16.mxu0 0
        %3642 = vmatmul.mubr.bf16.gmra.mrb[0].mxu0 %v3503
        %v3643 = vpop.f32.mrb[0].mxu0
        %v3644 = vadd.f32 0.0, %v3643
        %v3645 = vpop.f32.mrb[0].mxu0
        %v3646 = vpop.f32.mrb[0].mxu0
        %v3647 = vadd.f32 0.0, %v3646
        %v3648 = vpop.f32.mrb[0].mxu0
        %3649 = vmatprep.mubr.bf16.mxu0 0
        %3650 = vmatmul.mubr.bf16.gmra.mrb[0].mxu0 %v3504
        %v3651 = vpop.f32.mrb[0].mxu0
        %v3652 = vadd.f32 0.0, %v3651
        %v3653 = vpop.f32.mrb[0].mxu0
        %v3654 = vpop.f32.mrb[0].mxu0
        %v3655 = vadd.f32 0.0, %v3654
        %v3656 = vpop.f32.mrb[0].mxu0
        %3657 = vdwg.mxu0
        %v3658 = vunpack.c.l.b16 %v3322
        %v3659 = vunpack.c.l.b16 %v3325
        %v3660 = vunpack.c.l.b16 %v3329
        %v3661 = vunpack.c.l.b16 %v3332
        %v3662 = vunpack.c.l.b16 %v3336
        %v3663 = vunpack.c.l.b16 %v3339
        %v3664 = vunpack.c.l.b16 %v3343
        %v3665 = vunpack.c.l.b16 %v3346
        %v3666 = vunpack.c.l.b16 %v3350
        %v3667 = vunpack.c.l.b16 %v3353
        %v3668 = vunpack.c.l.b16 %v3357
        %v3669 = vunpack.c.l.b16 %v3360
        %v3670 = vunpack.c.l.b16 %v3364
        %v3671 = vunpack.c.l.b16 %v3367
        %v3672 = vunpack.c.l.b16 %v3371
        %v3673 = vunpack.c.l.b16 %v3374
        %v3674 = vpack.c.b16 %v3659, %v3658
        %v3675 = vpack.c.b16 %v3661, %v3660
        %v3676 = vpack.c.b16 %v3663, %v3662
        %v3677 = vpack.c.b16 %v3665, %v3664
        %v3678 = vpack.c.b16 %v3667, %v3666
        %v3679 = vpack.c.b16 %v3669, %v3668
        %v3680 = vpack.c.b16 %v3671, %v3670
        %v3681 = vpack.c.b16 %v3673, %v3672
        %v3706 = vunpack.c.l.b16 %v3376
        %v3707 = vunpack.c.l.b16 %v3377
        %v3708 = vunpack.c.l.b16 %v3378
        %v3709 = vunpack.c.l.b16 %v3379
        %v3710 = vunpack.c.l.b16 %v3380
        %v3711 = vunpack.c.l.b16 %v3381
        %v3712 = vunpack.c.l.b16 %v3382
        %v3713 = vunpack.c.l.b16 %v3383
        %v3714 = vunpack.c.l.b16 %v3384
        %v3715 = vunpack.c.l.b16 %v3385
        %v3716 = vunpack.c.l.b16 %v3386
        %v3717 = vunpack.c.l.b16 %v3387
        %v3718 = vunpack.c.l.b16 %v3388
        %v3719 = vunpack.c.l.b16 %v3389
        %v3720 = vunpack.c.l.b16 %v3390
        %v3721 = vunpack.c.l.b16 %v3391
        %v3722 = vpack.c.b16 %v3707, %v3706
        %v3723 = vpack.c.b16 %v3709, %v3708
        %v3724 = vpack.c.b16 %v3711, %v3710
        %v3725 = vpack.c.b16 %v3713, %v3712
        %v3726 = vpack.c.b16 %v3715, %v3714
        %v3727 = vpack.c.b16 %v3717, %v3716
        %v3728 = vpack.c.b16 %v3719, %v3718
        %v3729 = vpack.c.b16 %v3721, %v3720
        %3738 = vmatprep.subr.bf16.mxu0 0
        %3739 = vmatpush1.bf16.msra.mxu0 %v3722
        %3740 = vmatprep.subr.bf16.mxu0 0
        %3741 = vmatpush1.bf16.msra.mxu0 %v3723
        %3742 = vmatprep.subr.bf16.mxu0 0
        %3743 = vmatpush1.bf16.msra.mxu0 %v3724
        %3744 = vmatprep.subr.bf16.mxu0 0
        %3745 = vmatpush1.bf16.msra.mxu0 %v3725
        %3746 = vmatprep.subr.bf16.mxu0 0
        %3747 = vmatpush1.bf16.msra.mxu0 %v3726
        %3748 = vmatprep.subr.bf16.mxu0 0
        %3749 = vmatpush1.bf16.msra.mxu0 %v3727
        %3750 = vmatprep.subr.bf16.mxu0 0
        %3751 = vmatpush1.bf16.msra.mxu0 %v3728
        %3752 = vmatprep.subr.bf16.mxu0 0
        %3753 = vmatpush1.bf16.msra.mxu0 %v3729
        %3754 = vmatprep.subr.bf16.mxu0 0
        %3755 = vmatpush1.bf16.msra.mxu0 0
        %3756 = vmatprep.subr.bf16.mxu0 0
        %3757 = vmatpush1.bf16.msra.mxu0 0
        %3758 = vmatprep.subr.bf16.mxu0 0
        %3759 = vmatpush1.bf16.msra.mxu0 0
        %3760 = vmatprep.subr.bf16.mxu0 0
        %3761 = vmatpush1.bf16.msra.mxu0 0
        %3762 = vmatprep.subr.bf16.mxu0 0
        %3763 = vmatpush1.bf16.msra.mxu0 0
        %3764 = vmatprep.subr.bf16.mxu0 0
        %3765 = vmatpush1.bf16.msra.mxu0 0
        %3766 = vmatprep.subr.bf16.mxu0 0
        %3767 = vmatpush1.bf16.msra.mxu0 0
        %3768 = vmatprep.subr.bf16.mxu0 0
        %3769 = vmatpush1.bf16.msra.mxu0 0
        %3770 = vmatprep.mubr.bf16.mxu0 0
        %3771 = vmatmul.mubr.bf16.gmra.mrb[0].mxu0 %v3674
        %v3772 = vpop.f32.mrb[0].mxu0
        %v3773 = vadd.f32 %v3596, %v3772
        %v3774 = vpop.f32.mrb[0].mxu0
        %v3775 = vpop.f32.mrb[0].mxu0
        %v3776 = vadd.f32 %v3599, %v3775
        %v3777 = vpop.f32.mrb[0].mxu0
        %3778 = vmatprep.mubr.bf16.mxu0 0
        %3779 = vmatmul.mubr.bf16.gmra.mrb[0].mxu0 %v3675
        %v3780 = vpop.f32.mrb[0].mxu0
        %v3781 = vadd.f32 %v3604, %v3780
        %v3782 = vpop.f32.mrb[0].mxu0
        %v3783 = vpop.f32.mrb[0].mxu0
        %v3784 = vadd.f32 %v3607, %v3783
        %v3785 = vpop.f32.mrb[0].mxu0
        %3786 = vmatprep.mubr.bf16.mxu0 0
        %3787 = vmatmul.mubr.bf16.gmra.mrb[0].mxu0 %v3676
        %v3788 = vpop.f32.mrb[0].mxu0
        %v3789 = vadd.f32 %v3612, %v3788
        %v3790 = vpop.f32.mrb[0].mxu0
        %v3791 = vpop.f32.mrb[0].mxu0
        %v3792 = vadd.f32 %v3615, %v3791
        %v3793 = vpop.f32.mrb[0].mxu0
        %3794 = vmatprep.mubr.bf16.mxu0 0
        %3795 = vmatmul.mubr.bf16.gmra.mrb[0].mxu0 %v3677
        %v3796 = vpop.f32.mrb[0].mxu0
        %v3797 = vadd.f32 %v3620, %v3796
        %v3798 = vpop.f32.mrb[0].mxu0
        %v3799 = vpop.f32.mrb[0].mxu0
        %v3800 = vadd.f32 %v3623, %v3799
        %v3801 = vpop.f32.mrb[0].mxu0
        %3802 = vmatprep.mubr.bf16.mxu0 0
        %3803 = vmatmul.mubr.bf16.gmra.mrb[0].mxu0 %v3678
        %v3804 = vpop.f32.mrb[0].mxu0
        %v3805 = vadd.f32 %v3628, %v3804
        %v3806 = vpop.f32.mrb[0].mxu0
        %v3807 = vpop.f32.mrb[0].mxu0
        %v3808 = vadd.f32 %v3631, %v3807
        %v3809 = vpop.f32.mrb[0].mxu0
        %3810 = vmatprep.mubr.bf16.mxu0 0
        %3811 = vmatmul.mubr.bf16.gmra.mrb[0].mxu0 %v3679
        %v3812 = vpop.f32.mrb[0].mxu0
        %v3813 = vadd.f32 %v3636, %v3812
        %v3814 = vpop.f32.mrb[0].mxu0
        %v3815 = vpop.f32.mrb[0].mxu0
        %v3816 = vadd.f32 %v3639, %v3815
        %v3817 = vpop.f32.mrb[0].mxu0
        %3818 = vmatprep.mubr.bf16.mxu0 0
        %3819 = vmatmul.mubr.bf16.gmra.mrb[0].mxu0 %v3680
        %v3820 = vpop.f32.mrb[0].mxu0
        %v3821 = vadd.f32 %v3644, %v3820
        %v3822 = vpop.f32.mrb[0].mxu0
        %v3823 = vpop.f32.mrb[0].mxu0
        %v3824 = vadd.f32 %v3647, %v3823
        %v3825 = vpop.f32.mrb[0].mxu0
        %3826 = vmatprep.mubr.bf16.mxu0 0
        %3827 = vmatmul.mubr.bf16.gmra.mrb[0].mxu0 %v3681
        %v3828 = vpop.f32.mrb[0].mxu0
        %v3829 = vadd.f32 %v3652, %v3828
        %v3830 = vpop.f32.mrb[0].mxu0
        %v3831 = vpop.f32.mrb[0].mxu0
        %v3832 = vadd.f32 %v3655, %v3831
        %v3833 = vpop.f32.mrb[0].mxu0
        %3834 = vdwg.mxu0
        %v3843 = vrot.slane %v3247, 7
        %v3844 = vrot.slane %v3843, 4
        %v3845 = vrot.slane %v3248, 7
        %v3846 = vsel %vm3318, %v3844, %v3845
        %v3847 = vrot.slane %v3845, 4
        %v3848 = vrot.slane %v3249, 7
        %v3849 = vsel %vm3318, %v3847, %v3848
        %v3850 = vrot.slane %v3253, 7
        %v3851 = vrot.slane %v3850, 4
        %v3852 = vrot.slane %v3254, 7
        %v3853 = vsel %vm3318, %v3851, %v3852
        %v3854 = vrot.slane %v3852, 4
        %v3855 = vrot.slane %v3255, 7
        %v3856 = vsel %vm3318, %v3854, %v3855
        %v3857 = vrot.slane %v3259, 7
        %v3858 = vrot.slane %v3857, 4
        %v3859 = vrot.slane %v3260, 7
        %v3860 = vsel %vm3318, %v3858, %v3859
        %v3861 = vrot.slane %v3859, 4
        %v3862 = vrot.slane %v3261, 7
        %v3863 = vsel %vm3318, %v3861, %v3862
        %v3864 = vrot.slane %v3265, 7
        %v3865 = vrot.slane %v3864, 4
        %v3866 = vrot.slane %v3266, 7
        %v3867 = vsel %vm3318, %v3865, %v3866
        %v3868 = vrot.slane %v3866, 4
        %v3869 = vrot.slane %v3267, 7
        %v3870 = vsel %vm3318, %v3868, %v3869
        %v3871 = vrot.slane %v3271, 7
        %v3872 = vrot.slane %v3871, 4
        %v3873 = vrot.slane %v3272, 7
        %v3874 = vsel %vm3318, %v3872, %v3873
        %v3875 = vrot.slane %v3873, 4
        %v3876 = vrot.slane %v3273, 7
        %v3877 = vsel %vm3318, %v3875, %v3876
        %v3878 = vrot.slane %v3277, 7
        %v3879 = vrot.slane %v3878, 4
        %v3880 = vrot.slane %v3278, 7
        %v3881 = vsel %vm3318, %v3879, %v3880
        %v3882 = vrot.slane %v3880, 4
        %v3883 = vrot.slane %v3279, 7
        %v3884 = vsel %vm3318, %v3882, %v3883
        %v3885 = vrot.slane %v3283, 7
        %v3886 = vrot.slane %v3885, 4
        %v3887 = vrot.slane %v3284, 7
        %v3888 = vsel %vm3318, %v3886, %v3887
        %v3889 = vrot.slane %v3887, 4
        %v3890 = vrot.slane %v3285, 7
        %v3891 = vsel %vm3318, %v3889, %v3890
        %v3892 = vrot.slane %v3289, 7
        %v3893 = vrot.slane %v3892, 4
        %v3894 = vrot.slane %v3290, 7
        %v3895 = vsel %vm3318, %v3893, %v3894
        %v3896 = vrot.slane %v3894, 4
        %v3897 = vrot.slane %v3291, 7
        %v3898 = vsel %vm3318, %v3896, %v3897
        %s3899 = scalar_lea.vmem %s1, 768
        %v3900 = vld [vmem:[%s3899] sm:$0xf]
        %v3901 = vld [vmem:[%s3899 + $0x4] sm:$0xf]
        %v3902 = vld [vmem:[%s3899 + $0x8] sm:$0xf]
        %v3903 = vld [vmem:[%s3899 + $0xc] sm:$0xf]
        %v3904 = vld [vmem:[%s3899 + $0x10] sm:$0xf]
        %v3905 = vld [vmem:[%s3899 + $0x14] sm:$0xf]
        %v3906 = vld [vmem:[%s3899 + $0x18] sm:$0xf]
        %v3907 = vld [vmem:[%s3899 + $0x1c] sm:$0xf]
        %v3908 = vld [vmem:[%s3899 + $0x20] sm:$0xf]
        %v3909 = vld [vmem:[%s3899 + $0x24] sm:$0xf]
        %v3910 = vld [vmem:[%s3899 + $0x28] sm:$0xf]
        %v3911 = vld [vmem:[%s3899 + $0x2c] sm:$0xf]
        %v3912 = vld [vmem:[%s3899 + $0x30] sm:$0xf]
        %v3913 = vld [vmem:[%s3899 + $0x34] sm:$0xf]
        %v3914 = vld [vmem:[%s3899 + $0x38] sm:$0xf]
        %v3915 = vld [vmem:[%s3899 + $0x3c] sm:$0xf]
        %v3916 = vunpack.c.l.b16 %v3846
        %v3917 = vunpack.c.l.b16 %v3849
        %v3918 = vunpack.c.l.b16 %v3853
        %v3919 = vunpack.c.l.b16 %v3856
        %v3920 = vunpack.c.l.b16 %v3860
        %v3921 = vunpack.c.l.b16 %v3863
        %v3922 = vunpack.c.l.b16 %v3867
        %v3923 = vunpack.c.l.b16 %v3870
        %v3924 = vunpack.c.l.b16 %v3874
        %v3925 = vunpack.c.l.b16 %v3877
        %v3926 = vunpack.c.l.b16 %v3881
        %v3927 = vunpack.c.l.b16 %v3884
        %v3928 = vunpack.c.l.b16 %v3888
        %v3929 = vunpack.c.l.b16 %v3891
        %v3930 = vunpack.c.l.b16 %v3895
        %v3931 = vunpack.c.l.b16 %v3898
        %v3932 = vpack.c.b16 %v3917, %v3916
        %v3933 = vpack.c.b16 %v3919, %v3918
        %v3934 = vpack.c.b16 %v3921, %v3920
        %v3935 = vpack.c.b16 %v3923, %v3922
        %v3936 = vpack.c.b16 %v3925, %v3924
        %v3937 = vpack.c.b16 %v3927, %v3926
        %v3938 = vpack.c.b16 %v3929, %v3928
        %v3939 = vpack.c.b16 %v3931, %v3930
        %v3964 = vunpack.c.l.b16 %v3900
        %v3965 = vunpack.c.l.b16 %v3901
        %v3966 = vunpack.c.l.b16 %v3902
        %v3967 = vunpack.c.l.b16 %v3903
        %v3968 = vunpack.c.l.b16 %v3904
        %v3969 = vunpack.c.l.b16 %v3905
        %v3970 = vunpack.c.l.b16 %v3906
        %v3971 = vunpack.c.l.b16 %v3907
        %v3972 = vunpack.c.l.b16 %v3908
        %v3973 = vunpack.c.l.b16 %v3909
        %v3974 = vunpack.c.l.b16 %v3910
        %v3975 = vunpack.c.l.b16 %v3911
        %v3976 = vunpack.c.l.b16 %v3912
        %v3977 = vunpack.c.l.b16 %v3913
        %v3978 = vunpack.c.l.b16 %v3914
        %v3979 = vunpack.c.l.b16 %v3915
        %v3980 = vpack.c.b16 %v3965, %v3964
        %v3981 = vpack.c.b16 %v3967, %v3966
        %v3982 = vpack.c.b16 %v3969, %v3968
        %v3983 = vpack.c.b16 %v3971, %v3970
        %v3984 = vpack.c.b16 %v3973, %v3972
        %v3985 = vpack.c.b16 %v3975, %v3974
        %v3986 = vpack.c.b16 %v3977, %v3976
        %v3987 = vpack.c.b16 %v3979, %v3978
        %3996 = vmatprep.subr.bf16.mxu0 0
        %3997 = vmatpush1.bf16.msra.mxu0 %v3980
        %3998 = vmatprep.subr.bf16.mxu0 0
        %3999 = vmatpush1.bf16.msra.mxu0 %v3981
        %4000 = vmatprep.subr.bf16.mxu0 0
        %4001 = vmatpush1.bf16.msra.mxu0 %v3982
        %4002 = vmatprep.subr.bf16.mxu0 0
        %4003 = vmatpush1.bf16.msra.mxu0 %v3983
        %4004 = vmatprep.subr.bf16.mxu0 0
        %4005 = vmatpush1.bf16.msra.mxu0 %v3984
        %4006 = vmatprep.subr.bf16.mxu0 0
        %4007 = vmatpush1.bf16.msra.mxu0 %v3985
        %4008 = vmatprep.subr.bf16.mxu0 0
        %4009 = vmatpush1.bf16.msra.mxu0 %v3986
        %4010 = vmatprep.subr.bf16.mxu0 0
        %4011 = vmatpush1.bf16.msra.mxu0 %v3987
        %4012 = vmatprep.subr.bf16.mxu0 0
        %4013 = vmatpush1.bf16.msra.mxu0 0
        %4014 = vmatprep.subr.bf16.mxu0 0
        %4015 = vmatpush1.bf16.msra.mxu0 0
        %4016 = vmatprep.subr.bf16.mxu0 0
        %4017 = vmatpush1.bf16.msra.mxu0 0
        %4018 = vmatprep.subr.bf16.mxu0 0
        %4019 = vmatpush1.bf16.msra.mxu0 0
        %4020 = vmatprep.subr.bf16.mxu0 0
        %4021 = vmatpush1.bf16.msra.mxu0 0
        %4022 = vmatprep.subr.bf16.mxu0 0
        %4023 = vmatpush1.bf16.msra.mxu0 0
        %4024 = vmatprep.subr.bf16.mxu0 0
        %4025 = vmatpush1.bf16.msra.mxu0 0
        %4026 = vmatprep.subr.bf16.mxu0 0
        %4027 = vmatpush1.bf16.msra.mxu0 0
        %4028 = vmatprep.mubr.bf16.mxu0 0
        %4029 = vmatmul.mubr.bf16.gmra.mrb[0].mxu0 %v3932
        %v4030 = vpop.f32.mrb[0].mxu0
        %v4031 = vadd.f32 0.0, %v4030
        %v4032 = vpop.f32.mrb[0].mxu0
        %v4033 = vpop.f32.mrb[0].mxu0
        %v4034 = vadd.f32 0.0, %v4033
        %v4035 = vpop.f32.mrb[0].mxu0
        %4036 = vmatprep.mubr.bf16.mxu0 0
        %4037 = vmatmul.mubr.bf16.gmra.mrb[0].mxu0 %v3933
        %v4038 = vpop.f32.mrb[0].mxu0
        %v4039 = vadd.f32 0.0, %v4038
        %v4040 = vpop.f32.mrb[0].mxu0
        %v4041 = vpop.f32.mrb[0].mxu0
        %v4042 = vadd.f32 0.0, %v4041
        %v4043 = vpop.f32.mrb[0].mxu0
        %4044 = vmatprep.mubr.bf16.mxu0 0
        %4045 = vmatmul.mubr.bf16.gmra.mrb[0].mxu0 %v3934
        %v4046 = vpop.f32.mrb[0].mxu0
        %v4047 = vadd.f32 0.0, %v4046
        %v4048 = vpop.f32.mrb[0].mxu0
        %v4049 = vpop.f32.mrb[0].mxu0
        %v4050 = vadd.f32 0.0, %v4049
        %v4051 = vpop.f32.mrb[0].mxu0
        %4052 = vmatprep.mubr.bf16.mxu0 0
        %4053 = vmatmul.mubr.bf16.gmra.mrb[0].mxu0 %v3935
        %v4054 = vpop.f32.mrb[0].mxu0
        %v4055 = vadd.f32 0.0, %v4054
        %v4056 = vpop.f32.mrb[0].mxu0
        %v4057 = vpop.f32.mrb[0].mxu0
        %v4058 = vadd.f32 0.0, %v4057
        %v4059 = vpop.f32.mrb[0].mxu0
        %4060 = vmatprep.mubr.bf16.mxu0 0
        %4061 = vmatmul.mubr.bf16.gmra.mrb[0].mxu0 %v3936
        %v4062 = vpop.f32.mrb[0].mxu0
        %v4063 = vadd.f32 0.0, %v4062
        %v4064 = vpop.f32.mrb[0].mxu0
        %v4065 = vpop.f32.mrb[0].mxu0
        %v4066 = vadd.f32 0.0, %v4065
        %v4067 = vpop.f32.mrb[0].mxu0
        %4068 = vmatprep.mubr.bf16.mxu0 0
        %4069 = vmatmul.mubr.bf16.gmra.mrb[0].mxu0 %v3937
        %v4070 = vpop.f32.mrb[0].mxu0
        %v4071 = vadd.f32 0.0, %v4070
        %v4072 = vpop.f32.mrb[0].mxu0
        %v4073 = vpop.f32.mrb[0].mxu0
        %v4074 = vadd.f32 0.0, %v4073
        %v4075 = vpop.f32.mrb[0].mxu0
        %4076 = vmatprep.mubr.bf16.mxu0 0
        %4077 = vmatmul.mubr.bf16.gmra.mrb[0].mxu0 %v3938
        %v4078 = vpop.f32.mrb[0].mxu0
        %v4079 = vadd.f32 0.0, %v4078
        %v4080 = vpop.f32.mrb[0].mxu0
        %v4081 = vpop.f32.mrb[0].mxu0
        %v4082 = vadd.f32 0.0, %v4081
        %v4083 = vpop.f32.mrb[0].mxu0
        %4084 = vmatprep.mubr.bf16.mxu0 0
        %4085 = vmatmul.mubr.bf16.gmra.mrb[0].mxu0 %v3939
        %v4086 = vpop.f32.mrb[0].mxu0
        %v4087 = vadd.f32 0.0, %v4086
        %v4088 = vpop.f32.mrb[0].mxu0
        %v4089 = vpop.f32.mrb[0].mxu0
        %v4090 = vadd.f32 0.0, %v4089
        %v4091 = vpop.f32.mrb[0].mxu0
        %4092 = vdwg.mxu0
        %v4093 = vadd.f32 %v3773, %v4031
        %v4094 = vadd.f32 %v3776, %v4034
        %v4095 = vadd.f32 %v3781, %v4039
        %v4096 = vadd.f32 %v3784, %v4042
        %v4097 = vadd.f32 %v3789, %v4047
        %v4098 = vadd.f32 %v3792, %v4050
        %v4099 = vadd.f32 %v3797, %v4055
        %v4100 = vadd.f32 %v3800, %v4058
        %v4101 = vadd.f32 %v3805, %v4063
        %v4102 = vadd.f32 %v3808, %v4066
        %v4103 = vadd.f32 %v3813, %v4071
        %v4104 = vadd.f32 %v3816, %v4074
        %v4105 = vadd.f32 %v3821, %v4079
        %v4106 = vadd.f32 %v3824, %v4082
        %v4107 = vadd.f32 %v3829, %v4087
        %v4108 = vadd.f32 %v3832, %v4090
        %v4117 = vrot.slane %v258, 7
        %v4118 = vrot.slane %v4117, 4
        %v4119 = vrot.slane %v259, 7
        %v4120 = vsel %vm3318, %v4118, %v4119
        %v4121 = vrot.slane %v4119, 4
        %v4122 = vrot.slane %v260, 7
        %v4123 = vsel %vm3318, %v4121, %v4122
        %v4124 = vrot.slane %v265, 7
        %v4125 = vrot.slane %v4124, 4
        %v4126 = vrot.slane %v266, 7
        %v4127 = vsel %vm3318, %v4125, %v4126
        %v4128 = vrot.slane %v4126, 4
        %v4129 = vrot.slane %v267, 7
        %v4130 = vsel %vm3318, %v4128, %v4129
        %v4131 = vrot.slane %v272, 7
        %v4132 = vrot.slane %v4131, 4
        %v4133 = vrot.slane %v273, 7
        %v4134 = vsel %vm3318, %v4132, %v4133
        %v4135 = vrot.slane %v4133, 4
        %v4136 = vrot.slane %v274, 7
        %v4137 = vsel %vm3318, %v4135, %v4136
        %v4138 = vrot.slane %v279, 7
        %v4139 = vrot.slane %v4138, 4
        %v4140 = vrot.slane %v280, 7
        %v4141 = vsel %vm3318, %v4139, %v4140
        %v4142 = vrot.slane %v4140, 4
        %v4143 = vrot.slane %v281, 7
        %v4144 = vsel %vm3318, %v4142, %v4143
        %v4145 = vrot.slane %v286, 7
        %v4146 = vrot.slane %v4145, 4
        %v4147 = vrot.slane %v287, 7
        %v4148 = vsel %vm3318, %v4146, %v4147
        %v4149 = vrot.slane %v4147, 4
        %v4150 = vrot.slane %v288, 7
        %v4151 = vsel %vm3318, %v4149, %v4150
        %v4152 = vrot.slane %v293, 7
        %v4153 = vrot.slane %v4152, 4
        %v4154 = vrot.slane %v294, 7
        %v4155 = vsel %vm3318, %v4153, %v4154
        %v4156 = vrot.slane %v4154, 4
        %v4157 = vrot.slane %v295, 7
        %v4158 = vsel %vm3318, %v4156, %v4157
        %v4159 = vrot.slane %v300, 7
        %v4160 = vrot.slane %v4159, 4
        %v4161 = vrot.slane %v301, 7
        %v4162 = vsel %vm3318, %v4160, %v4161
        %v4163 = vrot.slane %v4161, 4
        %v4164 = vrot.slane %v302, 7
        %v4165 = vsel %vm3318, %v4163, %v4164
        %v4166 = vrot.slane %v307, 7
        %v4167 = vrot.slane %v4166, 4
        %v4168 = vrot.slane %v308, 7
        %v4169 = vsel %vm3318, %v4167, %v4168
        %v4170 = vrot.slane %v4168, 4
        %v4171 = vrot.slane %v309, 7
        %v4172 = vsel %vm3318, %v4170, %v4171
        %s4173 = scalar_lea.vmem %s1, 832
        %v4174 = vld [vmem:[%s4173] sm:$0xf]
        %v4175 = vld [vmem:[%s4173 + $0x4] sm:$0xf]
        %v4176 = vld [vmem:[%s4173 + $0x8] sm:$0xf]
        %v4177 = vld [vmem:[%s4173 + $0xc] sm:$0xf]
        %v4178 = vld [vmem:[%s4173 + $0x10] sm:$0xf]
        %v4179 = vld [vmem:[%s4173 + $0x14] sm:$0xf]
        %v4180 = vld [vmem:[%s4173 + $0x18] sm:$0xf]
        %v4181 = vld [vmem:[%s4173 + $0x1c] sm:$0xf]
        %v4182 = vld [vmem:[%s4173 + $0x20] sm:$0xf]
        %v4183 = vld [vmem:[%s4173 + $0x24] sm:$0xf]
        %v4184 = vld [vmem:[%s4173 + $0x28] sm:$0xf]
        %v4185 = vld [vmem:[%s4173 + $0x2c] sm:$0xf]
        %v4186 = vld [vmem:[%s4173 + $0x30] sm:$0xf]
        %v4187 = vld [vmem:[%s4173 + $0x34] sm:$0xf]
        %v4188 = vld [vmem:[%s4173 + $0x38] sm:$0xf]
        %v4189 = vld [vmem:[%s4173 + $0x3c] sm:$0xf]
        %v4190 = vunpack.c.l.b16 %v4120
        %v4191 = vunpack.c.l.b16 %v4123
        %v4192 = vunpack.c.l.b16 %v4127
        %v4193 = vunpack.c.l.b16 %v4130
        %v4194 = vunpack.c.l.b16 %v4134
        %v4195 = vunpack.c.l.b16 %v4137
        %v4196 = vunpack.c.l.b16 %v4141
        %v4197 = vunpack.c.l.b16 %v4144
        %v4198 = vunpack.c.l.b16 %v4148
        %v4199 = vunpack.c.l.b16 %v4151
        %v4200 = vunpack.c.l.b16 %v4155
        %v4201 = vunpack.c.l.b16 %v4158
        %v4202 = vunpack.c.l.b16 %v4162
        %v4203 = vunpack.c.l.b16 %v4165
        %v4204 = vunpack.c.l.b16 %v4169
        %v4205 = vunpack.c.l.b16 %v4172
        %v4206 = vpack.c.b16 %v4191, %v4190
        %v4207 = vpack.c.b16 %v4193, %v4192
        %v4208 = vpack.c.b16 %v4195, %v4194
        %v4209 = vpack.c.b16 %v4197, %v4196
        %v4210 = vpack.c.b16 %v4199, %v4198
        %v4211 = vpack.c.b16 %v4201, %v4200
        %v4212 = vpack.c.b16 %v4203, %v4202
        %v4213 = vpack.c.b16 %v4205, %v4204
        %v4238 = vunpack.c.l.b16 %v4174
        %v4239 = vunpack.c.l.b16 %v4175
        %v4240 = vunpack.c.l.b16 %v4176
        %v4241 = vunpack.c.l.b16 %v4177
        %v4242 = vunpack.c.l.b16 %v4178
        %v4243 = vunpack.c.l.b16 %v4179
        %v4244 = vunpack.c.l.b16 %v4180
        %v4245 = vunpack.c.l.b16 %v4181
        %v4246 = vunpack.c.l.b16 %v4182
        %v4247 = vunpack.c.l.b16 %v4183
        %v4248 = vunpack.c.l.b16 %v4184
        %v4249 = vunpack.c.l.b16 %v4185
        %v4250 = vunpack.c.l.b16 %v4186
        %v4251 = vunpack.c.l.b16 %v4187
        %v4252 = vunpack.c.l.b16 %v4188
        %v4253 = vunpack.c.l.b16 %v4189
        %v4254 = vpack.c.b16 %v4239, %v4238
        %v4255 = vpack.c.b16 %v4241, %v4240
        %v4256 = vpack.c.b16 %v4243, %v4242
        %v4257 = vpack.c.b16 %v4245, %v4244
        %v4258 = vpack.c.b16 %v4247, %v4246
        %v4259 = vpack.c.b16 %v4249, %v4248
        %v4260 = vpack.c.b16 %v4251, %v4250
        %v4261 = vpack.c.b16 %v4253, %v4252
        %4270 = vmatprep.subr.bf16.mxu0 0
        %4271 = vmatpush1.bf16.msra.mxu0 %v4254
        %4272 = vmatprep.subr.bf16.mxu0 0
        %4273 = vmatpush1.bf16.msra.mxu0 %v4255
        %4274 = vmatprep.subr.bf16.mxu0 0
        %4275 = vmatpush1.bf16.msra.mxu0 %v4256
        %4276 = vmatprep.subr.bf16.mxu0 0
        %4277 = vmatpush1.bf16.msra.mxu0 %v4257
        %4278 = vmatprep.subr.bf16.mxu0 0
        %4279 = vmatpush1.bf16.msra.mxu0 %v4258
        %4280 = vmatprep.subr.bf16.mxu0 0
        %4281 = vmatpush1.bf16.msra.mxu0 %v4259
        %4282 = vmatprep.subr.bf16.mxu0 0
        %4283 = vmatpush1.bf16.msra.mxu0 %v4260
        %4284 = vmatprep.subr.bf16.mxu0 0
        %4285 = vmatpush1.bf16.msra.mxu0 %v4261
        %4286 = vmatprep.subr.bf16.mxu0 0
        %4287 = vmatpush1.bf16.msra.mxu0 0
        %4288 = vmatprep.subr.bf16.mxu0 0
        %4289 = vmatpush1.bf16.msra.mxu0 0
        %4290 = vmatprep.subr.bf16.mxu0 0
        %4291 = vmatpush1.bf16.msra.mxu0 0
        %4292 = vmatprep.subr.bf16.mxu0 0
        %4293 = vmatpush1.bf16.msra.mxu0 0
        %4294 = vmatprep.subr.bf16.mxu0 0
        %4295 = vmatpush1.bf16.msra.mxu0 0
        %4296 = vmatprep.subr.bf16.mxu0 0
        %4297 = vmatpush1.bf16.msra.mxu0 0
        %4298 = vmatprep.subr.bf16.mxu0 0
        %4299 = vmatpush1.bf16.msra.mxu0 0
        %4300 = vmatprep.subr.bf16.mxu0 0
        %4301 = vmatpush1.bf16.msra.mxu0 0
        %4302 = vmatprep.mubr.bf16.mxu0 0
        %4303 = vmatmul.mubr.bf16.gmra.mrb[0].mxu0 %v4206
        %v4304 = vpop.f32.mrb[0].mxu0
        %v4305 = vadd.f32 0.0, %v4304
        %v4306 = vpop.f32.mrb[0].mxu0
        %v4307 = vpop.f32.mrb[0].mxu0
        %v4308 = vadd.f32 0.0, %v4307
        %v4309 = vpop.f32.mrb[0].mxu0
        %4310 = vmatprep.mubr.bf16.mxu0 0
        %4311 = vmatmul.mubr.bf16.gmra.mrb[0].mxu0 %v4207
        %v4312 = vpop.f32.mrb[0].mxu0
        %v4313 = vadd.f32 0.0, %v4312
        %v4314 = vpop.f32.mrb[0].mxu0
        %v4315 = vpop.f32.mrb[0].mxu0
        %v4316 = vadd.f32 0.0, %v4315
        %v4317 = vpop.f32.mrb[0].mxu0
        %4318 = vmatprep.mubr.bf16.mxu0 0
        %4319 = vmatmul.mubr.bf16.gmra.mrb[0].mxu0 %v4208
        %v4320 = vpop.f32.mrb[0].mxu0
        %v4321 = vadd.f32 0.0, %v4320
        %v4322 = vpop.f32.mrb[0].mxu0
        %v4323 = vpop.f32.mrb[0].mxu0
        %v4324 = vadd.f32 0.0, %v4323
        %v4325 = vpop.f32.mrb[0].mxu0
        %4326 = vmatprep.mubr.bf16.mxu0 0
        %4327 = vmatmul.mubr.bf16.gmra.mrb[0].mxu0 %v4209
        %v4328 = vpop.f32.mrb[0].mxu0
        %v4329 = vadd.f32 0.0, %v4328
        %v4330 = vpop.f32.mrb[0].mxu0
        %v4331 = vpop.f32.mrb[0].mxu0
        %v4332 = vadd.f32 0.0, %v4331
        %v4333 = vpop.f32.mrb[0].mxu0
        %4334 = vmatprep.mubr.bf16.mxu0 0
        %4335 = vmatmul.mubr.bf16.gmra.mrb[0].mxu0 %v4210
        %v4336 = vpop.f32.mrb[0].mxu0
        %v4337 = vadd.f32 0.0, %v4336
        %v4338 = vpop.f32.mrb[0].mxu0
        %v4339 = vpop.f32.mrb[0].mxu0
        %v4340 = vadd.f32 0.0, %v4339
        %v4341 = vpop.f32.mrb[0].mxu0
        %4342 = vmatprep.mubr.bf16.mxu0 0
        %4343 = vmatmul.mubr.bf16.gmra.mrb[0].mxu0 %v4211
        %v4344 = vpop.f32.mrb[0].mxu0
        %v4345 = vadd.f32 0.0, %v4344
        %v4346 = vpop.f32.mrb[0].mxu0
        %v4347 = vpop.f32.mrb[0].mxu0
        %v4348 = vadd.f32 0.0, %v4347
        %v4349 = vpop.f32.mrb[0].mxu0
        %4350 = vmatprep.mubr.bf16.mxu0 0
        %4351 = vmatmul.mubr.bf16.gmra.mrb[0].mxu0 %v4212
        %v4352 = vpop.f32.mrb[0].mxu0
        %v4353 = vadd.f32 0.0, %v4352
        %v4354 = vpop.f32.mrb[0].mxu0
        %v4355 = vpop.f32.mrb[0].mxu0
        %v4356 = vadd.f32 0.0, %v4355
        %v4357 = vpop.f32.mrb[0].mxu0
        %4358 = vmatprep.mubr.bf16.mxu0 0
        %4359 = vmatmul.mubr.bf16.gmra.mrb[0].mxu0 %v4213
        %v4360 = vpop.f32.mrb[0].mxu0
        %v4361 = vadd.f32 0.0, %v4360
        %v4362 = vpop.f32.mrb[0].mxu0
        %v4363 = vpop.f32.mrb[0].mxu0
        %v4364 = vadd.f32 0.0, %v4363
        %v4365 = vpop.f32.mrb[0].mxu0
        %4366 = vdwg.mxu0
        %v4367 = vadd.f32 %v4093, %v4305
        %v4368 = vadd.f32 %v4094, %v4308
        %v4369 = vadd.f32 %v4095, %v4313
        %v4370 = vadd.f32 %v4096, %v4316
        %v4371 = vadd.f32 %v4097, %v4321
        %v4372 = vadd.f32 %v4098, %v4324
        %v4373 = vadd.f32 %v4099, %v4329
        %v4374 = vadd.f32 %v4100, %v4332
        %v4375 = vadd.f32 %v4101, %v4337
        %v4376 = vadd.f32 %v4102, %v4340
        %v4377 = vadd.f32 %v4103, %v4345
        %v4378 = vadd.f32 %v4104, %v4348
        %v4379 = vadd.f32 %v4105, %v4353
        %v4380 = vadd.f32 %v4106, %v4356
        %v4381 = vadd.f32 %v4107, %v4361
        %v4382 = vadd.f32 %v4108, %v4364
        %s4383 = scalar_lea.vmem %s1, 896
        %v4384 = vld [vmem:[%s4383] sm:$0xf]
        %v4385 = vld [vmem:[%s4383 + $0x4] sm:$0xf]
        %v4386 = vld [vmem:[%s4383 + $0x8] sm:$0xf]
        %v4387 = vld [vmem:[%s4383 + $0xc] sm:$0xf]
        %v4388 = vld [vmem:[%s4383 + $0x10] sm:$0xf]
        %v4389 = vld [vmem:[%s4383 + $0x14] sm:$0xf]
        %v4390 = vld [vmem:[%s4383 + $0x18] sm:$0xf]
        %v4391 = vld [vmem:[%s4383 + $0x1c] sm:$0xf]
        %v4392 = vld [vmem:[%s4383 + $0x20] sm:$0xf]
        %v4393 = vld [vmem:[%s4383 + $0x24] sm:$0xf]
        %v4394 = vld [vmem:[%s4383 + $0x28] sm:$0xf]
        %v4395 = vld [vmem:[%s4383 + $0x2c] sm:$0xf]
        %v4396 = vld [vmem:[%s4383 + $0x30] sm:$0xf]
        %v4397 = vld [vmem:[%s4383 + $0x34] sm:$0xf]
        %v4398 = vld [vmem:[%s4383 + $0x38] sm:$0xf]
        %v4399 = vld [vmem:[%s4383 + $0x3c] sm:$0xf]
        %v4416 = vunpack.c.l.b16 %v4384
        %v4417 = vunpack.c.l.b16 %v4385
        %v4418 = vunpack.c.l.b16 %v4386
        %v4419 = vunpack.c.l.b16 %v4387
        %v4420 = vunpack.c.l.b16 %v4388
        %v4421 = vunpack.c.l.b16 %v4389
        %v4422 = vunpack.c.l.b16 %v4390
        %v4423 = vunpack.c.l.b16 %v4391
        %v4424 = vunpack.c.l.b16 %v4392
        %v4425 = vunpack.c.l.b16 %v4393
        %v4426 = vunpack.c.l.b16 %v4394
        %v4427 = vunpack.c.l.b16 %v4395
        %v4428 = vunpack.c.l.b16 %v4396
        %v4429 = vunpack.c.l.b16 %v4397
        %v4430 = vunpack.c.l.b16 %v4398
        %v4431 = vunpack.c.l.b16 %v4399
        %v4432 = vpack.c.b16 %v4417, %v4416
        %v4433 = vpack.c.b16 %v4419, %v4418
        %v4434 = vpack.c.b16 %v4421, %v4420
        %v4435 = vpack.c.b16 %v4423, %v4422
        %v4436 = vpack.c.b16 %v4425, %v4424
        %v4437 = vpack.c.b16 %v4427, %v4426
        %v4438 = vpack.c.b16 %v4429, %v4428
        %v4439 = vpack.c.b16 %v4431, %v4430
        %4448 = vmatprep.subr.bf16.mxu0 0
        %4449 = vmatpush1.bf16.msra.mxu0 %v4432
        %4450 = vmatprep.subr.bf16.mxu0 0
        %4451 = vmatpush1.bf16.msra.mxu0 %v4433
        %4452 = vmatprep.subr.bf16.mxu0 0
        %4453 = vmatpush1.bf16.msra.mxu0 %v4434
        %4454 = vmatprep.subr.bf16.mxu0 0
        %4455 = vmatpush1.bf16.msra.mxu0 %v4435
        %4456 = vmatprep.subr.bf16.mxu0 0
        %4457 = vmatpush1.bf16.msra.mxu0 %v4436
        %4458 = vmatprep.subr.bf16.mxu0 0
        %4459 = vmatpush1.bf16.msra.mxu0 %v4437
        %4460 = vmatprep.subr.bf16.mxu0 0
        %4461 = vmatpush1.bf16.msra.mxu0 %v4438
        %4462 = vmatprep.subr.bf16.mxu0 0
        %4463 = vmatpush1.bf16.msra.mxu0 %v4439
        %4464 = vmatprep.subr.bf16.mxu0 0
        %4465 = vmatpush1.bf16.msra.mxu0 0
        %4466 = vmatprep.subr.bf16.mxu0 0
        %4467 = vmatpush1.bf16.msra.mxu0 0
        %4468 = vmatprep.subr.bf16.mxu0 0
        %4469 = vmatpush1.bf16.msra.mxu0 0
        %4470 = vmatprep.subr.bf16.mxu0 0
        %4471 = vmatpush1.bf16.msra.mxu0 0
        %4472 = vmatprep.subr.bf16.mxu0 0
        %4473 = vmatpush1.bf16.msra.mxu0 0
        %4474 = vmatprep.subr.bf16.mxu0 0
        %4475 = vmatpush1.bf16.msra.mxu0 0
        %4476 = vmatprep.subr.bf16.mxu0 0
        %4477 = vmatpush1.bf16.msra.mxu0 0
        %4478 = vmatprep.subr.bf16.mxu0 0
        %4479 = vmatpush1.bf16.msra.mxu0 0
        %4480 = vmatprep.mubr.bf16.mxu0 0
        %4481 = vmatmul.mubr.bf16.gmra.mrb[0].mxu0 %v434
        %v4482 = vpop.f32.mrb[0].mxu0
        %v4483 = vadd.f32 0.0, %v4482
        %v4484 = vpop.f32.mrb[0].mxu0
        %v4485 = vpop.f32.mrb[0].mxu0
        %v4486 = vadd.f32 0.0, %v4485
        %v4487 = vpop.f32.mrb[0].mxu0
        %4488 = vmatprep.mubr.bf16.mxu0 0
        %4489 = vmatmul.mubr.bf16.gmra.mrb[0].mxu0 %v435
        %v4490 = vpop.f32.mrb[0].mxu0
        %v4491 = vadd.f32 0.0, %v4490
        %v4492 = vpop.f32.mrb[0].mxu0
        %v4493 = vpop.f32.mrb[0].mxu0
        %v4494 = vadd.f32 0.0, %v4493
        %v4495 = vpop.f32.mrb[0].mxu0
        %4496 = vmatprep.mubr.bf16.mxu0 0
        %4497 = vmatmul.mubr.bf16.gmra.mrb[0].mxu0 %v436
        %v4498 = vpop.f32.mrb[0].mxu0
        %v4499 = vadd.f32 0.0, %v4498
        %v4500 = vpop.f32.mrb[0].mxu0
        %v4501 = vpop.f32.mrb[0].mxu0
        %v4502 = vadd.f32 0.0, %v4501
        %v4503 = vpop.f32.mrb[0].mxu0
        %4504 = vmatprep.mubr.bf16.mxu0 0
        %4505 = vmatmul.mubr.bf16.gmra.mrb[0].mxu0 %v437
        %v4506 = vpop.f32.mrb[0].mxu0
        %v4507 = vadd.f32 0.0, %v4506
        %v4508 = vpop.f32.mrb[0].mxu0
        %v4509 = vpop.f32.mrb[0].mxu0
        %v4510 = vadd.f32 0.0, %v4509
        %v4511 = vpop.f32.mrb[0].mxu0
        %4512 = vmatprep.mubr.bf16.mxu0 0
        %4513 = vmatmul.mubr.bf16.gmra.mrb[0].mxu0 %v438
        %v4514 = vpop.f32.mrb[0].mxu0
        %v4515 = vadd.f32 0.0, %v4514
        %v4516 = vpop.f32.mrb[0].mxu0
        %v4517 = vpop.f32.mrb[0].mxu0
        %v4518 = vadd.f32 0.0, %v4517
        %v4519 = vpop.f32.mrb[0].mxu0
        %4520 = vmatprep.mubr.bf16.mxu0 0
        %4521 = vmatmul.mubr.bf16.gmra.mrb[0].mxu0 %v439
        %v4522 = vpop.f32.mrb[0].mxu0
        %v4523 = vadd.f32 0.0, %v4522
        %v4524 = vpop.f32.mrb[0].mxu0
        %v4525 = vpop.f32.mrb[0].mxu0
        %v4526 = vadd.f32 0.0, %v4525
        %v4527 = vpop.f32.mrb[0].mxu0
        %4528 = vmatprep.mubr.bf16.mxu0 0
        %4529 = vmatmul.mubr.bf16.gmra.mrb[0].mxu0 %v440
        %v4530 = vpop.f32.mrb[0].mxu0
        %v4531 = vadd.f32 0.0, %v4530
        %v4532 = vpop.f32.mrb[0].mxu0
        %v4533 = vpop.f32.mrb[0].mxu0
        %v4534 = vadd.f32 0.0, %v4533
        %v4535 = vpop.f32.mrb[0].mxu0
        %4536 = vmatprep.mubr.bf16.mxu0 0
        %4537 = vmatmul.mubr.bf16.gmra.mrb[0].mxu0 %v441
        %v4538 = vpop.f32.mrb[0].mxu0
        %v4539 = vadd.f32 0.0, %v4538
        %v4540 = vpop.f32.mrb[0].mxu0
        %v4541 = vpop.f32.mrb[0].mxu0
        %v4542 = vadd.f32 0.0, %v4541
        %v4543 = vpop.f32.mrb[0].mxu0
        %4544 = vdwg.mxu0
        %v4545 = vadd.f32 %v4367, %v4483
        %v4546 = vadd.f32 %v4368, %v4486
        %v4547 = vadd.f32 %v4369, %v4491
        %v4548 = vadd.f32 %v4370, %v4494
        %v4549 = vadd.f32 %v4371, %v4499
        %v4550 = vadd.f32 %v4372, %v4502
        %v4551 = vadd.f32 %v4373, %v4507
        %v4552 = vadd.f32 %v4374, %v4510
        %v4553 = vadd.f32 %v4375, %v4515
        %v4554 = vadd.f32 %v4376, %v4518
        %v4555 = vadd.f32 %v4377, %v4523
        %v4556 = vadd.f32 %v4378, %v4526
        %v4557 = vadd.f32 %v4379, %v4531
        %v4558 = vadd.f32 %v4380, %v4534
        %v4559 = vadd.f32 %v4381, %v4539
        %v4560 = vadd.f32 %v4382, %v4542
        %v4569 = vrot.slane %v261, 7
        %v4570 = vrot.slane %v4569, 4
        %v4571 = vrot.slane %v262, 7
        %v4572 = vsel %vm3318, %v4570, %v4571
        %v4573 = vrot.slane %v4571, 4
        %v4574 = vrot.slane %v263, 7
        %v4575 = vsel %vm3318, %v4573, %v4574
        %v4576 = vrot.slane %v268, 7
        %v4577 = vrot.slane %v4576, 4
        %v4578 = vrot.slane %v269, 7
        %v4579 = vsel %vm3318, %v4577, %v4578
        %v4580 = vrot.slane %v4578, 4
        %v4581 = vrot.slane %v270, 7
        %v4582 = vsel %vm3318, %v4580, %v4581
        %v4583 = vrot.slane %v275, 7
        %v4584 = vrot.slane %v4583, 4
        %v4585 = vrot.slane %v276, 7
        %v4586 = vsel %vm3318, %v4584, %v4585
        %v4587 = vrot.slane %v4585, 4
        %v4588 = vrot.slane %v277, 7
        %v4589 = vsel %vm3318, %v4587, %v4588
        %v4590 = vrot.slane %v282, 7
        %v4591 = vrot.slane %v4590, 4
        %v4592 = vrot.slane %v283, 7
        %v4593 = vsel %vm3318, %v4591, %v4592
        %v4594 = vrot.slane %v4592, 4
        %v4595 = vrot.slane %v284, 7
        %v4596 = vsel %vm3318, %v4594, %v4595
        %v4597 = vrot.slane %v289, 7
        %v4598 = vrot.slane %v4597, 4
        %v4599 = vrot.slane %v290, 7
        %v4600 = vsel %vm3318, %v4598, %v4599
        %v4601 = vrot.slane %v4599, 4
        %v4602 = vrot.slane %v291, 7
        %v4603 = vsel %vm3318, %v4601, %v4602
        %v4604 = vrot.slane %v296, 7
        %v4605 = vrot.slane %v4604, 4
        %v4606 = vrot.slane %v297, 7
        %v4607 = vsel %vm3318, %v4605, %v4606
        %v4608 = vrot.slane %v4606, 4
        %v4609 = vrot.slane %v298, 7
        %v4610 = vsel %vm3318, %v4608, %v4609
        %v4611 = vrot.slane %v303, 7
        %v4612 = vrot.slane %v4611, 4
        %v4613 = vrot.slane %v304, 7
        %v4614 = vsel %vm3318, %v4612, %v4613
        %v4615 = vrot.slane %v4613, 4
        %v4616 = vrot.slane %v305, 7
        %v4617 = vsel %vm3318, %v4615, %v4616
        %v4618 = vrot.slane %v310, 7
        %v4619 = vrot.slane %v4618, 4
        %v4620 = vrot.slane %v311, 7
        %v4621 = vsel %vm3318, %v4619, %v4620
        %v4622 = vrot.slane %v4620, 4
        %v4623 = vrot.slane %v312, 7
        %v4624 = vsel %vm3318, %v4622, %v4623
        %s4625 = scalar_lea.vmem %s1, 960
        %v4626 = vld [vmem:[%s4625] sm:$0xf]
        %v4627 = vld [vmem:[%s4625 + $0x4] sm:$0xf]
        %v4628 = vld [vmem:[%s4625 + $0x8] sm:$0xf]
        %v4629 = vld [vmem:[%s4625 + $0xc] sm:$0xf]
        %v4630 = vld [vmem:[%s4625 + $0x10] sm:$0xf]
        %v4631 = vld [vmem:[%s4625 + $0x14] sm:$0xf]
        %v4632 = vld [vmem:[%s4625 + $0x18] sm:$0xf]
        %v4633 = vld [vmem:[%s4625 + $0x1c] sm:$0xf]
        %v4634 = vld [vmem:[%s4625 + $0x20] sm:$0xf]
        %v4635 = vld [vmem:[%s4625 + $0x24] sm:$0xf]
        %v4636 = vld [vmem:[%s4625 + $0x28] sm:$0xf]
        %v4637 = vld [vmem:[%s4625 + $0x2c] sm:$0xf]
        %v4638 = vld [vmem:[%s4625 + $0x30] sm:$0xf]
        %v4639 = vld [vmem:[%s4625 + $0x34] sm:$0xf]
        %v4640 = vld [vmem:[%s4625 + $0x38] sm:$0xf]
        %v4641 = vld [vmem:[%s4625 + $0x3c] sm:$0xf]
        %v4642 = vunpack.c.l.b16 %v4572
        %v4643 = vunpack.c.l.b16 %v4575
        %v4644 = vunpack.c.l.b16 %v4579
        %v4645 = vunpack.c.l.b16 %v4582
        %v4646 = vunpack.c.l.b16 %v4586
        %v4647 = vunpack.c.l.b16 %v4589
        %v4648 = vunpack.c.l.b16 %v4593
        %v4649 = vunpack.c.l.b16 %v4596
        %v4650 = vunpack.c.l.b16 %v4600
        %v4651 = vunpack.c.l.b16 %v4603
        %v4652 = vunpack.c.l.b16 %v4607
        %v4653 = vunpack.c.l.b16 %v4610
        %v4654 = vunpack.c.l.b16 %v4614
        %v4655 = vunpack.c.l.b16 %v4617
        %v4656 = vunpack.c.l.b16 %v4621
        %v4657 = vunpack.c.l.b16 %v4624
        %v4658 = vpack.c.b16 %v4643, %v4642
        %v4659 = vpack.c.b16 %v4645, %v4644
        %v4660 = vpack.c.b16 %v4647, %v4646
        %v4661 = vpack.c.b16 %v4649, %v4648
        %v4662 = vpack.c.b16 %v4651, %v4650
        %v4663 = vpack.c.b16 %v4653, %v4652
        %v4664 = vpack.c.b16 %v4655, %v4654
        %v4665 = vpack.c.b16 %v4657, %v4656
        %v4690 = vunpack.c.l.b16 %v4626
        %v4691 = vunpack.c.l.b16 %v4627
        %v4692 = vunpack.c.l.b16 %v4628
        %v4693 = vunpack.c.l.b16 %v4629
        %v4694 = vunpack.c.l.b16 %v4630
        %v4695 = vunpack.c.l.b16 %v4631
        %v4696 = vunpack.c.l.b16 %v4632
        %v4697 = vunpack.c.l.b16 %v4633
        %v4698 = vunpack.c.l.b16 %v4634
        %v4699 = vunpack.c.l.b16 %v4635
        %v4700 = vunpack.c.l.b16 %v4636
        %v4701 = vunpack.c.l.b16 %v4637
        %v4702 = vunpack.c.l.b16 %v4638
        %v4703 = vunpack.c.l.b16 %v4639
        %v4704 = vunpack.c.l.b16 %v4640
        %v4705 = vunpack.c.l.b16 %v4641
        %v4706 = vpack.c.b16 %v4691, %v4690
        %v4707 = vpack.c.b16 %v4693, %v4692
        %v4708 = vpack.c.b16 %v4695, %v4694
        %v4709 = vpack.c.b16 %v4697, %v4696
        %v4710 = vpack.c.b16 %v4699, %v4698
        %v4711 = vpack.c.b16 %v4701, %v4700
        %v4712 = vpack.c.b16 %v4703, %v4702
        %v4713 = vpack.c.b16 %v4705, %v4704
        %4722 = vmatprep.subr.bf16.mxu0 0
        %4723 = vmatpush1.bf16.msra.mxu0 %v4706
        %4724 = vmatprep.subr.bf16.mxu0 0
        %4725 = vmatpush1.bf16.msra.mxu0 %v4707
        %4726 = vmatprep.subr.bf16.mxu0 0
        %4727 = vmatpush1.bf16.msra.mxu0 %v4708
        %4728 = vmatprep.subr.bf16.mxu0 0
        %4729 = vmatpush1.bf16.msra.mxu0 %v4709
        %4730 = vmatprep.subr.bf16.mxu0 0
        %4731 = vmatpush1.bf16.msra.mxu0 %v4710
        %4732 = vmatprep.subr.bf16.mxu0 0
        %4733 = vmatpush1.bf16.msra.mxu0 %v4711
        %4734 = vmatprep.subr.bf16.mxu0 0
        %4735 = vmatpush1.bf16.msra.mxu0 %v4712
        %4736 = vmatprep.subr.bf16.mxu0 0
        %4737 = vmatpush1.bf16.msra.mxu0 %v4713
        %4738 = vmatprep.subr.bf16.mxu0 0
        %4739 = vmatpush1.bf16.msra.mxu0 0
        %4740 = vmatprep.subr.bf16.mxu0 0
        %4741 = vmatpush1.bf16.msra.mxu0 0
        %4742 = vmatprep.subr.bf16.mxu0 0
        %4743 = vmatpush1.bf16.msra.mxu0 0
        %4744 = vmatprep.subr.bf16.mxu0 0
        %4745 = vmatpush1.bf16.msra.mxu0 0
        %4746 = vmatprep.subr.bf16.mxu0 0
        %4747 = vmatpush1.bf16.msra.mxu0 0
        %4748 = vmatprep.subr.bf16.mxu0 0
        %4749 = vmatpush1.bf16.msra.mxu0 0
        %4750 = vmatprep.subr.bf16.mxu0 0
        %4751 = vmatpush1.bf16.msra.mxu0 0
        %4752 = vmatprep.subr.bf16.mxu0 0
        %4753 = vmatpush1.bf16.msra.mxu0 0
        %4754 = vmatprep.mubr.bf16.mxu0 0
        %4755 = vmatmul.mubr.bf16.gmra.mrb[0].mxu0 %v4658
        %v4756 = vpop.f32.mrb[0].mxu0
        %v4757 = vadd.f32 0.0, %v4756
        %v4758 = vpop.f32.mrb[0].mxu0
        %v4759 = vpop.f32.mrb[0].mxu0
        %v4760 = vadd.f32 0.0, %v4759
        %v4761 = vpop.f32.mrb[0].mxu0
        %4762 = vmatprep.mubr.bf16.mxu0 0
        %4763 = vmatmul.mubr.bf16.gmra.mrb[0].mxu0 %v4659
        %v4764 = vpop.f32.mrb[0].mxu0
        %v4765 = vadd.f32 0.0, %v4764
        %v4766 = vpop.f32.mrb[0].mxu0
        %v4767 = vpop.f32.mrb[0].mxu0
        %v4768 = vadd.f32 0.0, %v4767
        %v4769 = vpop.f32.mrb[0].mxu0
        %4770 = vmatprep.mubr.bf16.mxu0 0
        %4771 = vmatmul.mubr.bf16.gmra.mrb[0].mxu0 %v4660
        %v4772 = vpop.f32.mrb[0].mxu0
        %v4773 = vadd.f32 0.0, %v4772
        %v4774 = vpop.f32.mrb[0].mxu0
        %v4775 = vpop.f32.mrb[0].mxu0
        %v4776 = vadd.f32 0.0, %v4775
        %v4777 = vpop.f32.mrb[0].mxu0
        %4778 = vmatprep.mubr.bf16.mxu0 0
        %4779 = vmatmul.mubr.bf16.gmra.mrb[0].mxu0 %v4661
        %v4780 = vpop.f32.mrb[0].mxu0
        %v4781 = vadd.f32 0.0, %v4780
        %v4782 = vpop.f32.mrb[0].mxu0
        %v4783 = vpop.f32.mrb[0].mxu0
        %v4784 = vadd.f32 0.0, %v4783
        %v4785 = vpop.f32.mrb[0].mxu0
        %4786 = vmatprep.mubr.bf16.mxu0 0
        %4787 = vmatmul.mubr.bf16.gmra.mrb[0].mxu0 %v4662
        %v4788 = vpop.f32.mrb[0].mxu0
        %v4789 = vadd.f32 0.0, %v4788
        %v4790 = vpop.f32.mrb[0].mxu0
        %v4791 = vpop.f32.mrb[0].mxu0
        %v4792 = vadd.f32 0.0, %v4791
        %v4793 = vpop.f32.mrb[0].mxu0
        %4794 = vmatprep.mubr.bf16.mxu0 0
        %4795 = vmatmul.mubr.bf16.gmra.mrb[0].mxu0 %v4663
        %v4796 = vpop.f32.mrb[0].mxu0
        %v4797 = vadd.f32 0.0, %v4796
        %v4798 = vpop.f32.mrb[0].mxu0
        %v4799 = vpop.f32.mrb[0].mxu0
        %v4800 = vadd.f32 0.0, %v4799
        %v4801 = vpop.f32.mrb[0].mxu0
        %4802 = vmatprep.mubr.bf16.mxu0 0
        %4803 = vmatmul.mubr.bf16.gmra.mrb[0].mxu0 %v4664
        %v4804 = vpop.f32.mrb[0].mxu0
        %v4805 = vadd.f32 0.0, %v4804
        %v4806 = vpop.f32.mrb[0].mxu0
        %v4807 = vpop.f32.mrb[0].mxu0
        %v4808 = vadd.f32 0.0, %v4807
        %v4809 = vpop.f32.mrb[0].mxu0
        %4810 = vmatprep.mubr.bf16.mxu0 0
        %4811 = vmatmul.mubr.bf16.gmra.mrb[0].mxu0 %v4665
        %v4812 = vpop.f32.mrb[0].mxu0
        %v4813 = vadd.f32 0.0, %v4812
        %v4814 = vpop.f32.mrb[0].mxu0
        %v4815 = vpop.f32.mrb[0].mxu0
        %v4816 = vadd.f32 0.0, %v4815
        %v4817 = vpop.f32.mrb[0].mxu0
        %4818 = vdwg.mxu0
        %v4819 = vadd.f32 %v4545, %v4757
        %v4820 = vadd.f32 %v4546, %v4760
        %v4821 = vadd.f32 %v4547, %v4765
        %v4822 = vadd.f32 %v4548, %v4768
        %v4823 = vadd.f32 %v4549, %v4773
        %v4824 = vadd.f32 %v4550, %v4776
        %v4825 = vadd.f32 %v4551, %v4781
        %v4826 = vadd.f32 %v4552, %v4784
        %v4827 = vadd.f32 %v4553, %v4789
        %v4828 = vadd.f32 %v4554, %v4792
        %v4829 = vadd.f32 %v4555, %v4797
        %v4830 = vadd.f32 %v4556, %v4800
        %v4831 = vadd.f32 %v4557, %v4805
        %v4832 = vadd.f32 %v4558, %v4808
        %v4833 = vadd.f32 %v4559, %v4813
        %v4834 = vadd.f32 %v4560, %v4816
        %s4835 = sadd.s32 %s253, 30
        %s4836 = smul.u32 %s4835, 7
        %s4837 = smul.addr %s4836, 4
        %s4838 = scalar_lea.vmem %s247, %s4837
        %v4839 = vld [vmem:[%s4838] sm:$0xf]
        %v4840 = vld [vmem:[%s4838 + $0x4] sm:$0xf]
        %v4841 = vld [vmem:[%s4838 + $0x8] sm:$0xf]
        %v4842 = vld [vmem:[%s4838 + $0xc] sm:$0xf]
        %v4843 = vld [vmem:[%s4838 + $0x10] sm:$0xf]
        %v4844 = vld [vmem:[%s4838 + $0x14] sm:$0xf]
        %v4845 = vld [vmem:[%s4838 + $0x1c] sm:$0xf]
        %v4846 = vld [vmem:[%s4838 + $0x20] sm:$0xf]
        %v4847 = vld [vmem:[%s4838 + $0x24] sm:$0xf]
        %v4848 = vld [vmem:[%s4838 + $0x28] sm:$0xf]
        %v4849 = vld [vmem:[%s4838 + $0x2c] sm:$0xf]
        %v4850 = vld [vmem:[%s4838 + $0x30] sm:$0xf]
        %v4851 = vld [vmem:[%s4838 + $0x38] sm:$0xf]
        %v4852 = vld [vmem:[%s4838 + $0x3c] sm:$0xf]
        %v4853 = vld [vmem:[%s4838 + $0x40] sm:$0xf]
        %v4854 = vld [vmem:[%s4838 + $0x44] sm:$0xf]
        %v4855 = vld [vmem:[%s4838 + $0x48] sm:$0xf]
        %v4856 = vld [vmem:[%s4838 + $0x4c] sm:$0xf]
        %v4857 = vld [vmem:[%s4838 + $0x54] sm:$0xf]
        %v4858 = vld [vmem:[%s4838 + $0x58] sm:$0xf]
        %v4859 = vld [vmem:[%s4838 + $0x5c] sm:$0xf]
        %v4860 = vld [vmem:[%s4838 + $0x60] sm:$0xf]
        %v4861 = vld [vmem:[%s4838 + $0x64] sm:$0xf]
        %v4862 = vld [vmem:[%s4838 + $0x68] sm:$0xf]
        %v4863 = vld [vmem:[%s4838 + $0x70] sm:$0xf]
        %v4864 = vld [vmem:[%s4838 + $0x74] sm:$0xf]
        %v4865 = vld [vmem:[%s4838 + $0x78] sm:$0xf]
        %v4866 = vld [vmem:[%s4838 + $0x7c] sm:$0xf]
        %v4867 = vld [vmem:[%s4838 + $0x80] sm:$0xf]
        %v4868 = vld [vmem:[%s4838 + $0x84] sm:$0xf]
        %v4869 = vld [vmem:[%s4838 + $0x8c] sm:$0xf]
        %v4870 = vld [vmem:[%s4838 + $0x90] sm:$0xf]
        %v4871 = vld [vmem:[%s4838 + $0x94] sm:$0xf]
        %v4872 = vld [vmem:[%s4838 + $0x98] sm:$0xf]
        %v4873 = vld [vmem:[%s4838 + $0x9c] sm:$0xf]
        %v4874 = vld [vmem:[%s4838 + $0xa0] sm:$0xf]
        %v4875 = vld [vmem:[%s4838 + $0xa8] sm:$0xf]
        %v4876 = vld [vmem:[%s4838 + $0xac] sm:$0xf]
        %v4877 = vld [vmem:[%s4838 + $0xb0] sm:$0xf]
        %v4878 = vld [vmem:[%s4838 + $0xb4] sm:$0xf]
        %v4879 = vld [vmem:[%s4838 + $0xb8] sm:$0xf]
        %v4880 = vld [vmem:[%s4838 + $0xbc] sm:$0xf]
        %v4881 = vld [vmem:[%s4838 + $0xc4] sm:$0xf]
        %v4882 = vld [vmem:[%s4838 + $0xc8] sm:$0xf]
        %v4883 = vld [vmem:[%s4838 + $0xcc] sm:$0xf]
        %v4884 = vld [vmem:[%s4838 + $0xd0] sm:$0xf]
        %v4885 = vld [vmem:[%s4838 + $0xd4] sm:$0xf]
        %v4886 = vld [vmem:[%s4838 + $0xd8] sm:$0xf]
        %v4911 = vrot.slane %v4839, 7
        %v4912 = vrot.slane %v4911, 4
        %v4913 = vrot.slane %v4840, 7
        %v4914 = vsel %vm3318, %v4912, %v4913
        %v4915 = vrot.slane %v4913, 4
        %v4916 = vrot.slane %v4841, 7
        %v4917 = vsel %vm3318, %v4915, %v4916
        %v4918 = vrot.slane %v4845, 7
        %v4919 = vrot.slane %v4918, 4
        %v4920 = vrot.slane %v4846, 7
        %v4921 = vsel %vm3318, %v4919, %v4920
        %v4922 = vrot.slane %v4920, 4
        %v4923 = vrot.slane %v4847, 7
        %v4924 = vsel %vm3318, %v4922, %v4923
        %v4925 = vrot.slane %v4851, 7
        %v4926 = vrot.slane %v4925, 4
        %v4927 = vrot.slane %v4852, 7
        %v4928 = vsel %vm3318, %v4926, %v4927
        %v4929 = vrot.slane %v4927, 4
        %v4930 = vrot.slane %v4853, 7
        %v4931 = vsel %vm3318, %v4929, %v4930
        %v4932 = vrot.slane %v4857, 7
        %v4933 = vrot.slane %v4932, 4
        %v4934 = vrot.slane %v4858, 7
        %v4935 = vsel %vm3318, %v4933, %v4934
        %v4936 = vrot.slane %v4934, 4
        %v4937 = vrot.slane %v4859, 7
        %v4938 = vsel %vm3318, %v4936, %v4937
        %v4939 = vrot.slane %v4863, 7
        %v4940 = vrot.slane %v4939, 4
        %v4941 = vrot.slane %v4864, 7
        %v4942 = vsel %vm3318, %v4940, %v4941
        %v4943 = vrot.slane %v4941, 4
        %v4944 = vrot.slane %v4865, 7
        %v4945 = vsel %vm3318, %v4943, %v4944
        %v4946 = vrot.slane %v4869, 7
        %v4947 = vrot.slane %v4946, 4
        %v4948 = vrot.slane %v4870, 7
        %v4949 = vsel %vm3318, %v4947, %v4948
        %v4950 = vrot.slane %v4948, 4
        %v4951 = vrot.slane %v4871, 7
        %v4952 = vsel %vm3318, %v4950, %v4951
        %v4953 = vrot.slane %v4875, 7
        %v4954 = vrot.slane %v4953, 4
        %v4955 = vrot.slane %v4876, 7
        %v4956 = vsel %vm3318, %v4954, %v4955
        %v4957 = vrot.slane %v4955, 4
        %v4958 = vrot.slane %v4877, 7
        %v4959 = vsel %vm3318, %v4957, %v4958
        %v4960 = vrot.slane %v4881, 7
        %v4961 = vrot.slane %v4960, 4
        %v4962 = vrot.slane %v4882, 7
        %v4963 = vsel %vm3318, %v4961, %v4962
        %v4964 = vrot.slane %v4962, 4
        %v4965 = vrot.slane %v4883, 7
        %v4966 = vsel %vm3318, %v4964, %v4965
        %s4967 = scalar_lea.vmem %s1, 1024
        %v4968 = vld [vmem:[%s4967] sm:$0xf]
        %v4969 = vld [vmem:[%s4967 + $0x4] sm:$0xf]
        %v4970 = vld [vmem:[%s4967 + $0x8] sm:$0xf]
        %v4971 = vld [vmem:[%s4967 + $0xc] sm:$0xf]
        %v4972 = vld [vmem:[%s4967 + $0x10] sm:$0xf]
        %v4973 = vld [vmem:[%s4967 + $0x14] sm:$0xf]
        %v4974 = vld [vmem:[%s4967 + $0x18] sm:$0xf]
        %v4975 = vld [vmem:[%s4967 + $0x1c] sm:$0xf]
        %v4976 = vld [vmem:[%s4967 + $0x20] sm:$0xf]
        %v4977 = vld [vmem:[%s4967 + $0x24] sm:$0xf]
        %v4978 = vld [vmem:[%s4967 + $0x28] sm:$0xf]
        %v4979 = vld [vmem:[%s4967 + $0x2c] sm:$0xf]
        %v4980 = vld [vmem:[%s4967 + $0x30] sm:$0xf]
        %v4981 = vld [vmem:[%s4967 + $0x34] sm:$0xf]
        %v4982 = vld [vmem:[%s4967 + $0x38] sm:$0xf]
        %v4983 = vld [vmem:[%s4967 + $0x3c] sm:$0xf]
        %v4984 = vunpack.c.l.b16 %v4914
        %v4985 = vunpack.c.l.b16 %v4917
        %v4986 = vunpack.c.l.b16 %v4921
        %v4987 = vunpack.c.l.b16 %v4924
        %v4988 = vunpack.c.l.b16 %v4928
        %v4989 = vunpack.c.l.b16 %v4931
        %v4990 = vunpack.c.l.b16 %v4935
        %v4991 = vunpack.c.l.b16 %v4938
        %v4992 = vunpack.c.l.b16 %v4942
        %v4993 = vunpack.c.l.b16 %v4945
        %v4994 = vunpack.c.l.b16 %v4949
        %v4995 = vunpack.c.l.b16 %v4952
        %v4996 = vunpack.c.l.b16 %v4956
        %v4997 = vunpack.c.l.b16 %v4959
        %v4998 = vunpack.c.l.b16 %v4963
        %v4999 = vunpack.c.l.b16 %v4966
        %v5000 = vpack.c.b16 %v4985, %v4984
        %v5001 = vpack.c.b16 %v4987, %v4986
        %v5002 = vpack.c.b16 %v4989, %v4988
        %v5003 = vpack.c.b16 %v4991, %v4990
        %v5004 = vpack.c.b16 %v4993, %v4992
        %v5005 = vpack.c.b16 %v4995, %v4994
        %v5006 = vpack.c.b16 %v4997, %v4996
        %v5007 = vpack.c.b16 %v4999, %v4998
        %v5032 = vunpack.c.l.b16 %v4968
        %v5033 = vunpack.c.l.b16 %v4969
        %v5034 = vunpack.c.l.b16 %v4970
        %v5035 = vunpack.c.l.b16 %v4971
        %v5036 = vunpack.c.l.b16 %v4972
        %v5037 = vunpack.c.l.b16 %v4973
        %v5038 = vunpack.c.l.b16 %v4974
        %v5039 = vunpack.c.l.b16 %v4975
        %v5040 = vunpack.c.l.b16 %v4976
        %v5041 = vunpack.c.l.b16 %v4977
        %v5042 = vunpack.c.l.b16 %v4978
        %v5043 = vunpack.c.l.b16 %v4979
        %v5044 = vunpack.c.l.b16 %v4980
        %v5045 = vunpack.c.l.b16 %v4981
        %v5046 = vunpack.c.l.b16 %v4982
        %v5047 = vunpack.c.l.b16 %v4983
        %v5048 = vpack.c.b16 %v5033, %v5032
        %v5049 = vpack.c.b16 %v5035, %v5034
        %v5050 = vpack.c.b16 %v5037, %v5036
        %v5051 = vpack.c.b16 %v5039, %v5038
        %v5052 = vpack.c.b16 %v5041, %v5040
        %v5053 = vpack.c.b16 %v5043, %v5042
        %v5054 = vpack.c.b16 %v5045, %v5044
        %v5055 = vpack.c.b16 %v5047, %v5046
        %5064 = vmatprep.subr.bf16.mxu0 0
        %5065 = vmatpush1.bf16.msra.mxu0 %v5048
        %5066 = vmatprep.subr.bf16.mxu0 0
        %5067 = vmatpush1.bf16.msra.mxu0 %v5049
        %5068 = vmatprep.subr.bf16.mxu0 0
        %5069 = vmatpush1.bf16.msra.mxu0 %v5050
        %5070 = vmatprep.subr.bf16.mxu0 0
        %5071 = vmatpush1.bf16.msra.mxu0 %v5051
        %5072 = vmatprep.subr.bf16.mxu0 0
        %5073 = vmatpush1.bf16.msra.mxu0 %v5052
        %5074 = vmatprep.subr.bf16.mxu0 0
        %5075 = vmatpush1.bf16.msra.mxu0 %v5053
        %5076 = vmatprep.subr.bf16.mxu0 0
        %5077 = vmatpush1.bf16.msra.mxu0 %v5054
        %5078 = vmatprep.subr.bf16.mxu0 0
        %5079 = vmatpush1.bf16.msra.mxu0 %v5055
        %5080 = vmatprep.subr.bf16.mxu0 0
        %5081 = vmatpush1.bf16.msra.mxu0 0
        %5082 = vmatprep.subr.bf16.mxu0 0
        %5083 = vmatpush1.bf16.msra.mxu0 0
        %5084 = vmatprep.subr.bf16.mxu0 0
        %5085 = vmatpush1.bf16.msra.mxu0 0
        %5086 = vmatprep.subr.bf16.mxu0 0
        %5087 = vmatpush1.bf16.msra.mxu0 0
        %5088 = vmatprep.subr.bf16.mxu0 0
        %5089 = vmatpush1.bf16.msra.mxu0 0
        %5090 = vmatprep.subr.bf16.mxu0 0
        %5091 = vmatpush1.bf16.msra.mxu0 0
        %5092 = vmatprep.subr.bf16.mxu0 0
        %5093 = vmatpush1.bf16.msra.mxu0 0
        %5094 = vmatprep.subr.bf16.mxu0 0
        %5095 = vmatpush1.bf16.msra.mxu0 0
        %5096 = vmatprep.mubr.bf16.mxu0 0
        %5097 = vmatmul.mubr.bf16.gmra.mrb[0].mxu0 %v5000
        %v5098 = vpop.f32.mrb[0].mxu0
        %v5099 = vadd.f32 0.0, %v5098
        %v5100 = vpop.f32.mrb[0].mxu0
        %v5101 = vpop.f32.mrb[0].mxu0
        %v5102 = vadd.f32 0.0, %v5101
        %v5103 = vpop.f32.mrb[0].mxu0
        %5104 = vmatprep.mubr.bf16.mxu0 0
        %5105 = vmatmul.mubr.bf16.gmra.mrb[0].mxu0 %v5001
        %v5106 = vpop.f32.mrb[0].mxu0
        %v5107 = vadd.f32 0.0, %v5106
        %v5108 = vpop.f32.mrb[0].mxu0
        %v5109 = vpop.f32.mrb[0].mxu0
        %v5110 = vadd.f32 0.0, %v5109
        %v5111 = vpop.f32.mrb[0].mxu0
        %5112 = vmatprep.mubr.bf16.mxu0 0
        %5113 = vmatmul.mubr.bf16.gmra.mrb[0].mxu0 %v5002
        %v5114 = vpop.f32.mrb[0].mxu0
        %v5115 = vadd.f32 0.0, %v5114
        %v5116 = vpop.f32.mrb[0].mxu0
        %v5117 = vpop.f32.mrb[0].mxu0
        %v5118 = vadd.f32 0.0, %v5117
        %v5119 = vpop.f32.mrb[0].mxu0
        %5120 = vmatprep.mubr.bf16.mxu0 0
        %5121 = vmatmul.mubr.bf16.gmra.mrb[0].mxu0 %v5003
        %v5122 = vpop.f32.mrb[0].mxu0
        %v5123 = vadd.f32 0.0, %v5122
        %v5124 = vpop.f32.mrb[0].mxu0
        %v5125 = vpop.f32.mrb[0].mxu0
        %v5126 = vadd.f32 0.0, %v5125
        %v5127 = vpop.f32.mrb[0].mxu0
        %5128 = vmatprep.mubr.bf16.mxu0 0
        %5129 = vmatmul.mubr.bf16.gmra.mrb[0].mxu0 %v5004
        %v5130 = vpop.f32.mrb[0].mxu0
        %v5131 = vadd.f32 0.0, %v5130
        %v5132 = vpop.f32.mrb[0].mxu0
        %v5133 = vpop.f32.mrb[0].mxu0
        %v5134 = vadd.f32 0.0, %v5133
        %v5135 = vpop.f32.mrb[0].mxu0
        %5136 = vmatprep.mubr.bf16.mxu0 0
        %5137 = vmatmul.mubr.bf16.gmra.mrb[0].mxu0 %v5005
        %v5138 = vpop.f32.mrb[0].mxu0
        %v5139 = vadd.f32 0.0, %v5138
        %v5140 = vpop.f32.mrb[0].mxu0
        %v5141 = vpop.f32.mrb[0].mxu0
        %v5142 = vadd.f32 0.0, %v5141
        %v5143 = vpop.f32.mrb[0].mxu0
        %5144 = vmatprep.mubr.bf16.mxu0 0
        %5145 = vmatmul.mubr.bf16.gmra.mrb[0].mxu0 %v5006
        %v5146 = vpop.f32.mrb[0].mxu0
        %v5147 = vadd.f32 0.0, %v5146
        %v5148 = vpop.f32.mrb[0].mxu0
        %v5149 = vpop.f32.mrb[0].mxu0
        %v5150 = vadd.f32 0.0, %v5149
        %v5151 = vpop.f32.mrb[0].mxu0
        %5152 = vmatprep.mubr.bf16.mxu0 0
        %5153 = vmatmul.mubr.bf16.gmra.mrb[0].mxu0 %v5007
        %v5154 = vpop.f32.mrb[0].mxu0
        %v5155 = vadd.f32 0.0, %v5154
        %v5156 = vpop.f32.mrb[0].mxu0
        %v5157 = vpop.f32.mrb[0].mxu0
        %v5158 = vadd.f32 0.0, %v5157
        %v5159 = vpop.f32.mrb[0].mxu0
        %5160 = vdwg.mxu0
        %v5161 = vadd.f32 %v4819, %v5099
        %v5162 = vadd.f32 %v4820, %v5102
        %v5163 = vadd.f32 %v4821, %v5107
        %v5164 = vadd.f32 %v4822, %v5110
        %v5165 = vadd.f32 %v4823, %v5115
        %v5166 = vadd.f32 %v4824, %v5118
        %v5167 = vadd.f32 %v4825, %v5123
        %v5168 = vadd.f32 %v4826, %v5126
        %v5169 = vadd.f32 %v4827, %v5131
        %v5170 = vadd.f32 %v4828, %v5134
        %v5171 = vadd.f32 %v4829, %v5139
        %v5172 = vadd.f32 %v4830, %v5142
        %v5173 = vadd.f32 %v4831, %v5147
        %v5174 = vadd.f32 %v4832, %v5150
        %v5175 = vadd.f32 %v4833, %v5155
        %v5176 = vadd.f32 %v4834, %v5158
        %v5193 = vrot.slane %v4841, 5
        %v5194 = vrot.slane %v5193, 4
        %v5195 = vrot.slane %v4842, 5
        %v5196 = vsel %vm340, %v5194, %v5195
        %v5197 = vrot.slane %v5195, 4
        %v5198 = vrot.slane %v4843, 5
        %v5199 = vsel %vm340, %v5197, %v5198
        %v5200 = vrot.slane %v4847, 5
        %v5201 = vrot.slane %v5200, 4
        %v5202 = vrot.slane %v4848, 5
        %v5203 = vsel %vm340, %v5201, %v5202
        %v5204 = vrot.slane %v5202, 4
        %v5205 = vrot.slane %v4849, 5
        %v5206 = vsel %vm340, %v5204, %v5205
        %v5207 = vrot.slane %v4853, 5
        %v5208 = vrot.slane %v5207, 4
        %v5209 = vrot.slane %v4854, 5
        %v5210 = vsel %vm340, %v5208, %v5209
        %v5211 = vrot.slane %v5209, 4
        %v5212 = vrot.slane %v4855, 5
        %v5213 = vsel %vm340, %v5211, %v5212
        %v5214 = vrot.slane %v4859, 5
        %v5215 = vrot.slane %v5214, 4
        %v5216 = vrot.slane %v4860, 5
        %v5217 = vsel %vm340, %v5215, %v5216
        %v5218 = vrot.slane %v5216, 4
        %v5219 = vrot.slane %v4861, 5
        %v5220 = vsel %vm340, %v5218, %v5219
        %v5221 = vrot.slane %v4865, 5
        %v5222 = vrot.slane %v5221, 4
        %v5223 = vrot.slane %v4866, 5
        %v5224 = vsel %vm340, %v5222, %v5223
        %v5225 = vrot.slane %v5223, 4
        %v5226 = vrot.slane %v4867, 5
        %v5227 = vsel %vm340, %v5225, %v5226
        %v5228 = vrot.slane %v4871, 5
        %v5229 = vrot.slane %v5228, 4
        %v5230 = vrot.slane %v4872, 5
        %v5231 = vsel %vm340, %v5229, %v5230
        %v5232 = vrot.slane %v5230, 4
        %v5233 = vrot.slane %v4873, 5
        %v5234 = vsel %vm340, %v5232, %v5233
        %v5235 = vrot.slane %v4877, 5
        %v5236 = vrot.slane %v5235, 4
        %v5237 = vrot.slane %v4878, 5
        %v5238 = vsel %vm340, %v5236, %v5237
        %v5239 = vrot.slane %v5237, 4
        %v5240 = vrot.slane %v4879, 5
        %v5241 = vsel %vm340, %v5239, %v5240
        %v5242 = vrot.slane %v4883, 5
        %v5243 = vrot.slane %v5242, 4
        %v5244 = vrot.slane %v4884, 5
        %v5245 = vsel %vm340, %v5243, %v5244
        %v5246 = vrot.slane %v5244, 4
        %v5247 = vrot.slane %v4885, 5
        %v5248 = vsel %vm340, %v5246, %v5247
        %s5249 = scalar_lea.vmem %s1, 1088
        %v5250 = vld [vmem:[%s5249] sm:$0xf]
        %v5251 = vld [vmem:[%s5249 + $0x4] sm:$0xf]
        %v5252 = vld [vmem:[%s5249 + $0x8] sm:$0xf]
        %v5253 = vld [vmem:[%s5249 + $0xc] sm:$0xf]
        %v5254 = vld [vmem:[%s5249 + $0x10] sm:$0xf]
        %v5255 = vld [vmem:[%s5249 + $0x14] sm:$0xf]
        %v5256 = vld [vmem:[%s5249 + $0x18] sm:$0xf]
        %v5257 = vld [vmem:[%s5249 + $0x1c] sm:$0xf]
        %v5258 = vld [vmem:[%s5249 + $0x20] sm:$0xf]
        %v5259 = vld [vmem:[%s5249 + $0x24] sm:$0xf]
        %v5260 = vld [vmem:[%s5249 + $0x28] sm:$0xf]
        %v5261 = vld [vmem:[%s5249 + $0x2c] sm:$0xf]
        %v5262 = vld [vmem:[%s5249 + $0x30] sm:$0xf]
        %v5263 = vld [vmem:[%s5249 + $0x34] sm:$0xf]
        %v5264 = vld [vmem:[%s5249 + $0x38] sm:$0xf]
        %v5265 = vld [vmem:[%s5249 + $0x3c] sm:$0xf]
        %v5266 = vunpack.c.l.b16 %v5196
        %v5267 = vunpack.c.l.b16 %v5199
        %v5268 = vunpack.c.l.b16 %v5203
        %v5269 = vunpack.c.l.b16 %v5206
        %v5270 = vunpack.c.l.b16 %v5210
        %v5271 = vunpack.c.l.b16 %v5213
        %v5272 = vunpack.c.l.b16 %v5217
        %v5273 = vunpack.c.l.b16 %v5220
        %v5274 = vunpack.c.l.b16 %v5224
        %v5275 = vunpack.c.l.b16 %v5227
        %v5276 = vunpack.c.l.b16 %v5231
        %v5277 = vunpack.c.l.b16 %v5234
        %v5278 = vunpack.c.l.b16 %v5238
        %v5279 = vunpack.c.l.b16 %v5241
        %v5280 = vunpack.c.l.b16 %v5245
        %v5281 = vunpack.c.l.b16 %v5248
        %v5282 = vpack.c.b16 %v5267, %v5266
        %v5283 = vpack.c.b16 %v5269, %v5268
        %v5284 = vpack.c.b16 %v5271, %v5270
        %v5285 = vpack.c.b16 %v5273, %v5272
        %v5286 = vpack.c.b16 %v5275, %v5274
        %v5287 = vpack.c.b16 %v5277, %v5276
        %v5288 = vpack.c.b16 %v5279, %v5278
        %v5289 = vpack.c.b16 %v5281, %v5280
        %v5314 = vunpack.c.l.b16 %v5250
        %v5315 = vunpack.c.l.b16 %v5251
        %v5316 = vunpack.c.l.b16 %v5252
        %v5317 = vunpack.c.l.b16 %v5253
        %v5318 = vunpack.c.l.b16 %v5254
        %v5319 = vunpack.c.l.b16 %v5255
        %v5320 = vunpack.c.l.b16 %v5256
        %v5321 = vunpack.c.l.b16 %v5257
        %v5322 = vunpack.c.l.b16 %v5258
        %v5323 = vunpack.c.l.b16 %v5259
        %v5324 = vunpack.c.l.b16 %v5260
        %v5325 = vunpack.c.l.b16 %v5261
        %v5326 = vunpack.c.l.b16 %v5262
        %v5327 = vunpack.c.l.b16 %v5263
        %v5328 = vunpack.c.l.b16 %v5264
        %v5329 = vunpack.c.l.b16 %v5265
        %v5330 = vpack.c.b16 %v5315, %v5314
        %v5331 = vpack.c.b16 %v5317, %v5316
        %v5332 = vpack.c.b16 %v5319, %v5318
        %v5333 = vpack.c.b16 %v5321, %v5320
        %v5334 = vpack.c.b16 %v5323, %v5322
        %v5335 = vpack.c.b16 %v5325, %v5324
        %v5336 = vpack.c.b16 %v5327, %v5326
        %v5337 = vpack.c.b16 %v5329, %v5328
        %5346 = vmatprep.subr.bf16.mxu0 0
        %5347 = vmatpush1.bf16.msra.mxu0 %v5330
        %5348 = vmatprep.subr.bf16.mxu0 0
        %5349 = vmatpush1.bf16.msra.mxu0 %v5331
        %5350 = vmatprep.subr.bf16.mxu0 0
        %5351 = vmatpush1.bf16.msra.mxu0 %v5332
        %5352 = vmatprep.subr.bf16.mxu0 0
        %5353 = vmatpush1.bf16.msra.mxu0 %v5333
        %5354 = vmatprep.subr.bf16.mxu0 0
        %5355 = vmatpush1.bf16.msra.mxu0 %v5334
        %5356 = vmatprep.subr.bf16.mxu0 0
        %5357 = vmatpush1.bf16.msra.mxu0 %v5335
        %5358 = vmatprep.subr.bf16.mxu0 0
        %5359 = vmatpush1.bf16.msra.mxu0 %v5336
        %5360 = vmatprep.subr.bf16.mxu0 0
        %5361 = vmatpush1.bf16.msra.mxu0 %v5337
        %5362 = vmatprep.subr.bf16.mxu0 0
        %5363 = vmatpush1.bf16.msra.mxu0 0
        %5364 = vmatprep.subr.bf16.mxu0 0
        %5365 = vmatpush1.bf16.msra.mxu0 0
        %5366 = vmatprep.subr.bf16.mxu0 0
        %5367 = vmatpush1.bf16.msra.mxu0 0
        %5368 = vmatprep.subr.bf16.mxu0 0
        %5369 = vmatpush1.bf16.msra.mxu0 0
        %5370 = vmatprep.subr.bf16.mxu0 0
        %5371 = vmatpush1.bf16.msra.mxu0 0
        %5372 = vmatprep.subr.bf16.mxu0 0
        %5373 = vmatpush1.bf16.msra.mxu0 0
        %5374 = vmatprep.subr.bf16.mxu0 0
        %5375 = vmatpush1.bf16.msra.mxu0 0
        %5376 = vmatprep.subr.bf16.mxu0 0
        %5377 = vmatpush1.bf16.msra.mxu0 0
        %5378 = vmatprep.mubr.bf16.mxu0 0
        %5379 = vmatmul.mubr.bf16.gmra.mrb[0].mxu0 %v5282
        %v5380 = vpop.f32.mrb[0].mxu0
        %v5381 = vadd.f32 0.0, %v5380
        %v5382 = vpop.f32.mrb[0].mxu0
        %v5383 = vpop.f32.mrb[0].mxu0
        %v5384 = vadd.f32 0.0, %v5383
        %v5385 = vpop.f32.mrb[0].mxu0
        %5386 = vmatprep.mubr.bf16.mxu0 0
        %5387 = vmatmul.mubr.bf16.gmra.mrb[0].mxu0 %v5283
        %v5388 = vpop.f32.mrb[0].mxu0
        %v5389 = vadd.f32 0.0, %v5388
        %v5390 = vpop.f32.mrb[0].mxu0
        %v5391 = vpop.f32.mrb[0].mxu0
        %v5392 = vadd.f32 0.0, %v5391
        %v5393 = vpop.f32.mrb[0].mxu0
        %5394 = vmatprep.mubr.bf16.mxu0 0
        %5395 = vmatmul.mubr.bf16.gmra.mrb[0].mxu0 %v5284
        %v5396 = vpop.f32.mrb[0].mxu0
        %v5397 = vadd.f32 0.0, %v5396
        %v5398 = vpop.f32.mrb[0].mxu0
        %v5399 = vpop.f32.mrb[0].mxu0
        %v5400 = vadd.f32 0.0, %v5399
        %v5401 = vpop.f32.mrb[0].mxu0
        %5402 = vmatprep.mubr.bf16.mxu0 0
        %5403 = vmatmul.mubr.bf16.gmra.mrb[0].mxu0 %v5285
        %v5404 = vpop.f32.mrb[0].mxu0
        %v5405 = vadd.f32 0.0, %v5404
        %v5406 = vpop.f32.mrb[0].mxu0
        %v5407 = vpop.f32.mrb[0].mxu0
        %v5408 = vadd.f32 0.0, %v5407
        %v5409 = vpop.f32.mrb[0].mxu0
        %5410 = vmatprep.mubr.bf16.mxu0 0
        %5411 = vmatmul.mubr.bf16.gmra.mrb[0].mxu0 %v5286
        %v5412 = vpop.f32.mrb[0].mxu0
        %v5413 = vadd.f32 0.0, %v5412
        %v5414 = vpop.f32.mrb[0].mxu0
        %v5415 = vpop.f32.mrb[0].mxu0
        %v5416 = vadd.f32 0.0, %v5415
        %v5417 = vpop.f32.mrb[0].mxu0
        %5418 = vmatprep.mubr.bf16.mxu0 0
        %5419 = vmatmul.mubr.bf16.gmra.mrb[0].mxu0 %v5287
        %v5420 = vpop.f32.mrb[0].mxu0
        %v5421 = vadd.f32 0.0, %v5420
        %v5422 = vpop.f32.mrb[0].mxu0
        %v5423 = vpop.f32.mrb[0].mxu0
        %v5424 = vadd.f32 0.0, %v5423
        %v5425 = vpop.f32.mrb[0].mxu0
        %5426 = vmatprep.mubr.bf16.mxu0 0
        %5427 = vmatmul.mubr.bf16.gmra.mrb[0].mxu0 %v5288
        %v5428 = vpop.f32.mrb[0].mxu0
        %v5429 = vadd.f32 0.0, %v5428
        %v5430 = vpop.f32.mrb[0].mxu0
        %v5431 = vpop.f32.mrb[0].mxu0
        %v5432 = vadd.f32 0.0, %v5431
        %v5433 = vpop.f32.mrb[0].mxu0
        %5434 = vmatprep.mubr.bf16.mxu0 0
        %5435 = vmatmul.mubr.bf16.gmra.mrb[0].mxu0 %v5289
        %v5436 = vpop.f32.mrb[0].mxu0
        %v5437 = vadd.f32 0.0, %v5436
        %v5438 = vpop.f32.mrb[0].mxu0
        %v5439 = vpop.f32.mrb[0].mxu0
        %v5440 = vadd.f32 0.0, %v5439
        %v5441 = vpop.f32.mrb[0].mxu0
        %5442 = vdwg.mxu0
        %v5443 = vadd.f32 %v5161, %v5381
        %v5444 = vadd.f32 %v5162, %v5384
        %v5445 = vadd.f32 %v5163, %v5389
        %v5446 = vadd.f32 %v5164, %v5392
        %v5447 = vadd.f32 %v5165, %v5397
        %v5448 = vadd.f32 %v5166, %v5400
        %v5449 = vadd.f32 %v5167, %v5405
        %v5450 = vadd.f32 %v5168, %v5408
        %v5451 = vadd.f32 %v5169, %v5413
        %v5452 = vadd.f32 %v5170, %v5416
        %v5453 = vadd.f32 %v5171, %v5421
        %v5454 = vadd.f32 %v5172, %v5424
        %v5455 = vadd.f32 %v5173, %v5429
        %v5456 = vadd.f32 %v5174, %v5432
        %v5457 = vadd.f32 %v5175, %v5437
        %v5458 = vadd.f32 %v5176, %v5440
        %v5467 = vrot.slane %v4842, 7
        %v5468 = vrot.slane %v5467, 4
        %v5469 = vrot.slane %v4843, 7
        %v5470 = vsel %vm3318, %v5468, %v5469
        %v5471 = vrot.slane %v5469, 4
        %v5472 = vrot.slane %v4844, 7
        %v5473 = vsel %vm3318, %v5471, %v5472
        %v5474 = vrot.slane %v4848, 7
        %v5475 = vrot.slane %v5474, 4
        %v5476 = vrot.slane %v4849, 7
        %v5477 = vsel %vm3318, %v5475, %v5476
        %v5478 = vrot.slane %v5476, 4
        %v5479 = vrot.slane %v4850, 7
        %v5480 = vsel %vm3318, %v5478, %v5479
        %v5481 = vrot.slane %v4854, 7
        %v5482 = vrot.slane %v5481, 4
        %v5483 = vrot.slane %v4855, 7
        %v5484 = vsel %vm3318, %v5482, %v5483
        %v5485 = vrot.slane %v5483, 4
        %v5486 = vrot.slane %v4856, 7
        %v5487 = vsel %vm3318, %v5485, %v5486
        %v5488 = vrot.slane %v4860, 7
        %v5489 = vrot.slane %v5488, 4
        %v5490 = vrot.slane %v4861, 7
        %v5491 = vsel %vm3318, %v5489, %v5490
        %v5492 = vrot.slane %v5490, 4
        %v5493 = vrot.slane %v4862, 7
        %v5494 = vsel %vm3318, %v5492, %v5493
        %v5495 = vrot.slane %v4866, 7
        %v5496 = vrot.slane %v5495, 4
        %v5497 = vrot.slane %v4867, 7
        %v5498 = vsel %vm3318, %v5496, %v5497
        %v5499 = vrot.slane %v5497, 4
        %v5500 = vrot.slane %v4868, 7
        %v5501 = vsel %vm3318, %v5499, %v5500
        %v5502 = vrot.slane %v4872, 7
        %v5503 = vrot.slane %v5502, 4
        %v5504 = vrot.slane %v4873, 7
        %v5505 = vsel %vm3318, %v5503, %v5504
        %v5506 = vrot.slane %v5504, 4
        %v5507 = vrot.slane %v4874, 7
        %v5508 = vsel %vm3318, %v5506, %v5507
        %v5509 = vrot.slane %v4878, 7
        %v5510 = vrot.slane %v5509, 4
        %v5511 = vrot.slane %v4879, 7
        %v5512 = vsel %vm3318, %v5510, %v5511
        %v5513 = vrot.slane %v5511, 4
        %v5514 = vrot.slane %v4880, 7
        %v5515 = vsel %vm3318, %v5513, %v5514
        %v5516 = vrot.slane %v4884, 7
        %v5517 = vrot.slane %v5516, 4
        %v5518 = vrot.slane %v4885, 7
        %v5519 = vsel %vm3318, %v5517, %v5518
        %v5520 = vrot.slane %v5518, 4
        %v5521 = vrot.slane %v4886, 7
        %v5522 = vsel %vm3318, %v5520, %v5521
        %s5523 = scalar_lea.vmem %s1, 1152
        %v5524 = vld [vmem:[%s5523] sm:$0xf]
        %v5525 = vld [vmem:[%s5523 + $0x4] sm:$0xf]
        %v5526 = vld [vmem:[%s5523 + $0x8] sm:$0xf]
        %v5527 = vld [vmem:[%s5523 + $0xc] sm:$0xf]
        %v5528 = vld [vmem:[%s5523 + $0x10] sm:$0xf]
        %v5529 = vld [vmem:[%s5523 + $0x14] sm:$0xf]
        %v5530 = vld [vmem:[%s5523 + $0x18] sm:$0xf]
        %v5531 = vld [vmem:[%s5523 + $0x1c] sm:$0xf]
        %v5532 = vld [vmem:[%s5523 + $0x20] sm:$0xf]
        %v5533 = vld [vmem:[%s5523 + $0x24] sm:$0xf]
        %v5534 = vld [vmem:[%s5523 + $0x28] sm:$0xf]
        %v5535 = vld [vmem:[%s5523 + $0x2c] sm:$0xf]
        %v5536 = vld [vmem:[%s5523 + $0x30] sm:$0xf]
        %v5537 = vld [vmem:[%s5523 + $0x34] sm:$0xf]
        %v5538 = vld [vmem:[%s5523 + $0x38] sm:$0xf]
        %v5539 = vld [vmem:[%s5523 + $0x3c] sm:$0xf]
        %v5540 = vunpack.c.l.b16 %v5470
        %v5541 = vunpack.c.l.b16 %v5473
        %v5542 = vunpack.c.l.b16 %v5477
        %v5543 = vunpack.c.l.b16 %v5480
        %v5544 = vunpack.c.l.b16 %v5484
        %v5545 = vunpack.c.l.b16 %v5487
        %v5546 = vunpack.c.l.b16 %v5491
        %v5547 = vunpack.c.l.b16 %v5494
        %v5548 = vunpack.c.l.b16 %v5498
        %v5549 = vunpack.c.l.b16 %v5501
        %v5550 = vunpack.c.l.b16 %v5505
        %v5551 = vunpack.c.l.b16 %v5508
        %v5552 = vunpack.c.l.b16 %v5512
        %v5553 = vunpack.c.l.b16 %v5515
        %v5554 = vunpack.c.l.b16 %v5519
        %v5555 = vunpack.c.l.b16 %v5522
        %v5556 = vpack.c.b16 %v5541, %v5540
        %v5557 = vpack.c.b16 %v5543, %v5542
        %v5558 = vpack.c.b16 %v5545, %v5544
        %v5559 = vpack.c.b16 %v5547, %v5546
        %v5560 = vpack.c.b16 %v5549, %v5548
        %v5561 = vpack.c.b16 %v5551, %v5550
        %v5562 = vpack.c.b16 %v5553, %v5552
        %v5563 = vpack.c.b16 %v5555, %v5554
        %v5588 = vunpack.c.l.b16 %v5524
        %v5589 = vunpack.c.l.b16 %v5525
        %v5590 = vunpack.c.l.b16 %v5526
        %v5591 = vunpack.c.l.b16 %v5527
        %v5592 = vunpack.c.l.b16 %v5528
        %v5593 = vunpack.c.l.b16 %v5529
        %v5594 = vunpack.c.l.b16 %v5530
        %v5595 = vunpack.c.l.b16 %v5531
        %v5596 = vunpack.c.l.b16 %v5532
        %v5597 = vunpack.c.l.b16 %v5533
        %v5598 = vunpack.c.l.b16 %v5534
        %v5599 = vunpack.c.l.b16 %v5535
        %v5600 = vunpack.c.l.b16 %v5536
        %v5601 = vunpack.c.l.b16 %v5537
        %v5602 = vunpack.c.l.b16 %v5538
        %v5603 = vunpack.c.l.b16 %v5539
        %v5604 = vpack.c.b16 %v5589, %v5588
        %v5605 = vpack.c.b16 %v5591, %v5590
        %v5606 = vpack.c.b16 %v5593, %v5592
        %v5607 = vpack.c.b16 %v5595, %v5594
        %v5608 = vpack.c.b16 %v5597, %v5596
        %v5609 = vpack.c.b16 %v5599, %v5598
        %v5610 = vpack.c.b16 %v5601, %v5600
        %v5611 = vpack.c.b16 %v5603, %v5602
        %5620 = vmatprep.subr.bf16.mxu0 0
        %5621 = vmatpush1.bf16.msra.mxu0 %v5604
        %5622 = vmatprep.subr.bf16.mxu0 0
        %5623 = vmatpush1.bf16.msra.mxu0 %v5605
        %5624 = vmatprep.subr.bf16.mxu0 0
        %5625 = vmatpush1.bf16.msra.mxu0 %v5606
        %5626 = vmatprep.subr.bf16.mxu0 0
        %5627 = vmatpush1.bf16.msra.mxu0 %v5607
        %5628 = vmatprep.subr.bf16.mxu0 0
        %5629 = vmatpush1.bf16.msra.mxu0 %v5608
        %5630 = vmatprep.subr.bf16.mxu0 0
        %5631 = vmatpush1.bf16.msra.mxu0 %v5609
        %5632 = vmatprep.subr.bf16.mxu0 0
        %5633 = vmatpush1.bf16.msra.mxu0 %v5610
        %5634 = vmatprep.subr.bf16.mxu0 0
        %5635 = vmatpush1.bf16.msra.mxu0 %v5611
        %5636 = vmatprep.subr.bf16.mxu0 0
        %5637 = vmatpush1.bf16.msra.mxu0 0
        %5638 = vmatprep.subr.bf16.mxu0 0
        %5639 = vmatpush1.bf16.msra.mxu0 0
        %5640 = vmatprep.subr.bf16.mxu0 0
        %5641 = vmatpush1.bf16.msra.mxu0 0
        %5642 = vmatprep.subr.bf16.mxu0 0
        %5643 = vmatpush1.bf16.msra.mxu0 0
        %5644 = vmatprep.subr.bf16.mxu0 0
        %5645 = vmatpush1.bf16.msra.mxu0 0
        %5646 = vmatprep.subr.bf16.mxu0 0
        %5647 = vmatpush1.bf16.msra.mxu0 0
        %5648 = vmatprep.subr.bf16.mxu0 0
        %5649 = vmatpush1.bf16.msra.mxu0 0
        %5650 = vmatprep.subr.bf16.mxu0 0
        %5651 = vmatpush1.bf16.msra.mxu0 0
        %5652 = vmatprep.mubr.bf16.mxu0 0
        %5653 = vmatmul.mubr.bf16.gmra.mrb[0].mxu0 %v5556
        %v5654 = vpop.f32.mrb[0].mxu0
        %v5655 = vadd.f32 0.0, %v5654
        %v5656 = vpop.f32.mrb[0].mxu0
        %v5657 = vpop.f32.mrb[0].mxu0
        %v5658 = vadd.f32 0.0, %v5657
        %v5659 = vpop.f32.mrb[0].mxu0
        %5660 = vmatprep.mubr.bf16.mxu0 0
        %5661 = vmatmul.mubr.bf16.gmra.mrb[0].mxu0 %v5557
        %v5662 = vpop.f32.mrb[0].mxu0
        %v5663 = vadd.f32 0.0, %v5662
        %v5664 = vpop.f32.mrb[0].mxu0
        %v5665 = vpop.f32.mrb[0].mxu0
        %v5666 = vadd.f32 0.0, %v5665
        %v5667 = vpop.f32.mrb[0].mxu0
        %5668 = vmatprep.mubr.bf16.mxu0 0
        %5669 = vmatmul.mubr.bf16.gmra.mrb[0].mxu0 %v5558
        %v5670 = vpop.f32.mrb[0].mxu0
        %v5671 = vadd.f32 0.0, %v5670
        %v5672 = vpop.f32.mrb[0].mxu0
        %v5673 = vpop.f32.mrb[0].mxu0
        %v5674 = vadd.f32 0.0, %v5673
        %v5675 = vpop.f32.mrb[0].mxu0
        %5676 = vmatprep.mubr.bf16.mxu0 0
        %5677 = vmatmul.mubr.bf16.gmra.mrb[0].mxu0 %v5559
        %v5678 = vpop.f32.mrb[0].mxu0
        %v5679 = vadd.f32 0.0, %v5678
        %v5680 = vpop.f32.mrb[0].mxu0
        %v5681 = vpop.f32.mrb[0].mxu0
        %v5682 = vadd.f32 0.0, %v5681
        %v5683 = vpop.f32.mrb[0].mxu0
        %5684 = vmatprep.mubr.bf16.mxu0 0
        %5685 = vmatmul.mubr.bf16.gmra.mrb[0].mxu0 %v5560
        %v5686 = vpop.f32.mrb[0].mxu0
        %v5687 = vadd.f32 0.0, %v5686
        %v5688 = vpop.f32.mrb[0].mxu0
        %v5689 = vpop.f32.mrb[0].mxu0
        %v5690 = vadd.f32 0.0, %v5689
        %v5691 = vpop.f32.mrb[0].mxu0
        %5692 = vmatprep.mubr.bf16.mxu0 0
        %5693 = vmatmul.mubr.bf16.gmra.mrb[0].mxu0 %v5561
        %v5694 = vpop.f32.mrb[0].mxu0
        %v5695 = vadd.f32 0.0, %v5694
        %v5696 = vpop.f32.mrb[0].mxu0
        %v5697 = vpop.f32.mrb[0].mxu0
        %v5698 = vadd.f32 0.0, %v5697
        %v5699 = vpop.f32.mrb[0].mxu0
        %5700 = vmatprep.mubr.bf16.mxu0 0
        %5701 = vmatmul.mubr.bf16.gmra.mrb[0].mxu0 %v5562
        %v5702 = vpop.f32.mrb[0].mxu0
        %v5703 = vadd.f32 0.0, %v5702
        %v5704 = vpop.f32.mrb[0].mxu0
        %v5705 = vpop.f32.mrb[0].mxu0
        %v5706 = vadd.f32 0.0, %v5705
        %v5707 = vpop.f32.mrb[0].mxu0
        %5708 = vmatprep.mubr.bf16.mxu0 0
        %5709 = vmatmul.mubr.bf16.gmra.mrb[0].mxu0 %v5563
        %v5710 = vpop.f32.mrb[0].mxu0
        %v5711 = vadd.f32 0.0, %v5710
        %v5712 = vpop.f32.mrb[0].mxu0
        %v5713 = vpop.f32.mrb[0].mxu0
        %v5714 = vadd.f32 0.0, %v5713
        %v5715 = vpop.f32.mrb[0].mxu0
        %5716 = vdwg.mxu0
        %v5717 = vadd.f32 %v5443, %v5655
        %v5718 = vadd.f32 %v5444, %v5658
        %v5719 = vadd.f32 %v5445, %v5663
        %v5720 = vadd.f32 %v5446, %v5666
        %v5721 = vadd.f32 %v5447, %v5671
        %v5722 = vadd.f32 %v5448, %v5674
        %v5723 = vadd.f32 %v5449, %v5679
        %v5724 = vadd.f32 %v5450, %v5682
        %v5725 = vadd.f32 %v5451, %v5687
        %v5726 = vadd.f32 %v5452, %v5690
        %v5727 = vadd.f32 %v5453, %v5695
        %v5728 = vadd.f32 %v5454, %v5698
        %v5729 = vadd.f32 %v5455, %v5703
        %v5730 = vadd.f32 %v5456, %v5706
        %v5731 = vadd.f32 %v5457, %v5711
        %v5732 = vadd.f32 %v5458, %v5714
        %v5733 = vld [vmem:[%s3 + $0x2] sm:$0x1]
        %v5734 = vlaneseq
        %v5735 = vshrl.u32 %v5734, 7
        %v5736 = vsub.s32 0, %v5735
        %v5737 = vrot.slane %v5733, %v5736
        %v5738 = vadd.f32 %v5717, %v5737
        %v5739 = vadd.f32 %v5718, %v5737
        %v5740 = vadd.f32 %v5719, %v5737
        %v5741 = vadd.f32 %v5720, %v5737
        %v5742 = vadd.f32 %v5721, %v5737
        %v5743 = vadd.f32 %v5722, %v5737
        %v5744 = vadd.f32 %v5723, %v5737
        %v5745 = vadd.f32 %v5724, %v5737
        %v5746 = vadd.f32 %v5725, %v5737
        %v5747 = vadd.f32 %v5726, %v5737
        %v5748 = vadd.f32 %v5727, %v5737
        %v5749 = vadd.f32 %v5728, %v5737
        %v5750 = vadd.f32 %v5729, %v5737
        %v5751 = vadd.f32 %v5730, %v5737
        %v5752 = vadd.f32 %v5731, %v5737
        %v5753 = vadd.f32 %v5732, %v5737
        %v5754 = vmax.f32 %v5738, 0.0
        %v5755 = vmax.f32 %v5739, 0.0
        %v5756 = vmax.f32 %v5740, 0.0
        %v5757 = vmax.f32 %v5741, 0.0
        %v5758 = vmax.f32 %v5742, 0.0
        %v5759 = vmax.f32 %v5743, 0.0
        %v5760 = vmax.f32 %v5744, 0.0
        %v5761 = vmax.f32 %v5745, 0.0
        %v5762 = vmax.f32 %v5746, 0.0
        %v5763 = vmax.f32 %v5747, 0.0
        %v5764 = vmax.f32 %v5748, 0.0
        %v5765 = vmax.f32 %v5749, 0.0
        %v5766 = vmax.f32 %v5750, 0.0
        %v5767 = vmax.f32 %v5751, 0.0
        %v5768 = vmax.f32 %v5752, 0.0
        %v5769 = vmax.f32 %v5753, 0.0
        %v5770 = vpack.c.bf16 %v5755, %v5754
        %v5771 = vpack.c.bf16 %v5757, %v5756
        %v5772 = vpack.c.bf16 %v5759, %v5758
        %v5773 = vpack.c.bf16 %v5761, %v5760
        %v5774 = vpack.c.bf16 %v5763, %v5762
        %v5775 = vpack.c.bf16 %v5765, %v5764
        %v5776 = vpack.c.bf16 %v5767, %v5766
        %v5777 = vpack.c.bf16 %v5769, %v5768
        %s5778 = scalar_lea.vmem %s2, 128
        %v5779 = vld [vmem:[%s5778] sm:$0xf]
        %v5780 = vld [vmem:[%s5778 + $0x4] sm:$0xf]
        %v5781 = vld [vmem:[%s5778 + $0x8] sm:$0xf]
        %v5782 = vld [vmem:[%s5778 + $0xc] sm:$0xf]
        %v5783 = vld [vmem:[%s5778 + $0x10] sm:$0xf]
        %v5784 = vld [vmem:[%s5778 + $0x14] sm:$0xf]
        %v5785 = vld [vmem:[%s5778 + $0x18] sm:$0xf]
        %v5786 = vld [vmem:[%s5778 + $0x1c] sm:$0xf]
        %v5787 = vld [vmem:[%s5778 + $0x20] sm:$0xf]
        %v5788 = vld [vmem:[%s5778 + $0x24] sm:$0xf]
        %v5789 = vld [vmem:[%s5778 + $0x28] sm:$0xf]
        %v5790 = vld [vmem:[%s5778 + $0x2c] sm:$0xf]
        %v5791 = vld [vmem:[%s5778 + $0x30] sm:$0xf]
        %v5792 = vld [vmem:[%s5778 + $0x34] sm:$0xf]
        %v5793 = vld [vmem:[%s5778 + $0x38] sm:$0xf]
        %v5794 = vld [vmem:[%s5778 + $0x3c] sm:$0xf]
        %v5811 = vunpack.c.l.b16 %v5779
        %v5812 = vunpack.c.l.b16 %v5780
        %v5813 = vunpack.c.l.b16 %v5781
        %v5814 = vunpack.c.l.b16 %v5782
        %v5815 = vunpack.c.l.b16 %v5783
        %v5816 = vunpack.c.l.b16 %v5784
        %v5817 = vunpack.c.l.b16 %v5785
        %v5818 = vunpack.c.l.b16 %v5786
        %v5819 = vunpack.c.l.b16 %v5787
        %v5820 = vunpack.c.l.b16 %v5788
        %v5821 = vunpack.c.l.b16 %v5789
        %v5822 = vunpack.c.l.b16 %v5790
        %v5823 = vunpack.c.l.b16 %v5791
        %v5824 = vunpack.c.l.b16 %v5792
        %v5825 = vunpack.c.l.b16 %v5793
        %v5826 = vunpack.c.l.b16 %v5794
        %v5827 = vpack.c.b16 %v5812, %v5811
        %v5828 = vpack.c.b16 %v5814, %v5813
        %v5829 = vpack.c.b16 %v5816, %v5815
        %v5830 = vpack.c.b16 %v5818, %v5817
        %v5831 = vpack.c.b16 %v5820, %v5819
        %v5832 = vpack.c.b16 %v5822, %v5821
        %v5833 = vpack.c.b16 %v5824, %v5823
        %v5834 = vpack.c.b16 %v5826, %v5825
        %5843 = vmatprep.subr.bf16.mxu0 0
        %5844 = vmatpush1.bf16.msra.mxu0 %v5827
        %5845 = vmatprep.subr.bf16.mxu0 0
        %5846 = vmatpush1.bf16.msra.mxu0 %v5828
        %5847 = vmatprep.subr.bf16.mxu0 0
        %5848 = vmatpush1.bf16.msra.mxu0 %v5829
        %5849 = vmatprep.subr.bf16.mxu0 0
        %5850 = vmatpush1.bf16.msra.mxu0 %v5830
        %5851 = vmatprep.subr.bf16.mxu0 0
        %5852 = vmatpush1.bf16.msra.mxu0 %v5831
        %5853 = vmatprep.subr.bf16.mxu0 0
        %5854 = vmatpush1.bf16.msra.mxu0 %v5832
        %5855 = vmatprep.subr.bf16.mxu0 0
        %5856 = vmatpush1.bf16.msra.mxu0 %v5833
        %5857 = vmatprep.subr.bf16.mxu0 0
        %5858 = vmatpush1.bf16.msra.mxu0 %v5834
        %5859 = vmatprep.subr.bf16.mxu0 0
        %5860 = vmatpush1.bf16.msra.mxu0 0
        %5861 = vmatprep.subr.bf16.mxu0 0
        %5862 = vmatpush1.bf16.msra.mxu0 0
        %5863 = vmatprep.subr.bf16.mxu0 0
        %5864 = vmatpush1.bf16.msra.mxu0 0
        %5865 = vmatprep.subr.bf16.mxu0 0
        %5866 = vmatpush1.bf16.msra.mxu0 0
        %5867 = vmatprep.subr.bf16.mxu0 0
        %5868 = vmatpush1.bf16.msra.mxu0 0
        %5869 = vmatprep.subr.bf16.mxu0 0
        %5870 = vmatpush1.bf16.msra.mxu0 0
        %5871 = vmatprep.subr.bf16.mxu0 0
        %5872 = vmatpush1.bf16.msra.mxu0 0
        %5873 = vmatprep.subr.bf16.mxu0 0
        %5874 = vmatpush1.bf16.msra.mxu0 0
        %5875 = vmatprep.mubr.bf16.mxu0 0
        %5876 = vmatmul.mubr.bf16.gmra.mrb[0].mxu0 %v5770
        %v5877 = vpop.f32.mrb[0].mxu0
        %v5878 = vadd.f32 0.0, %v5877
        %v5879 = vpop.f32.mrb[0].mxu0
        %v5880 = vpop.f32.mrb[0].mxu0
        %v5881 = vadd.f32 0.0, %v5880
        %v5882 = vpop.f32.mrb[0].mxu0
        %5883 = vmatprep.mubr.bf16.mxu0 0
        %5884 = vmatmul.mubr.bf16.gmra.mrb[0].mxu0 %v5771
        %v5885 = vpop.f32.mrb[0].mxu0
        %v5886 = vadd.f32 0.0, %v5885
        %v5887 = vpop.f32.mrb[0].mxu0
        %v5888 = vpop.f32.mrb[0].mxu0
        %v5889 = vadd.f32 0.0, %v5888
        %v5890 = vpop.f32.mrb[0].mxu0
        %5891 = vmatprep.mubr.bf16.mxu0 0
        %5892 = vmatmul.mubr.bf16.gmra.mrb[0].mxu0 %v5772
        %v5893 = vpop.f32.mrb[0].mxu0
        %v5894 = vadd.f32 0.0, %v5893
        %v5895 = vpop.f32.mrb[0].mxu0
        %v5896 = vpop.f32.mrb[0].mxu0
        %v5897 = vadd.f32 0.0, %v5896
        %v5898 = vpop.f32.mrb[0].mxu0
        %5899 = vmatprep.mubr.bf16.mxu0 0
        %5900 = vmatmul.mubr.bf16.gmra.mrb[0].mxu0 %v5773
        %v5901 = vpop.f32.mrb[0].mxu0
        %v5902 = vadd.f32 0.0, %v5901
        %v5903 = vpop.f32.mrb[0].mxu0
        %v5904 = vpop.f32.mrb[0].mxu0
        %v5905 = vadd.f32 0.0, %v5904
        %v5906 = vpop.f32.mrb[0].mxu0
        %5907 = vmatprep.mubr.bf16.mxu0 0
        %5908 = vmatmul.mubr.bf16.gmra.mrb[0].mxu0 %v5774
        %v5909 = vpop.f32.mrb[0].mxu0
        %v5910 = vadd.f32 0.0, %v5909
        %v5911 = vpop.f32.mrb[0].mxu0
        %v5912 = vpop.f32.mrb[0].mxu0
        %v5913 = vadd.f32 0.0, %v5912
        %v5914 = vpop.f32.mrb[0].mxu0
        %5915 = vmatprep.mubr.bf16.mxu0 0
        %5916 = vmatmul.mubr.bf16.gmra.mrb[0].mxu0 %v5775
        %v5917 = vpop.f32.mrb[0].mxu0
        %v5918 = vadd.f32 0.0, %v5917
        %v5919 = vpop.f32.mrb[0].mxu0
        %v5920 = vpop.f32.mrb[0].mxu0
        %v5921 = vadd.f32 0.0, %v5920
        %v5922 = vpop.f32.mrb[0].mxu0
        %5923 = vmatprep.mubr.bf16.mxu0 0
        %5924 = vmatmul.mubr.bf16.gmra.mrb[0].mxu0 %v5776
        %v5925 = vpop.f32.mrb[0].mxu0
        %v5926 = vadd.f32 0.0, %v5925
        %v5927 = vpop.f32.mrb[0].mxu0
        %v5928 = vpop.f32.mrb[0].mxu0
        %v5929 = vadd.f32 0.0, %v5928
        %v5930 = vpop.f32.mrb[0].mxu0
        %5931 = vmatprep.mubr.bf16.mxu0 0
        %5932 = vmatmul.mubr.bf16.gmra.mrb[0].mxu0 %v5777
        %v5933 = vpop.f32.mrb[0].mxu0
        %v5934 = vadd.f32 0.0, %v5933
        %v5935 = vpop.f32.mrb[0].mxu0
        %v5936 = vpop.f32.mrb[0].mxu0
        %v5937 = vadd.f32 0.0, %v5936
        %v5938 = vpop.f32.mrb[0].mxu0
        %5939 = vdwg.mxu0
        %v5940 = vadd.f32 %v3178, %v5878
        %v5941 = vadd.f32 %v3181, %v5881
        %v5942 = vadd.f32 %v3186, %v5886
        %v5943 = vadd.f32 %v3189, %v5889
        %v5944 = vadd.f32 %v3194, %v5894
        %v5945 = vadd.f32 %v3197, %v5897
        %v5946 = vadd.f32 %v3202, %v5902
        %v5947 = vadd.f32 %v3205, %v5905
        %v5948 = vadd.f32 %v3210, %v5910
        %v5949 = vadd.f32 %v3213, %v5913
        %v5950 = vadd.f32 %v3218, %v5918
        %v5951 = vadd.f32 %v3221, %v5921
        %v5952 = vadd.f32 %v3226, %v5926
        %v5953 = vadd.f32 %v3229, %v5929
        %v5954 = vadd.f32 %v3234, %v5934
        %v5955 = vadd.f32 %v3237, %v5937
        %s5956 = smul.u32 %s253, 7
        %s5957 = smul.addr %s5956, 4
        %s5958 = scalar_lea.vmem %s247, %s5957
        %v5959 = vld [vmem:[%s5958] sm:$0xf]
        %v5960 = vld [vmem:[%s5958 + $0x4] sm:$0xf]
        %v5961 = vld [vmem:[%s5958 + $0x8] sm:$0xf]
        %v5962 = vld [vmem:[%s5958 + $0xc] sm:$0xf]
        %v5963 = vld [vmem:[%s5958 + $0x10] sm:$0xf]
        %v5964 = vld [vmem:[%s5958 + $0x14] sm:$0xf]
        %v5965 = vld [vmem:[%s5958 + $0x18] sm:$0x3]
        %v5966 = vld [vmem:[%s5958 + $0x1c] sm:$0xf]
        %v5967 = vld [vmem:[%s5958 + $0x20] sm:$0xf]
        %v5968 = vld [vmem:[%s5958 + $0x24] sm:$0xf]
        %v5969 = vld [vmem:[%s5958 + $0x28] sm:$0xf]
        %v5970 = vld [vmem:[%s5958 + $0x2c] sm:$0xf]
        %v5971 = vld [vmem:[%s5958 + $0x30] sm:$0xf]
        %v5972 = vld [vmem:[%s5958 + $0x34] sm:$0x3]
        %v5973 = vld [vmem:[%s5958 + $0x38] sm:$0xf]
        %v5974 = vld [vmem:[%s5958 + $0x3c] sm:$0xf]
        %v5975 = vld [vmem:[%s5958 + $0x40] sm:$0xf]
        %v5976 = vld [vmem:[%s5958 + $0x44] sm:$0xf]
        %v5977 = vld [vmem:[%s5958 + $0x48] sm:$0xf]
        %v5978 = vld [vmem:[%s5958 + $0x4c] sm:$0xf]
        %v5979 = vld [vmem:[%s5958 + $0x50] sm:$0x3]
        %v5980 = vld [vmem:[%s5958 + $0x54] sm:$0xf]
        %v5981 = vld [vmem:[%s5958 + $0x58] sm:$0xf]
        %v5982 = vld [vmem:[%s5958 + $0x5c] sm:$0xf]
        %v5983 = vld [vmem:[%s5958 + $0x60] sm:$0xf]
        %v5984 = vld [vmem:[%s5958 + $0x64] sm:$0xf]
        %v5985 = vld [vmem:[%s5958 + $0x68] sm:$0xf]
        %v5986 = vld [vmem:[%s5958 + $0x6c] sm:$0x3]
        %v5987 = vld [vmem:[%s5958 + $0x70] sm:$0xf]
        %v5988 = vld [vmem:[%s5958 + $0x74] sm:$0xf]
        %v5989 = vld [vmem:[%s5958 + $0x78] sm:$0xf]
        %v5990 = vld [vmem:[%s5958 + $0x7c] sm:$0xf]
        %v5991 = vld [vmem:[%s5958 + $0x80] sm:$0xf]
        %v5992 = vld [vmem:[%s5958 + $0x84] sm:$0xf]
        %v5993 = vld [vmem:[%s5958 + $0x88] sm:$0x3]
        %v5994 = vld [vmem:[%s5958 + $0x8c] sm:$0xf]
        %v5995 = vld [vmem:[%s5958 + $0x90] sm:$0xf]
        %v5996 = vld [vmem:[%s5958 + $0x94] sm:$0xf]
        %v5997 = vld [vmem:[%s5958 + $0x98] sm:$0xf]
        %v5998 = vld [vmem:[%s5958 + $0x9c] sm:$0xf]
        %v5999 = vld [vmem:[%s5958 + $0xa0] sm:$0xf]
        %v6000 = vld [vmem:[%s5958 + $0xa4] sm:$0x3]
        %v6001 = vld [vmem:[%s5958 + $0xa8] sm:$0xf]
        %v6002 = vld [vmem:[%s5958 + $0xac] sm:$0xf]
        %v6003 = vld [vmem:[%s5958 + $0xb0] sm:$0xf]
        %v6004 = vld [vmem:[%s5958 + $0xb4] sm:$0xf]
        %v6005 = vld [vmem:[%s5958 + $0xb8] sm:$0xf]
        %v6006 = vld [vmem:[%s5958 + $0xbc] sm:$0xf]
        %v6007 = vld [vmem:[%s5958 + $0xc0] sm:$0x3]
        %v6008 = vld [vmem:[%s5958 + $0xc4] sm:$0xf]
        %v6009 = vld [vmem:[%s5958 + $0xc8] sm:$0xf]
        %v6010 = vld [vmem:[%s5958 + $0xcc] sm:$0xf]
        %v6011 = vld [vmem:[%s5958 + $0xd0] sm:$0xf]
        %v6012 = vld [vmem:[%s5958 + $0xd4] sm:$0xf]
        %v6013 = vld [vmem:[%s5958 + $0xd8] sm:$0xf]
        %v6014 = vld [vmem:[%s5958 + $0xdc] sm:$0x3]
        %s6015 = scalar_lea.vmem %s1, 1216
        %v6016 = vld [vmem:[%s6015] sm:$0xf]
        %v6017 = vld [vmem:[%s6015 + $0x4] sm:$0xf]
        %v6018 = vld [vmem:[%s6015 + $0x8] sm:$0xf]
        %v6019 = vld [vmem:[%s6015 + $0xc] sm:$0xf]
        %v6020 = vld [vmem:[%s6015 + $0x10] sm:$0xf]
        %v6021 = vld [vmem:[%s6015 + $0x14] sm:$0xf]
        %v6022 = vld [vmem:[%s6015 + $0x18] sm:$0xf]
        %v6023 = vld [vmem:[%s6015 + $0x1c] sm:$0xf]
        %v6024 = vld [vmem:[%s6015 + $0x20] sm:$0xf]
        %v6025 = vld [vmem:[%s6015 + $0x24] sm:$0xf]
        %v6026 = vld [vmem:[%s6015 + $0x28] sm:$0xf]
        %v6027 = vld [vmem:[%s6015 + $0x2c] sm:$0xf]
        %v6028 = vld [vmem:[%s6015 + $0x30] sm:$0xf]
        %v6029 = vld [vmem:[%s6015 + $0x34] sm:$0xf]
        %v6030 = vld [vmem:[%s6015 + $0x38] sm:$0xf]
        %v6031 = vld [vmem:[%s6015 + $0x3c] sm:$0xf]
        %v6056 = vrot.slane %v5961, 5
        %v6057 = vrot.slane %v6056, 4
        %v6058 = vrot.slane %v5962, 5
        %v6059 = vsel %vm340, %v6057, %v6058
        %v6060 = vrot.slane %v6058, 4
        %v6061 = vrot.slane %v5963, 5
        %v6062 = vsel %vm340, %v6060, %v6061
        %v6063 = vrot.slane %v5968, 5
        %v6064 = vrot.slane %v6063, 4
        %v6065 = vrot.slane %v5969, 5
        %v6066 = vsel %vm340, %v6064, %v6065
        %v6067 = vrot.slane %v6065, 4
        %v6068 = vrot.slane %v5970, 5
        %v6069 = vsel %vm340, %v6067, %v6068
        %v6070 = vrot.slane %v5975, 5
        %v6071 = vrot.slane %v6070, 4
        %v6072 = vrot.slane %v5976, 5
        %v6073 = vsel %vm340, %v6071, %v6072
        %v6074 = vrot.slane %v6072, 4
        %v6075 = vrot.slane %v5977, 5
        %v6076 = vsel %vm340, %v6074, %v6075
        %v6077 = vrot.slane %v5982, 5
        %v6078 = vrot.slane %v6077, 4
        %v6079 = vrot.slane %v5983, 5
        %v6080 = vsel %vm340, %v6078, %v6079
        %v6081 = vrot.slane %v6079, 4
        %v6082 = vrot.slane %v5984, 5
        %v6083 = vsel %vm340, %v6081, %v6082
        %v6084 = vrot.slane %v5989, 5
        %v6085 = vrot.slane %v6084, 4
        %v6086 = vrot.slane %v5990, 5
        %v6087 = vsel %vm340, %v6085, %v6086
        %v6088 = vrot.slane %v6086, 4
        %v6089 = vrot.slane %v5991, 5
        %v6090 = vsel %vm340, %v6088, %v6089
        %v6091 = vrot.slane %v5996, 5
        %v6092 = vrot.slane %v6091, 4
        %v6093 = vrot.slane %v5997, 5
        %v6094 = vsel %vm340, %v6092, %v6093
        %v6095 = vrot.slane %v6093, 4
        %v6096 = vrot.slane %v5998, 5
        %v6097 = vsel %vm340, %v6095, %v6096
        %v6098 = vrot.slane %v6003, 5
        %v6099 = vrot.slane %v6098, 4
        %v6100 = vrot.slane %v6004, 5
        %v6101 = vsel %vm340, %v6099, %v6100
        %v6102 = vrot.slane %v6100, 4
        %v6103 = vrot.slane %v6005, 5
        %v6104 = vsel %vm340, %v6102, %v6103
        %v6105 = vrot.slane %v6010, 5
        %v6106 = vrot.slane %v6105, 4
        %v6107 = vrot.slane %v6011, 5
        %v6108 = vsel %vm340, %v6106, %v6107
        %v6109 = vrot.slane %v6107, 4
        %v6110 = vrot.slane %v6012, 5
        %v6111 = vsel %vm340, %v6109, %v6110
        %s6112 = scalar_lea.vmem %s1, 1280
        %v6113 = vld [vmem:[%s6112] sm:$0xf]
        %v6114 = vld [vmem:[%s6112 + $0x4] sm:$0xf]
        %v6115 = vld [vmem:[%s6112 + $0x8] sm:$0xf]
        %v6116 = vld [vmem:[%s6112 + $0xc] sm:$0xf]
        %v6117 = vld [vmem:[%s6112 + $0x10] sm:$0xf]
        %v6118 = vld [vmem:[%s6112 + $0x14] sm:$0xf]
        %v6119 = vld [vmem:[%s6112 + $0x18] sm:$0xf]
        %v6120 = vld [vmem:[%s6112 + $0x1c] sm:$0xf]
        %v6121 = vld [vmem:[%s6112 + $0x20] sm:$0xf]
        %v6122 = vld [vmem:[%s6112 + $0x24] sm:$0xf]
        %v6123 = vld [vmem:[%s6112 + $0x28] sm:$0xf]
        %v6124 = vld [vmem:[%s6112 + $0x2c] sm:$0xf]
        %v6125 = vld [vmem:[%s6112 + $0x30] sm:$0xf]
        %v6126 = vld [vmem:[%s6112 + $0x34] sm:$0xf]
        %v6127 = vld [vmem:[%s6112 + $0x38] sm:$0xf]
        %v6128 = vld [vmem:[%s6112 + $0x3c] sm:$0xf]
        %v6129 = vunpack.c.l.b16 %v6059
        %v6130 = vunpack.c.l.b16 %v6062
        %v6131 = vunpack.c.l.b16 %v6066
        %v6132 = vunpack.c.l.b16 %v6069
        %v6133 = vunpack.c.l.b16 %v6073
        %v6134 = vunpack.c.l.b16 %v6076
        %v6135 = vunpack.c.l.b16 %v6080
        %v6136 = vunpack.c.l.b16 %v6083
        %v6137 = vunpack.c.l.b16 %v6087
        %v6138 = vunpack.c.l.b16 %v6090
        %v6139 = vunpack.c.l.b16 %v6094
        %v6140 = vunpack.c.l.b16 %v6097
        %v6141 = vunpack.c.l.b16 %v6101
        %v6142 = vunpack.c.l.b16 %v6104
        %v6143 = vunpack.c.l.b16 %v6108
        %v6144 = vunpack.c.l.b16 %v6111
        %v6145 = vpack.c.b16 %v6130, %v6129
        %v6146 = vpack.c.b16 %v6132, %v6131
        %v6147 = vpack.c.b16 %v6134, %v6133
        %v6148 = vpack.c.b16 %v6136, %v6135
        %v6149 = vpack.c.b16 %v6138, %v6137
        %v6150 = vpack.c.b16 %v6140, %v6139
        %v6151 = vpack.c.b16 %v6142, %v6141
        %v6152 = vpack.c.b16 %v6144, %v6143
        %v6177 = vunpack.c.l.b16 %v6113
        %v6178 = vunpack.c.l.b16 %v6114
        %v6179 = vunpack.c.l.b16 %v6115
        %v6180 = vunpack.c.l.b16 %v6116
        %v6181 = vunpack.c.l.b16 %v6117
        %v6182 = vunpack.c.l.b16 %v6118
        %v6183 = vunpack.c.l.b16 %v6119
        %v6184 = vunpack.c.l.b16 %v6120
        %v6185 = vunpack.c.l.b16 %v6121
        %v6186 = vunpack.c.l.b16 %v6122
        %v6187 = vunpack.c.l.b16 %v6123
        %v6188 = vunpack.c.l.b16 %v6124
        %v6189 = vunpack.c.l.b16 %v6125
        %v6190 = vunpack.c.l.b16 %v6126
        %v6191 = vunpack.c.l.b16 %v6127
        %v6192 = vunpack.c.l.b16 %v6128
        %v6193 = vpack.c.b16 %v6178, %v6177
        %v6194 = vpack.c.b16 %v6180, %v6179
        %v6195 = vpack.c.b16 %v6182, %v6181
        %v6196 = vpack.c.b16 %v6184, %v6183
        %v6197 = vpack.c.b16 %v6186, %v6185
        %v6198 = vpack.c.b16 %v6188, %v6187
        %v6199 = vpack.c.b16 %v6190, %v6189
        %v6200 = vpack.c.b16 %v6192, %v6191
        %6209 = vmatprep.subr.bf16.mxu0 0
        %6210 = vmatpush1.bf16.msra.mxu0 %v6193
        %6211 = vmatprep.subr.bf16.mxu0 0
        %6212 = vmatpush1.bf16.msra.mxu0 %v6194
        %6213 = vmatprep.subr.bf16.mxu0 0
        %6214 = vmatpush1.bf16.msra.mxu0 %v6195
        %6215 = vmatprep.subr.bf16.mxu0 0
        %6216 = vmatpush1.bf16.msra.mxu0 %v6196
        %6217 = vmatprep.subr.bf16.mxu0 0
        %6218 = vmatpush1.bf16.msra.mxu0 %v6197
        %6219 = vmatprep.subr.bf16.mxu0 0
        %6220 = vmatpush1.bf16.msra.mxu0 %v6198
        %6221 = vmatprep.subr.bf16.mxu0 0
        %6222 = vmatpush1.bf16.msra.mxu0 %v6199
        %6223 = vmatprep.subr.bf16.mxu0 0
        %6224 = vmatpush1.bf16.msra.mxu0 %v6200
        %6225 = vmatprep.subr.bf16.mxu0 0
        %6226 = vmatpush1.bf16.msra.mxu0 0
        %6227 = vmatprep.subr.bf16.mxu0 0
        %6228 = vmatpush1.bf16.msra.mxu0 0
        %6229 = vmatprep.subr.bf16.mxu0 0
        %6230 = vmatpush1.bf16.msra.mxu0 0
        %6231 = vmatprep.subr.bf16.mxu0 0
        %6232 = vmatpush1.bf16.msra.mxu0 0
        %6233 = vmatprep.subr.bf16.mxu0 0
        %6234 = vmatpush1.bf16.msra.mxu0 0
        %6235 = vmatprep.subr.bf16.mxu0 0
        %6236 = vmatpush1.bf16.msra.mxu0 0
        %6237 = vmatprep.subr.bf16.mxu0 0
        %6238 = vmatpush1.bf16.msra.mxu0 0
        %6239 = vmatprep.subr.bf16.mxu0 0
        %6240 = vmatpush1.bf16.msra.mxu0 0
        %6241 = vmatprep.mubr.bf16.mxu0 0
        %6242 = vmatmul.mubr.bf16.gmra.mrb[0].mxu0 %v6145
        %v6243 = vpop.f32.mrb[0].mxu0
        %v6244 = vadd.f32 0.0, %v6243
        %v6245 = vpop.f32.mrb[0].mxu0
        %v6246 = vpop.f32.mrb[0].mxu0
        %v6247 = vadd.f32 0.0, %v6246
        %v6248 = vpop.f32.mrb[0].mxu0
        %6249 = vmatprep.mubr.bf16.mxu0 0
        %6250 = vmatmul.mubr.bf16.gmra.mrb[0].mxu0 %v6146
        %v6251 = vpop.f32.mrb[0].mxu0
        %v6252 = vadd.f32 0.0, %v6251
        %v6253 = vpop.f32.mrb[0].mxu0
        %v6254 = vpop.f32.mrb[0].mxu0
        %v6255 = vadd.f32 0.0, %v6254
        %v6256 = vpop.f32.mrb[0].mxu0
        %6257 = vmatprep.mubr.bf16.mxu0 0
        %6258 = vmatmul.mubr.bf16.gmra.mrb[0].mxu0 %v6147
        %v6259 = vpop.f32.mrb[0].mxu0
        %v6260 = vadd.f32 0.0, %v6259
        %v6261 = vpop.f32.mrb[0].mxu0
        %v6262 = vpop.f32.mrb[0].mxu0
        %v6263 = vadd.f32 0.0, %v6262
        %v6264 = vpop.f32.mrb[0].mxu0
        %6265 = vmatprep.mubr.bf16.mxu0 0
        %6266 = vmatmul.mubr.bf16.gmra.mrb[0].mxu0 %v6148
        %v6267 = vpop.f32.mrb[0].mxu0
        %v6268 = vadd.f32 0.0, %v6267
        %v6269 = vpop.f32.mrb[0].mxu0
        %v6270 = vpop.f32.mrb[0].mxu0
        %v6271 = vadd.f32 0.0, %v6270
        %v6272 = vpop.f32.mrb[0].mxu0
        %6273 = vmatprep.mubr.bf16.mxu0 0
        %6274 = vmatmul.mubr.bf16.gmra.mrb[0].mxu0 %v6149
        %v6275 = vpop.f32.mrb[0].mxu0
        %v6276 = vadd.f32 0.0, %v6275
        %v6277 = vpop.f32.mrb[0].mxu0
        %v6278 = vpop.f32.mrb[0].mxu0
        %v6279 = vadd.f32 0.0, %v6278
        %v6280 = vpop.f32.mrb[0].mxu0
        %6281 = vmatprep.mubr.bf16.mxu0 0
        %6282 = vmatmul.mubr.bf16.gmra.mrb[0].mxu0 %v6150
        %v6283 = vpop.f32.mrb[0].mxu0
        %v6284 = vadd.f32 0.0, %v6283
        %v6285 = vpop.f32.mrb[0].mxu0
        %v6286 = vpop.f32.mrb[0].mxu0
        %v6287 = vadd.f32 0.0, %v6286
        %v6288 = vpop.f32.mrb[0].mxu0
        %6289 = vmatprep.mubr.bf16.mxu0 0
        %6290 = vmatmul.mubr.bf16.gmra.mrb[0].mxu0 %v6151
        %v6291 = vpop.f32.mrb[0].mxu0
        %v6292 = vadd.f32 0.0, %v6291
        %v6293 = vpop.f32.mrb[0].mxu0
        %v6294 = vpop.f32.mrb[0].mxu0
        %v6295 = vadd.f32 0.0, %v6294
        %v6296 = vpop.f32.mrb[0].mxu0
        %6297 = vmatprep.mubr.bf16.mxu0 0
        %6298 = vmatmul.mubr.bf16.gmra.mrb[0].mxu0 %v6152
        %v6299 = vpop.f32.mrb[0].mxu0
        %v6300 = vadd.f32 0.0, %v6299
        %v6301 = vpop.f32.mrb[0].mxu0
        %v6302 = vpop.f32.mrb[0].mxu0
        %v6303 = vadd.f32 0.0, %v6302
        %v6304 = vpop.f32.mrb[0].mxu0
        %6305 = vdwg.mxu0
        %v6322 = vunpack.c.l.b16 %v5959
        %v6323 = vunpack.c.l.b16 %v5960
        %v6324 = vunpack.c.l.b16 %v5966
        %v6325 = vunpack.c.l.b16 %v5967
        %v6326 = vunpack.c.l.b16 %v5973
        %v6327 = vunpack.c.l.b16 %v5974
        %v6328 = vunpack.c.l.b16 %v5980
        %v6329 = vunpack.c.l.b16 %v5981
        %v6330 = vunpack.c.l.b16 %v5987
        %v6331 = vunpack.c.l.b16 %v5988
        %v6332 = vunpack.c.l.b16 %v5994
        %v6333 = vunpack.c.l.b16 %v5995
        %v6334 = vunpack.c.l.b16 %v6001
        %v6335 = vunpack.c.l.b16 %v6002
        %v6336 = vunpack.c.l.b16 %v6008
        %v6337 = vunpack.c.l.b16 %v6009
        %v6338 = vpack.c.b16 %v6323, %v6322
        %v6339 = vpack.c.b16 %v6325, %v6324
        %v6340 = vpack.c.b16 %v6327, %v6326
        %v6341 = vpack.c.b16 %v6329, %v6328
        %v6342 = vpack.c.b16 %v6331, %v6330
        %v6343 = vpack.c.b16 %v6333, %v6332
        %v6344 = vpack.c.b16 %v6335, %v6334
        %v6345 = vpack.c.b16 %v6337, %v6336
        %v6370 = vunpack.c.l.b16 %v6016
        %v6371 = vunpack.c.l.b16 %v6017
        %v6372 = vunpack.c.l.b16 %v6018
        %v6373 = vunpack.c.l.b16 %v6019
        %v6374 = vunpack.c.l.b16 %v6020
        %v6375 = vunpack.c.l.b16 %v6021
        %v6376 = vunpack.c.l.b16 %v6022
        %v6377 = vunpack.c.l.b16 %v6023
        %v6378 = vunpack.c.l.b16 %v6024
        %v6379 = vunpack.c.l.b16 %v6025
        %v6380 = vunpack.c.l.b16 %v6026
        %v6381 = vunpack.c.l.b16 %v6027
        %v6382 = vunpack.c.l.b16 %v6028
        %v6383 = vunpack.c.l.b16 %v6029
        %v6384 = vunpack.c.l.b16 %v6030
        %v6385 = vunpack.c.l.b16 %v6031
        %v6386 = vpack.c.b16 %v6371, %v6370
        %v6387 = vpack.c.b16 %v6373, %v6372
        %v6388 = vpack.c.b16 %v6375, %v6374
        %v6389 = vpack.c.b16 %v6377, %v6376
        %v6390 = vpack.c.b16 %v6379, %v6378
        %v6391 = vpack.c.b16 %v6381, %v6380
        %v6392 = vpack.c.b16 %v6383, %v6382
        %v6393 = vpack.c.b16 %v6385, %v6384
        %6402 = vmatprep.subr.bf16.mxu0 0
        %6403 = vmatpush1.bf16.msra.mxu0 %v6386
        %6404 = vmatprep.subr.bf16.mxu0 0
        %6405 = vmatpush1.bf16.msra.mxu0 %v6387
        %6406 = vmatprep.subr.bf16.mxu0 0
        %6407 = vmatpush1.bf16.msra.mxu0 %v6388
        %6408 = vmatprep.subr.bf16.mxu0 0
        %6409 = vmatpush1.bf16.msra.mxu0 %v6389
        %6410 = vmatprep.subr.bf16.mxu0 0
        %6411 = vmatpush1.bf16.msra.mxu0 %v6390
        %6412 = vmatprep.subr.bf16.mxu0 0
        %6413 = vmatpush1.bf16.msra.mxu0 %v6391
        %6414 = vmatprep.subr.bf16.mxu0 0
        %6415 = vmatpush1.bf16.msra.mxu0 %v6392
        %6416 = vmatprep.subr.bf16.mxu0 0
        %6417 = vmatpush1.bf16.msra.mxu0 %v6393
        %6418 = vmatprep.subr.bf16.mxu0 0
        %6419 = vmatpush1.bf16.msra.mxu0 0
        %6420 = vmatprep.subr.bf16.mxu0 0
        %6421 = vmatpush1.bf16.msra.mxu0 0
        %6422 = vmatprep.subr.bf16.mxu0 0
        %6423 = vmatpush1.bf16.msra.mxu0 0
        %6424 = vmatprep.subr.bf16.mxu0 0
        %6425 = vmatpush1.bf16.msra.mxu0 0
        %6426 = vmatprep.subr.bf16.mxu0 0
        %6427 = vmatpush1.bf16.msra.mxu0 0
        %6428 = vmatprep.subr.bf16.mxu0 0
        %6429 = vmatpush1.bf16.msra.mxu0 0
        %6430 = vmatprep.subr.bf16.mxu0 0
        %6431 = vmatpush1.bf16.msra.mxu0 0
        %6432 = vmatprep.subr.bf16.mxu0 0
        %6433 = vmatpush1.bf16.msra.mxu0 0
        %6434 = vmatprep.mubr.bf16.mxu0 0
        %6435 = vmatmul.mubr.bf16.gmra.mrb[0].mxu0 %v6338
        %v6436 = vpop.f32.mrb[0].mxu0
        %v6437 = vadd.f32 %v6244, %v6436
        %v6438 = vpop.f32.mrb[0].mxu0
        %v6439 = vpop.f32.mrb[0].mxu0
        %v6440 = vadd.f32 %v6247, %v6439
        %v6441 = vpop.f32.mrb[0].mxu0
        %6442 = vmatprep.mubr.bf16.mxu0 0
        %6443 = vmatmul.mubr.bf16.gmra.mrb[0].mxu0 %v6339
        %v6444 = vpop.f32.mrb[0].mxu0
        %v6445 = vadd.f32 %v6252, %v6444
        %v6446 = vpop.f32.mrb[0].mxu0
        %v6447 = vpop.f32.mrb[0].mxu0
        %v6448 = vadd.f32 %v6255, %v6447
        %v6449 = vpop.f32.mrb[0].mxu0
        %6450 = vmatprep.mubr.bf16.mxu0 0
        %6451 = vmatmul.mubr.bf16.gmra.mrb[0].mxu0 %v6340
        %v6452 = vpop.f32.mrb[0].mxu0
        %v6453 = vadd.f32 %v6260, %v6452
        %v6454 = vpop.f32.mrb[0].mxu0
        %v6455 = vpop.f32.mrb[0].mxu0
        %v6456 = vadd.f32 %v6263, %v6455
        %v6457 = vpop.f32.mrb[0].mxu0
        %6458 = vmatprep.mubr.bf16.mxu0 0
        %6459 = vmatmul.mubr.bf16.gmra.mrb[0].mxu0 %v6341
        %v6460 = vpop.f32.mrb[0].mxu0
        %v6461 = vadd.f32 %v6268, %v6460
        %v6462 = vpop.f32.mrb[0].mxu0
        %v6463 = vpop.f32.mrb[0].mxu0
        %v6464 = vadd.f32 %v6271, %v6463
        %v6465 = vpop.f32.mrb[0].mxu0
        %6466 = vmatprep.mubr.bf16.mxu0 0
        %6467 = vmatmul.mubr.bf16.gmra.mrb[0].mxu0 %v6342
        %v6468 = vpop.f32.mrb[0].mxu0
        %v6469 = vadd.f32 %v6276, %v6468
        %v6470 = vpop.f32.mrb[0].mxu0
        %v6471 = vpop.f32.mrb[0].mxu0
        %v6472 = vadd.f32 %v6279, %v6471
        %v6473 = vpop.f32.mrb[0].mxu0
        %6474 = vmatprep.mubr.bf16.mxu0 0
        %6475 = vmatmul.mubr.bf16.gmra.mrb[0].mxu0 %v6343
        %v6476 = vpop.f32.mrb[0].mxu0
        %v6477 = vadd.f32 %v6284, %v6476
        %v6478 = vpop.f32.mrb[0].mxu0
        %v6479 = vpop.f32.mrb[0].mxu0
        %v6480 = vadd.f32 %v6287, %v6479
        %v6481 = vpop.f32.mrb[0].mxu0
        %6482 = vmatprep.mubr.bf16.mxu0 0
        %6483 = vmatmul.mubr.bf16.gmra.mrb[0].mxu0 %v6344
        %v6484 = vpop.f32.mrb[0].mxu0
        %v6485 = vadd.f32 %v6292, %v6484
        %v6486 = vpop.f32.mrb[0].mxu0
        %v6487 = vpop.f32.mrb[0].mxu0
        %v6488 = vadd.f32 %v6295, %v6487
        %v6489 = vpop.f32.mrb[0].mxu0
        %6490 = vmatprep.mubr.bf16.mxu0 0
        %6491 = vmatmul.mubr.bf16.gmra.mrb[0].mxu0 %v6345
        %v6492 = vpop.f32.mrb[0].mxu0
        %v6493 = vadd.f32 %v6300, %v6492
        %v6494 = vpop.f32.mrb[0].mxu0
        %v6495 = vpop.f32.mrb[0].mxu0
        %v6496 = vadd.f32 %v6303, %v6495
        %v6497 = vpop.f32.mrb[0].mxu0
        %6498 = vdwg.mxu0
        %v6515 = vrot.slane %v5963, 6
        %v6516 = vrot.slane %v6515, 4
        %v6517 = vrot.slane %v5964, 6
        %v6518 = vsel %vm697, %v6516, %v6517
        %v6519 = vrot.slane %v6517, 4
        %v6520 = vrot.slane %v5965, 6
        %v6521 = vsel %vm697, %v6519, %v6520
        %v6522 = vrot.slane %v5970, 6
        %v6523 = vrot.slane %v6522, 4
        %v6524 = vrot.slane %v5971, 6
        %v6525 = vsel %vm697, %v6523, %v6524
        %v6526 = vrot.slane %v6524, 4
        %v6527 = vrot.slane %v5972, 6
        %v6528 = vsel %vm697, %v6526, %v6527
        %v6529 = vrot.slane %v5977, 6
        %v6530 = vrot.slane %v6529, 4
        %v6531 = vrot.slane %v5978, 6
        %v6532 = vsel %vm697, %v6530, %v6531
        %v6533 = vrot.slane %v6531, 4
        %v6534 = vrot.slane %v5979, 6
        %v6535 = vsel %vm697, %v6533, %v6534
        %v6536 = vrot.slane %v5984, 6
        %v6537 = vrot.slane %v6536, 4
        %v6538 = vrot.slane %v5985, 6
        %v6539 = vsel %vm697, %v6537, %v6538
        %v6540 = vrot.slane %v6538, 4
        %v6541 = vrot.slane %v5986, 6
        %v6542 = vsel %vm697, %v6540, %v6541
        %v6543 = vrot.slane %v5991, 6
        %v6544 = vrot.slane %v6543, 4
        %v6545 = vrot.slane %v5992, 6
        %v6546 = vsel %vm697, %v6544, %v6545
        %v6547 = vrot.slane %v6545, 4
        %v6548 = vrot.slane %v5993, 6
        %v6549 = vsel %vm697, %v6547, %v6548
        %v6550 = vrot.slane %v5998, 6
        %v6551 = vrot.slane %v6550, 4
        %v6552 = vrot.slane %v5999, 6
        %v6553 = vsel %vm697, %v6551, %v6552
        %v6554 = vrot.slane %v6552, 4
        %v6555 = vrot.slane %v6000, 6
        %v6556 = vsel %vm697, %v6554, %v6555
        %v6557 = vrot.slane %v6005, 6
        %v6558 = vrot.slane %v6557, 4
        %v6559 = vrot.slane %v6006, 6
        %v6560 = vsel %vm697, %v6558, %v6559
        %v6561 = vrot.slane %v6559, 4
        %v6562 = vrot.slane %v6007, 6
        %v6563 = vsel %vm697, %v6561, %v6562
        %v6564 = vrot.slane %v6012, 6
        %v6565 = vrot.slane %v6564, 4
        %v6566 = vrot.slane %v6013, 6
        %v6567 = vsel %vm697, %v6565, %v6566
        %v6568 = vrot.slane %v6566, 4
        %v6569 = vrot.slane %v6014, 6
        %v6570 = vsel %vm697, %v6568, %v6569
        %s6571 = scalar_lea.vmem %s1, 1344
        %v6572 = vld [vmem:[%s6571] sm:$0xf]
        %v6573 = vld [vmem:[%s6571 + $0x4] sm:$0xf]
        %v6574 = vld [vmem:[%s6571 + $0x8] sm:$0xf]
        %v6575 = vld [vmem:[%s6571 + $0xc] sm:$0xf]
        %v6576 = vld [vmem:[%s6571 + $0x10] sm:$0xf]
        %v6577 = vld [vmem:[%s6571 + $0x14] sm:$0xf]
        %v6578 = vld [vmem:[%s6571 + $0x18] sm:$0xf]
        %v6579 = vld [vmem:[%s6571 + $0x1c] sm:$0xf]
        %v6580 = vld [vmem:[%s6571 + $0x20] sm:$0xf]
        %v6581 = vld [vmem:[%s6571 + $0x24] sm:$0xf]
        %v6582 = vld [vmem:[%s6571 + $0x28] sm:$0xf]
        %v6583 = vld [vmem:[%s6571 + $0x2c] sm:$0xf]
        %v6584 = vld [vmem:[%s6571 + $0x30] sm:$0xf]
        %v6585 = vld [vmem:[%s6571 + $0x34] sm:$0xf]
        %v6586 = vld [vmem:[%s6571 + $0x38] sm:$0xf]
        %v6587 = vld [vmem:[%s6571 + $0x3c] sm:$0xf]
        %v6588 = vunpack.c.l.b16 %v6518
        %v6589 = vunpack.c.l.b16 %v6521
        %v6590 = vunpack.c.l.b16 %v6525
        %v6591 = vunpack.c.l.b16 %v6528
        %v6592 = vunpack.c.l.b16 %v6532
        %v6593 = vunpack.c.l.b16 %v6535
        %v6594 = vunpack.c.l.b16 %v6539
        %v6595 = vunpack.c.l.b16 %v6542
        %v6596 = vunpack.c.l.b16 %v6546
        %v6597 = vunpack.c.l.b16 %v6549
        %v6598 = vunpack.c.l.b16 %v6553
        %v6599 = vunpack.c.l.b16 %v6556
        %v6600 = vunpack.c.l.b16 %v6560
        %v6601 = vunpack.c.l.b16 %v6563
        %v6602 = vunpack.c.l.b16 %v6567
        %v6603 = vunpack.c.l.b16 %v6570
        %v6604 = vpack.c.b16 %v6589, %v6588
        %v6605 = vpack.c.b16 %v6591, %v6590
        %v6606 = vpack.c.b16 %v6593, %v6592
        %v6607 = vpack.c.b16 %v6595, %v6594
        %v6608 = vpack.c.b16 %v6597, %v6596
        %v6609 = vpack.c.b16 %v6599, %v6598
        %v6610 = vpack.c.b16 %v6601, %v6600
        %v6611 = vpack.c.b16 %v6603, %v6602
        %v6636 = vunpack.c.l.b16 %v6572
        %v6637 = vunpack.c.l.b16 %v6573
        %v6638 = vunpack.c.l.b16 %v6574
        %v6639 = vunpack.c.l.b16 %v6575
        %v6640 = vunpack.c.l.b16 %v6576
        %v6641 = vunpack.c.l.b16 %v6577
        %v6642 = vunpack.c.l.b16 %v6578
        %v6643 = vunpack.c.l.b16 %v6579
        %v6644 = vunpack.c.l.b16 %v6580
        %v6645 = vunpack.c.l.b16 %v6581
        %v6646 = vunpack.c.l.b16 %v6582
        %v6647 = vunpack.c.l.b16 %v6583
        %v6648 = vunpack.c.l.b16 %v6584
        %v6649 = vunpack.c.l.b16 %v6585
        %v6650 = vunpack.c.l.b16 %v6586
        %v6651 = vunpack.c.l.b16 %v6587
        %v6652 = vpack.c.b16 %v6637, %v6636
        %v6653 = vpack.c.b16 %v6639, %v6638
        %v6654 = vpack.c.b16 %v6641, %v6640
        %v6655 = vpack.c.b16 %v6643, %v6642
        %v6656 = vpack.c.b16 %v6645, %v6644
        %v6657 = vpack.c.b16 %v6647, %v6646
        %v6658 = vpack.c.b16 %v6649, %v6648
        %v6659 = vpack.c.b16 %v6651, %v6650
        %6668 = vmatprep.subr.bf16.mxu0 0
        %6669 = vmatpush1.bf16.msra.mxu0 %v6652
        %6670 = vmatprep.subr.bf16.mxu0 0
        %6671 = vmatpush1.bf16.msra.mxu0 %v6653
        %6672 = vmatprep.subr.bf16.mxu0 0
        %6673 = vmatpush1.bf16.msra.mxu0 %v6654
        %6674 = vmatprep.subr.bf16.mxu0 0
        %6675 = vmatpush1.bf16.msra.mxu0 %v6655
        %6676 = vmatprep.subr.bf16.mxu0 0
        %6677 = vmatpush1.bf16.msra.mxu0 %v6656
        %6678 = vmatprep.subr.bf16.mxu0 0
        %6679 = vmatpush1.bf16.msra.mxu0 %v6657
        %6680 = vmatprep.subr.bf16.mxu0 0
        %6681 = vmatpush1.bf16.msra.mxu0 %v6658
        %6682 = vmatprep.subr.bf16.mxu0 0
        %6683 = vmatpush1.bf16.msra.mxu0 %v6659
        %6684 = vmatprep.subr.bf16.mxu0 0
        %6685 = vmatpush1.bf16.msra.mxu0 0
        %6686 = vmatprep.subr.bf16.mxu0 0
        %6687 = vmatpush1.bf16.msra.mxu0 0
        %6688 = vmatprep.subr.bf16.mxu0 0
        %6689 = vmatpush1.bf16.msra.mxu0 0
        %6690 = vmatprep.subr.bf16.mxu0 0
        %6691 = vmatpush1.bf16.msra.mxu0 0
        %6692 = vmatprep.subr.bf16.mxu0 0
        %6693 = vmatpush1.bf16.msra.mxu0 0
        %6694 = vmatprep.subr.bf16.mxu0 0
        %6695 = vmatpush1.bf16.msra.mxu0 0
        %6696 = vmatprep.subr.bf16.mxu0 0
        %6697 = vmatpush1.bf16.msra.mxu0 0
        %6698 = vmatprep.subr.bf16.mxu0 0
        %6699 = vmatpush1.bf16.msra.mxu0 0
        %6700 = vmatprep.mubr.bf16.mxu0 0
        %6701 = vmatmul.mubr.bf16.gmra.mrb[0].mxu0 %v6604
        %v6702 = vpop.f32.mrb[0].mxu0
        %v6703 = vadd.f32 0.0, %v6702
        %v6704 = vpop.f32.mrb[0].mxu0
        %v6705 = vpop.f32.mrb[0].mxu0
        %v6706 = vadd.f32 0.0, %v6705
        %v6707 = vpop.f32.mrb[0].mxu0
        %6708 = vmatprep.mubr.bf16.mxu0 0
        %6709 = vmatmul.mubr.bf16.gmra.mrb[0].mxu0 %v6605
        %v6710 = vpop.f32.mrb[0].mxu0
        %v6711 = vadd.f32 0.0, %v6710
        %v6712 = vpop.f32.mrb[0].mxu0
        %v6713 = vpop.f32.mrb[0].mxu0
        %v6714 = vadd.f32 0.0, %v6713
        %v6715 = vpop.f32.mrb[0].mxu0
        %6716 = vmatprep.mubr.bf16.mxu0 0
        %6717 = vmatmul.mubr.bf16.gmra.mrb[0].mxu0 %v6606
        %v6718 = vpop.f32.mrb[0].mxu0
        %v6719 = vadd.f32 0.0, %v6718
        %v6720 = vpop.f32.mrb[0].mxu0
        %v6721 = vpop.f32.mrb[0].mxu0
        %v6722 = vadd.f32 0.0, %v6721
        %v6723 = vpop.f32.mrb[0].mxu0
        %6724 = vmatprep.mubr.bf16.mxu0 0
        %6725 = vmatmul.mubr.bf16.gmra.mrb[0].mxu0 %v6607
        %v6726 = vpop.f32.mrb[0].mxu0
        %v6727 = vadd.f32 0.0, %v6726
        %v6728 = vpop.f32.mrb[0].mxu0
        %v6729 = vpop.f32.mrb[0].mxu0
        %v6730 = vadd.f32 0.0, %v6729
        %v6731 = vpop.f32.mrb[0].mxu0
        %6732 = vmatprep.mubr.bf16.mxu0 0
        %6733 = vmatmul.mubr.bf16.gmra.mrb[0].mxu0 %v6608
        %v6734 = vpop.f32.mrb[0].mxu0
        %v6735 = vadd.f32 0.0, %v6734
        %v6736 = vpop.f32.mrb[0].mxu0
        %v6737 = vpop.f32.mrb[0].mxu0
        %v6738 = vadd.f32 0.0, %v6737
        %v6739 = vpop.f32.mrb[0].mxu0
        %6740 = vmatprep.mubr.bf16.mxu0 0
        %6741 = vmatmul.mubr.bf16.gmra.mrb[0].mxu0 %v6609
        %v6742 = vpop.f32.mrb[0].mxu0
        %v6743 = vadd.f32 0.0, %v6742
        %v6744 = vpop.f32.mrb[0].mxu0
        %v6745 = vpop.f32.mrb[0].mxu0
        %v6746 = vadd.f32 0.0, %v6745
        %v6747 = vpop.f32.mrb[0].mxu0
        %6748 = vmatprep.mubr.bf16.mxu0 0
        %6749 = vmatmul.mubr.bf16.gmra.mrb[0].mxu0 %v6610
        %v6750 = vpop.f32.mrb[0].mxu0
        %v6751 = vadd.f32 0.0, %v6750
        %v6752 = vpop.f32.mrb[0].mxu0
        %v6753 = vpop.f32.mrb[0].mxu0
        %v6754 = vadd.f32 0.0, %v6753
        %v6755 = vpop.f32.mrb[0].mxu0
        %6756 = vmatprep.mubr.bf16.mxu0 0
        %6757 = vmatmul.mubr.bf16.gmra.mrb[0].mxu0 %v6611
        %v6758 = vpop.f32.mrb[0].mxu0
        %v6759 = vadd.f32 0.0, %v6758
        %v6760 = vpop.f32.mrb[0].mxu0
        %v6761 = vpop.f32.mrb[0].mxu0
        %v6762 = vadd.f32 0.0, %v6761
        %v6763 = vpop.f32.mrb[0].mxu0
        %6764 = vdwg.mxu0
        %v6765 = vadd.f32 %v6437, %v6703
        %v6766 = vadd.f32 %v6440, %v6706
        %v6767 = vadd.f32 %v6445, %v6711
        %v6768 = vadd.f32 %v6448, %v6714
        %v6769 = vadd.f32 %v6453, %v6719
        %v6770 = vadd.f32 %v6456, %v6722
        %v6771 = vadd.f32 %v6461, %v6727
        %v6772 = vadd.f32 %v6464, %v6730
        %v6773 = vadd.f32 %v6469, %v6735
        %v6774 = vadd.f32 %v6472, %v6738
        %v6775 = vadd.f32 %v6477, %v6743
        %v6776 = vadd.f32 %v6480, %v6746
        %v6777 = vadd.f32 %v6485, %v6751
        %v6778 = vadd.f32 %v6488, %v6754
        %v6779 = vadd.f32 %v6493, %v6759
        %v6780 = vadd.f32 %v6496, %v6762
        %s6781 = scalar_lea.vmem %s1, 1408
        %v6782 = vld [vmem:[%s6781] sm:$0xf]
        %v6783 = vld [vmem:[%s6781 + $0x4] sm:$0xf]
        %v6784 = vld [vmem:[%s6781 + $0x8] sm:$0xf]
        %v6785 = vld [vmem:[%s6781 + $0xc] sm:$0xf]
        %v6786 = vld [vmem:[%s6781 + $0x10] sm:$0xf]
        %v6787 = vld [vmem:[%s6781 + $0x14] sm:$0xf]
        %v6788 = vld [vmem:[%s6781 + $0x18] sm:$0xf]
        %v6789 = vld [vmem:[%s6781 + $0x1c] sm:$0xf]
        %v6790 = vld [vmem:[%s6781 + $0x20] sm:$0xf]
        %v6791 = vld [vmem:[%s6781 + $0x24] sm:$0xf]
        %v6792 = vld [vmem:[%s6781 + $0x28] sm:$0xf]
        %v6793 = vld [vmem:[%s6781 + $0x2c] sm:$0xf]
        %v6794 = vld [vmem:[%s6781 + $0x30] sm:$0xf]
        %v6795 = vld [vmem:[%s6781 + $0x34] sm:$0xf]
        %v6796 = vld [vmem:[%s6781 + $0x38] sm:$0xf]
        %v6797 = vld [vmem:[%s6781 + $0x3c] sm:$0xf]
        %v6798 = vunpack.c.l.b16 %v258
        %v6799 = vunpack.c.l.b16 %v259
        %v6800 = vunpack.c.l.b16 %v265
        %v6801 = vunpack.c.l.b16 %v266
        %v6802 = vunpack.c.l.b16 %v272
        %v6803 = vunpack.c.l.b16 %v273
        %v6804 = vunpack.c.l.b16 %v279
        %v6805 = vunpack.c.l.b16 %v280
        %v6806 = vunpack.c.l.b16 %v286
        %v6807 = vunpack.c.l.b16 %v287
        %v6808 = vunpack.c.l.b16 %v293
        %v6809 = vunpack.c.l.b16 %v294
        %v6810 = vunpack.c.l.b16 %v300
        %v6811 = vunpack.c.l.b16 %v301
        %v6812 = vunpack.c.l.b16 %v307
        %v6813 = vunpack.c.l.b16 %v308
        %v6814 = vpack.c.b16 %v6799, %v6798
        %v6815 = vpack.c.b16 %v6801, %v6800
        %v6816 = vpack.c.b16 %v6803, %v6802
        %v6817 = vpack.c.b16 %v6805, %v6804
        %v6818 = vpack.c.b16 %v6807, %v6806
        %v6819 = vpack.c.b16 %v6809, %v6808
        %v6820 = vpack.c.b16 %v6811, %v6810
        %v6821 = vpack.c.b16 %v6813, %v6812
        %v6846 = vunpack.c.l.b16 %v6782
        %v6847 = vunpack.c.l.b16 %v6783
        %v6848 = vunpack.c.l.b16 %v6784
        %v6849 = vunpack.c.l.b16 %v6785
        %v6850 = vunpack.c.l.b16 %v6786
        %v6851 = vunpack.c.l.b16 %v6787
        %v6852 = vunpack.c.l.b16 %v6788
        %v6853 = vunpack.c.l.b16 %v6789
        %v6854 = vunpack.c.l.b16 %v6790
        %v6855 = vunpack.c.l.b16 %v6791
        %v6856 = vunpack.c.l.b16 %v6792
        %v6857 = vunpack.c.l.b16 %v6793
        %v6858 = vunpack.c.l.b16 %v6794
        %v6859 = vunpack.c.l.b16 %v6795
        %v6860 = vunpack.c.l.b16 %v6796
        %v6861 = vunpack.c.l.b16 %v6797
        %v6862 = vpack.c.b16 %v6847, %v6846
        %v6863 = vpack.c.b16 %v6849, %v6848
        %v6864 = vpack.c.b16 %v6851, %v6850
        %v6865 = vpack.c.b16 %v6853, %v6852
        %v6866 = vpack.c.b16 %v6855, %v6854
        %v6867 = vpack.c.b16 %v6857, %v6856
        %v6868 = vpack.c.b16 %v6859, %v6858
        %v6869 = vpack.c.b16 %v6861, %v6860
        %6878 = vmatprep.subr.bf16.mxu0 0
        %6879 = vmatpush1.bf16.msra.mxu0 %v6862
        %6880 = vmatprep.subr.bf16.mxu0 0
        %6881 = vmatpush1.bf16.msra.mxu0 %v6863
        %6882 = vmatprep.subr.bf16.mxu0 0
        %6883 = vmatpush1.bf16.msra.mxu0 %v6864
        %6884 = vmatprep.subr.bf16.mxu0 0
        %6885 = vmatpush1.bf16.msra.mxu0 %v6865
        %6886 = vmatprep.subr.bf16.mxu0 0
        %6887 = vmatpush1.bf16.msra.mxu0 %v6866
        %6888 = vmatprep.subr.bf16.mxu0 0
        %6889 = vmatpush1.bf16.msra.mxu0 %v6867
        %6890 = vmatprep.subr.bf16.mxu0 0
        %6891 = vmatpush1.bf16.msra.mxu0 %v6868
        %6892 = vmatprep.subr.bf16.mxu0 0
        %6893 = vmatpush1.bf16.msra.mxu0 %v6869
        %6894 = vmatprep.subr.bf16.mxu0 0
        %6895 = vmatpush1.bf16.msra.mxu0 0
        %6896 = vmatprep.subr.bf16.mxu0 0
        %6897 = vmatpush1.bf16.msra.mxu0 0
        %6898 = vmatprep.subr.bf16.mxu0 0
        %6899 = vmatpush1.bf16.msra.mxu0 0
        %6900 = vmatprep.subr.bf16.mxu0 0
        %6901 = vmatpush1.bf16.msra.mxu0 0
        %6902 = vmatprep.subr.bf16.mxu0 0
        %6903 = vmatpush1.bf16.msra.mxu0 0
        %6904 = vmatprep.subr.bf16.mxu0 0
        %6905 = vmatpush1.bf16.msra.mxu0 0
        %6906 = vmatprep.subr.bf16.mxu0 0
        %6907 = vmatpush1.bf16.msra.mxu0 0
        %6908 = vmatprep.subr.bf16.mxu0 0
        %6909 = vmatpush1.bf16.msra.mxu0 0
        %6910 = vmatprep.mubr.bf16.mxu0 0
        %6911 = vmatmul.mubr.bf16.gmra.mrb[0].mxu0 %v6814
        %v6912 = vpop.f32.mrb[0].mxu0
        %v6913 = vadd.f32 0.0, %v6912
        %v6914 = vpop.f32.mrb[0].mxu0
        %v6915 = vpop.f32.mrb[0].mxu0
        %v6916 = vadd.f32 0.0, %v6915
        %v6917 = vpop.f32.mrb[0].mxu0
        %6918 = vmatprep.mubr.bf16.mxu0 0
        %6919 = vmatmul.mubr.bf16.gmra.mrb[0].mxu0 %v6815
        %v6920 = vpop.f32.mrb[0].mxu0
        %v6921 = vadd.f32 0.0, %v6920
        %v6922 = vpop.f32.mrb[0].mxu0
        %v6923 = vpop.f32.mrb[0].mxu0
        %v6924 = vadd.f32 0.0, %v6923
        %v6925 = vpop.f32.mrb[0].mxu0
        %6926 = vmatprep.mubr.bf16.mxu0 0
        %6927 = vmatmul.mubr.bf16.gmra.mrb[0].mxu0 %v6816
        %v6928 = vpop.f32.mrb[0].mxu0
        %v6929 = vadd.f32 0.0, %v6928
        %v6930 = vpop.f32.mrb[0].mxu0
        %v6931 = vpop.f32.mrb[0].mxu0
        %v6932 = vadd.f32 0.0, %v6931
        %v6933 = vpop.f32.mrb[0].mxu0
        %6934 = vmatprep.mubr.bf16.mxu0 0
        %6935 = vmatmul.mubr.bf16.gmra.mrb[0].mxu0 %v6817
        %v6936 = vpop.f32.mrb[0].mxu0
        %v6937 = vadd.f32 0.0, %v6936
        %v6938 = vpop.f32.mrb[0].mxu0
        %v6939 = vpop.f32.mrb[0].mxu0
        %v6940 = vadd.f32 0.0, %v6939
        %v6941 = vpop.f32.mrb[0].mxu0
        %6942 = vmatprep.mubr.bf16.mxu0 0
        %6943 = vmatmul.mubr.bf16.gmra.mrb[0].mxu0 %v6818
        %v6944 = vpop.f32.mrb[0].mxu0
        %v6945 = vadd.f32 0.0, %v6944
        %v6946 = vpop.f32.mrb[0].mxu0
        %v6947 = vpop.f32.mrb[0].mxu0
        %v6948 = vadd.f32 0.0, %v6947
        %v6949 = vpop.f32.mrb[0].mxu0
        %6950 = vmatprep.mubr.bf16.mxu0 0
        %6951 = vmatmul.mubr.bf16.gmra.mrb[0].mxu0 %v6819
        %v6952 = vpop.f32.mrb[0].mxu0
        %v6953 = vadd.f32 0.0, %v6952
        %v6954 = vpop.f32.mrb[0].mxu0
        %v6955 = vpop.f32.mrb[0].mxu0
        %v6956 = vadd.f32 0.0, %v6955
        %v6957 = vpop.f32.mrb[0].mxu0
        %6958 = vmatprep.mubr.bf16.mxu0 0
        %6959 = vmatmul.mubr.bf16.gmra.mrb[0].mxu0 %v6820
        %v6960 = vpop.f32.mrb[0].mxu0
        %v6961 = vadd.f32 0.0, %v6960
        %v6962 = vpop.f32.mrb[0].mxu0
        %v6963 = vpop.f32.mrb[0].mxu0
        %v6964 = vadd.f32 0.0, %v6963
        %v6965 = vpop.f32.mrb[0].mxu0
        %6966 = vmatprep.mubr.bf16.mxu0 0
        %6967 = vmatmul.mubr.bf16.gmra.mrb[0].mxu0 %v6821
        %v6968 = vpop.f32.mrb[0].mxu0
        %v6969 = vadd.f32 0.0, %v6968
        %v6970 = vpop.f32.mrb[0].mxu0
        %v6971 = vpop.f32.mrb[0].mxu0
        %v6972 = vadd.f32 0.0, %v6971
        %v6973 = vpop.f32.mrb[0].mxu0
        %6974 = vdwg.mxu0
        %v6975 = vadd.f32 %v6765, %v6913
        %v6976 = vadd.f32 %v6766, %v6916
        %v6977 = vadd.f32 %v6767, %v6921
        %v6978 = vadd.f32 %v6768, %v6924
        %v6979 = vadd.f32 %v6769, %v6929
        %v6980 = vadd.f32 %v6770, %v6932
        %v6981 = vadd.f32 %v6771, %v6937
        %v6982 = vadd.f32 %v6772, %v6940
        %v6983 = vadd.f32 %v6773, %v6945
        %v6984 = vadd.f32 %v6774, %v6948
        %v6985 = vadd.f32 %v6775, %v6953
        %v6986 = vadd.f32 %v6776, %v6956
        %v6987 = vadd.f32 %v6777, %v6961
        %v6988 = vadd.f32 %v6778, %v6964
        %v6989 = vadd.f32 %v6779, %v6969
        %v6990 = vadd.f32 %v6780, %v6972
        %s6991 = scalar_lea.vmem %s1, 1472
        %v6992 = vld [vmem:[%s6991] sm:$0xf]
        %v6993 = vld [vmem:[%s6991 + $0x4] sm:$0xf]
        %v6994 = vld [vmem:[%s6991 + $0x8] sm:$0xf]
        %v6995 = vld [vmem:[%s6991 + $0xc] sm:$0xf]
        %v6996 = vld [vmem:[%s6991 + $0x10] sm:$0xf]
        %v6997 = vld [vmem:[%s6991 + $0x14] sm:$0xf]
        %v6998 = vld [vmem:[%s6991 + $0x18] sm:$0xf]
        %v6999 = vld [vmem:[%s6991 + $0x1c] sm:$0xf]
        %v7000 = vld [vmem:[%s6991 + $0x20] sm:$0xf]
        %v7001 = vld [vmem:[%s6991 + $0x24] sm:$0xf]
        %v7002 = vld [vmem:[%s6991 + $0x28] sm:$0xf]
        %v7003 = vld [vmem:[%s6991 + $0x2c] sm:$0xf]
        %v7004 = vld [vmem:[%s6991 + $0x30] sm:$0xf]
        %v7005 = vld [vmem:[%s6991 + $0x34] sm:$0xf]
        %v7006 = vld [vmem:[%s6991 + $0x38] sm:$0xf]
        %v7007 = vld [vmem:[%s6991 + $0x3c] sm:$0xf]
        %v7024 = vunpack.c.l.b16 %v6992
        %v7025 = vunpack.c.l.b16 %v6993
        %v7026 = vunpack.c.l.b16 %v6994
        %v7027 = vunpack.c.l.b16 %v6995
        %v7028 = vunpack.c.l.b16 %v6996
        %v7029 = vunpack.c.l.b16 %v6997
        %v7030 = vunpack.c.l.b16 %v6998
        %v7031 = vunpack.c.l.b16 %v6999
        %v7032 = vunpack.c.l.b16 %v7000
        %v7033 = vunpack.c.l.b16 %v7001
        %v7034 = vunpack.c.l.b16 %v7002
        %v7035 = vunpack.c.l.b16 %v7003
        %v7036 = vunpack.c.l.b16 %v7004
        %v7037 = vunpack.c.l.b16 %v7005
        %v7038 = vunpack.c.l.b16 %v7006
        %v7039 = vunpack.c.l.b16 %v7007
        %v7040 = vpack.c.b16 %v7025, %v7024
        %v7041 = vpack.c.b16 %v7027, %v7026
        %v7042 = vpack.c.b16 %v7029, %v7028
        %v7043 = vpack.c.b16 %v7031, %v7030
        %v7044 = vpack.c.b16 %v7033, %v7032
        %v7045 = vpack.c.b16 %v7035, %v7034
        %v7046 = vpack.c.b16 %v7037, %v7036
        %v7047 = vpack.c.b16 %v7039, %v7038
        %7056 = vmatprep.subr.bf16.mxu0 0
        %7057 = vmatpush1.bf16.msra.mxu0 %v7040
        %7058 = vmatprep.subr.bf16.mxu0 0
        %7059 = vmatpush1.bf16.msra.mxu0 %v7041
        %7060 = vmatprep.subr.bf16.mxu0 0
        %7061 = vmatpush1.bf16.msra.mxu0 %v7042
        %7062 = vmatprep.subr.bf16.mxu0 0
        %7063 = vmatpush1.bf16.msra.mxu0 %v7043
        %7064 = vmatprep.subr.bf16.mxu0 0
        %7065 = vmatpush1.bf16.msra.mxu0 %v7044
        %7066 = vmatprep.subr.bf16.mxu0 0
        %7067 = vmatpush1.bf16.msra.mxu0 %v7045
        %7068 = vmatprep.subr.bf16.mxu0 0
        %7069 = vmatpush1.bf16.msra.mxu0 %v7046
        %7070 = vmatprep.subr.bf16.mxu0 0
        %7071 = vmatpush1.bf16.msra.mxu0 %v7047
        %7072 = vmatprep.subr.bf16.mxu0 0
        %7073 = vmatpush1.bf16.msra.mxu0 0
        %7074 = vmatprep.subr.bf16.mxu0 0
        %7075 = vmatpush1.bf16.msra.mxu0 0
        %7076 = vmatprep.subr.bf16.mxu0 0
        %7077 = vmatpush1.bf16.msra.mxu0 0
        %7078 = vmatprep.subr.bf16.mxu0 0
        %7079 = vmatpush1.bf16.msra.mxu0 0
        %7080 = vmatprep.subr.bf16.mxu0 0
        %7081 = vmatpush1.bf16.msra.mxu0 0
        %7082 = vmatprep.subr.bf16.mxu0 0
        %7083 = vmatpush1.bf16.msra.mxu0 0
        %7084 = vmatprep.subr.bf16.mxu0 0
        %7085 = vmatpush1.bf16.msra.mxu0 0
        %7086 = vmatprep.subr.bf16.mxu0 0
        %7087 = vmatpush1.bf16.msra.mxu0 0
        %7088 = vmatprep.mubr.bf16.mxu0 0
        %7089 = vmatmul.mubr.bf16.gmra.mrb[0].mxu0 %v434
        %v7090 = vpop.f32.mrb[0].mxu0
        %v7091 = vadd.f32 0.0, %v7090
        %v7092 = vpop.f32.mrb[0].mxu0
        %v7093 = vpop.f32.mrb[0].mxu0
        %v7094 = vadd.f32 0.0, %v7093
        %v7095 = vpop.f32.mrb[0].mxu0
        %7096 = vmatprep.mubr.bf16.mxu0 0
        %7097 = vmatmul.mubr.bf16.gmra.mrb[0].mxu0 %v435
        %v7098 = vpop.f32.mrb[0].mxu0
        %v7099 = vadd.f32 0.0, %v7098
        %v7100 = vpop.f32.mrb[0].mxu0
        %v7101 = vpop.f32.mrb[0].mxu0
        %v7102 = vadd.f32 0.0, %v7101
        %v7103 = vpop.f32.mrb[0].mxu0
        %7104 = vmatprep.mubr.bf16.mxu0 0
        %7105 = vmatmul.mubr.bf16.gmra.mrb[0].mxu0 %v436
        %v7106 = vpop.f32.mrb[0].mxu0
        %v7107 = vadd.f32 0.0, %v7106
        %v7108 = vpop.f32.mrb[0].mxu0
        %v7109 = vpop.f32.mrb[0].mxu0
        %v7110 = vadd.f32 0.0, %v7109
        %v7111 = vpop.f32.mrb[0].mxu0
        %7112 = vmatprep.mubr.bf16.mxu0 0
        %7113 = vmatmul.mubr.bf16.gmra.mrb[0].mxu0 %v437
        %v7114 = vpop.f32.mrb[0].mxu0
        %v7115 = vadd.f32 0.0, %v7114
        %v7116 = vpop.f32.mrb[0].mxu0
        %v7117 = vpop.f32.mrb[0].mxu0
        %v7118 = vadd.f32 0.0, %v7117
        %v7119 = vpop.f32.mrb[0].mxu0
        %7120 = vmatprep.mubr.bf16.mxu0 0
        %7121 = vmatmul.mubr.bf16.gmra.mrb[0].mxu0 %v438
        %v7122 = vpop.f32.mrb[0].mxu0
        %v7123 = vadd.f32 0.0, %v7122
        %v7124 = vpop.f32.mrb[0].mxu0
        %v7125 = vpop.f32.mrb[0].mxu0
        %v7126 = vadd.f32 0.0, %v7125
        %v7127 = vpop.f32.mrb[0].mxu0
        %7128 = vmatprep.mubr.bf16.mxu0 0
        %7129 = vmatmul.mubr.bf16.gmra.mrb[0].mxu0 %v439
        %v7130 = vpop.f32.mrb[0].mxu0
        %v7131 = vadd.f32 0.0, %v7130
        %v7132 = vpop.f32.mrb[0].mxu0
        %v7133 = vpop.f32.mrb[0].mxu0
        %v7134 = vadd.f32 0.0, %v7133
        %v7135 = vpop.f32.mrb[0].mxu0
        %7136 = vmatprep.mubr.bf16.mxu0 0
        %7137 = vmatmul.mubr.bf16.gmra.mrb[0].mxu0 %v440
        %v7138 = vpop.f32.mrb[0].mxu0
        %v7139 = vadd.f32 0.0, %v7138
        %v7140 = vpop.f32.mrb[0].mxu0
        %v7141 = vpop.f32.mrb[0].mxu0
        %v7142 = vadd.f32 0.0, %v7141
        %v7143 = vpop.f32.mrb[0].mxu0
        %7144 = vmatprep.mubr.bf16.mxu0 0
        %7145 = vmatmul.mubr.bf16.gmra.mrb[0].mxu0 %v441
        %v7146 = vpop.f32.mrb[0].mxu0
        %v7147 = vadd.f32 0.0, %v7146
        %v7148 = vpop.f32.mrb[0].mxu0
        %v7149 = vpop.f32.mrb[0].mxu0
        %v7150 = vadd.f32 0.0, %v7149
        %v7151 = vpop.f32.mrb[0].mxu0
        %7152 = vdwg.mxu0
        %v7153 = vadd.f32 %v6975, %v7091
        %v7154 = vadd.f32 %v6976, %v7094
        %v7155 = vadd.f32 %v6977, %v7099
        %v7156 = vadd.f32 %v6978, %v7102
        %v7157 = vadd.f32 %v6979, %v7107
        %v7158 = vadd.f32 %v6980, %v7110
        %v7159 = vadd.f32 %v6981, %v7115
        %v7160 = vadd.f32 %v6982, %v7118
        %v7161 = vadd.f32 %v6983, %v7123
        %v7162 = vadd.f32 %v6984, %v7126
        %v7163 = vadd.f32 %v6985, %v7131
        %v7164 = vadd.f32 %v6986, %v7134
        %v7165 = vadd.f32 %v6987, %v7139
        %v7166 = vadd.f32 %v6988, %v7142
        %v7167 = vadd.f32 %v6989, %v7147
        %v7168 = vadd.f32 %v6990, %v7150
        %v7177 = vrot.slane %v262, 6
        %v7178 = vrot.slane %v7177, 4
        %v7179 = vrot.slane %v263, 6
        %v7180 = vsel %vm697, %v7178, %v7179
        %v7181 = vrot.slane %v7179, 4
        %v7182 = vrot.slane %v264, 6
        %v7183 = vsel %vm697, %v7181, %v7182
        %v7184 = vrot.slane %v269, 6
        %v7185 = vrot.slane %v7184, 4
        %v7186 = vrot.slane %v270, 6
        %v7187 = vsel %vm697, %v7185, %v7186
        %v7188 = vrot.slane %v7186, 4
        %v7189 = vrot.slane %v271, 6
        %v7190 = vsel %vm697, %v7188, %v7189
        %v7191 = vrot.slane %v276, 6
        %v7192 = vrot.slane %v7191, 4
        %v7193 = vrot.slane %v277, 6
        %v7194 = vsel %vm697, %v7192, %v7193
        %v7195 = vrot.slane %v7193, 4
        %v7196 = vrot.slane %v278, 6
        %v7197 = vsel %vm697, %v7195, %v7196
        %v7198 = vrot.slane %v283, 6
        %v7199 = vrot.slane %v7198, 4
        %v7200 = vrot.slane %v284, 6
        %v7201 = vsel %vm697, %v7199, %v7200
        %v7202 = vrot.slane %v7200, 4
        %v7203 = vrot.slane %v285, 6
        %v7204 = vsel %vm697, %v7202, %v7203
        %v7205 = vrot.slane %v290, 6
        %v7206 = vrot.slane %v7205, 4
        %v7207 = vrot.slane %v291, 6
        %v7208 = vsel %vm697, %v7206, %v7207
        %v7209 = vrot.slane %v7207, 4
        %v7210 = vrot.slane %v292, 6
        %v7211 = vsel %vm697, %v7209, %v7210
        %v7212 = vrot.slane %v297, 6
        %v7213 = vrot.slane %v7212, 4
        %v7214 = vrot.slane %v298, 6
        %v7215 = vsel %vm697, %v7213, %v7214
        %v7216 = vrot.slane %v7214, 4
        %v7217 = vrot.slane %v299, 6
        %v7218 = vsel %vm697, %v7216, %v7217
        %v7219 = vrot.slane %v304, 6
        %v7220 = vrot.slane %v7219, 4
        %v7221 = vrot.slane %v305, 6
        %v7222 = vsel %vm697, %v7220, %v7221
        %v7223 = vrot.slane %v7221, 4
        %v7224 = vrot.slane %v306, 6
        %v7225 = vsel %vm697, %v7223, %v7224
        %v7226 = vrot.slane %v311, 6
        %v7227 = vrot.slane %v7226, 4
        %v7228 = vrot.slane %v312, 6
        %v7229 = vsel %vm697, %v7227, %v7228
        %v7230 = vrot.slane %v7228, 4
        %v7231 = vrot.slane %v313, 6
        %v7232 = vsel %vm697, %v7230, %v7231
        %s7233 = scalar_lea.vmem %s1, 1536
        %v7234 = vld [vmem:[%s7233] sm:$0xf]
        %v7235 = vld [vmem:[%s7233 + $0x4] sm:$0xf]
        %v7236 = vld [vmem:[%s7233 + $0x8] sm:$0xf]
        %v7237 = vld [vmem:[%s7233 + $0xc] sm:$0xf]
        %v7238 = vld [vmem:[%s7233 + $0x10] sm:$0xf]
        %v7239 = vld [vmem:[%s7233 + $0x14] sm:$0xf]
        %v7240 = vld [vmem:[%s7233 + $0x18] sm:$0xf]
        %v7241 = vld [vmem:[%s7233 + $0x1c] sm:$0xf]
        %v7242 = vld [vmem:[%s7233 + $0x20] sm:$0xf]
        %v7243 = vld [vmem:[%s7233 + $0x24] sm:$0xf]
        %v7244 = vld [vmem:[%s7233 + $0x28] sm:$0xf]
        %v7245 = vld [vmem:[%s7233 + $0x2c] sm:$0xf]
        %v7246 = vld [vmem:[%s7233 + $0x30] sm:$0xf]
        %v7247 = vld [vmem:[%s7233 + $0x34] sm:$0xf]
        %v7248 = vld [vmem:[%s7233 + $0x38] sm:$0xf]
        %v7249 = vld [vmem:[%s7233 + $0x3c] sm:$0xf]
        %v7250 = vunpack.c.l.b16 %v7180
        %v7251 = vunpack.c.l.b16 %v7183
        %v7252 = vunpack.c.l.b16 %v7187
        %v7253 = vunpack.c.l.b16 %v7190
        %v7254 = vunpack.c.l.b16 %v7194
        %v7255 = vunpack.c.l.b16 %v7197
        %v7256 = vunpack.c.l.b16 %v7201
        %v7257 = vunpack.c.l.b16 %v7204
        %v7258 = vunpack.c.l.b16 %v7208
        %v7259 = vunpack.c.l.b16 %v7211
        %v7260 = vunpack.c.l.b16 %v7215
        %v7261 = vunpack.c.l.b16 %v7218
        %v7262 = vunpack.c.l.b16 %v7222
        %v7263 = vunpack.c.l.b16 %v7225
        %v7264 = vunpack.c.l.b16 %v7229
        %v7265 = vunpack.c.l.b16 %v7232
        %v7266 = vpack.c.b16 %v7251, %v7250
        %v7267 = vpack.c.b16 %v7253, %v7252
        %v7268 = vpack.c.b16 %v7255, %v7254
        %v7269 = vpack.c.b16 %v7257, %v7256
        %v7270 = vpack.c.b16 %v7259, %v7258
        %v7271 = vpack.c.b16 %v7261, %v7260
        %v7272 = vpack.c.b16 %v7263, %v7262
        %v7273 = vpack.c.b16 %v7265, %v7264
        %v7298 = vunpack.c.l.b16 %v7234
        %v7299 = vunpack.c.l.b16 %v7235
        %v7300 = vunpack.c.l.b16 %v7236
        %v7301 = vunpack.c.l.b16 %v7237
        %v7302 = vunpack.c.l.b16 %v7238
        %v7303 = vunpack.c.l.b16 %v7239
        %v7304 = vunpack.c.l.b16 %v7240
        %v7305 = vunpack.c.l.b16 %v7241
        %v7306 = vunpack.c.l.b16 %v7242
        %v7307 = vunpack.c.l.b16 %v7243
        %v7308 = vunpack.c.l.b16 %v7244
        %v7309 = vunpack.c.l.b16 %v7245
        %v7310 = vunpack.c.l.b16 %v7246
        %v7311 = vunpack.c.l.b16 %v7247
        %v7312 = vunpack.c.l.b16 %v7248
        %v7313 = vunpack.c.l.b16 %v7249
        %v7314 = vpack.c.b16 %v7299, %v7298
        %v7315 = vpack.c.b16 %v7301, %v7300
        %v7316 = vpack.c.b16 %v7303, %v7302
        %v7317 = vpack.c.b16 %v7305, %v7304
        %v7318 = vpack.c.b16 %v7307, %v7306
        %v7319 = vpack.c.b16 %v7309, %v7308
        %v7320 = vpack.c.b16 %v7311, %v7310
        %v7321 = vpack.c.b16 %v7313, %v7312
        %7330 = vmatprep.subr.bf16.mxu0 0
        %7331 = vmatpush1.bf16.msra.mxu0 %v7314
        %7332 = vmatprep.subr.bf16.mxu0 0
        %7333 = vmatpush1.bf16.msra.mxu0 %v7315
        %7334 = vmatprep.subr.bf16.mxu0 0
        %7335 = vmatpush1.bf16.msra.mxu0 %v7316
        %7336 = vmatprep.subr.bf16.mxu0 0
        %7337 = vmatpush1.bf16.msra.mxu0 %v7317
        %7338 = vmatprep.subr.bf16.mxu0 0
        %7339 = vmatpush1.bf16.msra.mxu0 %v7318
        %7340 = vmatprep.subr.bf16.mxu0 0
        %7341 = vmatpush1.bf16.msra.mxu0 %v7319
        %7342 = vmatprep.subr.bf16.mxu0 0
        %7343 = vmatpush1.bf16.msra.mxu0 %v7320
        %7344 = vmatprep.subr.bf16.mxu0 0
        %7345 = vmatpush1.bf16.msra.mxu0 %v7321
        %7346 = vmatprep.subr.bf16.mxu0 0
        %7347 = vmatpush1.bf16.msra.mxu0 0
        %7348 = vmatprep.subr.bf16.mxu0 0
        %7349 = vmatpush1.bf16.msra.mxu0 0
        %7350 = vmatprep.subr.bf16.mxu0 0
        %7351 = vmatpush1.bf16.msra.mxu0 0
        %7352 = vmatprep.subr.bf16.mxu0 0
        %7353 = vmatpush1.bf16.msra.mxu0 0
        %7354 = vmatprep.subr.bf16.mxu0 0
        %7355 = vmatpush1.bf16.msra.mxu0 0
        %7356 = vmatprep.subr.bf16.mxu0 0
        %7357 = vmatpush1.bf16.msra.mxu0 0
        %7358 = vmatprep.subr.bf16.mxu0 0
        %7359 = vmatpush1.bf16.msra.mxu0 0
        %7360 = vmatprep.subr.bf16.mxu0 0
        %7361 = vmatpush1.bf16.msra.mxu0 0
        %7362 = vmatprep.mubr.bf16.mxu0 0
        %7363 = vmatmul.mubr.bf16.gmra.mrb[0].mxu0 %v7266
        %v7364 = vpop.f32.mrb[0].mxu0
        %v7365 = vadd.f32 0.0, %v7364
        %v7366 = vpop.f32.mrb[0].mxu0
        %v7367 = vpop.f32.mrb[0].mxu0
        %v7368 = vadd.f32 0.0, %v7367
        %v7369 = vpop.f32.mrb[0].mxu0
        %7370 = vmatprep.mubr.bf16.mxu0 0
        %7371 = vmatmul.mubr.bf16.gmra.mrb[0].mxu0 %v7267
        %v7372 = vpop.f32.mrb[0].mxu0
        %v7373 = vadd.f32 0.0, %v7372
        %v7374 = vpop.f32.mrb[0].mxu0
        %v7375 = vpop.f32.mrb[0].mxu0
        %v7376 = vadd.f32 0.0, %v7375
        %v7377 = vpop.f32.mrb[0].mxu0
        %7378 = vmatprep.mubr.bf16.mxu0 0
        %7379 = vmatmul.mubr.bf16.gmra.mrb[0].mxu0 %v7268
        %v7380 = vpop.f32.mrb[0].mxu0
        %v7381 = vadd.f32 0.0, %v7380
        %v7382 = vpop.f32.mrb[0].mxu0
        %v7383 = vpop.f32.mrb[0].mxu0
        %v7384 = vadd.f32 0.0, %v7383
        %v7385 = vpop.f32.mrb[0].mxu0
        %7386 = vmatprep.mubr.bf16.mxu0 0
        %7387 = vmatmul.mubr.bf16.gmra.mrb[0].mxu0 %v7269
        %v7388 = vpop.f32.mrb[0].mxu0
        %v7389 = vadd.f32 0.0, %v7388
        %v7390 = vpop.f32.mrb[0].mxu0
        %v7391 = vpop.f32.mrb[0].mxu0
        %v7392 = vadd.f32 0.0, %v7391
        %v7393 = vpop.f32.mrb[0].mxu0
        %7394 = vmatprep.mubr.bf16.mxu0 0
        %7395 = vmatmul.mubr.bf16.gmra.mrb[0].mxu0 %v7270
        %v7396 = vpop.f32.mrb[0].mxu0
        %v7397 = vadd.f32 0.0, %v7396
        %v7398 = vpop.f32.mrb[0].mxu0
        %v7399 = vpop.f32.mrb[0].mxu0
        %v7400 = vadd.f32 0.0, %v7399
        %v7401 = vpop.f32.mrb[0].mxu0
        %7402 = vmatprep.mubr.bf16.mxu0 0
        %7403 = vmatmul.mubr.bf16.gmra.mrb[0].mxu0 %v7271
        %v7404 = vpop.f32.mrb[0].mxu0
        %v7405 = vadd.f32 0.0, %v7404
        %v7406 = vpop.f32.mrb[0].mxu0
        %v7407 = vpop.f32.mrb[0].mxu0
        %v7408 = vadd.f32 0.0, %v7407
        %v7409 = vpop.f32.mrb[0].mxu0
        %7410 = vmatprep.mubr.bf16.mxu0 0
        %7411 = vmatmul.mubr.bf16.gmra.mrb[0].mxu0 %v7272
        %v7412 = vpop.f32.mrb[0].mxu0
        %v7413 = vadd.f32 0.0, %v7412
        %v7414 = vpop.f32.mrb[0].mxu0
        %v7415 = vpop.f32.mrb[0].mxu0
        %v7416 = vadd.f32 0.0, %v7415
        %v7417 = vpop.f32.mrb[0].mxu0
        %7418 = vmatprep.mubr.bf16.mxu0 0
        %7419 = vmatmul.mubr.bf16.gmra.mrb[0].mxu0 %v7273
        %v7420 = vpop.f32.mrb[0].mxu0
        %v7421 = vadd.f32 0.0, %v7420
        %v7422 = vpop.f32.mrb[0].mxu0
        %v7423 = vpop.f32.mrb[0].mxu0
        %v7424 = vadd.f32 0.0, %v7423
        %v7425 = vpop.f32.mrb[0].mxu0
        %7426 = vdwg.mxu0
        %v7427 = vadd.f32 %v7153, %v7365
        %v7428 = vadd.f32 %v7154, %v7368
        %v7429 = vadd.f32 %v7155, %v7373
        %v7430 = vadd.f32 %v7156, %v7376
        %v7431 = vadd.f32 %v7157, %v7381
        %v7432 = vadd.f32 %v7158, %v7384
        %v7433 = vadd.f32 %v7159, %v7389
        %v7434 = vadd.f32 %v7160, %v7392
        %v7435 = vadd.f32 %v7161, %v7397
        %v7436 = vadd.f32 %v7162, %v7400
        %v7437 = vadd.f32 %v7163, %v7405
        %v7438 = vadd.f32 %v7164, %v7408
        %v7439 = vadd.f32 %v7165, %v7413
        %v7440 = vadd.f32 %v7166, %v7416
        %v7441 = vadd.f32 %v7167, %v7421
        %v7442 = vadd.f32 %v7168, %v7424
        %s7443 = sadd.s32 %s253, 36
        %s7444 = smul.u32 %s7443, 7
        %s7445 = smul.addr %s7444, 4
        %s7446 = scalar_lea.vmem %s247, %s7445
        %v7447 = vld [vmem:[%s7446] sm:$0xf]
        %v7448 = vld [vmem:[%s7446 + $0x4] sm:$0xf]
        %v7449 = vld [vmem:[%s7446 + $0x8] sm:$0xf]
        %v7450 = vld [vmem:[%s7446 + $0xc] sm:$0xf]
        %v7451 = vld [vmem:[%s7446 + $0x10] sm:$0xf]
        %v7452 = vld [vmem:[%s7446 + $0x14] sm:$0xf]
        %v7453 = vld [vmem:[%s7446 + $0x18] sm:$0x3]
        %v7454 = vld [vmem:[%s7446 + $0x1c] sm:$0xf]
        %v7455 = vld [vmem:[%s7446 + $0x20] sm:$0xf]
        %v7456 = vld [vmem:[%s7446 + $0x24] sm:$0xf]
        %v7457 = vld [vmem:[%s7446 + $0x28] sm:$0xf]
        %v7458 = vld [vmem:[%s7446 + $0x2c] sm:$0xf]
        %v7459 = vld [vmem:[%s7446 + $0x30] sm:$0xf]
        %v7460 = vld [vmem:[%s7446 + $0x34] sm:$0x3]
        %v7461 = vld [vmem:[%s7446 + $0x38] sm:$0xf]
        %v7462 = vld [vmem:[%s7446 + $0x3c] sm:$0xf]
        %v7463 = vld [vmem:[%s7446 + $0x40] sm:$0xf]
        %v7464 = vld [vmem:[%s7446 + $0x44] sm:$0xf]
        %v7465 = vld [vmem:[%s7446 + $0x48] sm:$0xf]
        %v7466 = vld [vmem:[%s7446 + $0x4c] sm:$0xf]
        %v7467 = vld [vmem:[%s7446 + $0x50] sm:$0x3]
        %v7468 = vld [vmem:[%s7446 + $0x54] sm:$0xf]
        %v7469 = vld [vmem:[%s7446 + $0x58] sm:$0xf]
        %v7470 = vld [vmem:[%s7446 + $0x5c] sm:$0xf]
        %v7471 = vld [vmem:[%s7446 + $0x60] sm:$0xf]
        %v7472 = vld [vmem:[%s7446 + $0x64] sm:$0xf]
        %v7473 = vld [vmem:[%s7446 + $0x68] sm:$0xf]
        %v7474 = vld [vmem:[%s7446 + $0x6c] sm:$0x3]
        %v7475 = vld [vmem:[%s7446 + $0x70] sm:$0xf]
        %v7476 = vld [vmem:[%s7446 + $0x74] sm:$0xf]
        %v7477 = vld [vmem:[%s7446 + $0x78] sm:$0xf]
        %v7478 = vld [vmem:[%s7446 + $0x7c] sm:$0xf]
        %v7479 = vld [vmem:[%s7446 + $0x80] sm:$0xf]
        %v7480 = vld [vmem:[%s7446 + $0x84] sm:$0xf]
        %v7481 = vld [vmem:[%s7446 + $0x88] sm:$0x3]
        %v7482 = vld [vmem:[%s7446 + $0x8c] sm:$0xf]
        %v7483 = vld [vmem:[%s7446 + $0x90] sm:$0xf]
        %v7484 = vld [vmem:[%s7446 + $0x94] sm:$0xf]
        %v7485 = vld [vmem:[%s7446 + $0x98] sm:$0xf]
        %v7486 = vld [vmem:[%s7446 + $0x9c] sm:$0xf]
        %v7487 = vld [vmem:[%s7446 + $0xa0] sm:$0xf]
        %v7488 = vld [vmem:[%s7446 + $0xa4] sm:$0x3]
        %v7489 = vld [vmem:[%s7446 + $0xa8] sm:$0xf]
        %v7490 = vld [vmem:[%s7446 + $0xac] sm:$0xf]
        %v7491 = vld [vmem:[%s7446 + $0xb0] sm:$0xf]
        %v7492 = vld [vmem:[%s7446 + $0xb4] sm:$0xf]
        %v7493 = vld [vmem:[%s7446 + $0xb8] sm:$0xf]
        %v7494 = vld [vmem:[%s7446 + $0xbc] sm:$0xf]
        %v7495 = vld [vmem:[%s7446 + $0xc0] sm:$0x3]
        %v7496 = vld [vmem:[%s7446 + $0xc4] sm:$0xf]
        %v7497 = vld [vmem:[%s7446 + $0xc8] sm:$0xf]
        %v7498 = vld [vmem:[%s7446 + $0xcc] sm:$0xf]
        %v7499 = vld [vmem:[%s7446 + $0xd0] sm:$0xf]
        %v7500 = vld [vmem:[%s7446 + $0xd4] sm:$0xf]
        %v7501 = vld [vmem:[%s7446 + $0xd8] sm:$0xf]
        %v7502 = vld [vmem:[%s7446 + $0xdc] sm:$0x3]
        %s7503 = scalar_lea.vmem %s1, 1600
        %v7504 = vld [vmem:[%s7503] sm:$0xf]
        %v7505 = vld [vmem:[%s7503 + $0x4] sm:$0xf]
        %v7506 = vld [vmem:[%s7503 + $0x8] sm:$0xf]
        %v7507 = vld [vmem:[%s7503 + $0xc] sm:$0xf]
        %v7508 = vld [vmem:[%s7503 + $0x10] sm:$0xf]
        %v7509 = vld [vmem:[%s7503 + $0x14] sm:$0xf]
        %v7510 = vld [vmem:[%s7503 + $0x18] sm:$0xf]
        %v7511 = vld [vmem:[%s7503 + $0x1c] sm:$0xf]
        %v7512 = vld [vmem:[%s7503 + $0x20] sm:$0xf]
        %v7513 = vld [vmem:[%s7503 + $0x24] sm:$0xf]
        %v7514 = vld [vmem:[%s7503 + $0x28] sm:$0xf]
        %v7515 = vld [vmem:[%s7503 + $0x2c] sm:$0xf]
        %v7516 = vld [vmem:[%s7503 + $0x30] sm:$0xf]
        %v7517 = vld [vmem:[%s7503 + $0x34] sm:$0xf]
        %v7518 = vld [vmem:[%s7503 + $0x38] sm:$0xf]
        %v7519 = vld [vmem:[%s7503 + $0x3c] sm:$0xf]
        %v7536 = vunpack.c.l.b16 %v7447
        %v7537 = vunpack.c.l.b16 %v7448
        %v7538 = vunpack.c.l.b16 %v7454
        %v7539 = vunpack.c.l.b16 %v7455
        %v7540 = vunpack.c.l.b16 %v7461
        %v7541 = vunpack.c.l.b16 %v7462
        %v7542 = vunpack.c.l.b16 %v7468
        %v7543 = vunpack.c.l.b16 %v7469
        %v7544 = vunpack.c.l.b16 %v7475
        %v7545 = vunpack.c.l.b16 %v7476
        %v7546 = vunpack.c.l.b16 %v7482
        %v7547 = vunpack.c.l.b16 %v7483
        %v7548 = vunpack.c.l.b16 %v7489
        %v7549 = vunpack.c.l.b16 %v7490
        %v7550 = vunpack.c.l.b16 %v7496
        %v7551 = vunpack.c.l.b16 %v7497
        %v7552 = vpack.c.b16 %v7537, %v7536
        %v7553 = vpack.c.b16 %v7539, %v7538
        %v7554 = vpack.c.b16 %v7541, %v7540
        %v7555 = vpack.c.b16 %v7543, %v7542
        %v7556 = vpack.c.b16 %v7545, %v7544
        %v7557 = vpack.c.b16 %v7547, %v7546
        %v7558 = vpack.c.b16 %v7549, %v7548
        %v7559 = vpack.c.b16 %v7551, %v7550
        %v7584 = vunpack.c.l.b16 %v7504
        %v7585 = vunpack.c.l.b16 %v7505
        %v7586 = vunpack.c.l.b16 %v7506
        %v7587 = vunpack.c.l.b16 %v7507
        %v7588 = vunpack.c.l.b16 %v7508
        %v7589 = vunpack.c.l.b16 %v7509
        %v7590 = vunpack.c.l.b16 %v7510
        %v7591 = vunpack.c.l.b16 %v7511
        %v7592 = vunpack.c.l.b16 %v7512
        %v7593 = vunpack.c.l.b16 %v7513
        %v7594 = vunpack.c.l.b16 %v7514
        %v7595 = vunpack.c.l.b16 %v7515
        %v7596 = vunpack.c.l.b16 %v7516
        %v7597 = vunpack.c.l.b16 %v7517
        %v7598 = vunpack.c.l.b16 %v7518
        %v7599 = vunpack.c.l.b16 %v7519
        %v7600 = vpack.c.b16 %v7585, %v7584
        %v7601 = vpack.c.b16 %v7587, %v7586
        %v7602 = vpack.c.b16 %v7589, %v7588
        %v7603 = vpack.c.b16 %v7591, %v7590
        %v7604 = vpack.c.b16 %v7593, %v7592
        %v7605 = vpack.c.b16 %v7595, %v7594
        %v7606 = vpack.c.b16 %v7597, %v7596
        %v7607 = vpack.c.b16 %v7599, %v7598
        %7616 = vmatprep.subr.bf16.mxu0 0
        %7617 = vmatpush1.bf16.msra.mxu0 %v7600
        %7618 = vmatprep.subr.bf16.mxu0 0
        %7619 = vmatpush1.bf16.msra.mxu0 %v7601
        %7620 = vmatprep.subr.bf16.mxu0 0
        %7621 = vmatpush1.bf16.msra.mxu0 %v7602
        %7622 = vmatprep.subr.bf16.mxu0 0
        %7623 = vmatpush1.bf16.msra.mxu0 %v7603
        %7624 = vmatprep.subr.bf16.mxu0 0
        %7625 = vmatpush1.bf16.msra.mxu0 %v7604
        %7626 = vmatprep.subr.bf16.mxu0 0
        %7627 = vmatpush1.bf16.msra.mxu0 %v7605
        %7628 = vmatprep.subr.bf16.mxu0 0
        %7629 = vmatpush1.bf16.msra.mxu0 %v7606
        %7630 = vmatprep.subr.bf16.mxu0 0
        %7631 = vmatpush1.bf16.msra.mxu0 %v7607
        %7632 = vmatprep.subr.bf16.mxu0 0
        %7633 = vmatpush1.bf16.msra.mxu0 0
        %7634 = vmatprep.subr.bf16.mxu0 0
        %7635 = vmatpush1.bf16.msra.mxu0 0
        %7636 = vmatprep.subr.bf16.mxu0 0
        %7637 = vmatpush1.bf16.msra.mxu0 0
        %7638 = vmatprep.subr.bf16.mxu0 0
        %7639 = vmatpush1.bf16.msra.mxu0 0
        %7640 = vmatprep.subr.bf16.mxu0 0
        %7641 = vmatpush1.bf16.msra.mxu0 0
        %7642 = vmatprep.subr.bf16.mxu0 0
        %7643 = vmatpush1.bf16.msra.mxu0 0
        %7644 = vmatprep.subr.bf16.mxu0 0
        %7645 = vmatpush1.bf16.msra.mxu0 0
        %7646 = vmatprep.subr.bf16.mxu0 0
        %7647 = vmatpush1.bf16.msra.mxu0 0
        %7648 = vmatprep.mubr.bf16.mxu0 0
        %7649 = vmatmul.mubr.bf16.gmra.mrb[0].mxu0 %v7552
        %v7650 = vpop.f32.mrb[0].mxu0
        %v7651 = vadd.f32 0.0, %v7650
        %v7652 = vpop.f32.mrb[0].mxu0
        %v7653 = vpop.f32.mrb[0].mxu0
        %v7654 = vadd.f32 0.0, %v7653
        %v7655 = vpop.f32.mrb[0].mxu0
        %7656 = vmatprep.mubr.bf16.mxu0 0
        %7657 = vmatmul.mubr.bf16.gmra.mrb[0].mxu0 %v7553
        %v7658 = vpop.f32.mrb[0].mxu0
        %v7659 = vadd.f32 0.0, %v7658
        %v7660 = vpop.f32.mrb[0].mxu0
        %v7661 = vpop.f32.mrb[0].mxu0
        %v7662 = vadd.f32 0.0, %v7661
        %v7663 = vpop.f32.mrb[0].mxu0
        %7664 = vmatprep.mubr.bf16.mxu0 0
        %7665 = vmatmul.mubr.bf16.gmra.mrb[0].mxu0 %v7554
        %v7666 = vpop.f32.mrb[0].mxu0
        %v7667 = vadd.f32 0.0, %v7666
        %v7668 = vpop.f32.mrb[0].mxu0
        %v7669 = vpop.f32.mrb[0].mxu0
        %v7670 = vadd.f32 0.0, %v7669
        %v7671 = vpop.f32.mrb[0].mxu0
        %7672 = vmatprep.mubr.bf16.mxu0 0
        %7673 = vmatmul.mubr.bf16.gmra.mrb[0].mxu0 %v7555
        %v7674 = vpop.f32.mrb[0].mxu0
        %v7675 = vadd.f32 0.0, %v7674
        %v7676 = vpop.f32.mrb[0].mxu0
        %v7677 = vpop.f32.mrb[0].mxu0
        %v7678 = vadd.f32 0.0, %v7677
        %v7679 = vpop.f32.mrb[0].mxu0
        %7680 = vmatprep.mubr.bf16.mxu0 0
        %7681 = vmatmul.mubr.bf16.gmra.mrb[0].mxu0 %v7556
        %v7682 = vpop.f32.mrb[0].mxu0
        %v7683 = vadd.f32 0.0, %v7682
        %v7684 = vpop.f32.mrb[0].mxu0
        %v7685 = vpop.f32.mrb[0].mxu0
        %v7686 = vadd.f32 0.0, %v7685
        %v7687 = vpop.f32.mrb[0].mxu0
        %7688 = vmatprep.mubr.bf16.mxu0 0
        %7689 = vmatmul.mubr.bf16.gmra.mrb[0].mxu0 %v7557
        %v7690 = vpop.f32.mrb[0].mxu0
        %v7691 = vadd.f32 0.0, %v7690
        %v7692 = vpop.f32.mrb[0].mxu0
        %v7693 = vpop.f32.mrb[0].mxu0
        %v7694 = vadd.f32 0.0, %v7693
        %v7695 = vpop.f32.mrb[0].mxu0
        %7696 = vmatprep.mubr.bf16.mxu0 0
        %7697 = vmatmul.mubr.bf16.gmra.mrb[0].mxu0 %v7558
        %v7698 = vpop.f32.mrb[0].mxu0
        %v7699 = vadd.f32 0.0, %v7698
        %v7700 = vpop.f32.mrb[0].mxu0
        %v7701 = vpop.f32.mrb[0].mxu0
        %v7702 = vadd.f32 0.0, %v7701
        %v7703 = vpop.f32.mrb[0].mxu0
        %7704 = vmatprep.mubr.bf16.mxu0 0
        %7705 = vmatmul.mubr.bf16.gmra.mrb[0].mxu0 %v7559
        %v7706 = vpop.f32.mrb[0].mxu0
        %v7707 = vadd.f32 0.0, %v7706
        %v7708 = vpop.f32.mrb[0].mxu0
        %v7709 = vpop.f32.mrb[0].mxu0
        %v7710 = vadd.f32 0.0, %v7709
        %v7711 = vpop.f32.mrb[0].mxu0
        %7712 = vdwg.mxu0
        %v7713 = vadd.f32 %v7427, %v7651
        %v7714 = vadd.f32 %v7428, %v7654
        %v7715 = vadd.f32 %v7429, %v7659
        %v7716 = vadd.f32 %v7430, %v7662
        %v7717 = vadd.f32 %v7431, %v7667
        %v7718 = vadd.f32 %v7432, %v7670
        %v7719 = vadd.f32 %v7433, %v7675
        %v7720 = vadd.f32 %v7434, %v7678
        %v7721 = vadd.f32 %v7435, %v7683
        %v7722 = vadd.f32 %v7436, %v7686
        %v7723 = vadd.f32 %v7437, %v7691
        %v7724 = vadd.f32 %v7438, %v7694
        %v7725 = vadd.f32 %v7439, %v7699
        %v7726 = vadd.f32 %v7440, %v7702
        %v7727 = vadd.f32 %v7441, %v7707
        %v7728 = vadd.f32 %v7442, %v7710
        %v7753 = vrot.slane %v7449, 5
        %v7754 = vrot.slane %v7753, 4
        %v7755 = vrot.slane %v7450, 5
        %v7756 = vsel %vm340, %v7754, %v7755
        %v7757 = vrot.slane %v7755, 4
        %v7758 = vrot.slane %v7451, 5
        %v7759 = vsel %vm340, %v7757, %v7758
        %v7760 = vrot.slane %v7456, 5
        %v7761 = vrot.slane %v7760, 4
        %v7762 = vrot.slane %v7457, 5
        %v7763 = vsel %vm340, %v7761, %v7762
        %v7764 = vrot.slane %v7762, 4
        %v7765 = vrot.slane %v7458, 5
        %v7766 = vsel %vm340, %v7764, %v7765
        %v7767 = vrot.slane %v7463, 5
        %v7768 = vrot.slane %v7767, 4
        %v7769 = vrot.slane %v7464, 5
        %v7770 = vsel %vm340, %v7768, %v7769
        %v7771 = vrot.slane %v7769, 4
        %v7772 = vrot.slane %v7465, 5
        %v7773 = vsel %vm340, %v7771, %v7772
        %v7774 = vrot.slane %v7470, 5
        %v7775 = vrot.slane %v7774, 4
        %v7776 = vrot.slane %v7471, 5
        %v7777 = vsel %vm340, %v7775, %v7776
        %v7778 = vrot.slane %v7776, 4
        %v7779 = vrot.slane %v7472, 5
        %v7780 = vsel %vm340, %v7778, %v7779
        %v7781 = vrot.slane %v7477, 5
        %v7782 = vrot.slane %v7781, 4
        %v7783 = vrot.slane %v7478, 5
        %v7784 = vsel %vm340, %v7782, %v7783
        %v7785 = vrot.slane %v7783, 4
        %v7786 = vrot.slane %v7479, 5
        %v7787 = vsel %vm340, %v7785, %v7786
        %v7788 = vrot.slane %v7484, 5
        %v7789 = vrot.slane %v7788, 4
        %v7790 = vrot.slane %v7485, 5
        %v7791 = vsel %vm340, %v7789, %v7790
        %v7792 = vrot.slane %v7790, 4
        %v7793 = vrot.slane %v7486, 5
        %v7794 = vsel %vm340, %v7792, %v7793
        %v7795 = vrot.slane %v7491, 5
        %v7796 = vrot.slane %v7795, 4
        %v7797 = vrot.slane %v7492, 5
        %v7798 = vsel %vm340, %v7796, %v7797
        %v7799 = vrot.slane %v7797, 4
        %v7800 = vrot.slane %v7493, 5
        %v7801 = vsel %vm340, %v7799, %v7800
        %v7802 = vrot.slane %v7498, 5
        %v7803 = vrot.slane %v7802, 4
        %v7804 = vrot.slane %v7499, 5
        %v7805 = vsel %vm340, %v7803, %v7804
        %v7806 = vrot.slane %v7804, 4
        %v7807 = vrot.slane %v7500, 5
        %v7808 = vsel %vm340, %v7806, %v7807
        %s7809 = scalar_lea.vmem %s1, 1664
        %v7810 = vld [vmem:[%s7809] sm:$0xf]
        %v7811 = vld [vmem:[%s7809 + $0x4] sm:$0xf]
        %v7812 = vld [vmem:[%s7809 + $0x8] sm:$0xf]
        %v7813 = vld [vmem:[%s7809 + $0xc] sm:$0xf]
        %v7814 = vld [vmem:[%s7809 + $0x10] sm:$0xf]
        %v7815 = vld [vmem:[%s7809 + $0x14] sm:$0xf]
        %v7816 = vld [vmem:[%s7809 + $0x18] sm:$0xf]
        %v7817 = vld [vmem:[%s7809 + $0x1c] sm:$0xf]
        %v7818 = vld [vmem:[%s7809 + $0x20] sm:$0xf]
        %v7819 = vld [vmem:[%s7809 + $0x24] sm:$0xf]
        %v7820 = vld [vmem:[%s7809 + $0x28] sm:$0xf]
        %v7821 = vld [vmem:[%s7809 + $0x2c] sm:$0xf]
        %v7822 = vld [vmem:[%s7809 + $0x30] sm:$0xf]
        %v7823 = vld [vmem:[%s7809 + $0x34] sm:$0xf]
        %v7824 = vld [vmem:[%s7809 + $0x38] sm:$0xf]
        %v7825 = vld [vmem:[%s7809 + $0x3c] sm:$0xf]
        %v7826 = vunpack.c.l.b16 %v7756
        %v7827 = vunpack.c.l.b16 %v7759
        %v7828 = vunpack.c.l.b16 %v7763
        %v7829 = vunpack.c.l.b16 %v7766
        %v7830 = vunpack.c.l.b16 %v7770
        %v7831 = vunpack.c.l.b16 %v7773
        %v7832 = vunpack.c.l.b16 %v7777
        %v7833 = vunpack.c.l.b16 %v7780
        %v7834 = vunpack.c.l.b16 %v7784
        %v7835 = vunpack.c.l.b16 %v7787
        %v7836 = vunpack.c.l.b16 %v7791
        %v7837 = vunpack.c.l.b16 %v7794
        %v7838 = vunpack.c.l.b16 %v7798
        %v7839 = vunpack.c.l.b16 %v7801
        %v7840 = vunpack.c.l.b16 %v7805
        %v7841 = vunpack.c.l.b16 %v7808
        %v7842 = vpack.c.b16 %v7827, %v7826
        %v7843 = vpack.c.b16 %v7829, %v7828
        %v7844 = vpack.c.b16 %v7831, %v7830
        %v7845 = vpack.c.b16 %v7833, %v7832
        %v7846 = vpack.c.b16 %v7835, %v7834
        %v7847 = vpack.c.b16 %v7837, %v7836
        %v7848 = vpack.c.b16 %v7839, %v7838
        %v7849 = vpack.c.b16 %v7841, %v7840
        %v7874 = vunpack.c.l.b16 %v7810
        %v7875 = vunpack.c.l.b16 %v7811
        %v7876 = vunpack.c.l.b16 %v7812
        %v7877 = vunpack.c.l.b16 %v7813
        %v7878 = vunpack.c.l.b16 %v7814
        %v7879 = vunpack.c.l.b16 %v7815
        %v7880 = vunpack.c.l.b16 %v7816
        %v7881 = vunpack.c.l.b16 %v7817
        %v7882 = vunpack.c.l.b16 %v7818
        %v7883 = vunpack.c.l.b16 %v7819
        %v7884 = vunpack.c.l.b16 %v7820
        %v7885 = vunpack.c.l.b16 %v7821
        %v7886 = vunpack.c.l.b16 %v7822
        %v7887 = vunpack.c.l.b16 %v7823
        %v7888 = vunpack.c.l.b16 %v7824
        %v7889 = vunpack.c.l.b16 %v7825
        %v7890 = vpack.c.b16 %v7875, %v7874
        %v7891 = vpack.c.b16 %v7877, %v7876
        %v7892 = vpack.c.b16 %v7879, %v7878
        %v7893 = vpack.c.b16 %v7881, %v7880
        %v7894 = vpack.c.b16 %v7883, %v7882
        %v7895 = vpack.c.b16 %v7885, %v7884
        %v7896 = vpack.c.b16 %v7887, %v7886
        %v7897 = vpack.c.b16 %v7889, %v7888
        %7906 = vmatprep.subr.bf16.mxu0 0
        %7907 = vmatpush1.bf16.msra.mxu0 %v7890
        %7908 = vmatprep.subr.bf16.mxu0 0
        %7909 = vmatpush1.bf16.msra.mxu0 %v7891
        %7910 = vmatprep.subr.bf16.mxu0 0
        %7911 = vmatpush1.bf16.msra.mxu0 %v7892
        %7912 = vmatprep.subr.bf16.mxu0 0
        %7913 = vmatpush1.bf16.msra.mxu0 %v7893
        %7914 = vmatprep.subr.bf16.mxu0 0
        %7915 = vmatpush1.bf16.msra.mxu0 %v7894
        %7916 = vmatprep.subr.bf16.mxu0 0
        %7917 = vmatpush1.bf16.msra.mxu0 %v7895
        %7918 = vmatprep.subr.bf16.mxu0 0
        %7919 = vmatpush1.bf16.msra.mxu0 %v7896
        %7920 = vmatprep.subr.bf16.mxu0 0
        %7921 = vmatpush1.bf16.msra.mxu0 %v7897
        %7922 = vmatprep.subr.bf16.mxu0 0
        %7923 = vmatpush1.bf16.msra.mxu0 0
        %7924 = vmatprep.subr.bf16.mxu0 0
        %7925 = vmatpush1.bf16.msra.mxu0 0
        %7926 = vmatprep.subr.bf16.mxu0 0
        %7927 = vmatpush1.bf16.msra.mxu0 0
        %7928 = vmatprep.subr.bf16.mxu0 0
        %7929 = vmatpush1.bf16.msra.mxu0 0
        %7930 = vmatprep.subr.bf16.mxu0 0
        %7931 = vmatpush1.bf16.msra.mxu0 0
        %7932 = vmatprep.subr.bf16.mxu0 0
        %7933 = vmatpush1.bf16.msra.mxu0 0
        %7934 = vmatprep.subr.bf16.mxu0 0
        %7935 = vmatpush1.bf16.msra.mxu0 0
        %7936 = vmatprep.subr.bf16.mxu0 0
        %7937 = vmatpush1.bf16.msra.mxu0 0
        %7938 = vmatprep.mubr.bf16.mxu0 0
        %7939 = vmatmul.mubr.bf16.gmra.mrb[0].mxu0 %v7842
        %v7940 = vpop.f32.mrb[0].mxu0
        %v7941 = vadd.f32 0.0, %v7940
        %v7942 = vpop.f32.mrb[0].mxu0
        %v7943 = vpop.f32.mrb[0].mxu0
        %v7944 = vadd.f32 0.0, %v7943
        %v7945 = vpop.f32.mrb[0].mxu0
        %7946 = vmatprep.mubr.bf16.mxu0 0
        %7947 = vmatmul.mubr.bf16.gmra.mrb[0].mxu0 %v7843
        %v7948 = vpop.f32.mrb[0].mxu0
        %v7949 = vadd.f32 0.0, %v7948
        %v7950 = vpop.f32.mrb[0].mxu0
        %v7951 = vpop.f32.mrb[0].mxu0
        %v7952 = vadd.f32 0.0, %v7951
        %v7953 = vpop.f32.mrb[0].mxu0
        %7954 = vmatprep.mubr.bf16.mxu0 0
        %7955 = vmatmul.mubr.bf16.gmra.mrb[0].mxu0 %v7844
        %v7956 = vpop.f32.mrb[0].mxu0
        %v7957 = vadd.f32 0.0, %v7956
        %v7958 = vpop.f32.mrb[0].mxu0
        %v7959 = vpop.f32.mrb[0].mxu0
        %v7960 = vadd.f32 0.0, %v7959
        %v7961 = vpop.f32.mrb[0].mxu0
        %7962 = vmatprep.mubr.bf16.mxu0 0
        %7963 = vmatmul.mubr.bf16.gmra.mrb[0].mxu0 %v7845
        %v7964 = vpop.f32.mrb[0].mxu0
        %v7965 = vadd.f32 0.0, %v7964
        %v7966 = vpop.f32.mrb[0].mxu0
        %v7967 = vpop.f32.mrb[0].mxu0
        %v7968 = vadd.f32 0.0, %v7967
        %v7969 = vpop.f32.mrb[0].mxu0
        %7970 = vmatprep.mubr.bf16.mxu0 0
        %7971 = vmatmul.mubr.bf16.gmra.mrb[0].mxu0 %v7846
        %v7972 = vpop.f32.mrb[0].mxu0
        %v7973 = vadd.f32 0.0, %v7972
        %v7974 = vpop.f32.mrb[0].mxu0
        %v7975 = vpop.f32.mrb[0].mxu0
        %v7976 = vadd.f32 0.0, %v7975
        %v7977 = vpop.f32.mrb[0].mxu0
        %7978 = vmatprep.mubr.bf16.mxu0 0
        %7979 = vmatmul.mubr.bf16.gmra.mrb[0].mxu0 %v7847
        %v7980 = vpop.f32.mrb[0].mxu0
        %v7981 = vadd.f32 0.0, %v7980
        %v7982 = vpop.f32.mrb[0].mxu0
        %v7983 = vpop.f32.mrb[0].mxu0
        %v7984 = vadd.f32 0.0, %v7983
        %v7985 = vpop.f32.mrb[0].mxu0
        %7986 = vmatprep.mubr.bf16.mxu0 0
        %7987 = vmatmul.mubr.bf16.gmra.mrb[0].mxu0 %v7848
        %v7988 = vpop.f32.mrb[0].mxu0
        %v7989 = vadd.f32 0.0, %v7988
        %v7990 = vpop.f32.mrb[0].mxu0
        %v7991 = vpop.f32.mrb[0].mxu0
        %v7992 = vadd.f32 0.0, %v7991
        %v7993 = vpop.f32.mrb[0].mxu0
        %7994 = vmatprep.mubr.bf16.mxu0 0
        %7995 = vmatmul.mubr.bf16.gmra.mrb[0].mxu0 %v7849
        %v7996 = vpop.f32.mrb[0].mxu0
        %v7997 = vadd.f32 0.0, %v7996
        %v7998 = vpop.f32.mrb[0].mxu0
        %v7999 = vpop.f32.mrb[0].mxu0
        %v8000 = vadd.f32 0.0, %v7999
        %v8001 = vpop.f32.mrb[0].mxu0
        %8002 = vdwg.mxu0
        %v8003 = vadd.f32 %v7713, %v7941
        %v8004 = vadd.f32 %v7714, %v7944
        %v8005 = vadd.f32 %v7715, %v7949
        %v8006 = vadd.f32 %v7716, %v7952
        %v8007 = vadd.f32 %v7717, %v7957
        %v8008 = vadd.f32 %v7718, %v7960
        %v8009 = vadd.f32 %v7719, %v7965
        %v8010 = vadd.f32 %v7720, %v7968
        %v8011 = vadd.f32 %v7721, %v7973
        %v8012 = vadd.f32 %v7722, %v7976
        %v8013 = vadd.f32 %v7723, %v7981
        %v8014 = vadd.f32 %v7724, %v7984
        %v8015 = vadd.f32 %v7725, %v7989
        %v8016 = vadd.f32 %v7726, %v7992
        %v8017 = vadd.f32 %v7727, %v7997
        %v8018 = vadd.f32 %v7728, %v8000
        %v8035 = vrot.slane %v7451, 6
        %v8036 = vrot.slane %v8035, 4
        %v8037 = vrot.slane %v7452, 6
        %v8038 = vsel %vm697, %v8036, %v8037
        %v8039 = vrot.slane %v8037, 4
        %v8040 = vrot.slane %v7453, 6
        %v8041 = vsel %vm697, %v8039, %v8040
        %v8042 = vrot.slane %v7458, 6
        %v8043 = vrot.slane %v8042, 4
        %v8044 = vrot.slane %v7459, 6
        %v8045 = vsel %vm697, %v8043, %v8044
        %v8046 = vrot.slane %v8044, 4
        %v8047 = vrot.slane %v7460, 6
        %v8048 = vsel %vm697, %v8046, %v8047
        %v8049 = vrot.slane %v7465, 6
        %v8050 = vrot.slane %v8049, 4
        %v8051 = vrot.slane %v7466, 6
        %v8052 = vsel %vm697, %v8050, %v8051
        %v8053 = vrot.slane %v8051, 4
        %v8054 = vrot.slane %v7467, 6
        %v8055 = vsel %vm697, %v8053, %v8054
        %v8056 = vrot.slane %v7472, 6
        %v8057 = vrot.slane %v8056, 4
        %v8058 = vrot.slane %v7473, 6
        %v8059 = vsel %vm697, %v8057, %v8058
        %v8060 = vrot.slane %v8058, 4
        %v8061 = vrot.slane %v7474, 6
        %v8062 = vsel %vm697, %v8060, %v8061
        %v8063 = vrot.slane %v7479, 6
        %v8064 = vrot.slane %v8063, 4
        %v8065 = vrot.slane %v7480, 6
        %v8066 = vsel %vm697, %v8064, %v8065
        %v8067 = vrot.slane %v8065, 4
        %v8068 = vrot.slane %v7481, 6
        %v8069 = vsel %vm697, %v8067, %v8068
        %v8070 = vrot.slane %v7486, 6
        %v8071 = vrot.slane %v8070, 4
        %v8072 = vrot.slane %v7487, 6
        %v8073 = vsel %vm697, %v8071, %v8072
        %v8074 = vrot.slane %v8072, 4
        %v8075 = vrot.slane %v7488, 6
        %v8076 = vsel %vm697, %v8074, %v8075
        %v8077 = vrot.slane %v7493, 6
        %v8078 = vrot.slane %v8077, 4
        %v8079 = vrot.slane %v7494, 6
        %v8080 = vsel %vm697, %v8078, %v8079
        %v8081 = vrot.slane %v8079, 4
        %v8082 = vrot.slane %v7495, 6
        %v8083 = vsel %vm697, %v8081, %v8082
        %v8084 = vrot.slane %v7500, 6
        %v8085 = vrot.slane %v8084, 4
        %v8086 = vrot.slane %v7501, 6
        %v8087 = vsel %vm697, %v8085, %v8086
        %v8088 = vrot.slane %v8086, 4
        %v8089 = vrot.slane %v7502, 6
        %v8090 = vsel %vm697, %v8088, %v8089
        %s8091 = scalar_lea.vmem %s1, 1728
        %v8092 = vld [vmem:[%s8091] sm:$0xf]
        %v8093 = vld [vmem:[%s8091 + $0x4] sm:$0xf]
        %v8094 = vld [vmem:[%s8091 + $0x8] sm:$0xf]
        %v8095 = vld [vmem:[%s8091 + $0xc] sm:$0xf]
        %v8096 = vld [vmem:[%s8091 + $0x10] sm:$0xf]
        %v8097 = vld [vmem:[%s8091 + $0x14] sm:$0xf]
        %v8098 = vld [vmem:[%s8091 + $0x18] sm:$0xf]
        %v8099 = vld [vmem:[%s8091 + $0x1c] sm:$0xf]
        %v8100 = vld [vmem:[%s8091 + $0x20] sm:$0xf]
        %v8101 = vld [vmem:[%s8091 + $0x24] sm:$0xf]
        %v8102 = vld [vmem:[%s8091 + $0x28] sm:$0xf]
        %v8103 = vld [vmem:[%s8091 + $0x2c] sm:$0xf]
        %v8104 = vld [vmem:[%s8091 + $0x30] sm:$0xf]
        %v8105 = vld [vmem:[%s8091 + $0x34] sm:$0xf]
        %v8106 = vld [vmem:[%s8091 + $0x38] sm:$0xf]
        %v8107 = vld [vmem:[%s8091 + $0x3c] sm:$0xf]
        %v8108 = vunpack.c.l.b16 %v8038
        %v8109 = vunpack.c.l.b16 %v8041
        %v8110 = vunpack.c.l.b16 %v8045
        %v8111 = vunpack.c.l.b16 %v8048
        %v8112 = vunpack.c.l.b16 %v8052
        %v8113 = vunpack.c.l.b16 %v8055
        %v8114 = vunpack.c.l.b16 %v8059
        %v8115 = vunpack.c.l.b16 %v8062
        %v8116 = vunpack.c.l.b16 %v8066
        %v8117 = vunpack.c.l.b16 %v8069
        %v8118 = vunpack.c.l.b16 %v8073
        %v8119 = vunpack.c.l.b16 %v8076
        %v8120 = vunpack.c.l.b16 %v8080
        %v8121 = vunpack.c.l.b16 %v8083
        %v8122 = vunpack.c.l.b16 %v8087
        %v8123 = vunpack.c.l.b16 %v8090
        %v8124 = vpack.c.b16 %v8109, %v8108
        %v8125 = vpack.c.b16 %v8111, %v8110
        %v8126 = vpack.c.b16 %v8113, %v8112
        %v8127 = vpack.c.b16 %v8115, %v8114
        %v8128 = vpack.c.b16 %v8117, %v8116
        %v8129 = vpack.c.b16 %v8119, %v8118
        %v8130 = vpack.c.b16 %v8121, %v8120
        %v8131 = vpack.c.b16 %v8123, %v8122
        %v8156 = vunpack.c.l.b16 %v8092
        %v8157 = vunpack.c.l.b16 %v8093
        %v8158 = vunpack.c.l.b16 %v8094
        %v8159 = vunpack.c.l.b16 %v8095
        %v8160 = vunpack.c.l.b16 %v8096
        %v8161 = vunpack.c.l.b16 %v8097
        %v8162 = vunpack.c.l.b16 %v8098
        %v8163 = vunpack.c.l.b16 %v8099
        %v8164 = vunpack.c.l.b16 %v8100
        %v8165 = vunpack.c.l.b16 %v8101
        %v8166 = vunpack.c.l.b16 %v8102
        %v8167 = vunpack.c.l.b16 %v8103
        %v8168 = vunpack.c.l.b16 %v8104
        %v8169 = vunpack.c.l.b16 %v8105
        %v8170 = vunpack.c.l.b16 %v8106
        %v8171 = vunpack.c.l.b16 %v8107
        %v8172 = vpack.c.b16 %v8157, %v8156
        %v8173 = vpack.c.b16 %v8159, %v8158
        %v8174 = vpack.c.b16 %v8161, %v8160
        %v8175 = vpack.c.b16 %v8163, %v8162
        %v8176 = vpack.c.b16 %v8165, %v8164
        %v8177 = vpack.c.b16 %v8167, %v8166
        %v8178 = vpack.c.b16 %v8169, %v8168
        %v8179 = vpack.c.b16 %v8171, %v8170
        %8188 = vmatprep.subr.bf16.mxu0 0
        %8189 = vmatpush1.bf16.msra.mxu0 %v8172
        %8190 = vmatprep.subr.bf16.mxu0 0
        %8191 = vmatpush1.bf16.msra.mxu0 %v8173
        %8192 = vmatprep.subr.bf16.mxu0 0
        %8193 = vmatpush1.bf16.msra.mxu0 %v8174
        %8194 = vmatprep.subr.bf16.mxu0 0
        %8195 = vmatpush1.bf16.msra.mxu0 %v8175
        %8196 = vmatprep.subr.bf16.mxu0 0
        %8197 = vmatpush1.bf16.msra.mxu0 %v8176
        %8198 = vmatprep.subr.bf16.mxu0 0
        %8199 = vmatpush1.bf16.msra.mxu0 %v8177
        %8200 = vmatprep.subr.bf16.mxu0 0
        %8201 = vmatpush1.bf16.msra.mxu0 %v8178
        %8202 = vmatprep.subr.bf16.mxu0 0
        %8203 = vmatpush1.bf16.msra.mxu0 %v8179
        %8204 = vmatprep.subr.bf16.mxu0 0
        %8205 = vmatpush1.bf16.msra.mxu0 0
        %8206 = vmatprep.subr.bf16.mxu0 0
        %8207 = vmatpush1.bf16.msra.mxu0 0
        %8208 = vmatprep.subr.bf16.mxu0 0
        %8209 = vmatpush1.bf16.msra.mxu0 0
        %8210 = vmatprep.subr.bf16.mxu0 0
        %8211 = vmatpush1.bf16.msra.mxu0 0
        %8212 = vmatprep.subr.bf16.mxu0 0
        %8213 = vmatpush1.bf16.msra.mxu0 0
        %8214 = vmatprep.subr.bf16.mxu0 0
        %8215 = vmatpush1.bf16.msra.mxu0 0
        %8216 = vmatprep.subr.bf16.mxu0 0
        %8217 = vmatpush1.bf16.msra.mxu0 0
        %8218 = vmatprep.subr.bf16.mxu0 0
        %8219 = vmatpush1.bf16.msra.mxu0 0
        %8220 = vmatprep.mubr.bf16.mxu0 0
        %8221 = vmatmul.mubr.bf16.gmra.mrb[0].mxu0 %v8124
        %v8222 = vpop.f32.mrb[0].mxu0
        %v8223 = vadd.f32 0.0, %v8222
        %v8224 = vpop.f32.mrb[0].mxu0
        %v8225 = vpop.f32.mrb[0].mxu0
        %v8226 = vadd.f32 0.0, %v8225
        %v8227 = vpop.f32.mrb[0].mxu0
        %8228 = vmatprep.mubr.bf16.mxu0 0
        %8229 = vmatmul.mubr.bf16.gmra.mrb[0].mxu0 %v8125
        %v8230 = vpop.f32.mrb[0].mxu0
        %v8231 = vadd.f32 0.0, %v8230
        %v8232 = vpop.f32.mrb[0].mxu0
        %v8233 = vpop.f32.mrb[0].mxu0
        %v8234 = vadd.f32 0.0, %v8233
        %v8235 = vpop.f32.mrb[0].mxu0
        %8236 = vmatprep.mubr.bf16.mxu0 0
        %8237 = vmatmul.mubr.bf16.gmra.mrb[0].mxu0 %v8126
        %v8238 = vpop.f32.mrb[0].mxu0
        %v8239 = vadd.f32 0.0, %v8238
        %v8240 = vpop.f32.mrb[0].mxu0
        %v8241 = vpop.f32.mrb[0].mxu0
        %v8242 = vadd.f32 0.0, %v8241
        %v8243 = vpop.f32.mrb[0].mxu0
        %8244 = vmatprep.mubr.bf16.mxu0 0
        %8245 = vmatmul.mubr.bf16.gmra.mrb[0].mxu0 %v8127
        %v8246 = vpop.f32.mrb[0].mxu0
        %v8247 = vadd.f32 0.0, %v8246
        %v8248 = vpop.f32.mrb[0].mxu0
        %v8249 = vpop.f32.mrb[0].mxu0
        %v8250 = vadd.f32 0.0, %v8249
        %v8251 = vpop.f32.mrb[0].mxu0
        %8252 = vmatprep.mubr.bf16.mxu0 0
        %8253 = vmatmul.mubr.bf16.gmra.mrb[0].mxu0 %v8128
        %v8254 = vpop.f32.mrb[0].mxu0
        %v8255 = vadd.f32 0.0, %v8254
        %v8256 = vpop.f32.mrb[0].mxu0
        %v8257 = vpop.f32.mrb[0].mxu0
        %v8258 = vadd.f32 0.0, %v8257
        %v8259 = vpop.f32.mrb[0].mxu0
        %8260 = vmatprep.mubr.bf16.mxu0 0
        %8261 = vmatmul.mubr.bf16.gmra.mrb[0].mxu0 %v8129
        %v8262 = vpop.f32.mrb[0].mxu0
        %v8263 = vadd.f32 0.0, %v8262
        %v8264 = vpop.f32.mrb[0].mxu0
        %v8265 = vpop.f32.mrb[0].mxu0
        %v8266 = vadd.f32 0.0, %v8265
        %v8267 = vpop.f32.mrb[0].mxu0
        %8268 = vmatprep.mubr.bf16.mxu0 0
        %8269 = vmatmul.mubr.bf16.gmra.mrb[0].mxu0 %v8130
        %v8270 = vpop.f32.mrb[0].mxu0
        %v8271 = vadd.f32 0.0, %v8270
        %v8272 = vpop.f32.mrb[0].mxu0
        %v8273 = vpop.f32.mrb[0].mxu0
        %v8274 = vadd.f32 0.0, %v8273
        %v8275 = vpop.f32.mrb[0].mxu0
        %8276 = vmatprep.mubr.bf16.mxu0 0
        %8277 = vmatmul.mubr.bf16.gmra.mrb[0].mxu0 %v8131
        %v8278 = vpop.f32.mrb[0].mxu0
        %v8279 = vadd.f32 0.0, %v8278
        %v8280 = vpop.f32.mrb[0].mxu0
        %v8281 = vpop.f32.mrb[0].mxu0
        %v8282 = vadd.f32 0.0, %v8281
        %v8283 = vpop.f32.mrb[0].mxu0
        %8284 = vdwg.mxu0
        %v8285 = vadd.f32 %v8003, %v8223
        %v8286 = vadd.f32 %v8004, %v8226
        %v8287 = vadd.f32 %v8005, %v8231
        %v8288 = vadd.f32 %v8006, %v8234
        %v8289 = vadd.f32 %v8007, %v8239
        %v8290 = vadd.f32 %v8008, %v8242
        %v8291 = vadd.f32 %v8009, %v8247
        %v8292 = vadd.f32 %v8010, %v8250
        %v8293 = vadd.f32 %v8011, %v8255
        %v8294 = vadd.f32 %v8012, %v8258
        %v8295 = vadd.f32 %v8013, %v8263
        %v8296 = vadd.f32 %v8014, %v8266
        %v8297 = vadd.f32 %v8015, %v8271
        %v8298 = vadd.f32 %v8016, %v8274
        %v8299 = vadd.f32 %v8017, %v8279
        %v8300 = vadd.f32 %v8018, %v8282
        %v8301 = vld [vmem:[%s3 + $0x3] sm:$0x1]
        %v8302 = vlaneseq
        %v8303 = vshrl.u32 %v8302, 7
        %v8304 = vsub.s32 0, %v8303
        %v8305 = vrot.slane %v8301, %v8304
        %v8306 = vadd.f32 %v8285, %v8305
        %v8307 = vadd.f32 %v8286, %v8305
        %v8308 = vadd.f32 %v8287, %v8305
        %v8309 = vadd.f32 %v8288, %v8305
        %v8310 = vadd.f32 %v8289, %v8305
        %v8311 = vadd.f32 %v8290, %v8305
        %v8312 = vadd.f32 %v8291, %v8305
        %v8313 = vadd.f32 %v8292, %v8305
        %v8314 = vadd.f32 %v8293, %v8305
        %v8315 = vadd.f32 %v8294, %v8305
        %v8316 = vadd.f32 %v8295, %v8305
        %v8317 = vadd.f32 %v8296, %v8305
        %v8318 = vadd.f32 %v8297, %v8305
        %v8319 = vadd.f32 %v8298, %v8305
        %v8320 = vadd.f32 %v8299, %v8305
        %v8321 = vadd.f32 %v8300, %v8305
        %v8322 = vmax.f32 %v8306, 0.0
        %v8323 = vmax.f32 %v8307, 0.0
        %v8324 = vmax.f32 %v8308, 0.0
        %v8325 = vmax.f32 %v8309, 0.0
        %v8326 = vmax.f32 %v8310, 0.0
        %v8327 = vmax.f32 %v8311, 0.0
        %v8328 = vmax.f32 %v8312, 0.0
        %v8329 = vmax.f32 %v8313, 0.0
        %v8330 = vmax.f32 %v8314, 0.0
        %v8331 = vmax.f32 %v8315, 0.0
        %v8332 = vmax.f32 %v8316, 0.0
        %v8333 = vmax.f32 %v8317, 0.0
        %v8334 = vmax.f32 %v8318, 0.0
        %v8335 = vmax.f32 %v8319, 0.0
        %v8336 = vmax.f32 %v8320, 0.0
        %v8337 = vmax.f32 %v8321, 0.0
        %v8338 = vpack.c.bf16 %v8323, %v8322
        %v8339 = vpack.c.bf16 %v8325, %v8324
        %v8340 = vpack.c.bf16 %v8327, %v8326
        %v8341 = vpack.c.bf16 %v8329, %v8328
        %v8342 = vpack.c.bf16 %v8331, %v8330
        %v8343 = vpack.c.bf16 %v8333, %v8332
        %v8344 = vpack.c.bf16 %v8335, %v8334
        %v8345 = vpack.c.bf16 %v8337, %v8336
        %s8346 = scalar_lea.vmem %s2, 192
        %v8347 = vld [vmem:[%s8346] sm:$0xf]
        %v8348 = vld [vmem:[%s8346 + $0x4] sm:$0xf]
        %v8349 = vld [vmem:[%s8346 + $0x8] sm:$0xf]
        %v8350 = vld [vmem:[%s8346 + $0xc] sm:$0xf]
        %v8351 = vld [vmem:[%s8346 + $0x10] sm:$0xf]
        %v8352 = vld [vmem:[%s8346 + $0x14] sm:$0xf]
        %v8353 = vld [vmem:[%s8346 + $0x18] sm:$0xf]
        %v8354 = vld [vmem:[%s8346 + $0x1c] sm:$0xf]
        %v8355 = vld [vmem:[%s8346 + $0x20] sm:$0xf]
        %v8356 = vld [vmem:[%s8346 + $0x24] sm:$0xf]
        %v8357 = vld [vmem:[%s8346 + $0x28] sm:$0xf]
        %v8358 = vld [vmem:[%s8346 + $0x2c] sm:$0xf]
        %v8359 = vld [vmem:[%s8346 + $0x30] sm:$0xf]
        %v8360 = vld [vmem:[%s8346 + $0x34] sm:$0xf]
        %v8361 = vld [vmem:[%s8346 + $0x38] sm:$0xf]
        %v8362 = vld [vmem:[%s8346 + $0x3c] sm:$0xf]
        %v8379 = vunpack.c.l.b16 %v8347
        %v8380 = vunpack.c.l.b16 %v8348
        %v8381 = vunpack.c.l.b16 %v8349
        %v8382 = vunpack.c.l.b16 %v8350
        %v8383 = vunpack.c.l.b16 %v8351
        %v8384 = vunpack.c.l.b16 %v8352
        %v8385 = vunpack.c.l.b16 %v8353
        %v8386 = vunpack.c.l.b16 %v8354
        %v8387 = vunpack.c.l.b16 %v8355
        %v8388 = vunpack.c.l.b16 %v8356
        %v8389 = vunpack.c.l.b16 %v8357
        %v8390 = vunpack.c.l.b16 %v8358
        %v8391 = vunpack.c.l.b16 %v8359
        %v8392 = vunpack.c.l.b16 %v8360
        %v8393 = vunpack.c.l.b16 %v8361
        %v8394 = vunpack.c.l.b16 %v8362
        %v8395 = vpack.c.b16 %v8380, %v8379
        %v8396 = vpack.c.b16 %v8382, %v8381
        %v8397 = vpack.c.b16 %v8384, %v8383
        %v8398 = vpack.c.b16 %v8386, %v8385
        %v8399 = vpack.c.b16 %v8388, %v8387
        %v8400 = vpack.c.b16 %v8390, %v8389
        %v8401 = vpack.c.b16 %v8392, %v8391
        %v8402 = vpack.c.b16 %v8394, %v8393
        %8411 = vmatprep.subr.bf16.mxu0 0
        %8412 = vmatpush1.bf16.msra.mxu0 %v8395
        %8413 = vmatprep.subr.bf16.mxu0 0
        %8414 = vmatpush1.bf16.msra.mxu0 %v8396
        %8415 = vmatprep.subr.bf16.mxu0 0
        %8416 = vmatpush1.bf16.msra.mxu0 %v8397
        %8417 = vmatprep.subr.bf16.mxu0 0
        %8418 = vmatpush1.bf16.msra.mxu0 %v8398
        %8419 = vmatprep.subr.bf16.mxu0 0
        %8420 = vmatpush1.bf16.msra.mxu0 %v8399
        %8421 = vmatprep.subr.bf16.mxu0 0
        %8422 = vmatpush1.bf16.msra.mxu0 %v8400
        %8423 = vmatprep.subr.bf16.mxu0 0
        %8424 = vmatpush1.bf16.msra.mxu0 %v8401
        %8425 = vmatprep.subr.bf16.mxu0 0
        %8426 = vmatpush1.bf16.msra.mxu0 %v8402
        %8427 = vmatprep.subr.bf16.mxu0 0
        %8428 = vmatpush1.bf16.msra.mxu0 0
        %8429 = vmatprep.subr.bf16.mxu0 0
        %8430 = vmatpush1.bf16.msra.mxu0 0
        %8431 = vmatprep.subr.bf16.mxu0 0
        %8432 = vmatpush1.bf16.msra.mxu0 0
        %8433 = vmatprep.subr.bf16.mxu0 0
        %8434 = vmatpush1.bf16.msra.mxu0 0
        %8435 = vmatprep.subr.bf16.mxu0 0
        %8436 = vmatpush1.bf16.msra.mxu0 0
        %8437 = vmatprep.subr.bf16.mxu0 0
        %8438 = vmatpush1.bf16.msra.mxu0 0
        %8439 = vmatprep.subr.bf16.mxu0 0
        %8440 = vmatpush1.bf16.msra.mxu0 0
        %8441 = vmatprep.subr.bf16.mxu0 0
        %8442 = vmatpush1.bf16.msra.mxu0 0
        %8443 = vmatprep.mubr.bf16.mxu0 0
        %8444 = vmatmul.mubr.bf16.gmra.mrb[0].mxu0 %v8338
        %v8445 = vpop.f32.mrb[0].mxu0
        %v8446 = vadd.f32 0.0, %v8445
        %v8447 = vpop.f32.mrb[0].mxu0
        %v8448 = vpop.f32.mrb[0].mxu0
        %v8449 = vadd.f32 0.0, %v8448
        %v8450 = vpop.f32.mrb[0].mxu0
        %8451 = vmatprep.mubr.bf16.mxu0 0
        %8452 = vmatmul.mubr.bf16.gmra.mrb[0].mxu0 %v8339
        %v8453 = vpop.f32.mrb[0].mxu0
        %v8454 = vadd.f32 0.0, %v8453
        %v8455 = vpop.f32.mrb[0].mxu0
        %v8456 = vpop.f32.mrb[0].mxu0
        %v8457 = vadd.f32 0.0, %v8456
        %v8458 = vpop.f32.mrb[0].mxu0
        %8459 = vmatprep.mubr.bf16.mxu0 0
        %8460 = vmatmul.mubr.bf16.gmra.mrb[0].mxu0 %v8340
        %v8461 = vpop.f32.mrb[0].mxu0
        %v8462 = vadd.f32 0.0, %v8461
        %v8463 = vpop.f32.mrb[0].mxu0
        %v8464 = vpop.f32.mrb[0].mxu0
        %v8465 = vadd.f32 0.0, %v8464
        %v8466 = vpop.f32.mrb[0].mxu0
        %8467 = vmatprep.mubr.bf16.mxu0 0
        %8468 = vmatmul.mubr.bf16.gmra.mrb[0].mxu0 %v8341
        %v8469 = vpop.f32.mrb[0].mxu0
        %v8470 = vadd.f32 0.0, %v8469
        %v8471 = vpop.f32.mrb[0].mxu0
        %v8472 = vpop.f32.mrb[0].mxu0
        %v8473 = vadd.f32 0.0, %v8472
        %v8474 = vpop.f32.mrb[0].mxu0
        %8475 = vmatprep.mubr.bf16.mxu0 0
        %8476 = vmatmul.mubr.bf16.gmra.mrb[0].mxu0 %v8342
        %v8477 = vpop.f32.mrb[0].mxu0
        %v8478 = vadd.f32 0.0, %v8477
        %v8479 = vpop.f32.mrb[0].mxu0
        %v8480 = vpop.f32.mrb[0].mxu0
        %v8481 = vadd.f32 0.0, %v8480
        %v8482 = vpop.f32.mrb[0].mxu0
        %8483 = vmatprep.mubr.bf16.mxu0 0
        %8484 = vmatmul.mubr.bf16.gmra.mrb[0].mxu0 %v8343
        %v8485 = vpop.f32.mrb[0].mxu0
        %v8486 = vadd.f32 0.0, %v8485
        %v8487 = vpop.f32.mrb[0].mxu0
        %v8488 = vpop.f32.mrb[0].mxu0
        %v8489 = vadd.f32 0.0, %v8488
        %v8490 = vpop.f32.mrb[0].mxu0
        %8491 = vmatprep.mubr.bf16.mxu0 0
        %8492 = vmatmul.mubr.bf16.gmra.mrb[0].mxu0 %v8344
        %v8493 = vpop.f32.mrb[0].mxu0
        %v8494 = vadd.f32 0.0, %v8493
        %v8495 = vpop.f32.mrb[0].mxu0
        %v8496 = vpop.f32.mrb[0].mxu0
        %v8497 = vadd.f32 0.0, %v8496
        %v8498 = vpop.f32.mrb[0].mxu0
        %8499 = vmatprep.mubr.bf16.mxu0 0
        %8500 = vmatmul.mubr.bf16.gmra.mrb[0].mxu0 %v8345
        %v8501 = vpop.f32.mrb[0].mxu0
        %v8502 = vadd.f32 0.0, %v8501
        %v8503 = vpop.f32.mrb[0].mxu0
        %v8504 = vpop.f32.mrb[0].mxu0
        %v8505 = vadd.f32 0.0, %v8504
        %v8506 = vpop.f32.mrb[0].mxu0
        %8507 = vdwg.mxu0
        %v8508 = vadd.f32 %v5940, %v8446
        %v8509 = vadd.f32 %v5941, %v8449
        %v8510 = vadd.f32 %v5942, %v8454
        %v8511 = vadd.f32 %v5943, %v8457
        %v8512 = vadd.f32 %v5944, %v8462
        %v8513 = vadd.f32 %v5945, %v8465
        %v8514 = vadd.f32 %v5946, %v8470
        %v8515 = vadd.f32 %v5947, %v8473
        %v8516 = vadd.f32 %v5948, %v8478
        %v8517 = vadd.f32 %v5949, %v8481
        %v8518 = vadd.f32 %v5950, %v8486
        %v8519 = vadd.f32 %v5951, %v8489
        %v8520 = vadd.f32 %v5952, %v8494
        %v8521 = vadd.f32 %v5953, %v8497
        %v8522 = vadd.f32 %v5954, %v8502
        %v8523 = vadd.f32 %v5955, %v8505
        %v8524 = vld [vmem:[%s250] sm:$0x1]
        %v8526 = vlaneseq
        %v8527 = vshrl.u32 %v8526, 7
        %v8528 = vsub.s32 0, %v8527
        %v8529 = vrot.slane %v8524, %v8528
        %v8531 = vadd.f32 %v8508, %v8529
        %v8532 = vadd.f32 %v8509, %v8529
        %v8533 = vadd.f32 %v8510, %v8529
        %v8534 = vadd.f32 %v8511, %v8529
        %v8535 = vadd.f32 %v8512, %v8529
        %v8536 = vadd.f32 %v8513, %v8529
        %v8537 = vadd.f32 %v8514, %v8529
        %v8538 = vadd.f32 %v8515, %v8529
        %v8539 = vadd.f32 %v8516, %v8529
        %v8540 = vadd.f32 %v8517, %v8529
        %v8541 = vadd.f32 %v8518, %v8529
        %v8542 = vadd.f32 %v8519, %v8529
        %v8543 = vadd.f32 %v8520, %v8529
        %v8544 = vadd.f32 %v8521, %v8529
        %v8545 = vadd.f32 %v8522, %v8529
        %v8546 = vadd.f32 %v8523, %v8529
        %v8547 = vmax.f32 %v8531, 0.0
        %v8548 = vmax.f32 %v8532, 0.0
        %v8549 = vmax.f32 %v8533, 0.0
        %v8550 = vmax.f32 %v8534, 0.0
        %v8551 = vmax.f32 %v8535, 0.0
        %v8552 = vmax.f32 %v8536, 0.0
        %v8553 = vmax.f32 %v8537, 0.0
        %v8554 = vmax.f32 %v8538, 0.0
        %v8555 = vmax.f32 %v8539, 0.0
        %v8556 = vmax.f32 %v8540, 0.0
        %v8557 = vmax.f32 %v8541, 0.0
        %v8558 = vmax.f32 %v8542, 0.0
        %v8559 = vmax.f32 %v8543, 0.0
        %v8560 = vmax.f32 %v8544, 0.0
        %v8561 = vmax.f32 %v8545, 0.0
        %v8562 = vmax.f32 %v8546, 0.0
        %8563 = vst [vmem:[%s242] sm:$0xff] %v8547
        %8564 = vst [vmem:[%s242 + $0x8] sm:$0xff] %v8548
        %8565 = vst [vmem:[%s242 + $0x10] sm:$0xff] %v8549
        %8566 = vst [vmem:[%s242 + $0x18] sm:$0xff] %v8550
        %8567 = vst [vmem:[%s242 + $0x20] sm:$0xff] %v8551
        %8568 = vst [vmem:[%s242 + $0x28] sm:$0xff] %v8552
        %8569 = vst [vmem:[%s242 + $0x30] sm:$0xff] %v8553
        %8570 = vst [vmem:[%s242 + $0x38] sm:$0xff] %v8554
        %8571 = vst [vmem:[%s242 + $0x40] sm:$0xff] %v8555
        %8572 = vst [vmem:[%s242 + $0x48] sm:$0xff] %v8556
        %8573 = vst [vmem:[%s242 + $0x50] sm:$0xff] %v8557
        %8574 = vst [vmem:[%s242 + $0x58] sm:$0xff] %v8558
        %8575 = vst [vmem:[%s242 + $0x60] sm:$0xff] %v8559
        %8576 = vst [vmem:[%s242 + $0x68] sm:$0xff] %v8560
        %8577 = vst [vmem:[%s242 + $0x70] sm:$0xff] %v8561
        %8578 = vst [vmem:[%s242 + $0x78] sm:$0xff] %v8562
        %s8579 = sand.u32 %s156, 1
        %s8580 = scalar_lea.sflag [#allocation3], %s8579
        %s8581 = sand.u32 %s156, 1
        %s8582 = smul.addr %s8581, 128
        %s8583 = scalar_lea.vmem [#allocation2], %s8582
        // Predicated region
        $region41: #{tpu_custom_call.1} parent=39 // pred_check
          %p8584 = pneg %p166
        $region42: #{tpu_custom_call.1} parent=39 // pred_check_branch
          %8586 = sbr.rel (%p8584) target = $region44
        $region43: #{tpu_custom_call.1} parent=39 // pred_region
          %s8587 = smul.u32 16, %s24
          %s8589 = ssub.s32 2048, 2048
          %8590 = vsyncadd %s8580, %s8589
          %s8591 = smul.addr %s23, 32
          %s8592 = sadd.s32 %s8587, %s8591
          %s8593 = smul.addr %s8592, 128
          %s8594 = scalar_lea.hbm %s5, %s8593
          %s8595 = sshll.u32 %s8583, 4
          %s8596 = int_to_ptr.vmem [resolvable:$true] %s8595
          %8601 = dma.vmem_to_hbm [thread:$0]  %s8596, 2048, %s8594, %s8580, 128, 128, 8
        $region44: #{tpu_custom_call.1} parent=39 // pred_fallthru
          _
      $region40: #{tpu_custom_call.1} parent=5 // pred_fallthru
        _
      %p8602 = scmp.le.s32.totalorder 2, %s14
      // Predicated region
      $region45: #{tpu_custom_call.1} parent=5 // pred_check
        %p8603 = pneg %p8602
      $region46: #{tpu_custom_call.1} parent=5 // pred_check_branch
        %8605 = sbr.rel (%p8603) target = $region48
      $region47: #{tpu_custom_call.1} parent=5 // pred_region
        %s8606 = ssub.s32 %s14, 2
        // Predicated region
        $region49: #{tpu_custom_call.1} parent=47 // pred_check
          %p8607 = pneg %p172
        $region50: #{tpu_custom_call.1} parent=47 // pred_check_branch
          %8609 = sbr.rel (%p8607) target = $region52
        $region51: #{tpu_custom_call.1} parent=47 // pred_region
          %s8610 = sand.u32 %s157, 1
          %s8611 = scalar_lea.sflag [#allocation3], %s8610
          %s8612 = sand.u32 %s157, 1
          %s8613 = smul.addr %s8612, 128
          %s8614 = scalar_lea.vmem [#allocation2], %s8613
          %8615 = dma.done %s8611, 2048
        $region52: #{tpu_custom_call.1} parent=47 // pred_fallthru
          _
      $region48: #{tpu_custom_call.1} parent=5 // pred_fallthru
        _
    $region6: #{tpu_custom_call.1} parent=1 // loop_footer
      %s18 = sadd.s32 1, %s14
    $region7: #{tpu_custom_call.1} parent=1 // loop_footer_branch
      %13 = sbr.rel target = $region3
    $region8: #{tpu_custom_call.1} parent=1 // loop_exit
      _
    %8616 = vsyncpa [#allocation3], 1
    %s8617 = scalar_lea.sflag [#allocation3], 1
    %8618 = vsyncpa %s8617, 1

</llo_original>
